<compile_context>
chip_gen: v5e
topology: v5e:2x2
jax: 0.10.0
libtpu: 0.0.40
codegen_flags: <defaults>
</compile_context>

<pallas_src>
import functools

import jax
import jax.numpy as jnp
from jax.experimental import pallas as pl
from jax.experimental.pallas import tpu as pltpu


# ----------------------------------------------------------------------------
# Tiling helpers
# ----------------------------------------------------------------------------
def _round_up(x, m):
    return ((x + m - 1) // m) * m


def _pad_and_tile(dim, unit, max_tile):
    """Return (padded_dim, tile): tile % unit == 0 and padded_dim % tile == 0."""
    d = _round_up(dim, unit)
    if d <= max_tile:
        return d, d
    return _round_up(dim, max_tile), max_tile


# ----------------------------------------------------------------------------
# Pallas kernels
# ----------------------------------------------------------------------------
def _matmul_bias_act_kernel(a_ref, w_ref, b_ref, o_ref, acc_ref, *, act):
    """Tiled out = act(a @ w + b); K is the (reduction) grid axis 2."""
    k = pl.program_id(2)

    @pl.when(k == 0)
    def _():
        acc_ref[...] = jnp.zeros_like(acc_ref)

    acc_ref[...] += jnp.dot(a_ref[...], w_ref[...],
                            preferred_element_type=jnp.float32)

    @pl.when(k == pl.num_programs(2) - 1)
    def _():
        out = acc_ref[...] + b_ref[...].astype(jnp.float32)
        if act == "leaky":
            out = jnp.where(out >= 0.0, out, 0.2 * out)
        elif act == "sigmoid":
            out = jax.nn.sigmoid(out)
        o_ref[...] = out.astype(o_ref.dtype)


def _instnorm_lrelu_kernel(x_ref, o_ref):
    """InstanceNorm2d (no affine, eps=1e-5) + LeakyReLU(0.2) on a (1,S,tc) block.

    Single-pass stats: var = E[x^2] - E[x]^2 (biased, matching torch defaults),
    computed in f32 regardless of the activation dtype."""
    x = x_ref[...].astype(jnp.float32)
    mean = jnp.mean(x, axis=1, keepdims=True)
    meansq = jnp.mean(x * x, axis=1, keepdims=True)
    var = jnp.maximum(meansq - mean * mean, 0.0)
    y = (x - mean) * jax.lax.rsqrt(var + 1e-5)
    o_ref[...] = jnp.where(y >= 0.0, y, 0.2 * y).astype(o_ref.dtype)


# ----------------------------------------------------------------------------
# Pallas wrappers
# ----------------------------------------------------------------------------
# Max tile sizes (bf16 operands): double-buffered inputs + bf16 output +
# f32 accumulator stay well under the 16 MiB v5e scoped-VMEM default.
_TM_MAX = 512
_TK_MAX = 512
_TN_MAX = 256


def _pallas_matmul_bias_act(a, w, b, act, out_dtype):
    """a:(M,K) bf16, w:(K,Cout) bf16, b:(Cout,) f32 -> act(a@w+b):(M,Cout)."""
    M, K = a.shape
    Cout = w.shape[1]

    M_pad, tm = _pad_and_tile(M, 8, _TM_MAX)
    K_pad, tk = _pad_and_tile(K, 128, _TK_MAX)
    N_pad, tn = _pad_and_tile(Cout, 128, _TN_MAX)

    a_p = jnp.pad(a, ((0, M_pad - M), (0, K_pad - K)))
    w_p = jnp.pad(w, ((0, K_pad - K), (0, N_pad - Cout)))
    b_p = jnp.pad(b.reshape(1, Cout), ((0, 0), (0, N_pad - Cout)))

    grid = (M_pad // tm, N_pad // tn, K_pad // tk)
    out_bytes = M_pad * N_pad * jnp.dtype(out_dtype).itemsize

    out = pl.pallas_call(
        functools.partial(_matmul_bias_act_kernel, act=act),
        out_shape=jax.ShapeDtypeStruct((M_pad, N_pad), out_dtype),
        grid_spec=pltpu.PrefetchScalarGridSpec(
            num_scalar_prefetch=0,
            grid=grid,
            in_specs=[
                pl.BlockSpec((tm, tk), lambda i, j, k: (i, k)),
                pl.BlockSpec((tk, tn), lambda i, j, k: (k, j)),
                pl.BlockSpec((1, tn), lambda i, j, k: (0, j)),
            ],
            out_specs=pl.BlockSpec((tm, tn), lambda i, j, k: (i, j)),
            scratch_shapes=[pltpu.VMEM((tm, tn), jnp.float32)],
        ),
        compiler_params=pltpu.CompilerParams(
            dimension_semantics=("parallel", "parallel", "arbitrary")),
        cost_estimate=pl.CostEstimate(
            flops=2 * M_pad * K_pad * N_pad,
            transcendentals=(M_pad * N_pad) if act == "sigmoid" else 0,
            bytes_accessed=2 * M_pad * K_pad + 2 * K_pad * N_pad + out_bytes),
    )(a_p, w_p, b_p)

    # Slice off M/Cout padding BEFORE any downstream statistics.
    return out[:M, :Cout]


def _pallas_instnorm_lrelu(x_nsc):
    """x:(N, S=H*W, C) -> InstanceNorm + LeakyReLU(0.2), gridded over (N, C/128)."""
    N, S, C = x_nsc.shape
    tc = 128 if C % 128 == 0 else C
    grid = (N, C // tc)
    nbytes = N * S * C * x_nsc.dtype.itemsize

    return pl.pallas_call(
        _instnorm_lrelu_kernel,
        out_shape=jax.ShapeDtypeStruct((N, S, C), x_nsc.dtype),
        grid_spec=pltpu.PrefetchScalarGridSpec(
            num_scalar_prefetch=0,
            grid=grid,
            in_specs=[pl.BlockSpec((1, S, tc), lambda n, c: (n, 0, c))],
            out_specs=pl.BlockSpec((1, S, tc), lambda n, c: (n, 0, c)),
        ),
        compiler_params=pltpu.CompilerParams(
            dimension_semantics=("parallel", "parallel")),
        cost_estimate=pl.CostEstimate(
            flops=8 * N * S * C, transcendentals=N * C,
            bytes_accessed=2 * nbytes),
    )(x_nsc)


# ----------------------------------------------------------------------------
# Glue: reflect pad + im2col (pure JAX reshapes/slices)
# ----------------------------------------------------------------------------
def _im2col(x_nhwc, kh, kw, stride):
    """x_nhwc already reflect-padded.  Returns (N*OH*OW, kh*kw*C), (N,OH,OW)."""
    N, H, W, C = x_nhwc.shape
    OH = (H - kh) // stride + 1
    OW = (W - kw) // stride + 1
    patches = []
    for i in range(kh):
        for j in range(kw):
            patches.append(
                x_nhwc[:, i:i + stride * OH:stride, j:j + stride * OW:stride, :]
            )
    p = jnp.stack(patches, axis=3)                 # (N, OH, OW, kh*kw, C)
    return p.reshape(N * OH * OW, kh * kw * C), (N, OH, OW)


def _conv2d_reflect(x_nhwc, w_oihw, b, stride, act, out_dtype=jnp.bfloat16):
    """Conv2d(k=4, pad=1, padding_mode='reflect') + optional fused activation."""
    cout, cin, kh, kw = w_oihw.shape
    xp = jnp.pad(x_nhwc, ((0, 0), (1, 1), (1, 1), (0, 0)), mode="reflect")
    a, (N, OH, OW) = _im2col(xp, kh, kw, stride)
    # (Cout, Cin, KH, KW) -> (KH, KW, Cin, Cout) -> (KH*KW*Cin, Cout)
    w_mat = jnp.transpose(w_oihw, (2, 3, 1, 0)).reshape(kh * kw * cin, cout)
    out = _pallas_matmul_bias_act(
        a.astype(jnp.bfloat16), w_mat.astype(jnp.bfloat16),
        b.astype(jnp.float32), act, out_dtype)
    return out.reshape(N, OH, OW, cout)


# ----------------------------------------------------------------------------
# Model: parameters + forward
# ----------------------------------------------------------------------------
def init_params(key, in_channels=3, features=(64, 128, 256, 512)):
    params = []
    chans = [in_channels] + list(features) + [1]
    for idx in range(len(chans) - 1):
        cin, cout = chans[idx], chans[idx + 1]
        key, kw_, kb_ = jax.random.split(key, 3)
        fan_in = cin * 4 * 4
        w = jax.random.normal(kw_, (cout, cin, 4, 4), jnp.float32) / jnp.sqrt(fan_in)
        b = jax.random.normal(kb_, (cout,), jnp.float32) * 0.01
        params.append((w, b))
    return params


def discriminator_forward(params, x_nchw, features=(64, 128, 256, 512)):
    # NCHW (torch convention) -> NHWC for the kernels; bf16 activations.
    x = jnp.transpose(x_nchw, (0, 2, 3, 1)).astype(jnp.bfloat16)

    # initial: Conv(s=2, reflect) + LeakyReLU(0.2), fused in the matmul kernel.
    w, b = params[0]
    x = _conv2d_reflect(x, w, b, stride=2, act="leaky", out_dtype=jnp.bfloat16)

    # Blocks: Conv(reflect, bias) -> InstanceNorm2d -> LeakyReLU(0.2)
    for li, feat in enumerate(features[1:], start=1):
        stride = 1 if feat == features[-1] else 2
        w, b = params[li]
        x = _conv2d_reflect(x, w, b, stride=stride, act="none",
                            out_dtype=jnp.bfloat16)
        N, H, W, C = x.shape
        x = _pallas_instnorm_lrelu(x.reshape(N, H * W, C)).reshape(N, H, W, C)

    # Final Conv(s=1, reflect) -> sigmoid (f32 epilogue), fused in the kernel.
    w, b = params[-1]
    x = _conv2d_reflect(x, w, b, stride=1, act="sigmoid", out_dtype=jnp.float32)

    # Back to NCHW to match torch output layout.
    return jnp.transpose(x, (0, 3, 1, 2))


if __name__ == "__main__":
    key = jax.random.PRNGKey(0)
    pkey, xkey = jax.random.split(key)

    # 32x32 input survives all reflect-padded 4x4 convs
    # (32 -> 16 -> 8 -> 4 -> 3 -> 2 spatial).
    x = jax.random.normal(xkey, (2, 3, 32, 32), jnp.float32)
    params = init_params(pkey)

    out = jax.jit(discriminator_forward)(params, x)
    out = jax.block_until_ready(out)

    assert out.shape == (2, 1, 2, 2), out.shape
    assert out.dtype == jnp.float32, out.dtype
    assert bool(jnp.all((out >= 0.0) & (out <= 1.0)))
    print("KERNEL_OK")
</pallas_src>

<mosaic_0001>
module attributes {stable_mosaic.version = 11 : i64} {
  func.func @_matmul_bias_act_kernel(%arg0: i32, %arg1: i32, %arg2: i32, %arg3: memref<512x128xbf16, #tpu.memory_space<vmem>>, %arg4: memref<128x128xbf16, #tpu.memory_space<vmem>>, %arg5: memref<1x128xf32, #tpu.memory_space<vmem>>, %arg6: memref<512x128xbf16, #tpu.memory_space<vmem>>, %arg7: memref<512x128xf32, #tpu.memory_space<vmem>>) attributes {dimension_semantics = [#tpu.dimension_semantics<parallel>, #tpu.dimension_semantics<parallel>, #tpu.dimension_semantics<arbitrary>], iteration_bounds = array<i64: 1, 1, 1>, scalar_prefetch = 0 : i64, scratch_operands = 1 : i64, tpu.core_type = #tpu.core_type<tc>, window_params = [{transform_indices = @transform_0, window_bounds = array<i64: 512, 128>}, {transform_indices = @transform_1, window_bounds = array<i64: 128, 128>}, {transform_indices = @transform_2, window_bounds = array<i64: 1, 128>}, {transform_indices = @transform_3, window_bounds = array<i64: 512, 128>}]} {
    %c0_i32 = arith.constant 0 : i32
    %0 = arith.cmpi eq, %arg2, %c0_i32 : i32
    %1 = arith.extui %0 : i1 to i32
    %c0_i32_0 = arith.constant 0 : i32
    %2 = arith.cmpi ne, %1, %c0_i32_0 : i32
    scf.if %2 {
      %cst_10 = arith.constant 0.000000e+00 : f32
      %12 = vector.broadcast %cst_10 : f32 to vector<512x128xf32>
      %c0_11 = arith.constant 0 : index
      %c0_12 = arith.constant 0 : index
      %13 = vector.load %arg7[%c0_11, %c0_12] : memref<512x128xf32, #tpu.memory_space<vmem>>, vector<512x128xf32>
      tpu.vector_store %arg7[%c0_11, %c0_12], %12 {strides = array<i32>} : memref<512x128xf32, #tpu.memory_space<vmem>>, vector<512x128xf32>,
    } else {
    }
    %c0 = arith.constant 0 : index
    %c0_1 = arith.constant 0 : index
    %3 = vector.load %arg7[%c0, %c0_1] : memref<512x128xf32, #tpu.memory_space<vmem>>, vector<512x128xf32>
    %c0_2 = arith.constant 0 : index
    %c0_3 = arith.constant 0 : index
    %4 = vector.load %arg3[%c0_2, %c0_3] : memref<512x128xbf16, #tpu.memory_space<vmem>>, vector<512x128xbf16>
    %c0_4 = arith.constant 0 : index
    %c0_5 = arith.constant 0 : index
    %5 = vector.load %arg4[%c0_4, %c0_5] : memref<128x128xbf16, #tpu.memory_space<vmem>>, vector<128x128xbf16>
    %cst = arith.constant dense<0.000000e+00> : vector<512x128xf32>
    %6 = tpu.matmul %4, %5, %cst {dimension_numbers = #tpu.dot_dimension_numbers<[1], [0], [0], [1], [0, 0, 1, 1], [], []>} : vector<512x128xbf16>, vector<128x128xbf16>, vector<512x128xf32> -> vector<512x128xf32>
    %7 = arith.addf %3, %6 : vector<512x128xf32>
    %c0_6 = arith.constant 0 : index
    %c0_7 = arith.constant 0 : index
    %8 = vector.load %arg7[%c0_6, %c0_7] : memref<512x128xf32, #tpu.memory_space<vmem>>, vector<512x128xf32>
    tpu.vector_store %arg7[%c0_6, %c0_7], %7 {strides = array<i32>} : memref<512x128xf32, #tpu.memory_space<vmem>>, vector<512x128xf32>,
    %c0_i32_8 = arith.constant 0 : i32
    %9 = arith.cmpi eq, %arg2, %c0_i32_8 : i32
    %10 = arith.extui %9 : i1 to i32
    %c0_i32_9 = arith.constant 0 : i32
    %11 = arith.cmpi ne, %10, %c0_i32_9 : i32
    scf.if %11 {
      %c0_10 = arith.constant 0 : index
      %c0_11 = arith.constant 0 : index
      %12 = vector.load %arg7[%c0_10, %c0_11] : memref<512x128xf32, #tpu.memory_space<vmem>>, vector<512x128xf32>
      %c0_12 = arith.constant 0 : index
      %c0_13 = arith.constant 0 : index
      %13 = vector.load %arg5[%c0_12, %c0_13] : memref<1x128xf32, #tpu.memory_space<vmem>>, vector<1x128xf32>
      %14 = vector.broadcast %13 : vector<1x128xf32> to vector<512x128xf32>
      %15 = arith.addf %12, %14 : vector<512x128xf32>
      %cst_14 = arith.constant 0.000000e+00 : f32
      %16 = vector.broadcast %cst_14 : f32 to vector<512x128xf32>
      %17 = arith.cmpf oge, %15, %16 : vector<512x128xf32>
      %cst_15 = arith.constant 2.000000e-01 : f32
      %18 = vector.broadcast %cst_15 : f32 to vector<512x128xf32>
      %19 = arith.mulf %18, %15 : vector<512x128xf32>
      %20 = arith.select %17, %15, %19 : vector<512x128xi1>, vector<512x128xf32>
      %21 = arith.truncf %20 : vector<512x128xf32> to vector<512x128xbf16>
      %c0_16 = arith.constant 0 : index
      %c0_17 = arith.constant 0 : index
      %22 = vector.load %arg6[%c0_16, %c0_17] : memref<512x128xbf16, #tpu.memory_space<vmem>>, vector<512x128xbf16>
      tpu.vector_store %arg6[%c0_16, %c0_17], %21 {strides = array<i32>} : memref<512x128xbf16, #tpu.memory_space<vmem>>, vector<512x128xbf16>,
    } else {
    }
    return
  }
  func.func @transform_0(%arg0: i32, %arg1: i32, %arg2: i32) -> (i32, i32) {
    %c0_i32 = arith.constant 0 : i32
    return %arg0, %arg2 : i32, i32
  }
  func.func @transform_1(%arg0: i32, %arg1: i32, %arg2: i32) -> (i32, i32) {
    %c0_i32 = arith.constant 0 : i32
    return %arg2, %arg1 : i32, i32
  }
  func.func @transform_2(%arg0: i32, %arg1: i32, %arg2: i32) -> (i32, i32) {
    %c0_i32 = arith.constant 0 : i32
    %c0_i32_0 = arith.constant 0 : i32
    return %c0_i32, %arg1 : i32, i32
  }
  func.func @transform_3(%arg0: i32, %arg1: i32, %arg2: i32) -> (i32, i32) {
    %c0_i32 = arith.constant 0 : i32
    return %arg0, %arg1 : i32, i32
  }
}

module attributes {stable_mosaic.version = 11 : i64} {
  func.func @_matmul_bias_act_kernel(%arg0: i32, %arg1: i32, %arg2: i32, %arg3: memref<128x512xbf16, #tpu.memory_space<vmem>>, %arg4: memref<512x128xbf16, #tpu.memory_space<vmem>>, %arg5: memref<1x128xf32, #tpu.memory_space<vmem>>, %arg6: memref<128x128xbf16, #tpu.memory_space<vmem>>, %arg7: memref<128x128xf32, #tpu.memory_space<vmem>>) attributes {dimension_semantics = [#tpu.dimension_semantics<parallel>, #tpu.dimension_semantics<parallel>, #tpu.dimension_semantics<arbitrary>], iteration_bounds = array<i64: 1, 1, 2>, scalar_prefetch = 0 : i64, scratch_operands = 1 : i64, tpu.core_type = #tpu.core_type<tc>, window_params = [{transform_indices = @transform_0, window_bounds = array<i64: 128, 512>}, {transform_indices = @transform_1, window_bounds = array<i64: 512, 128>}, {transform_indices = @transform_2, window_bounds = array<i64: 1, 128>}, {transform_indices = @transform_3, window_bounds = array<i64: 128, 128>}]} {
    %c0_i32 = arith.constant 0 : i32
    %0 = arith.cmpi eq, %arg2, %c0_i32 : i32
    %1 = arith.extui %0 : i1 to i32
    %c0_i32_0 = arith.constant 0 : i32
    %2 = arith.cmpi ne, %1, %c0_i32_0 : i32
    scf.if %2 {
      %cst_9 = arith.constant 0.000000e+00 : f32
      %12 = vector.broadcast %cst_9 : f32 to vector<128x128xf32>
      %c0_10 = arith.constant 0 : index
      %c0_11 = arith.constant 0 : index
      %13 = vector.load %arg7[%c0_10, %c0_11] : memref<128x128xf32, #tpu.memory_space<vmem>>, vector<128x128xf32>
      tpu.vector_store %arg7[%c0_10, %c0_11], %12 {strides = array<i32>} : memref<128x128xf32, #tpu.memory_space<vmem>>, vector<128x128xf32>,
    } else {
    }
    %c0 = arith.constant 0 : index
    %c0_1 = arith.constant 0 : index
    %3 = vector.load %arg7[%c0, %c0_1] : memref<128x128xf32, #tpu.memory_space<vmem>>, vector<128x128xf32>
    %c0_2 = arith.constant 0 : index
    %c0_3 = arith.constant 0 : index
    %4 = vector.load %arg3[%c0_2, %c0_3] : memref<128x512xbf16, #tpu.memory_space<vmem>>, vector<128x512xbf16>
    %c0_4 = arith.constant 0 : index
    %c0_5 = arith.constant 0 : index
    %5 = vector.load %arg4[%c0_4, %c0_5] : memref<512x128xbf16, #tpu.memory_space<vmem>>, vector<512x128xbf16>
    %cst = arith.constant dense<0.000000e+00> : vector<128x128xf32>
    %6 = tpu.matmul %4, %5, %cst {dimension_numbers = #tpu.dot_dimension_numbers<[1], [0], [0], [1], [0, 0, 1, 1], [], []>} : vector<128x512xbf16>, vector<512x128xbf16>, vector<128x128xf32> -> vector<128x128xf32>
    %7 = arith.addf %3, %6 : vector<128x128xf32>
    %c0_6 = arith.constant 0 : index
    %c0_7 = arith.constant 0 : index
    %8 = vector.load %arg7[%c0_6, %c0_7] : memref<128x128xf32, #tpu.memory_space<vmem>>, vector<128x128xf32>
    tpu.vector_store %arg7[%c0_6, %c0_7], %7 {strides = array<i32>} : memref<128x128xf32, #tpu.memory_space<vmem>>, vector<128x128xf32>,
    %c1_i32 = arith.constant 1 : i32
    %9 = arith.cmpi eq, %arg2, %c1_i32 : i32
    %10 = arith.extui %9 : i1 to i32
    %c0_i32_8 = arith.constant 0 : i32
    %11 = arith.cmpi ne, %10, %c0_i32_8 : i32
    scf.if %11 {
      %c0_9 = arith.constant 0 : index
      %c0_10 = arith.constant 0 : index
      %12 = vector.load %arg7[%c0_9, %c0_10] : memref<128x128xf32, #tpu.memory_space<vmem>>, vector<128x128xf32>
      %c0_11 = arith.constant 0 : index
      %c0_12 = arith.constant 0 : index
      %13 = vector.load %arg5[%c0_11, %c0_12] : memref<1x128xf32, #tpu.memory_space<vmem>>, vector<1x128xf32>
      %14 = vector.broadcast %13 : vector<1x128xf32> to vector<128x128xf32>
      %15 = arith.addf %12, %14 : vector<128x128xf32>
      %16 = arith.truncf %15 : vector<128x128xf32> to vector<128x128xbf16>
      %c0_13 = arith.constant 0 : index
      %c0_14 = arith.constant 0 : index
      %17 = vector.load %arg6[%c0_13, %c0_14] : memref<128x128xbf16, #tpu.memory_space<vmem>>, vector<128x128xbf16>
      tpu.vector_store %arg6[%c0_13, %c0_14], %16 {strides = array<i32>} : memref<128x128xbf16, #tpu.memory_space<vmem>>, vector<128x128xbf16>,
    } else {
    }
    return
  }
  func.func @transform_0(%arg0: i32, %arg1: i32, %arg2: i32) -> (i32, i32) {
    %c0_i32 = arith.constant 0 : i32
    return %arg0, %arg2 : i32, i32
  }
  func.func @transform_1(%arg0: i32, %arg1: i32, %arg2: i32) -> (i32, i32) {
    %c0_i32 = arith.constant 0 : i32
    return %arg2, %arg1 : i32, i32
  }
  func.func @transform_2(%arg0: i32, %arg1: i32, %arg2: i32) -> (i32, i32) {
    %c0_i32 = arith.constant 0 : i32
    %c0_i32_0 = arith.constant 0 : i32
    return %c0_i32, %arg1 : i32, i32
  }
  func.func @transform_3(%arg0: i32, %arg1: i32, %arg2: i32) -> (i32, i32) {
    %c0_i32 = arith.constant 0 : i32
    return %arg0, %arg1 : i32, i32
  }
}

module attributes {stable_mosaic.version = 11 : i64} {
  func.func @_instnorm_lrelu_kernel(%arg0: i32, %arg1: i32, %arg2: memref<1x64x128xbf16, #tpu.memory_space<vmem>>, %arg3: memref<1x64x128xbf16, #tpu.memory_space<vmem>>) attributes {dimension_semantics = [#tpu.dimension_semantics<parallel>, #tpu.dimension_semantics<parallel>], iteration_bounds = array<i64: 2, 1>, scalar_prefetch = 0 : i64, scratch_operands = 0 : i64, tpu.core_type = #tpu.core_type<tc>, window_params = [{transform_indices = @transform_0, window_bounds = array<i64: 1, 64, 128>}, {transform_indices = @transform_1, window_bounds = array<i64: 1, 64, 128>}]} {
    %c0 = arith.constant 0 : index
    %c0_0 = arith.constant 0 : index
    %c0_1 = arith.constant 0 : index
    %0 = vector.load %arg2[%c0, %c0_0, %c0_1] : memref<1x64x128xbf16, #tpu.memory_space<vmem>>, vector<1x64x128xbf16>
    %1 = arith.extf %0 : vector<1x64x128xbf16> to vector<1x64x128xf32>
    %cst = arith.constant dense<0.000000e+00> : vector<1x128xf32>
    %2 = vector.multi_reduction <add>, %1, %cst [1] : vector<1x64x128xf32> to vector<1x128xf32>
    %3 = vector.shape_cast %2 : vector<1x128xf32> to vector<1x1x128xf32>
    %cst_2 = arith.constant 6.400000e+01 : f32
    %4 = vector.broadcast %cst_2 : f32 to vector<1x1x128xf32>
    %5 = arith.divf %3, %4 : vector<1x1x128xf32>
    %6 = arith.mulf %1, %1 : vector<1x64x128xf32>
    %cst_3 = arith.constant dense<0.000000e+00> : vector<1x128xf32>
    %7 = vector.multi_reduction <add>, %6, %cst_3 [1] : vector<1x64x128xf32> to vector<1x128xf32>
    %8 = vector.shape_cast %7 : vector<1x128xf32> to vector<1x1x128xf32>
    %cst_4 = arith.constant 6.400000e+01 : f32
    %9 = vector.broadcast %cst_4 : f32 to vector<1x1x128xf32>
    %10 = arith.divf %8, %9 : vector<1x1x128xf32>
    %11 = arith.mulf %5, %5 : vector<1x1x128xf32>
    %12 = arith.subf %10, %11 : vector<1x1x128xf32>
    %cst_5 = arith.constant 0.000000e+00 : f32
    %13 = vector.broadcast %cst_5 : f32 to vector<1x1x128xf32>
    %14 = arith.maximumf %12, %13 : vector<1x1x128xf32>
    %15 = vector.broadcast %5 : vector<1x1x128xf32> to vector<1x64x128xf32>
    %16 = arith.subf %1, %15 : vector<1x64x128xf32>
    %cst_6 = arith.constant 9.99999974E-6 : f32
    %17 = vector.broadcast %cst_6 : f32 to vector<1x1x128xf32>
    %18 = arith.addf %14, %17 : vector<1x1x128xf32>
    %19 = math.rsqrt %18 : vector<1x1x128xf32>
    %20 = vector.broadcast %19 : vector<1x1x128xf32> to vector<1x64x128xf32>
    %21 = arith.mulf %16, %20 : vector<1x64x128xf32>
    %cst_7 = arith.constant 0.000000e+00 : f32
    %22 = vector.broadcast %cst_7 : f32 to vector<1x64x128xf32>
    %23 = arith.cmpf oge, %21, %22 : vector<1x64x128xf32>
    %cst_8 = arith.constant 2.000000e-01 : f32
    %24 = vector.broadcast %cst_8 : f32 to vector<1x64x128xf32>
    %25 = arith.mulf %24, %21 : vector<1x64x128xf32>
    %26 = arith.select %23, %21, %25 : vector<1x64x128xi1>, vector<1x64x128xf32>
    %27 = arith.truncf %26 : vector<1x64x128xf32> to vector<1x64x128xbf16>
    %c0_9 = arith.constant 0 : index
    %c0_10 = arith.constant 0 : index
    %c0_11 = arith.constant 0 : index
    %28 = vector.load %arg3[%c0_9, %c0_10, %c0_11] : memref<1x64x128xbf16, #tpu.memory_space<vmem>>, vector<1x64x128xbf16>
    tpu.vector_store %arg3[%c0_9, %c0_10, %c0_11], %27 {strides = array<i32>} : memref<1x64x128xbf16, #tpu.memory_space<vmem>>, vector<1x64x128xbf16>,
    return
  }
  func.func @transform_0(%arg0: i32, %arg1: i32) -> (i32, i32, i32) {
    %c0_i32 = arith.constant 0 : i32
    %c0_i32_0 = arith.constant 0 : i32
    return %arg0, %c0_i32, %arg1 : i32, i32, i32
  }
  func.func @transform_1(%arg0: i32, %arg1: i32) -> (i32, i32, i32) {
    %c0_i32 = arith.constant 0 : i32
    %c0_i32_0 = arith.constant 0 : i32
    return %arg0, %c0_i32, %arg1 : i32, i32, i32
  }
}

module attributes {stable_mosaic.version = 11 : i64} {
  func.func @_matmul_bias_act_kernel(%arg0: i32, %arg1: i32, %arg2: i32, %arg3: memref<32x512xbf16, #tpu.memory_space<vmem>>, %arg4: memref<512x256xbf16, #tpu.memory_space<vmem>>, %arg5: memref<1x256xf32, #tpu.memory_space<vmem>>, %arg6: memref<32x256xbf16, #tpu.memory_space<vmem>>, %arg7: memref<32x256xf32, #tpu.memory_space<vmem>>) attributes {dimension_semantics = [#tpu.dimension_semantics<parallel>, #tpu.dimension_semantics<parallel>, #tpu.dimension_semantics<arbitrary>], iteration_bounds = array<i64: 1, 1, 4>, scalar_prefetch = 0 : i64, scratch_operands = 1 : i64, tpu.core_type = #tpu.core_type<tc>, window_params = [{transform_indices = @transform_0, window_bounds = array<i64: 32, 512>}, {transform_indices = @transform_1, window_bounds = array<i64: 512, 256>}, {transform_indices = @transform_2, window_bounds = array<i64: 1, 256>}, {transform_indices = @transform_3, window_bounds = array<i64: 32, 256>}]} {
    %c0_i32 = arith.constant 0 : i32
    %0 = arith.cmpi eq, %arg2, %c0_i32 : i32
    %1 = arith.extui %0 : i1 to i32
    %c0_i32_0 = arith.constant 0 : i32
    %2 = arith.cmpi ne, %1, %c0_i32_0 : i32
    scf.if %2 {
      %cst_9 = arith.constant 0.000000e+00 : f32
      %12 = vector.broadcast %cst_9 : f32 to vector<32x256xf32>
      %c0_10 = arith.constant 0 : index
      %c0_11 = arith.constant 0 : index
      %13 = vector.load %arg7[%c0_10, %c0_11] : memref<32x256xf32, #tpu.memory_space<vmem>>, vector<32x256xf32>
      tpu.vector_store %arg7[%c0_10, %c0_11], %12 {strides = array<i32>} : memref<32x256xf32, #tpu.memory_space<vmem>>, vector<32x256xf32>,
    } else {
    }
    %c0 = arith.constant 0 : index
    %c0_1 = arith.constant 0 : index
    %3 = vector.load %arg7[%c0, %c0_1] : memref<32x256xf32, #tpu.memory_space<vmem>>, vector<32x256xf32>
    %c0_2 = arith.constant 0 : index
    %c0_3 = arith.constant 0 : index
    %4 = vector.load %arg3[%c0_2, %c0_3] : memref<32x512xbf16, #tpu.memory_space<vmem>>, vector<32x512xbf16>
    %c0_4 = arith.constant 0 : index
    %c0_5 = arith.constant 0 : index
    %5 = vector.load %arg4[%c0_4, %c0_5] : memref<512x256xbf16, #tpu.memory_space<vmem>>, vector<512x256xbf16>
    %cst = arith.constant dense<0.000000e+00> : vector<32x256xf32>
    %6 = tpu.matmul %4, %5, %cst {dimension_numbers = #tpu.dot_dimension_numbers<[1], [0], [0], [1], [0, 0, 1, 1], [], []>} : vector<32x512xbf16>, vector<512x256xbf16>, vector<32x256xf32> -> vector<32x256xf32>
    %7 = arith.addf %3, %6 : vector<32x256xf32>
    %c0_6 = arith.constant 0 : index
    %c0_7 = arith.constant 0 : index
    %8 = vector.load %arg7[%c0_6, %c0_7] : memref<32x256xf32, #tpu.memory_space<vmem>>, vector<32x256xf32>
    tpu.vector_store %arg7[%c0_6, %c0_7], %7 {strides = array<i32>} : memref<32x256xf32, #tpu.memory_space<vmem>>, vector<32x256xf32>,
    %c3_i32 = arith.constant 3 : i32
    %9 = arith.cmpi eq, %arg2, %c3_i32 : i32
    %10 = arith.extui %9 : i1 to i32
    %c0_i32_8 = arith.constant 0 : i32
    %11 = arith.cmpi ne, %10, %c0_i32_8 : i32
    scf.if %11 {
      %c0_9 = arith.constant 0 : index
      %c0_10 = arith.constant 0 : index
      %12 = vector.load %arg7[%c0_9, %c0_10] : memref<32x256xf32, #tpu.memory_space<vmem>>, vector<32x256xf32>
      %c0_11 = arith.constant 0 : index
      %c0_12 = arith.constant 0 : index
      %13 = vector.load %arg5[%c0_11, %c0_12] : memref<1x256xf32, #tpu.memory_space<vmem>>, vector<1x256xf32>
      %14 = vector.broadcast %13 : vector<1x256xf32> to vector<32x256xf32>
      %15 = arith.addf %12, %14 : vector<32x256xf32>
      %16 = arith.truncf %15 : vector<32x256xf32> to vector<32x256xbf16>
      %c0_13 = arith.constant 0 : index
      %c0_14 = arith.constant 0 : index
      %17 = vector.load %arg6[%c0_13, %c0_14] : memref<32x256xbf16, #tpu.memory_space<vmem>>, vector<32x256xbf16>
      tpu.vector_store %arg6[%c0_13, %c0_14], %16 {strides = array<i32>} : memref<32x256xbf16, #tpu.memory_space<vmem>>, vector<32x256xbf16>,
    } else {
    }
    return
  }
  func.func @transform_0(%arg0: i32, %arg1: i32, %arg2: i32) -> (i32, i32) {
    %c0_i32 = arith.constant 0 : i32
    return %arg0, %arg2 : i32, i32
  }
  func.func @transform_1(%arg0: i32, %arg1: i32, %arg2: i32) -> (i32, i32) {
    %c0_i32 = arith.constant 0 : i32
    return %arg2, %arg1 : i32, i32
  }
  func.func @transform_2(%arg0: i32, %arg1: i32, %arg2: i32) -> (i32, i32) {
    %c0_i32 = arith.constant 0 : i32
    %c0_i32_0 = arith.constant 0 : i32
    return %c0_i32, %arg1 : i32, i32
  }
  func.func @transform_3(%arg0: i32, %arg1: i32, %arg2: i32) -> (i32, i32) {
    %c0_i32 = arith.constant 0 : i32
    return %arg0, %arg1 : i32, i32
  }
}

module attributes {stable_mosaic.version = 11 : i64} {
  func.func @_instnorm_lrelu_kernel(%arg0: i32, %arg1: i32, %arg2: memref<1x16x128xbf16, #tpu.memory_space<vmem>>, %arg3: memref<1x16x128xbf16, #tpu.memory_space<vmem>>) attributes {dimension_semantics = [#tpu.dimension_semantics<parallel>, #tpu.dimension_semantics<parallel>], iteration_bounds = array<i64: 2, 2>, scalar_prefetch = 0 : i64, scratch_operands = 0 : i64, tpu.core_type = #tpu.core_type<tc>, window_params = [{transform_indices = @transform_0, window_bounds = array<i64: 1, 16, 128>}, {transform_indices = @transform_1, window_bounds = array<i64: 1, 16, 128>}]} {
    %c0 = arith.constant 0 : index
    %c0_0 = arith.constant 0 : index
    %c0_1 = arith.constant 0 : index
    %0 = vector.load %arg2[%c0, %c0_0, %c0_1] : memref<1x16x128xbf16, #tpu.memory_space<vmem>>, vector<1x16x128xbf16>
    %1 = arith.extf %0 : vector<1x16x128xbf16> to vector<1x16x128xf32>
    %cst = arith.constant dense<0.000000e+00> : vector<1x128xf32>
    %2 = vector.multi_reduction <add>, %1, %cst [1] : vector<1x16x128xf32> to vector<1x128xf32>
    %3 = vector.shape_cast %2 : vector<1x128xf32> to vector<1x1x128xf32>
    %cst_2 = arith.constant 1.600000e+01 : f32
    %4 = vector.broadcast %cst_2 : f32 to vector<1x1x128xf32>
    %5 = arith.divf %3, %4 : vector<1x1x128xf32>
    %6 = arith.mulf %1, %1 : vector<1x16x128xf32>
    %cst_3 = arith.constant dense<0.000000e+00> : vector<1x128xf32>
    %7 = vector.multi_reduction <add>, %6, %cst_3 [1] : vector<1x16x128xf32> to vector<1x128xf32>
    %8 = vector.shape_cast %7 : vector<1x128xf32> to vector<1x1x128xf32>
    %cst_4 = arith.constant 1.600000e+01 : f32
    %9 = vector.broadcast %cst_4 : f32 to vector<1x1x128xf32>
    %10 = arith.divf %8, %9 : vector<1x1x128xf32>
    %11 = arith.mulf %5, %5 : vector<1x1x128xf32>
    %12 = arith.subf %10, %11 : vector<1x1x128xf32>
    %cst_5 = arith.constant 0.000000e+00 : f32
    %13 = vector.broadcast %cst_5 : f32 to vector<1x1x128xf32>
    %14 = arith.maximumf %12, %13 : vector<1x1x128xf32>
    %15 = vector.broadcast %5 : vector<1x1x128xf32> to vector<1x16x128xf32>
    %16 = arith.subf %1, %15 : vector<1x16x128xf32>
    %cst_6 = arith.constant 9.99999974E-6 : f32
    %17 = vector.broadcast %cst_6 : f32 to vector<1x1x128xf32>
    %18 = arith.addf %14, %17 : vector<1x1x128xf32>
    %19 = math.rsqrt %18 : vector<1x1x128xf32>
    %20 = vector.broadcast %19 : vector<1x1x128xf32> to vector<1x16x128xf32>
    %21 = arith.mulf %16, %20 : vector<1x16x128xf32>
    %cst_7 = arith.constant 0.000000e+00 : f32
    %22 = vector.broadcast %cst_7 : f32 to vector<1x16x128xf32>
    %23 = arith.cmpf oge, %21, %22 : vector<1x16x128xf32>
    %cst_8 = arith.constant 2.000000e-01 : f32
    %24 = vector.broadcast %cst_8 : f32 to vector<1x16x128xf32>
    %25 = arith.mulf %24, %21 : vector<1x16x128xf32>
    %26 = arith.select %23, %21, %25 : vector<1x16x128xi1>, vector<1x16x128xf32>
    %27 = arith.truncf %26 : vector<1x16x128xf32> to vector<1x16x128xbf16>
    %c0_9 = arith.constant 0 : index
    %c0_10 = arith.constant 0 : index
    %c0_11 = arith.constant 0 : index
    %28 = vector.load %arg3[%c0_9, %c0_10, %c0_11] : memref<1x16x128xbf16, #tpu.memory_space<vmem>>, vector<1x16x128xbf16>
    tpu.vector_store %arg3[%c0_9, %c0_10, %c0_11], %27 {strides = array<i32>} : memref<1x16x128xbf16, #tpu.memory_space<vmem>>, vector<1x16x128xbf16>,
    return
  }
  func.func @transform_0(%arg0: i32, %arg1: i32) -> (i32, i32, i32) {
    %c0_i32 = arith.constant 0 : i32
    %c0_i32_0 = arith.constant 0 : i32
    return %arg0, %c0_i32, %arg1 : i32, i32, i32
  }
  func.func @transform_1(%arg0: i32, %arg1: i32) -> (i32, i32, i32) {
    %c0_i32 = arith.constant 0 : i32
    %c0_i32_0 = arith.constant 0 : i32
    return %arg0, %c0_i32, %arg1 : i32, i32, i32
  }
}

module attributes {stable_mosaic.version = 11 : i64} {
  func.func @_matmul_bias_act_kernel(%arg0: i32, %arg1: i32, %arg2: i32, %arg3: memref<24x512xbf16, #tpu.memory_space<vmem>>, %arg4: memref<512x256xbf16, #tpu.memory_space<vmem>>, %arg5: memref<1x256xf32, #tpu.memory_space<vmem>>, %arg6: memref<24x256xbf16, #tpu.memory_space<vmem>>, %arg7: memref<24x256xf32, #tpu.memory_space<vmem>>) attributes {dimension_semantics = [#tpu.dimension_semantics<parallel>, #tpu.dimension_semantics<parallel>, #tpu.dimension_semantics<arbitrary>], iteration_bounds = array<i64: 1, 2, 8>, scalar_prefetch = 0 : i64, scratch_operands = 1 : i64, tpu.core_type = #tpu.core_type<tc>, window_params = [{transform_indices = @transform_0, window_bounds = array<i64: 24, 512>}, {transform_indices = @transform_1, window_bounds = array<i64: 512, 256>}, {transform_indices = @transform_2, window_bounds = array<i64: 1, 256>}, {transform_indices = @transform_3, window_bounds = array<i64: 24, 256>}]} {
    %c0_i32 = arith.constant 0 : i32
    %0 = arith.cmpi eq, %arg2, %c0_i32 : i32
    %1 = arith.extui %0 : i1 to i32
    %c0_i32_0 = arith.constant 0 : i32
    %2 = arith.cmpi ne, %1, %c0_i32_0 : i32
    scf.if %2 {
      %cst_9 = arith.constant 0.000000e+00 : f32
      %12 = vector.broadcast %cst_9 : f32 to vector<24x256xf32>
      %c0_10 = arith.constant 0 : index
      %c0_11 = arith.constant 0 : index
      %13 = vector.load %arg7[%c0_10, %c0_11] : memref<24x256xf32, #tpu.memory_space<vmem>>, vector<24x256xf32>
      tpu.vector_store %arg7[%c0_10, %c0_11], %12 {strides = array<i32>} : memref<24x256xf32, #tpu.memory_space<vmem>>, vector<24x256xf32>,
    } else {
    }
    %c0 = arith.constant 0 : index
    %c0_1 = arith.constant 0 : index
    %3 = vector.load %arg7[%c0, %c0_1] : memref<24x256xf32, #tpu.memory_space<vmem>>, vector<24x256xf32>
    %c0_2 = arith.constant 0 : index
    %c0_3 = arith.constant 0 : index
    %4 = vector.load %arg3[%c0_2, %c0_3] : memref<24x512xbf16, #tpu.memory_space<vmem>>, vector<24x512xbf16>
    %c0_4 = arith.constant 0 : index
    %c0_5 = arith.constant 0 : index
    %5 = vector.load %arg4[%c0_4, %c0_5] : memref<512x256xbf16, #tpu.memory_space<vmem>>, vector<512x256xbf16>
    %cst = arith.constant dense<0.000000e+00> : vector<24x256xf32>
    %6 = tpu.matmul %4, %5, %cst {dimension_numbers = #tpu.dot_dimension_numbers<[1], [0], [0], [1], [0, 0, 1, 1], [], []>} : vector<24x512xbf16>, vector<512x256xbf16>, vector<24x256xf32> -> vector<24x256xf32>
    %7 = arith.addf %3, %6 : vector<24x256xf32>
    %c0_6 = arith.constant 0 : index
    %c0_7 = arith.constant 0 : index
    %8 = vector.load %arg7[%c0_6, %c0_7] : memref<24x256xf32, #tpu.memory_space<vmem>>, vector<24x256xf32>
    tpu.vector_store %arg7[%c0_6, %c0_7], %7 {strides = array<i32>} : memref<24x256xf32, #tpu.memory_space<vmem>>, vector<24x256xf32>,
    %c7_i32 = arith.constant 7 : i32
    %9 = arith.cmpi eq, %arg2, %c7_i32 : i32
    %10 = arith.extui %9 : i1 to i32
    %c0_i32_8 = arith.constant 0 : i32
    %11 = arith.cmpi ne, %10, %c0_i32_8 : i32
    scf.if %11 {
      %c0_9 = arith.constant 0 : index
      %c0_10 = arith.constant 0 : index
      %12 = vector.load %arg7[%c0_9, %c0_10] : memref<24x256xf32, #tpu.memory_space<vmem>>, vector<24x256xf32>
      %c0_11 = arith.constant 0 : index
      %c0_12 = arith.constant 0 : index
      %13 = vector.load %arg5[%c0_11, %c0_12] : memref<1x256xf32, #tpu.memory_space<vmem>>, vector<1x256xf32>
      %14 = vector.broadcast %13 : vector<1x256xf32> to vector<24x256xf32>
      %15 = arith.addf %12, %14 : vector<24x256xf32>
      %16 = arith.truncf %15 : vector<24x256xf32> to vector<24x256xbf16>
      %c0_13 = arith.constant 0 : index
      %c0_14 = arith.constant 0 : index
      %17 = vector.load %arg6[%c0_13, %c0_14] : memref<24x256xbf16, #tpu.memory_space<vmem>>, vector<24x256xbf16>
      tpu.vector_store %arg6[%c0_13, %c0_14], %16 {strides = array<i32>} : memref<24x256xbf16, #tpu.memory_space<vmem>>, vector<24x256xbf16>,
    } else {
    }
    return
  }
  func.func @transform_0(%arg0: i32, %arg1: i32, %arg2: i32) -> (i32, i32) {
    %c0_i32 = arith.constant 0 : i32
    return %arg0, %arg2 : i32, i32
  }
  func.func @transform_1(%arg0: i32, %arg1: i32, %arg2: i32) -> (i32, i32) {
    %c0_i32 = arith.constant 0 : i32
    return %arg2, %arg1 : i32, i32
  }
  func.func @transform_2(%arg0: i32, %arg1: i32, %arg2: i32) -> (i32, i32) {
    %c0_i32 = arith.constant 0 : i32
    %c0_i32_0 = arith.constant 0 : i32
    return %c0_i32, %arg1 : i32, i32
  }
  func.func @transform_3(%arg0: i32, %arg1: i32, %arg2: i32) -> (i32, i32) {
    %c0_i32 = arith.constant 0 : i32
    return %arg0, %arg1 : i32, i32
  }
}

module attributes {stable_mosaic.version = 11 : i64} {
  func.func @_instnorm_lrelu_kernel(%arg0: i32, %arg1: i32, %arg2: memref<1x9x128xbf16, #tpu.memory_space<vmem>>, %arg3: memref<1x9x128xbf16, #tpu.memory_space<vmem>>) attributes {dimension_semantics = [#tpu.dimension_semantics<parallel>, #tpu.dimension_semantics<parallel>], iteration_bounds = array<i64: 2, 4>, scalar_prefetch = 0 : i64, scratch_operands = 0 : i64, tpu.core_type = #tpu.core_type<tc>, window_params = [{transform_indices = @transform_0, window_bounds = array<i64: 1, 9, 128>}, {transform_indices = @transform_1, window_bounds = array<i64: 1, 9, 128>}]} {
    %c0 = arith.constant 0 : index
    %c0_0 = arith.constant 0 : index
    %c0_1 = arith.constant 0 : index
    %0 = vector.load %arg2[%c0, %c0_0, %c0_1] : memref<1x9x128xbf16, #tpu.memory_space<vmem>>, vector<1x9x128xbf16>
    %1 = arith.extf %0 : vector<1x9x128xbf16> to vector<1x9x128xf32>
    %cst = arith.constant dense<0.000000e+00> : vector<1x128xf32>
    %2 = vector.multi_reduction <add>, %1, %cst [1] : vector<1x9x128xf32> to vector<1x128xf32>
    %3 = vector.shape_cast %2 : vector<1x128xf32> to vector<1x1x128xf32>
    %cst_2 = arith.constant 9.000000e+00 : f32
    %4 = vector.broadcast %cst_2 : f32 to vector<1x1x128xf32>
    %5 = arith.divf %3, %4 : vector<1x1x128xf32>
    %6 = arith.mulf %1, %1 : vector<1x9x128xf32>
    %cst_3 = arith.constant dense<0.000000e+00> : vector<1x128xf32>
    %7 = vector.multi_reduction <add>, %6, %cst_3 [1] : vector<1x9x128xf32> to vector<1x128xf32>
    %8 = vector.shape_cast %7 : vector<1x128xf32> to vector<1x1x128xf32>
    %cst_4 = arith.constant 9.000000e+00 : f32
    %9 = vector.broadcast %cst_4 : f32 to vector<1x1x128xf32>
    %10 = arith.divf %8, %9 : vector<1x1x128xf32>
    %11 = arith.mulf %5, %5 : vector<1x1x128xf32>
    %12 = arith.subf %10, %11 : vector<1x1x128xf32>
    %cst_5 = arith.constant 0.000000e+00 : f32
    %13 = vector.broadcast %cst_5 : f32 to vector<1x1x128xf32>
    %14 = arith.maximumf %12, %13 : vector<1x1x128xf32>
    %15 = vector.broadcast %5 : vector<1x1x128xf32> to vector<1x9x128xf32>
    %16 = arith.subf %1, %15 : vector<1x9x128xf32>
    %cst_6 = arith.constant 9.99999974E-6 : f32
    %17 = vector.broadcast %cst_6 : f32 to vector<1x1x128xf32>
    %18 = arith.addf %14, %17 : vector<1x1x128xf32>
    %19 = math.rsqrt %18 : vector<1x1x128xf32>
    %20 = vector.broadcast %19 : vector<1x1x128xf32> to vector<1x9x128xf32>
    %21 = arith.mulf %16, %20 : vector<1x9x128xf32>
    %cst_7 = arith.constant 0.000000e+00 : f32
    %22 = vector.broadcast %cst_7 : f32 to vector<1x9x128xf32>
    %23 = arith.cmpf oge, %21, %22 : vector<1x9x128xf32>
    %cst_8 = arith.constant 2.000000e-01 : f32
    %24 = vector.broadcast %cst_8 : f32 to vector<1x9x128xf32>
    %25 = arith.mulf %24, %21 : vector<1x9x128xf32>
    %26 = arith.select %23, %21, %25 : vector<1x9x128xi1>, vector<1x9x128xf32>
    %27 = arith.truncf %26 : vector<1x9x128xf32> to vector<1x9x128xbf16>
    %c0_9 = arith.constant 0 : index
    %c0_10 = arith.constant 0 : index
    %c0_11 = arith.constant 0 : index
    %28 = vector.load %arg3[%c0_9, %c0_10, %c0_11] : memref<1x9x128xbf16, #tpu.memory_space<vmem>>, vector<1x9x128xbf16>
    tpu.vector_store %arg3[%c0_9, %c0_10, %c0_11], %27 {strides = array<i32>} : memref<1x9x128xbf16, #tpu.memory_space<vmem>>, vector<1x9x128xbf16>,
    return
  }
  func.func @transform_0(%arg0: i32, %arg1: i32) -> (i32, i32, i32) {
    %c0_i32 = arith.constant 0 : i32
    %c0_i32_0 = arith.constant 0 : i32
    return %arg0, %c0_i32, %arg1 : i32, i32, i32
  }
  func.func @transform_1(%arg0: i32, %arg1: i32) -> (i32, i32, i32) {
    %c0_i32 = arith.constant 0 : i32
    %c0_i32_0 = arith.constant 0 : i32
    return %arg0, %c0_i32, %arg1 : i32, i32, i32
  }
}

module attributes {stable_mosaic.version = 11 : i64} {
  func.func @_matmul_bias_act_kernel(%arg0: i32, %arg1: i32, %arg2: i32, %arg3: memref<8x512xbf16, #tpu.memory_space<vmem>>, %arg4: memref<512x128xbf16, #tpu.memory_space<vmem>>, %arg5: memref<1x128xf32, #tpu.memory_space<vmem>>, %arg6: memref<8x128xf32, #tpu.memory_space<vmem>>, %arg7: memref<8x128xf32, #tpu.memory_space<vmem>>) attributes {dimension_semantics = [#tpu.dimension_semantics<parallel>, #tpu.dimension_semantics<parallel>, #tpu.dimension_semantics<arbitrary>], iteration_bounds = array<i64: 1, 1, 16>, scalar_prefetch = 0 : i64, scratch_operands = 1 : i64, tpu.core_type = #tpu.core_type<tc>, window_params = [{transform_indices = @transform_0, window_bounds = array<i64: 8, 512>}, {transform_indices = @transform_1, window_bounds = array<i64: 512, 128>}, {transform_indices = @transform_2, window_bounds = array<i64: 1, 128>}, {transform_indices = @transform_3, window_bounds = array<i64: 8, 128>}]} {
    %c0_i32 = arith.constant 0 : i32
    %0 = arith.cmpi eq, %arg2, %c0_i32 : i32
    %1 = arith.extui %0 : i1 to i32
    %c0_i32_0 = arith.constant 0 : i32
    %2 = arith.cmpi ne, %1, %c0_i32_0 : i32
    scf.if %2 {
      %cst_9 = arith.constant 0.000000e+00 : f32
      %12 = vector.broadcast %cst_9 : f32 to vector<8x128xf32>
      %c0_10 = arith.constant 0 : index
      %c0_11 = arith.constant 0 : index
      %13 = vector.load %arg7[%c0_10, %c0_11] : memref<8x128xf32, #tpu.memory_space<vmem>>, vector<8x128xf32>
      tpu.vector_store %arg7[%c0_10, %c0_11], %12 {strides = array<i32>} : memref<8x128xf32, #tpu.memory_space<vmem>>, vector<8x128xf32>,
    } else {
    }
    %c0 = arith.constant 0 : index
    %c0_1 = arith.constant 0 : index
    %3 = vector.load %arg7[%c0, %c0_1] : memref<8x128xf32, #tpu.memory_space<vmem>>, vector<8x128xf32>
    %c0_2 = arith.constant 0 : index
    %c0_3 = arith.constant 0 : index
    %4 = vector.load %arg3[%c0_2, %c0_3] : memref<8x512xbf16, #tpu.memory_space<vmem>>, vector<8x512xbf16>
    %c0_4 = arith.constant 0 : index
    %c0_5 = arith.constant 0 : index
    %5 = vector.load %arg4[%c0_4, %c0_5] : memref<512x128xbf16, #tpu.memory_space<vmem>>, vector<512x128xbf16>
    %cst = arith.constant dense<0.000000e+00> : vector<8x128xf32>
    %6 = tpu.matmul %4, %5, %cst {dimension_numbers = #tpu.dot_dimension_numbers<[1], [0], [0], [1], [0, 0, 1, 1], [], []>} : vector<8x512xbf16>, vector<512x128xbf16>, vector<8x128xf32> -> vector<8x128xf32>
    %7 = arith.addf %3, %6 : vector<8x128xf32>
    %c0_6 = arith.constant 0 : index
    %c0_7 = arith.constant 0 : index
    %8 = vector.load %arg7[%c0_6, %c0_7] : memref<8x128xf32, #tpu.memory_space<vmem>>, vector<8x128xf32>
    tpu.vector_store %arg7[%c0_6, %c0_7], %7 {strides = array<i32>} : memref<8x128xf32, #tpu.memory_space<vmem>>, vector<8x128xf32>,
    %c15_i32 = arith.constant 15 : i32
    %9 = arith.cmpi eq, %arg2, %c15_i32 : i32
    %10 = arith.extui %9 : i1 to i32
    %c0_i32_8 = arith.constant 0 : i32
    %11 = arith.cmpi ne, %10, %c0_i32_8 : i32
    scf.if %11 {
      %c0_9 = arith.constant 0 : index
      %c0_10 = arith.constant 0 : index
      %12 = vector.load %arg7[%c0_9, %c0_10] : memref<8x128xf32, #tpu.memory_space<vmem>>, vector<8x128xf32>
      %c0_11 = arith.constant 0 : index
      %c0_12 = arith.constant 0 : index
      %13 = vector.load %arg5[%c0_11, %c0_12] : memref<1x128xf32, #tpu.memory_space<vmem>>, vector<1x128xf32>
      %14 = vector.broadcast %13 : vector<1x128xf32> to vector<8x128xf32>
      %15 = arith.addf %12, %14 : vector<8x128xf32>
      %16 = arith.negf %15 : vector<8x128xf32>
      %17 = math.exp %16 : vector<8x128xf32>
      %cst_13 = arith.constant 1.000000e+00 : f32
      %18 = vector.broadcast %cst_13 : f32 to vector<8x128xf32>
      %19 = arith.addf %18, %17 : vector<8x128xf32>
      %20 = arith.divf %18, %19 : vector<8x128xf32>
      %c0_14 = arith.constant 0 : index
      %c0_15 = arith.constant 0 : index
      %21 = vector.load %arg6[%c0_14, %c0_15] : memref<8x128xf32, #tpu.memory_space<vmem>>, vector<8x128xf32>
      tpu.vector_store %arg6[%c0_14, %c0_15], %20 {strides = array<i32>} : memref<8x128xf32, #tpu.memory_space<vmem>>, vector<8x128xf32>,
    } else {
    }
    return
  }
  func.func @transform_0(%arg0: i32, %arg1: i32, %arg2: i32) -> (i32, i32) {
    %c0_i32 = arith.constant 0 : i32
    return %arg0, %arg2 : i32, i32
  }
  func.func @transform_1(%arg0: i32, %arg1: i32, %arg2: i32) -> (i32, i32) {
    %c0_i32 = arith.constant 0 : i32
    return %arg2, %arg1 : i32, i32
  }
  func.func @transform_2(%arg0: i32, %arg1: i32, %arg2: i32) -> (i32, i32) {
    %c0_i32 = arith.constant 0 : i32
    %c0_i32_0 = arith.constant 0 : i32
    return %c0_i32, %arg1 : i32, i32
  }
  func.func @transform_3(%arg0: i32, %arg1: i32, %arg2: i32) -> (i32, i32) {
    %c0_i32 = arith.constant 0 : i32
    return %arg0, %arg1 : i32, i32
  }
}

</mosaic_0001>

<llo_original>
// kernel: discriminator_forward.8
$region0: #{discriminator_forward.8}
  #allocation0 [shape = 'u32[]', space=smem, size = 0x4, offset = 0x4, fixed_abs, tag = 'smem constant byte address 0x4 - core index']
  #allocation1 [shape = 'u32[72,128]{1,0:T(1,128)}', space=vmem, size = 0x9000, scoped, tag = 'internal scratch']
  #allocation2 [shape = 'f32[512,128]{1,0:T(8,128)}', space=vmem, size = 0x40000, scoped, tag = 'scratch operand']
  %s0 = inlined_call_operand.vmem [shape: bf16[512,128], index: 0, kind: input, shape index: {}]
  %s1 = inlined_call_operand.vmem [shape: bf16[128,128], index: 1, kind: input, shape index: {}]
  %s2 = inlined_call_operand.vmem [shape: f32[1,128], index: 2, kind: input, shape index: {}]
  %s3 = inlined_call_operand.vmem [shape: bf16[512,128], index: 3, kind: output, shape index: {}]
  %s4 = sld [smem:[#allocation0]]
  $region30: #{discriminator_forward.8} parent=0
    _
  %s6 = ssub.s32 1, %s4
  %s7 = scalar_select 0, %s6, %s4
  // Predicated region
  $region2: #{discriminator_forward.8} parent=0 // pred_check
    _
  $region3: #{discriminator_forward.8} parent=0 // pred_check_branch
    %9 = sbr.rel (0) target = $region5
  $region4: #{discriminator_forward.8} parent=0 // pred_region
    _
  $region5: #{discriminator_forward.8} parent=0 // pred_fallthru
    _
  // Predicated region
  $region6: #{discriminator_forward.8} parent=0 // pred_check
    _
  $region7: #{discriminator_forward.8} parent=0 // pred_check_branch
    %11 = sbr.rel (0) target = $region9
  $region8: #{discriminator_forward.8} parent=0 // pred_region
    _
  $region9: #{discriminator_forward.8} parent=0 // pred_fallthru
    _
  // Predicated region
  $region10: #{discriminator_forward.8} parent=0 // pred_check
    _
  $region11: #{discriminator_forward.8} parent=0 // pred_check_branch
    %13 = sbr.rel (0) target = $region13
  $region12: #{discriminator_forward.8} parent=0 // pred_region
    _
  $region13: #{discriminator_forward.8} parent=0 // pred_fallthru
    _
  %p14 = scmp.eq.s32.totalorder 0, 0
  // Predicated region
  $region14: #{discriminator_forward.8} parent=0 // pred_check
    %p15 = pneg %p14
  $region15: #{discriminator_forward.8} parent=0 // pred_check_branch
    %17 = sbr.rel (%p15) target = $region17
  $region16: #{discriminator_forward.8} parent=0 // pred_region
    %18 = vst [vmem:[#allocation2] sm:$0xff] 0.0
    %19 = vst [vmem:[#allocation2 + $0x8] sm:$0xff] 0.0
    %20 = vst [vmem:[#allocation2 + $0x10] sm:$0xff] 0.0
    %21 = vst [vmem:[#allocation2 + $0x18] sm:$0xff] 0.0
    %22 = vst [vmem:[#allocation2 + $0x20] sm:$0xff] 0.0
    %23 = vst [vmem:[#allocation2 + $0x28] sm:$0xff] 0.0
    %24 = vst [vmem:[#allocation2 + $0x30] sm:$0xff] 0.0
    %25 = vst [vmem:[#allocation2 + $0x38] sm:$0xff] 0.0
    %26 = vst [vmem:[#allocation2 + $0x40] sm:$0xff] 0.0
    %27 = vst [vmem:[#allocation2 + $0x48] sm:$0xff] 0.0
    %28 = vst [vmem:[#allocation2 + $0x50] sm:$0xff] 0.0
    %29 = vst [vmem:[#allocation2 + $0x58] sm:$0xff] 0.0
    %30 = vst [vmem:[#allocation2 + $0x60] sm:$0xff] 0.0
    %31 = vst [vmem:[#allocation2 + $0x68] sm:$0xff] 0.0
    %32 = vst [vmem:[#allocation2 + $0x70] sm:$0xff] 0.0
    %33 = vst [vmem:[#allocation2 + $0x78] sm:$0xff] 0.0
    %34 = vst [vmem:[#allocation2 + $0x80] sm:$0xff] 0.0
    %35 = vst [vmem:[#allocation2 + $0x88] sm:$0xff] 0.0
    %36 = vst [vmem:[#allocation2 + $0x90] sm:$0xff] 0.0
    %37 = vst [vmem:[#allocation2 + $0x98] sm:$0xff] 0.0
    %38 = vst [vmem:[#allocation2 + $0xa0] sm:$0xff] 0.0
    %39 = vst [vmem:[#allocation2 + $0xa8] sm:$0xff] 0.0
    %40 = vst [vmem:[#allocation2 + $0xb0] sm:$0xff] 0.0
    %41 = vst [vmem:[#allocation2 + $0xb8] sm:$0xff] 0.0
    %42 = vst [vmem:[#allocation2 + $0xc0] sm:$0xff] 0.0
    %43 = vst [vmem:[#allocation2 + $0xc8] sm:$0xff] 0.0
    %44 = vst [vmem:[#allocation2 + $0xd0] sm:$0xff] 0.0
    %45 = vst [vmem:[#allocation2 + $0xd8] sm:$0xff] 0.0
    %46 = vst [vmem:[#allocation2 + $0xe0] sm:$0xff] 0.0
    %47 = vst [vmem:[#allocation2 + $0xe8] sm:$0xff] 0.0
    %48 = vst [vmem:[#allocation2 + $0xf0] sm:$0xff] 0.0
    %49 = vst [vmem:[#allocation2 + $0xf8] sm:$0xff] 0.0
    %50 = vst [vmem:[#allocation2 + $0x100] sm:$0xff] 0.0
    %51 = vst [vmem:[#allocation2 + $0x108] sm:$0xff] 0.0
    %52 = vst [vmem:[#allocation2 + $0x110] sm:$0xff] 0.0
    %53 = vst [vmem:[#allocation2 + $0x118] sm:$0xff] 0.0
    %54 = vst [vmem:[#allocation2 + $0x120] sm:$0xff] 0.0
    %55 = vst [vmem:[#allocation2 + $0x128] sm:$0xff] 0.0
    %56 = vst [vmem:[#allocation2 + $0x130] sm:$0xff] 0.0
    %57 = vst [vmem:[#allocation2 + $0x138] sm:$0xff] 0.0
    %58 = vst [vmem:[#allocation2 + $0x140] sm:$0xff] 0.0
    %59 = vst [vmem:[#allocation2 + $0x148] sm:$0xff] 0.0
    %60 = vst [vmem:[#allocation2 + $0x150] sm:$0xff] 0.0
    %61 = vst [vmem:[#allocation2 + $0x158] sm:$0xff] 0.0
    %62 = vst [vmem:[#allocation2 + $0x160] sm:$0xff] 0.0
    %63 = vst [vmem:[#allocation2 + $0x168] sm:$0xff] 0.0
    %64 = vst [vmem:[#allocation2 + $0x170] sm:$0xff] 0.0
    %65 = vst [vmem:[#allocation2 + $0x178] sm:$0xff] 0.0
    %66 = vst [vmem:[#allocation2 + $0x180] sm:$0xff] 0.0
    %67 = vst [vmem:[#allocation2 + $0x188] sm:$0xff] 0.0
    %68 = vst [vmem:[#allocation2 + $0x190] sm:$0xff] 0.0
    %69 = vst [vmem:[#allocation2 + $0x198] sm:$0xff] 0.0
    %70 = vst [vmem:[#allocation2 + $0x1a0] sm:$0xff] 0.0
    %71 = vst [vmem:[#allocation2 + $0x1a8] sm:$0xff] 0.0
    %72 = vst [vmem:[#allocation2 + $0x1b0] sm:$0xff] 0.0
    %73 = vst [vmem:[#allocation2 + $0x1b8] sm:$0xff] 0.0
    %74 = vst [vmem:[#allocation2 + $0x1c0] sm:$0xff] 0.0
    %75 = vst [vmem:[#allocation2 + $0x1c8] sm:$0xff] 0.0
    %76 = vst [vmem:[#allocation2 + $0x1d0] sm:$0xff] 0.0
    %77 = vst [vmem:[#allocation2 + $0x1d8] sm:$0xff] 0.0
    %78 = vst [vmem:[#allocation2 + $0x1e0] sm:$0xff] 0.0
    %79 = vst [vmem:[#allocation2 + $0x1e8] sm:$0xff] 0.0
    %80 = vst [vmem:[#allocation2 + $0x1f0] sm:$0xff] 0.0
    %81 = vst [vmem:[#allocation2 + $0x1f8] sm:$0xff] 0.0
  $region17: #{discriminator_forward.8} parent=0 // pred_fallthru
    _
  %v82 = vld [vmem:[#allocation2] sm:$0xff]
  %v83 = vld [vmem:[#allocation2 + $0x8] sm:$0xff]
  %v84 = vld [vmem:[#allocation2 + $0x10] sm:$0xff]
  %v85 = vld [vmem:[#allocation2 + $0x18] sm:$0xff]
  %v86 = vld [vmem:[#allocation2 + $0x20] sm:$0xff]
  %v87 = vld [vmem:[#allocation2 + $0x28] sm:$0xff]
  %v88 = vld [vmem:[#allocation2 + $0x30] sm:$0xff]
  %v89 = vld [vmem:[#allocation2 + $0x38] sm:$0xff]
  %v90 = vld [vmem:[#allocation2 + $0x40] sm:$0xff]
  %v91 = vld [vmem:[#allocation2 + $0x48] sm:$0xff]
  %v92 = vld [vmem:[#allocation2 + $0x50] sm:$0xff]
  %v93 = vld [vmem:[#allocation2 + $0x58] sm:$0xff]
  %v94 = vld [vmem:[#allocation2 + $0x60] sm:$0xff]
  %v95 = vld [vmem:[#allocation2 + $0x68] sm:$0xff]
  %v96 = vld [vmem:[#allocation2 + $0x70] sm:$0xff]
  %v97 = vld [vmem:[#allocation2 + $0x78] sm:$0xff]
  %v98 = vld [vmem:[#allocation2 + $0x80] sm:$0xff]
  %v99 = vld [vmem:[#allocation2 + $0x88] sm:$0xff]
  %v100 = vld [vmem:[#allocation2 + $0x90] sm:$0xff]
  %v101 = vld [vmem:[#allocation2 + $0x98] sm:$0xff]
  %v102 = vld [vmem:[#allocation2 + $0xa0] sm:$0xff]
  %v103 = vld [vmem:[#allocation2 + $0xa8] sm:$0xff]
  %v104 = vld [vmem:[#allocation2 + $0xb0] sm:$0xff]
  %v105 = vld [vmem:[#allocation2 + $0xb8] sm:$0xff]
  %v106 = vld [vmem:[#allocation2 + $0xc0] sm:$0xff]
  %v107 = vld [vmem:[#allocation2 + $0xc8] sm:$0xff]
  %v108 = vld [vmem:[#allocation2 + $0xd0] sm:$0xff]
  %v109 = vld [vmem:[#allocation2 + $0xd8] sm:$0xff]
  %v110 = vld [vmem:[#allocation2 + $0xe0] sm:$0xff]
  %v111 = vld [vmem:[#allocation2 + $0xe8] sm:$0xff]
  %v112 = vld [vmem:[#allocation2 + $0xf0] sm:$0xff]
  %v113 = vld [vmem:[#allocation2 + $0xf8] sm:$0xff]
  %v114 = vld [vmem:[#allocation2 + $0x100] sm:$0xff]
  %v115 = vld [vmem:[#allocation2 + $0x108] sm:$0xff]
  %v116 = vld [vmem:[#allocation2 + $0x110] sm:$0xff]
  %v117 = vld [vmem:[#allocation2 + $0x118] sm:$0xff]
  %v118 = vld [vmem:[#allocation2 + $0x120] sm:$0xff]
  %v119 = vld [vmem:[#allocation2 + $0x128] sm:$0xff]
  %v120 = vld [vmem:[#allocation2 + $0x130] sm:$0xff]
  %v121 = vld [vmem:[#allocation2 + $0x138] sm:$0xff]
  %v122 = vld [vmem:[#allocation2 + $0x140] sm:$0xff]
  %v123 = vld [vmem:[#allocation2 + $0x148] sm:$0xff]
  %v124 = vld [vmem:[#allocation2 + $0x150] sm:$0xff]
  %v125 = vld [vmem:[#allocation2 + $0x158] sm:$0xff]
  %v126 = vld [vmem:[#allocation2 + $0x160] sm:$0xff]
  %v127 = vld [vmem:[#allocation2 + $0x168] sm:$0xff]
  %v128 = vld [vmem:[#allocation2 + $0x170] sm:$0xff]
  %v129 = vld [vmem:[#allocation2 + $0x178] sm:$0xff]
  %v130 = vld [vmem:[#allocation2 + $0x180] sm:$0xff]
  %v131 = vld [vmem:[#allocation2 + $0x188] sm:$0xff]
  %v132 = vld [vmem:[#allocation2 + $0x190] sm:$0xff]
  %v133 = vld [vmem:[#allocation2 + $0x198] sm:$0xff]
  %v134 = vld [vmem:[#allocation2 + $0x1a0] sm:$0xff]
  %v135 = vld [vmem:[#allocation2 + $0x1a8] sm:$0xff]
  %v136 = vld [vmem:[#allocation2 + $0x1b0] sm:$0xff]
  %v137 = vld [vmem:[#allocation2 + $0x1b8] sm:$0xff]
  %v138 = vld [vmem:[#allocation2 + $0x1c0] sm:$0xff]
  %v139 = vld [vmem:[#allocation2 + $0x1c8] sm:$0xff]
  %v140 = vld [vmem:[#allocation2 + $0x1d0] sm:$0xff]
  %v141 = vld [vmem:[#allocation2 + $0x1d8] sm:$0xff]
  %v142 = vld [vmem:[#allocation2 + $0x1e0] sm:$0xff]
  %v143 = vld [vmem:[#allocation2 + $0x1e8] sm:$0xff]
  %v144 = vld [vmem:[#allocation2 + $0x1f0] sm:$0xff]
  %v145 = vld [vmem:[#allocation2 + $0x1f8] sm:$0xff]
  %v146 = vld [vmem:[%s0] sm:$0xf]
  %v147 = vld [vmem:[%s0 + $0x4] sm:$0xf]
  %v148 = vld [vmem:[%s0 + $0x8] sm:$0xf]
  %v149 = vld [vmem:[%s0 + $0xc] sm:$0xf]
  %v150 = vld [vmem:[%s0 + $0x10] sm:$0xf]
  %v151 = vld [vmem:[%s0 + $0x14] sm:$0xf]
  %v152 = vld [vmem:[%s0 + $0x18] sm:$0xf]
  %v153 = vld [vmem:[%s0 + $0x1c] sm:$0xf]
  %v154 = vld [vmem:[%s0 + $0x20] sm:$0xf]
  %v155 = vld [vmem:[%s0 + $0x24] sm:$0xf]
  %v156 = vld [vmem:[%s0 + $0x28] sm:$0xf]
  %v157 = vld [vmem:[%s0 + $0x2c] sm:$0xf]
  %v158 = vld [vmem:[%s0 + $0x30] sm:$0xf]
  %v159 = vld [vmem:[%s0 + $0x34] sm:$0xf]
  %v160 = vld [vmem:[%s0 + $0x38] sm:$0xf]
  %v161 = vld [vmem:[%s0 + $0x3c] sm:$0xf]
  %v162 = vld [vmem:[%s0 + $0x40] sm:$0xf]
  %v163 = vld [vmem:[%s0 + $0x44] sm:$0xf]
  %v164 = vld [vmem:[%s0 + $0x48] sm:$0xf]
  %v165 = vld [vmem:[%s0 + $0x4c] sm:$0xf]
  %v166 = vld [vmem:[%s0 + $0x50] sm:$0xf]
  %v167 = vld [vmem:[%s0 + $0x54] sm:$0xf]
  %v168 = vld [vmem:[%s0 + $0x58] sm:$0xf]
  %v169 = vld [vmem:[%s0 + $0x5c] sm:$0xf]
  %v170 = vld [vmem:[%s0 + $0x60] sm:$0xf]
  %v171 = vld [vmem:[%s0 + $0x64] sm:$0xf]
  %v172 = vld [vmem:[%s0 + $0x68] sm:$0xf]
  %v173 = vld [vmem:[%s0 + $0x6c] sm:$0xf]
  %v174 = vld [vmem:[%s0 + $0x70] sm:$0xf]
  %v175 = vld [vmem:[%s0 + $0x74] sm:$0xf]
  %v176 = vld [vmem:[%s0 + $0x78] sm:$0xf]
  %v177 = vld [vmem:[%s0 + $0x7c] sm:$0xf]
  %v178 = vld [vmem:[%s0 + $0x80] sm:$0xf]
  %v179 = vld [vmem:[%s0 + $0x84] sm:$0xf]
  %v180 = vld [vmem:[%s0 + $0x88] sm:$0xf]
  %v181 = vld [vmem:[%s0 + $0x8c] sm:$0xf]
  %v182 = vld [vmem:[%s0 + $0x90] sm:$0xf]
  %v183 = vld [vmem:[%s0 + $0x94] sm:$0xf]
  %v184 = vld [vmem:[%s0 + $0x98] sm:$0xf]
  %v185 = vld [vmem:[%s0 + $0x9c] sm:$0xf]
  %v186 = vld [vmem:[%s0 + $0xa0] sm:$0xf]
  %v187 = vld [vmem:[%s0 + $0xa4] sm:$0xf]
  %v188 = vld [vmem:[%s0 + $0xa8] sm:$0xf]
  %v189 = vld [vmem:[%s0 + $0xac] sm:$0xf]
  %v190 = vld [vmem:[%s0 + $0xb0] sm:$0xf]
  %v191 = vld [vmem:[%s0 + $0xb4] sm:$0xf]
  %v192 = vld [vmem:[%s0 + $0xb8] sm:$0xf]
  %v193 = vld [vmem:[%s0 + $0xbc] sm:$0xf]
  %v194 = vld [vmem:[%s0 + $0xc0] sm:$0xf]
  %v195 = vld [vmem:[%s0 + $0xc4] sm:$0xf]
  %v196 = vld [vmem:[%s0 + $0xc8] sm:$0xf]
  %v197 = vld [vmem:[%s0 + $0xcc] sm:$0xf]
  %v198 = vld [vmem:[%s0 + $0xd0] sm:$0xf]
  %v199 = vld [vmem:[%s0 + $0xd4] sm:$0xf]
  %v200 = vld [vmem:[%s0 + $0xd8] sm:$0xf]
  %v201 = vld [vmem:[%s0 + $0xdc] sm:$0xf]
  %v202 = vld [vmem:[%s0 + $0xe0] sm:$0xf]
  %v203 = vld [vmem:[%s0 + $0xe4] sm:$0xf]
  %v204 = vld [vmem:[%s0 + $0xe8] sm:$0xf]
  %v205 = vld [vmem:[%s0 + $0xec] sm:$0xf]
  %v206 = vld [vmem:[%s0 + $0xf0] sm:$0xf]
  %v207 = vld [vmem:[%s0 + $0xf4] sm:$0xf]
  %v208 = vld [vmem:[%s0 + $0xf8] sm:$0xf]
  %v209 = vld [vmem:[%s0 + $0xfc] sm:$0xf]
  %v210 = vld [vmem:[%s1] sm:$0xf]
  %v211 = vld [vmem:[%s1 + $0x4] sm:$0xf]
  %v212 = vld [vmem:[%s1 + $0x8] sm:$0xf]
  %v213 = vld [vmem:[%s1 + $0xc] sm:$0xf]
  %v214 = vld [vmem:[%s1 + $0x10] sm:$0xf]
  %v215 = vld [vmem:[%s1 + $0x14] sm:$0xf]
  %v216 = vld [vmem:[%s1 + $0x18] sm:$0xf]
  %v217 = vld [vmem:[%s1 + $0x1c] sm:$0xf]
  %v218 = vld [vmem:[%s1 + $0x20] sm:$0xf]
  %v219 = vld [vmem:[%s1 + $0x24] sm:$0xf]
  %v220 = vld [vmem:[%s1 + $0x28] sm:$0xf]
  %v221 = vld [vmem:[%s1 + $0x2c] sm:$0xf]
  %v222 = vld [vmem:[%s1 + $0x30] sm:$0xf]
  %v223 = vld [vmem:[%s1 + $0x34] sm:$0xf]
  %v224 = vld [vmem:[%s1 + $0x38] sm:$0xf]
  %v225 = vld [vmem:[%s1 + $0x3c] sm:$0xf]
  %v290 = vunpack.c.l.b16 %v146
  %v291 = vunpack.c.l.b16 %v147
  %v292 = vunpack.c.l.b16 %v148
  %v293 = vunpack.c.l.b16 %v149
  %v294 = vunpack.c.l.b16 %v150
  %v295 = vunpack.c.l.b16 %v151
  %v296 = vunpack.c.l.b16 %v152
  %v297 = vunpack.c.l.b16 %v153
  %v298 = vunpack.c.l.b16 %v154
  %v299 = vunpack.c.l.b16 %v155
  %v300 = vunpack.c.l.b16 %v156
  %v301 = vunpack.c.l.b16 %v157
  %v302 = vunpack.c.l.b16 %v158
  %v303 = vunpack.c.l.b16 %v159
  %v304 = vunpack.c.l.b16 %v160
  %v305 = vunpack.c.l.b16 %v161
  %v306 = vunpack.c.l.b16 %v162
  %v307 = vunpack.c.l.b16 %v163
  %v308 = vunpack.c.l.b16 %v164
  %v309 = vunpack.c.l.b16 %v165
  %v310 = vunpack.c.l.b16 %v166
  %v311 = vunpack.c.l.b16 %v167
  %v312 = vunpack.c.l.b16 %v168
  %v313 = vunpack.c.l.b16 %v169
  %v314 = vunpack.c.l.b16 %v170
  %v315 = vunpack.c.l.b16 %v171
  %v316 = vunpack.c.l.b16 %v172
  %v317 = vunpack.c.l.b16 %v173
  %v318 = vunpack.c.l.b16 %v174
  %v319 = vunpack.c.l.b16 %v175
  %v320 = vunpack.c.l.b16 %v176
  %v321 = vunpack.c.l.b16 %v177
  %v322 = vunpack.c.l.b16 %v178
  %v323 = vunpack.c.l.b16 %v179
  %v324 = vunpack.c.l.b16 %v180
  %v325 = vunpack.c.l.b16 %v181
  %v326 = vunpack.c.l.b16 %v182
  %v327 = vunpack.c.l.b16 %v183
  %v328 = vunpack.c.l.b16 %v184
  %v329 = vunpack.c.l.b16 %v185
  %v330 = vunpack.c.l.b16 %v186
  %v331 = vunpack.c.l.b16 %v187
  %v332 = vunpack.c.l.b16 %v188
  %v333 = vunpack.c.l.b16 %v189
  %v334 = vunpack.c.l.b16 %v190
  %v335 = vunpack.c.l.b16 %v191
  %v336 = vunpack.c.l.b16 %v192
  %v337 = vunpack.c.l.b16 %v193
  %v338 = vunpack.c.l.b16 %v194
  %v339 = vunpack.c.l.b16 %v195
  %v340 = vunpack.c.l.b16 %v196
  %v341 = vunpack.c.l.b16 %v197
  %v342 = vunpack.c.l.b16 %v198
  %v343 = vunpack.c.l.b16 %v199
  %v344 = vunpack.c.l.b16 %v200
  %v345 = vunpack.c.l.b16 %v201
  %v346 = vunpack.c.l.b16 %v202
  %v347 = vunpack.c.l.b16 %v203
  %v348 = vunpack.c.l.b16 %v204
  %v349 = vunpack.c.l.b16 %v205
  %v350 = vunpack.c.l.b16 %v206
  %v351 = vunpack.c.l.b16 %v207
  %v352 = vunpack.c.l.b16 %v208
  %v353 = vunpack.c.l.b16 %v209
  %v354 = vpack.c.b16 %v291, %v290
  %v355 = vpack.c.b16 %v293, %v292
  %v356 = vpack.c.b16 %v295, %v294
  %v357 = vpack.c.b16 %v297, %v296
  %v358 = vpack.c.b16 %v299, %v298
  %v359 = vpack.c.b16 %v301, %v300
  %v360 = vpack.c.b16 %v303, %v302
  %v361 = vpack.c.b16 %v305, %v304
  %v362 = vpack.c.b16 %v307, %v306
  %v363 = vpack.c.b16 %v309, %v308
  %v364 = vpack.c.b16 %v311, %v310
  %v365 = vpack.c.b16 %v313, %v312
  %v366 = vpack.c.b16 %v315, %v314
  %v367 = vpack.c.b16 %v317, %v316
  %v368 = vpack.c.b16 %v319, %v318
  %v369 = vpack.c.b16 %v321, %v320
  %v370 = vpack.c.b16 %v323, %v322
  %v371 = vpack.c.b16 %v325, %v324
  %v372 = vpack.c.b16 %v327, %v326
  %v373 = vpack.c.b16 %v329, %v328
  %v374 = vpack.c.b16 %v331, %v330
  %v375 = vpack.c.b16 %v333, %v332
  %v376 = vpack.c.b16 %v335, %v334
  %v377 = vpack.c.b16 %v337, %v336
  %v378 = vpack.c.b16 %v339, %v338
  %v379 = vpack.c.b16 %v341, %v340
  %v380 = vpack.c.b16 %v343, %v342
  %v381 = vpack.c.b16 %v345, %v344
  %v382 = vpack.c.b16 %v347, %v346
  %v383 = vpack.c.b16 %v349, %v348
  %v384 = vpack.c.b16 %v351, %v350
  %v385 = vpack.c.b16 %v353, %v352
  %v434 = vunpack.c.l.b16 %v210
  %v435 = vunpack.c.l.b16 %v211
  %v436 = vunpack.c.l.b16 %v212
  %v437 = vunpack.c.l.b16 %v213
  %v438 = vunpack.c.l.b16 %v214
  %v439 = vunpack.c.l.b16 %v215
  %v440 = vunpack.c.l.b16 %v216
  %v441 = vunpack.c.l.b16 %v217
  %v442 = vunpack.c.l.b16 %v218
  %v443 = vunpack.c.l.b16 %v219
  %v444 = vunpack.c.l.b16 %v220
  %v445 = vunpack.c.l.b16 %v221
  %v446 = vunpack.c.l.b16 %v222
  %v447 = vunpack.c.l.b16 %v223
  %v448 = vunpack.c.l.b16 %v224
  %v449 = vunpack.c.l.b16 %v225
  %v450 = vpack.c.b16 %v435, %v434
  %v451 = vpack.c.b16 %v437, %v436
  %v452 = vpack.c.b16 %v439, %v438
  %v453 = vpack.c.b16 %v441, %v440
  %v454 = vpack.c.b16 %v443, %v442
  %v455 = vpack.c.b16 %v445, %v444
  %v456 = vpack.c.b16 %v447, %v446
  %v457 = vpack.c.b16 %v449, %v448
  %466 = vmatpush.bf16.msra.mxu0 %v457
  %467 = vmatpush.bf16.msra.mxu0 %v456
  %468 = vmatpush.bf16.msra.mxu0 %v455
  %469 = vmatpush.bf16.msra.mxu0 %v454
  %470 = vmatpush.bf16.msra.mxu0 %v453
  %471 = vmatpush.bf16.msra.mxu0 %v452
  %472 = vmatpush.bf16.msra.mxu0 %v451
  %473 = vmatpush.bf16.msra.mxu0 %v450
  %474 = vmatmul.bf16.gmra.mxu0 %v354
  %v475 = vpop.f32.mrf.mxu0
  %v476 = vadd.f32 0.0, %v475
  %v477 = vpop.f32.mrf.mxu0
  %v478 = vadd.f32 0.0, %v477
  %479 = vmatmul.bf16.gmra.mxu0 %v355
  %v480 = vpop.f32.mrf.mxu0
  %v481 = vadd.f32 0.0, %v480
  %v482 = vpop.f32.mrf.mxu0
  %v483 = vadd.f32 0.0, %v482
  %484 = vmatmul.bf16.gmra.mxu0 %v356
  %v485 = vpop.f32.mrf.mxu0
  %v486 = vadd.f32 0.0, %v485
  %v487 = vpop.f32.mrf.mxu0
  %v488 = vadd.f32 0.0, %v487
  %489 = vmatmul.bf16.gmra.mxu0 %v357
  %v490 = vpop.f32.mrf.mxu0
  %v491 = vadd.f32 0.0, %v490
  %v492 = vpop.f32.mrf.mxu0
  %v493 = vadd.f32 0.0, %v492
  %494 = vmatmul.bf16.gmra.mxu0 %v358
  %v495 = vpop.f32.mrf.mxu0
  %v496 = vadd.f32 0.0, %v495
  %v497 = vpop.f32.mrf.mxu0
  %v498 = vadd.f32 0.0, %v497
  %499 = vmatmul.bf16.gmra.mxu0 %v359
  %v500 = vpop.f32.mrf.mxu0
  %v501 = vadd.f32 0.0, %v500
  %v502 = vpop.f32.mrf.mxu0
  %v503 = vadd.f32 0.0, %v502
  %504 = vmatmul.bf16.gmra.mxu0 %v360
  %v505 = vpop.f32.mrf.mxu0
  %v506 = vadd.f32 0.0, %v505
  %v507 = vpop.f32.mrf.mxu0
  %v508 = vadd.f32 0.0, %v507
  %509 = vmatmul.bf16.gmra.mxu0 %v361
  %v510 = vpop.f32.mrf.mxu0
  %v511 = vadd.f32 0.0, %v510
  %v512 = vpop.f32.mrf.mxu0
  %v513 = vadd.f32 0.0, %v512
  %514 = vmatmul.bf16.gmra.mxu0 %v362
  %v515 = vpop.f32.mrf.mxu0
  %v516 = vadd.f32 0.0, %v515
  %v517 = vpop.f32.mrf.mxu0
  %v518 = vadd.f32 0.0, %v517
  %519 = vmatmul.bf16.gmra.mxu0 %v363
  %v520 = vpop.f32.mrf.mxu0
  %v521 = vadd.f32 0.0, %v520
  %v522 = vpop.f32.mrf.mxu0
  %v523 = vadd.f32 0.0, %v522
  %524 = vmatmul.bf16.gmra.mxu0 %v364
  %v525 = vpop.f32.mrf.mxu0
  %v526 = vadd.f32 0.0, %v525
  %v527 = vpop.f32.mrf.mxu0
  %v528 = vadd.f32 0.0, %v527
  %529 = vmatmul.bf16.gmra.mxu0 %v365
  %v530 = vpop.f32.mrf.mxu0
  %v531 = vadd.f32 0.0, %v530
  %v532 = vpop.f32.mrf.mxu0
  %v533 = vadd.f32 0.0, %v532
  %534 = vmatmul.bf16.gmra.mxu0 %v366
  %v535 = vpop.f32.mrf.mxu0
  %v536 = vadd.f32 0.0, %v535
  %v537 = vpop.f32.mrf.mxu0
  %v538 = vadd.f32 0.0, %v537
  %539 = vmatmul.bf16.gmra.mxu0 %v367
  %v540 = vpop.f32.mrf.mxu0
  %v541 = vadd.f32 0.0, %v540
  %v542 = vpop.f32.mrf.mxu0
  %v543 = vadd.f32 0.0, %v542
  %544 = vmatmul.bf16.gmra.mxu0 %v368
  %v545 = vpop.f32.mrf.mxu0
  %v546 = vadd.f32 0.0, %v545
  %v547 = vpop.f32.mrf.mxu0
  %v548 = vadd.f32 0.0, %v547
  %549 = vmatmul.bf16.gmra.mxu0 %v369
  %v550 = vpop.f32.mrf.mxu0
  %v551 = vadd.f32 0.0, %v550
  %v552 = vpop.f32.mrf.mxu0
  %v553 = vadd.f32 0.0, %v552
  %554 = vmatmul.bf16.gmra.mxu0 %v370
  %v555 = vpop.f32.mrf.mxu0
  %v556 = vadd.f32 0.0, %v555
  %v557 = vpop.f32.mrf.mxu0
  %v558 = vadd.f32 0.0, %v557
  %559 = vmatmul.bf16.gmra.mxu0 %v371
  %v560 = vpop.f32.mrf.mxu0
  %v561 = vadd.f32 0.0, %v560
  %v562 = vpop.f32.mrf.mxu0
  %v563 = vadd.f32 0.0, %v562
  %564 = vmatmul.bf16.gmra.mxu0 %v372
  %v565 = vpop.f32.mrf.mxu0
  %v566 = vadd.f32 0.0, %v565
  %v567 = vpop.f32.mrf.mxu0
  %v568 = vadd.f32 0.0, %v567
  %569 = vmatmul.bf16.gmra.mxu0 %v373
  %v570 = vpop.f32.mrf.mxu0
  %v571 = vadd.f32 0.0, %v570
  %v572 = vpop.f32.mrf.mxu0
  %v573 = vadd.f32 0.0, %v572
  %574 = vmatmul.bf16.gmra.mxu0 %v374
  %v575 = vpop.f32.mrf.mxu0
  %v576 = vadd.f32 0.0, %v575
  %v577 = vpop.f32.mrf.mxu0
  %v578 = vadd.f32 0.0, %v577
  %579 = vmatmul.bf16.gmra.mxu0 %v375
  %v580 = vpop.f32.mrf.mxu0
  %v581 = vadd.f32 0.0, %v580
  %v582 = vpop.f32.mrf.mxu0
  %v583 = vadd.f32 0.0, %v582
  %584 = vmatmul.bf16.gmra.mxu0 %v376
  %v585 = vpop.f32.mrf.mxu0
  %v586 = vadd.f32 0.0, %v585
  %v587 = vpop.f32.mrf.mxu0
  %v588 = vadd.f32 0.0, %v587
  %589 = vmatmul.bf16.gmra.mxu0 %v377
  %v590 = vpop.f32.mrf.mxu0
  %v591 = vadd.f32 0.0, %v590
  %v592 = vpop.f32.mrf.mxu0
  %v593 = vadd.f32 0.0, %v592
  %594 = vmatmul.bf16.gmra.mxu0 %v378
  %v595 = vpop.f32.mrf.mxu0
  %v596 = vadd.f32 0.0, %v595
  %v597 = vpop.f32.mrf.mxu0
  %v598 = vadd.f32 0.0, %v597
  %599 = vmatmul.bf16.gmra.mxu0 %v379
  %v600 = vpop.f32.mrf.mxu0
  %v601 = vadd.f32 0.0, %v600
  %v602 = vpop.f32.mrf.mxu0
  %v603 = vadd.f32 0.0, %v602
  %604 = vmatmul.bf16.gmra.mxu0 %v380
  %v605 = vpop.f32.mrf.mxu0
  %v606 = vadd.f32 0.0, %v605
  %v607 = vpop.f32.mrf.mxu0
  %v608 = vadd.f32 0.0, %v607
  %609 = vmatmul.bf16.gmra.mxu0 %v381
  %v610 = vpop.f32.mrf.mxu0
  %v611 = vadd.f32 0.0, %v610
  %v612 = vpop.f32.mrf.mxu0
  %v613 = vadd.f32 0.0, %v612
  %614 = vmatmul.bf16.gmra.mxu0 %v382
  %v615 = vpop.f32.mrf.mxu0
  %v616 = vadd.f32 0.0, %v615
  %v617 = vpop.f32.mrf.mxu0
  %v618 = vadd.f32 0.0, %v617
  %619 = vmatmul.bf16.gmra.mxu0 %v383
  %v620 = vpop.f32.mrf.mxu0
  %v621 = vadd.f32 0.0, %v620
  %v622 = vpop.f32.mrf.mxu0
  %v623 = vadd.f32 0.0, %v622
  %624 = vmatmul.bf16.gmra.mxu0 %v384
  %v625 = vpop.f32.mrf.mxu0
  %v626 = vadd.f32 0.0, %v625
  %v627 = vpop.f32.mrf.mxu0
  %v628 = vadd.f32 0.0, %v627
  %629 = vmatmul.bf16.gmra.mxu0 %v385
  %v630 = vpop.f32.mrf.mxu0
  %v631 = vadd.f32 0.0, %v630
  %v632 = vpop.f32.mrf.mxu0
  %v633 = vadd.f32 0.0, %v632
  %634 = vdwg.mxu0
  %v635 = vadd.f32 %v82, %v476
  %v636 = vadd.f32 %v83, %v478
  %v637 = vadd.f32 %v84, %v481
  %v638 = vadd.f32 %v85, %v483
  %v639 = vadd.f32 %v86, %v486
  %v640 = vadd.f32 %v87, %v488
  %v641 = vadd.f32 %v88, %v491
  %v642 = vadd.f32 %v89, %v493
  %v643 = vadd.f32 %v90, %v496
  %v644 = vadd.f32 %v91, %v498
  %v645 = vadd.f32 %v92, %v501
  %v646 = vadd.f32 %v93, %v503
  %v647 = vadd.f32 %v94, %v506
  %v648 = vadd.f32 %v95, %v508
  %v649 = vadd.f32 %v96, %v511
  %v650 = vadd.f32 %v97, %v513
  %v651 = vadd.f32 %v98, %v516
  %v652 = vadd.f32 %v99, %v518
  %v653 = vadd.f32 %v100, %v521
  %v654 = vadd.f32 %v101, %v523
  %v655 = vadd.f32 %v102, %v526
  %v656 = vadd.f32 %v103, %v528
  %v657 = vadd.f32 %v104, %v531
  %v658 = vadd.f32 %v105, %v533
  %v659 = vadd.f32 %v106, %v536
  %v660 = vadd.f32 %v107, %v538
  %v661 = vadd.f32 %v108, %v541
  %v662 = vadd.f32 %v109, %v543
  %v663 = vadd.f32 %v110, %v546
  %v664 = vadd.f32 %v111, %v548
  %v665 = vadd.f32 %v112, %v551
  %v666 = vadd.f32 %v113, %v553
  %v667 = vadd.f32 %v114, %v556
  %v668 = vadd.f32 %v115, %v558
  %v669 = vadd.f32 %v116, %v561
  %v670 = vadd.f32 %v117, %v563
  %v671 = vadd.f32 %v118, %v566
  %v672 = vadd.f32 %v119, %v568
  %v673 = vadd.f32 %v120, %v571
  %v674 = vadd.f32 %v121, %v573
  %v675 = vadd.f32 %v122, %v576
  %v676 = vadd.f32 %v123, %v578
  %v677 = vadd.f32 %v124, %v581
  %v678 = vadd.f32 %v125, %v583
  %v679 = vadd.f32 %v126, %v586
  %v680 = vadd.f32 %v127, %v588
  %v681 = vadd.f32 %v128, %v591
  %v682 = vadd.f32 %v129, %v593
  %v683 = vadd.f32 %v130, %v596
  %v684 = vadd.f32 %v131, %v598
  %v685 = vadd.f32 %v132, %v601
  %v686 = vadd.f32 %v133, %v603
  %v687 = vadd.f32 %v134, %v606
  %v688 = vadd.f32 %v135, %v608
  %v689 = vadd.f32 %v136, %v611
  %v690 = vadd.f32 %v137, %v613
  %v691 = vadd.f32 %v138, %v616
  %v692 = vadd.f32 %v139, %v618
  %v693 = vadd.f32 %v140, %v621
  %v694 = vadd.f32 %v141, %v623
  %v695 = vadd.f32 %v142, %v626
  %v696 = vadd.f32 %v143, %v628
  %v697 = vadd.f32 %v144, %v631
  %v698 = vadd.f32 %v145, %v633
  %699 = vst [vmem:[#allocation2] sm:$0xff] %v635
  %700 = vst [vmem:[#allocation2 + $0x8] sm:$0xff] %v636
  %701 = vst [vmem:[#allocation2 + $0x10] sm:$0xff] %v637
  %702 = vst [vmem:[#allocation2 + $0x18] sm:$0xff] %v638
  %703 = vst [vmem:[#allocation2 + $0x20] sm:$0xff] %v639
  %704 = vst [vmem:[#allocation2 + $0x28] sm:$0xff] %v640
  %705 = vst [vmem:[#allocation2 + $0x30] sm:$0xff] %v641
  %706 = vst [vmem:[#allocation2 + $0x38] sm:$0xff] %v642
  %707 = vst [vmem:[#allocation2 + $0x40] sm:$0xff] %v643
  %708 = vst [vmem:[#allocation2 + $0x48] sm:$0xff] %v644
  %709 = vst [vmem:[#allocation2 + $0x50] sm:$0xff] %v645
  %710 = vst [vmem:[#allocation2 + $0x58] sm:$0xff] %v646
  %711 = vst [vmem:[#allocation2 + $0x60] sm:$0xff] %v647
  %712 = vst [vmem:[#allocation2 + $0x68] sm:$0xff] %v648
  %713 = vst [vmem:[#allocation2 + $0x70] sm:$0xff] %v649
  %714 = vst [vmem:[#allocation2 + $0x78] sm:$0xff] %v650
  %715 = vst [vmem:[#allocation2 + $0x80] sm:$0xff] %v651
  %716 = vst [vmem:[#allocation2 + $0x88] sm:$0xff] %v652
  %717 = vst [vmem:[#allocation2 + $0x90] sm:$0xff] %v653
  %718 = vst [vmem:[#allocation2 + $0x98] sm:$0xff] %v654
  %719 = vst [vmem:[#allocation2 + $0xa0] sm:$0xff] %v655
  %720 = vst [vmem:[#allocation2 + $0xa8] sm:$0xff] %v656
  %721 = vst [vmem:[#allocation2 + $0xb0] sm:$0xff] %v657
  %722 = vst [vmem:[#allocation2 + $0xb8] sm:$0xff] %v658
  %723 = vst [vmem:[#allocation2 + $0xc0] sm:$0xff] %v659
  %724 = vst [vmem:[#allocation2 + $0xc8] sm:$0xff] %v660
  %725 = vst [vmem:[#allocation2 + $0xd0] sm:$0xff] %v661
  %726 = vst [vmem:[#allocation2 + $0xd8] sm:$0xff] %v662
  %727 = vst [vmem:[#allocation2 + $0xe0] sm:$0xff] %v663
  %728 = vst [vmem:[#allocation2 + $0xe8] sm:$0xff] %v664
  %729 = vst [vmem:[#allocation2 + $0xf0] sm:$0xff] %v665
  %730 = vst [vmem:[#allocation2 + $0xf8] sm:$0xff] %v666
  %731 = vst [vmem:[#allocation2 + $0x100] sm:$0xff] %v667
  %732 = vst [vmem:[#allocation2 + $0x108] sm:$0xff] %v668
  %733 = vst [vmem:[#allocation2 + $0x110] sm:$0xff] %v669
  %734 = vst [vmem:[#allocation2 + $0x118] sm:$0xff] %v670
  %735 = vst [vmem:[#allocation2 + $0x120] sm:$0xff] %v671
  %736 = vst [vmem:[#allocation2 + $0x128] sm:$0xff] %v672
  %737 = vst [vmem:[#allocation2 + $0x130] sm:$0xff] %v673
  %738 = vst [vmem:[#allocation2 + $0x138] sm:$0xff] %v674
  %739 = vst [vmem:[#allocation2 + $0x140] sm:$0xff] %v675
  %740 = vst [vmem:[#allocation2 + $0x148] sm:$0xff] %v676
  %741 = vst [vmem:[#allocation2 + $0x150] sm:$0xff] %v677
  %742 = vst [vmem:[#allocation2 + $0x158] sm:$0xff] %v678
  %743 = vst [vmem:[#allocation2 + $0x160] sm:$0xff] %v679
  %744 = vst [vmem:[#allocation2 + $0x168] sm:$0xff] %v680
  %745 = vst [vmem:[#allocation2 + $0x170] sm:$0xff] %v681
  %746 = vst [vmem:[#allocation2 + $0x178] sm:$0xff] %v682
  %747 = vst [vmem:[#allocation2 + $0x180] sm:$0xff] %v683
  %748 = vst [vmem:[#allocation2 + $0x188] sm:$0xff] %v684
  %749 = vst [vmem:[#allocation2 + $0x190] sm:$0xff] %v685
  %750 = vst [vmem:[#allocation2 + $0x198] sm:$0xff] %v686
  %751 = vst [vmem:[#allocation2 + $0x1a0] sm:$0xff] %v687
  %752 = vst [vmem:[#allocation2 + $0x1a8] sm:$0xff] %v688
  %753 = vst [vmem:[#allocation2 + $0x1b0] sm:$0xff] %v689
  %754 = vst [vmem:[#allocation2 + $0x1b8] sm:$0xff] %v690
  %755 = vst [vmem:[#allocation2 + $0x1c0] sm:$0xff] %v691
  %756 = vst [vmem:[#allocation2 + $0x1c8] sm:$0xff] %v692
  %757 = vst [vmem:[#allocation2 + $0x1d0] sm:$0xff] %v693
  %758 = vst [vmem:[#allocation2 + $0x1d8] sm:$0xff] %v694
  %759 = vst [vmem:[#allocation2 + $0x1e0] sm:$0xff] %v695
  %760 = vst [vmem:[#allocation2 + $0x1e8] sm:$0xff] %v696
  %761 = vst [vmem:[#allocation2 + $0x1f0] sm:$0xff] %v697
  %762 = vst [vmem:[#allocation2 + $0x1f8] sm:$0xff] %v698
  // Predicated region
  $region18: #{discriminator_forward.8} parent=0 // pred_check
    %p763 = pneg %p14
  $region19: #{discriminator_forward.8} parent=0 // pred_check_branch
    %765 = sbr.rel (%p763) target = $region21
  $region20: #{discriminator_forward.8} parent=0 // pred_region
    %v766 = vld [vmem:[#allocation2] sm:$0xff]
    %v767 = vld [vmem:[#allocation2 + $0x8] sm:$0xff]
    %v768 = vld [vmem:[#allocation2 + $0x10] sm:$0xff]
    %v769 = vld [vmem:[#allocation2 + $0x18] sm:$0xff]
    %v770 = vld [vmem:[#allocation2 + $0x20] sm:$0xff]
    %v771 = vld [vmem:[#allocation2 + $0x28] sm:$0xff]
    %v772 = vld [vmem:[#allocation2 + $0x30] sm:$0xff]
    %v773 = vld [vmem:[#allocation2 + $0x38] sm:$0xff]
    %v774 = vld [vmem:[#allocation2 + $0x40] sm:$0xff]
    %v775 = vld [vmem:[#allocation2 + $0x48] sm:$0xff]
    %v776 = vld [vmem:[#allocation2 + $0x50] sm:$0xff]
    %v777 = vld [vmem:[#allocation2 + $0x58] sm:$0xff]
    %v778 = vld [vmem:[#allocation2 + $0x60] sm:$0xff]
    %v779 = vld [vmem:[#allocation2 + $0x68] sm:$0xff]
    %v780 = vld [vmem:[#allocation2 + $0x70] sm:$0xff]
    %v781 = vld [vmem:[#allocation2 + $0x78] sm:$0xff]
    %v782 = vld [vmem:[#allocation2 + $0x80] sm:$0xff]
    %v783 = vld [vmem:[#allocation2 + $0x88] sm:$0xff]
    %v784 = vld [vmem:[#allocation2 + $0x90] sm:$0xff]
    %v785 = vld [vmem:[#allocation2 + $0x98] sm:$0xff]
    %v786 = vld [vmem:[#allocation2 + $0xa0] sm:$0xff]
    %v787 = vld [vmem:[#allocation2 + $0xa8] sm:$0xff]
    %v788 = vld [vmem:[#allocation2 + $0xb0] sm:$0xff]
    %v789 = vld [vmem:[#allocation2 + $0xb8] sm:$0xff]
    %v790 = vld [vmem:[#allocation2 + $0xc0] sm:$0xff]
    %v791 = vld [vmem:[#allocation2 + $0xc8] sm:$0xff]
    %v792 = vld [vmem:[#allocation2 + $0xd0] sm:$0xff]
    %v793 = vld [vmem:[#allocation2 + $0xd8] sm:$0xff]
    %v794 = vld [vmem:[#allocation2 + $0xe0] sm:$0xff]
    %v795 = vld [vmem:[#allocation2 + $0xe8] sm:$0xff]
    %v796 = vld [vmem:[#allocation2 + $0xf0] sm:$0xff]
    %v797 = vld [vmem:[#allocation2 + $0xf8] sm:$0xff]
    %v798 = vld [vmem:[#allocation2 + $0x100] sm:$0xff]
    %v799 = vld [vmem:[#allocation2 + $0x108] sm:$0xff]
    %v800 = vld [vmem:[#allocation2 + $0x110] sm:$0xff]
    %v801 = vld [vmem:[#allocation2 + $0x118] sm:$0xff]
    %v802 = vld [vmem:[#allocation2 + $0x120] sm:$0xff]
    %v803 = vld [vmem:[#allocation2 + $0x128] sm:$0xff]
    %v804 = vld [vmem:[#allocation2 + $0x130] sm:$0xff]
    %v805 = vld [vmem:[#allocation2 + $0x138] sm:$0xff]
    %v806 = vld [vmem:[#allocation2 + $0x140] sm:$0xff]
    %v807 = vld [vmem:[#allocation2 + $0x148] sm:$0xff]
    %v808 = vld [vmem:[#allocation2 + $0x150] sm:$0xff]
    %v809 = vld [vmem:[#allocation2 + $0x158] sm:$0xff]
    %v810 = vld [vmem:[#allocation2 + $0x160] sm:$0xff]
    %v811 = vld [vmem:[#allocation2 + $0x168] sm:$0xff]
    %v812 = vld [vmem:[#allocation2 + $0x170] sm:$0xff]
    %v813 = vld [vmem:[#allocation2 + $0x178] sm:$0xff]
    %v814 = vld [vmem:[#allocation2 + $0x180] sm:$0xff]
    %v815 = vld [vmem:[#allocation2 + $0x188] sm:$0xff]
    %v816 = vld [vmem:[#allocation2 + $0x190] sm:$0xff]
    %v817 = vld [vmem:[#allocation2 + $0x198] sm:$0xff]
    %v818 = vld [vmem:[#allocation2 + $0x1a0] sm:$0xff]
    %v819 = vld [vmem:[#allocation2 + $0x1a8] sm:$0xff]
    %v820 = vld [vmem:[#allocation2 + $0x1b0] sm:$0xff]
    %v821 = vld [vmem:[#allocation2 + $0x1b8] sm:$0xff]
    %v822 = vld [vmem:[#allocation2 + $0x1c0] sm:$0xff]
    %v823 = vld [vmem:[#allocation2 + $0x1c8] sm:$0xff]
    %v824 = vld [vmem:[#allocation2 + $0x1d0] sm:$0xff]
    %v825 = vld [vmem:[#allocation2 + $0x1d8] sm:$0xff]
    %v826 = vld [vmem:[#allocation2 + $0x1e0] sm:$0xff]
    %v827 = vld [vmem:[#allocation2 + $0x1e8] sm:$0xff]
    %v828 = vld [vmem:[#allocation2 + $0x1f0] sm:$0xff]
    %v829 = vld [vmem:[#allocation2 + $0x1f8] sm:$0xff]
    %v830 = vld [vmem:[%s2] sm:$0x1]
    %v832 = vperm.slane %v830, 0
    %v834 = vadd.f32 %v766, %v832
    %v835 = vadd.f32 %v767, %v832
    %v836 = vadd.f32 %v768, %v832
    %v837 = vadd.f32 %v769, %v832
    %v838 = vadd.f32 %v770, %v832
    %v839 = vadd.f32 %v771, %v832
    %v840 = vadd.f32 %v772, %v832
    %v841 = vadd.f32 %v773, %v832
    %v842 = vadd.f32 %v774, %v832
    %v843 = vadd.f32 %v775, %v832
    %v844 = vadd.f32 %v776, %v832
    %v845 = vadd.f32 %v777, %v832
    %v846 = vadd.f32 %v778, %v832
    %v847 = vadd.f32 %v779, %v832
    %v848 = vadd.f32 %v780, %v832
    %v849 = vadd.f32 %v781, %v832
    %v850 = vadd.f32 %v782, %v832
    %v851 = vadd.f32 %v783, %v832
    %v852 = vadd.f32 %v784, %v832
    %v853 = vadd.f32 %v785, %v832
    %v854 = vadd.f32 %v786, %v832
    %v855 = vadd.f32 %v787, %v832
    %v856 = vadd.f32 %v788, %v832
    %v857 = vadd.f32 %v789, %v832
    %v858 = vadd.f32 %v790, %v832
    %v859 = vadd.f32 %v791, %v832
    %v860 = vadd.f32 %v792, %v832
    %v861 = vadd.f32 %v793, %v832
    %v862 = vadd.f32 %v794, %v832
    %v863 = vadd.f32 %v795, %v832
    %v864 = vadd.f32 %v796, %v832
    %v865 = vadd.f32 %v797, %v832
    %v866 = vadd.f32 %v798, %v832
    %v867 = vadd.f32 %v799, %v832
    %v868 = vadd.f32 %v800, %v832
    %v869 = vadd.f32 %v801, %v832
    %v870 = vadd.f32 %v802, %v832
    %v871 = vadd.f32 %v803, %v832
    %v872 = vadd.f32 %v804, %v832
    %v873 = vadd.f32 %v805, %v832
    %v874 = vadd.f32 %v806, %v832
    %v875 = vadd.f32 %v807, %v832
    %v876 = vadd.f32 %v808, %v832
    %v877 = vadd.f32 %v809, %v832
    %v878 = vadd.f32 %v810, %v832
    %v879 = vadd.f32 %v811, %v832
    %v880 = vadd.f32 %v812, %v832
    %v881 = vadd.f32 %v813, %v832
    %v882 = vadd.f32 %v814, %v832
    %v883 = vadd.f32 %v815, %v832
    %v884 = vadd.f32 %v816, %v832
    %v885 = vadd.f32 %v817, %v832
    %v886 = vadd.f32 %v818, %v832
    %v887 = vadd.f32 %v819, %v832
    %v888 = vadd.f32 %v820, %v832
    %v889 = vadd.f32 %v821, %v832
    %v890 = vadd.f32 %v822, %v832
    %v891 = vadd.f32 %v823, %v832
    %v892 = vadd.f32 %v824, %v832
    %v893 = vadd.f32 %v825, %v832
    %v894 = vadd.f32 %v826, %v832
    %v895 = vadd.f32 %v827, %v832
    %v896 = vadd.f32 %v828, %v832
    %v897 = vadd.f32 %v829, %v832
    %vm898 = vcmp.ge.f32.partialorder %v834, 0.0
    %vm899 = vcmp.ge.f32.partialorder %v835, 0.0
    %vm900 = vcmp.ge.f32.partialorder %v836, 0.0
    %vm901 = vcmp.ge.f32.partialorder %v837, 0.0
    %vm902 = vcmp.ge.f32.partialorder %v838, 0.0
    %vm903 = vcmp.ge.f32.partialorder %v839, 0.0
    %vm904 = vcmp.ge.f32.partialorder %v840, 0.0
    %vm905 = vcmp.ge.f32.partialorder %v841, 0.0
    %vm906 = vcmp.ge.f32.partialorder %v842, 0.0
    %vm907 = vcmp.ge.f32.partialorder %v843, 0.0
    %vm908 = vcmp.ge.f32.partialorder %v844, 0.0
    %vm909 = vcmp.ge.f32.partialorder %v845, 0.0
    %vm910 = vcmp.ge.f32.partialorder %v846, 0.0
    %vm911 = vcmp.ge.f32.partialorder %v847, 0.0
    %vm912 = vcmp.ge.f32.partialorder %v848, 0.0
    %vm913 = vcmp.ge.f32.partialorder %v849, 0.0
    %vm914 = vcmp.ge.f32.partialorder %v850, 0.0
    %vm915 = vcmp.ge.f32.partialorder %v851, 0.0
    %vm916 = vcmp.ge.f32.partialorder %v852, 0.0
    %vm917 = vcmp.ge.f32.partialorder %v853, 0.0
    %vm918 = vcmp.ge.f32.partialorder %v854, 0.0
    %vm919 = vcmp.ge.f32.partialorder %v855, 0.0
    %vm920 = vcmp.ge.f32.partialorder %v856, 0.0
    %vm921 = vcmp.ge.f32.partialorder %v857, 0.0
    %vm922 = vcmp.ge.f32.partialorder %v858, 0.0
    %vm923 = vcmp.ge.f32.partialorder %v859, 0.0
    %vm924 = vcmp.ge.f32.partialorder %v860, 0.0
    %vm925 = vcmp.ge.f32.partialorder %v861, 0.0
    %vm926 = vcmp.ge.f32.partialorder %v862, 0.0
    %vm927 = vcmp.ge.f32.partialorder %v863, 0.0
    %vm928 = vcmp.ge.f32.partialorder %v864, 0.0
    %vm929 = vcmp.ge.f32.partialorder %v865, 0.0
    %vm930 = vcmp.ge.f32.partialorder %v866, 0.0
    %vm931 = vcmp.ge.f32.partialorder %v867, 0.0
    %vm932 = vcmp.ge.f32.partialorder %v868, 0.0
    %vm933 = vcmp.ge.f32.partialorder %v869, 0.0
    %vm934 = vcmp.ge.f32.partialorder %v870, 0.0
    %vm935 = vcmp.ge.f32.partialorder %v871, 0.0
    %vm936 = vcmp.ge.f32.partialorder %v872, 0.0
    %vm937 = vcmp.ge.f32.partialorder %v873, 0.0
    %vm938 = vcmp.ge.f32.partialorder %v874, 0.0
    %vm939 = vcmp.ge.f32.partialorder %v875, 0.0
    %vm940 = vcmp.ge.f32.partialorder %v876, 0.0
    %vm941 = vcmp.ge.f32.partialorder %v877, 0.0
    %vm942 = vcmp.ge.f32.partialorder %v878, 0.0
    %vm943 = vcmp.ge.f32.partialorder %v879, 0.0
    %vm944 = vcmp.ge.f32.partialorder %v880, 0.0
    %vm945 = vcmp.ge.f32.partialorder %v881, 0.0
    %vm946 = vcmp.ge.f32.partialorder %v882, 0.0
    %vm947 = vcmp.ge.f32.partialorder %v883, 0.0
    %vm948 = vcmp.ge.f32.partialorder %v884, 0.0
    %vm949 = vcmp.ge.f32.partialorder %v885, 0.0
    %vm950 = vcmp.ge.f32.partialorder %v886, 0.0
    %vm951 = vcmp.ge.f32.partialorder %v887, 0.0
    %vm952 = vcmp.ge.f32.partialorder %v888, 0.0
    %vm953 = vcmp.ge.f32.partialorder %v889, 0.0
    %vm954 = vcmp.ge.f32.partialorder %v890, 0.0
    %vm955 = vcmp.ge.f32.partialorder %v891, 0.0
    %vm956 = vcmp.ge.f32.partialorder %v892, 0.0
    %vm957 = vcmp.ge.f32.partialorder %v893, 0.0
    %vm958 = vcmp.ge.f32.partialorder %v894, 0.0
    %vm959 = vcmp.ge.f32.partialorder %v895, 0.0
    %vm960 = vcmp.ge.f32.partialorder %v896, 0.0
    %vm961 = vcmp.ge.f32.partialorder %v897, 0.0
    %v962 = vmul.f32 %v834, 0.2
    %v963 = vmul.f32 %v835, 0.2
    %v964 = vmul.f32 %v836, 0.2
    %v965 = vmul.f32 %v837, 0.2
    %v966 = vmul.f32 %v838, 0.2
    %v967 = vmul.f32 %v839, 0.2
    %v968 = vmul.f32 %v840, 0.2
    %v969 = vmul.f32 %v841, 0.2
    %v970 = vmul.f32 %v842, 0.2
    %v971 = vmul.f32 %v843, 0.2
    %v972 = vmul.f32 %v844, 0.2
    %v973 = vmul.f32 %v845, 0.2
    %v974 = vmul.f32 %v846, 0.2
    %v975 = vmul.f32 %v847, 0.2
    %v976 = vmul.f32 %v848, 0.2
    %v977 = vmul.f32 %v849, 0.2
    %v978 = vmul.f32 %v850, 0.2
    %v979 = vmul.f32 %v851, 0.2
    %v980 = vmul.f32 %v852, 0.2
    %v981 = vmul.f32 %v853, 0.2
    %v982 = vmul.f32 %v854, 0.2
    %v983 = vmul.f32 %v855, 0.2
    %v984 = vmul.f32 %v856, 0.2
    %v985 = vmul.f32 %v857, 0.2
    %v986 = vmul.f32 %v858, 0.2
    %v987 = vmul.f32 %v859, 0.2
    %v988 = vmul.f32 %v860, 0.2
    %v989 = vmul.f32 %v861, 0.2
    %v990 = vmul.f32 %v862, 0.2
    %v991 = vmul.f32 %v863, 0.2
    %v992 = vmul.f32 %v864, 0.2
    %v993 = vmul.f32 %v865, 0.2
    %v994 = vmul.f32 %v866, 0.2
    %v995 = vmul.f32 %v867, 0.2
    %v996 = vmul.f32 %v868, 0.2
    %v997 = vmul.f32 %v869, 0.2
    %v998 = vmul.f32 %v870, 0.2
    %v999 = vmul.f32 %v871, 0.2
    %v1000 = vmul.f32 %v872, 0.2
    %v1001 = vmul.f32 %v873, 0.2
    %v1002 = vmul.f32 %v874, 0.2
    %v1003 = vmul.f32 %v875, 0.2
    %v1004 = vmul.f32 %v876, 0.2
    %v1005 = vmul.f32 %v877, 0.2
    %v1006 = vmul.f32 %v878, 0.2
    %v1007 = vmul.f32 %v879, 0.2
    %v1008 = vmul.f32 %v880, 0.2
    %v1009 = vmul.f32 %v881, 0.2
    %v1010 = vmul.f32 %v882, 0.2
    %v1011 = vmul.f32 %v883, 0.2
    %v1012 = vmul.f32 %v884, 0.2
    %v1013 = vmul.f32 %v885, 0.2
    %v1014 = vmul.f32 %v886, 0.2
    %v1015 = vmul.f32 %v887, 0.2
    %v1016 = vmul.f32 %v888, 0.2
    %v1017 = vmul.f32 %v889, 0.2
    %v1018 = vmul.f32 %v890, 0.2
    %v1019 = vmul.f32 %v891, 0.2
    %v1020 = vmul.f32 %v892, 0.2
    %v1021 = vmul.f32 %v893, 0.2
    %v1022 = vmul.f32 %v894, 0.2
    %v1023 = vmul.f32 %v895, 0.2
    %v1024 = vmul.f32 %v896, 0.2
    %v1025 = vmul.f32 %v897, 0.2
    %v1026 = vsel %vm898, %v834, %v962
    %v1027 = vsel %vm899, %v835, %v963
    %v1028 = vsel %vm900, %v836, %v964
    %v1029 = vsel %vm901, %v837, %v965
    %v1030 = vsel %vm902, %v838, %v966
    %v1031 = vsel %vm903, %v839, %v967
    %v1032 = vsel %vm904, %v840, %v968
    %v1033 = vsel %vm905, %v841, %v969
    %v1034 = vsel %vm906, %v842, %v970
    %v1035 = vsel %vm907, %v843, %v971
    %v1036 = vsel %vm908, %v844, %v972
    %v1037 = vsel %vm909, %v845, %v973
    %v1038 = vsel %vm910, %v846, %v974
    %v1039 = vsel %vm911, %v847, %v975
    %v1040 = vsel %vm912, %v848, %v976
    %v1041 = vsel %vm913, %v849, %v977
    %v1042 = vsel %vm914, %v850, %v978
    %v1043 = vsel %vm915, %v851, %v979
    %v1044 = vsel %vm916, %v852, %v980
    %v1045 = vsel %vm917, %v853, %v981
    %v1046 = vsel %vm918, %v854, %v982
    %v1047 = vsel %vm919, %v855, %v983
    %v1048 = vsel %vm920, %v856, %v984
    %v1049 = vsel %vm921, %v857, %v985
    %v1050 = vsel %vm922, %v858, %v986
    %v1051 = vsel %vm923, %v859, %v987
    %v1052 = vsel %vm924, %v860, %v988
    %v1053 = vsel %vm925, %v861, %v989
    %v1054 = vsel %vm926, %v862, %v990
    %v1055 = vsel %vm927, %v863, %v991
    %v1056 = vsel %vm928, %v864, %v992
    %v1057 = vsel %vm929, %v865, %v993
    %v1058 = vsel %vm930, %v866, %v994
    %v1059 = vsel %vm931, %v867, %v995
    %v1060 = vsel %vm932, %v868, %v996
    %v1061 = vsel %vm933, %v869, %v997
    %v1062 = vsel %vm934, %v870, %v998
    %v1063 = vsel %vm935, %v871, %v999
    %v1064 = vsel %vm936, %v872, %v1000
    %v1065 = vsel %vm937, %v873, %v1001
    %v1066 = vsel %vm938, %v874, %v1002
    %v1067 = vsel %vm939, %v875, %v1003
    %v1068 = vsel %vm940, %v876, %v1004
    %v1069 = vsel %vm941, %v877, %v1005
    %v1070 = vsel %vm942, %v878, %v1006
    %v1071 = vsel %vm943, %v879, %v1007
    %v1072 = vsel %vm944, %v880, %v1008
    %v1073 = vsel %vm945, %v881, %v1009
    %v1074 = vsel %vm946, %v882, %v1010
    %v1075 = vsel %vm947, %v883, %v1011
    %v1076 = vsel %vm948, %v884, %v1012
    %v1077 = vsel %vm949, %v885, %v1013
    %v1078 = vsel %vm950, %v886, %v1014
    %v1079 = vsel %vm951, %v887, %v1015
    %v1080 = vsel %vm952, %v888, %v1016
    %v1081 = vsel %vm953, %v889, %v1017
    %v1082 = vsel %vm954, %v890, %v1018
    %v1083 = vsel %vm955, %v891, %v1019
    %v1084 = vsel %vm956, %v892, %v1020
    %v1085 = vsel %vm957, %v893, %v1021
    %v1086 = vsel %vm958, %v894, %v1022
    %v1087 = vsel %vm959, %v895, %v1023
    %v1088 = vsel %vm960, %v896, %v1024
    %v1089 = vsel %vm961, %v897, %v1025
    %v1090 = vpack.c.bf16 %v1026, %v1026
    %v1091 = vpack.c.bf16 %v1027, %v1027
    %v1092 = vpack.c.bf16 %v1028, %v1028
    %v1093 = vpack.c.bf16 %v1029, %v1029
    %v1094 = vpack.c.bf16 %v1030, %v1030
    %v1095 = vpack.c.bf16 %v1031, %v1031
    %v1096 = vpack.c.bf16 %v1032, %v1032
    %v1097 = vpack.c.bf16 %v1033, %v1033
    %v1098 = vpack.c.bf16 %v1034, %v1034
    %v1099 = vpack.c.bf16 %v1035, %v1035
    %v1100 = vpack.c.bf16 %v1036, %v1036
    %v1101 = vpack.c.bf16 %v1037, %v1037
    %v1102 = vpack.c.bf16 %v1038, %v1038
    %v1103 = vpack.c.bf16 %v1039, %v1039
    %v1104 = vpack.c.bf16 %v1040, %v1040
    %v1105 = vpack.c.bf16 %v1041, %v1041
    %v1106 = vpack.c.bf16 %v1042, %v1042
    %v1107 = vpack.c.bf16 %v1043, %v1043
    %v1108 = vpack.c.bf16 %v1044, %v1044
    %v1109 = vpack.c.bf16 %v1045, %v1045
    %v1110 = vpack.c.bf16 %v1046, %v1046
    %v1111 = vpack.c.bf16 %v1047, %v1047
    %v1112 = vpack.c.bf16 %v1048, %v1048
    %v1113 = vpack.c.bf16 %v1049, %v1049
    %v1114 = vpack.c.bf16 %v1050, %v1050
    %v1115 = vpack.c.bf16 %v1051, %v1051
    %v1116 = vpack.c.bf16 %v1052, %v1052
    %v1117 = vpack.c.bf16 %v1053, %v1053
    %v1118 = vpack.c.bf16 %v1054, %v1054
    %v1119 = vpack.c.bf16 %v1055, %v1055
    %v1120 = vpack.c.bf16 %v1056, %v1056
    %v1121 = vpack.c.bf16 %v1057, %v1057
    %v1122 = vpack.c.bf16 %v1058, %v1058
    %v1123 = vpack.c.bf16 %v1059, %v1059
    %v1124 = vpack.c.bf16 %v1060, %v1060
    %v1125 = vpack.c.bf16 %v1061, %v1061
    %v1126 = vpack.c.bf16 %v1062, %v1062
    %v1127 = vpack.c.bf16 %v1063, %v1063
    %v1128 = vpack.c.bf16 %v1064, %v1064
    %v1129 = vpack.c.bf16 %v1065, %v1065
    %v1130 = vpack.c.bf16 %v1066, %v1066
    %v1131 = vpack.c.bf16 %v1067, %v1067
    %v1132 = vpack.c.bf16 %v1068, %v1068
    %v1133 = vpack.c.bf16 %v1069, %v1069
    %v1134 = vpack.c.bf16 %v1070, %v1070
    %v1135 = vpack.c.bf16 %v1071, %v1071
    %v1136 = vpack.c.bf16 %v1072, %v1072
    %v1137 = vpack.c.bf16 %v1073, %v1073
    %v1138 = vpack.c.bf16 %v1074, %v1074
    %v1139 = vpack.c.bf16 %v1075, %v1075
    %v1140 = vpack.c.bf16 %v1076, %v1076
    %v1141 = vpack.c.bf16 %v1077, %v1077
    %v1142 = vpack.c.bf16 %v1078, %v1078
    %v1143 = vpack.c.bf16 %v1079, %v1079
    %v1144 = vpack.c.bf16 %v1080, %v1080
    %v1145 = vpack.c.bf16 %v1081, %v1081
    %v1146 = vpack.c.bf16 %v1082, %v1082
    %v1147 = vpack.c.bf16 %v1083, %v1083
    %v1148 = vpack.c.bf16 %v1084, %v1084
    %v1149 = vpack.c.bf16 %v1085, %v1085
    %v1150 = vpack.c.bf16 %v1086, %v1086
    %v1151 = vpack.c.bf16 %v1087, %v1087
    %v1152 = vpack.c.bf16 %v1088, %v1088
    %v1153 = vpack.c.bf16 %v1089, %v1089
    %1154 = vst [vmem:[%s3] sm:$0xf] %v1090
    %1155 = vst [vmem:[%s3 + $0x4] sm:$0xf] %v1091
    %1156 = vst [vmem:[%s3 + $0x8] sm:$0xf] %v1092
    %1157 = vst [vmem:[%s3 + $0xc] sm:$0xf] %v1093
    %1158 = vst [vmem:[%s3 + $0x10] sm:$0xf] %v1094
    %1159 = vst [vmem:[%s3 + $0x14] sm:$0xf] %v1095
    %1160 = vst [vmem:[%s3 + $0x18] sm:$0xf] %v1096
    %1161 = vst [vmem:[%s3 + $0x1c] sm:$0xf] %v1097
    %1162 = vst [vmem:[%s3 + $0x20] sm:$0xf] %v1098
    %1163 = vst [vmem:[%s3 + $0x24] sm:$0xf] %v1099
    %1164 = vst [vmem:[%s3 + $0x28] sm:$0xf] %v1100
    %1165 = vst [vmem:[%s3 + $0x2c] sm:$0xf] %v1101
    %1166 = vst [vmem:[%s3 + $0x30] sm:$0xf] %v1102
    %1167 = vst [vmem:[%s3 + $0x34] sm:$0xf] %v1103
    %1168 = vst [vmem:[%s3 + $0x38] sm:$0xf] %v1104
    %1169 = vst [vmem:[%s3 + $0x3c] sm:$0xf] %v1105
    %1170 = vst [vmem:[%s3 + $0x40] sm:$0xf] %v1106
    %1171 = vst [vmem:[%s3 + $0x44] sm:$0xf] %v1107
    %1172 = vst [vmem:[%s3 + $0x48] sm:$0xf] %v1108
    %1173 = vst [vmem:[%s3 + $0x4c] sm:$0xf] %v1109
    %1174 = vst [vmem:[%s3 + $0x50] sm:$0xf] %v1110
    %1175 = vst [vmem:[%s3 + $0x54] sm:$0xf] %v1111
    %1176 = vst [vmem:[%s3 + $0x58] sm:$0xf] %v1112
    %1177 = vst [vmem:[%s3 + $0x5c] sm:$0xf] %v1113
    %1178 = vst [vmem:[%s3 + $0x60] sm:$0xf] %v1114
    %1179 = vst [vmem:[%s3 + $0x64] sm:$0xf] %v1115
    %1180 = vst [vmem:[%s3 + $0x68] sm:$0xf] %v1116
    %1181 = vst [vmem:[%s3 + $0x6c] sm:$0xf] %v1117
    %1182 = vst [vmem:[%s3 + $0x70] sm:$0xf] %v1118
    %1183 = vst [vmem:[%s3 + $0x74] sm:$0xf] %v1119
    %1184 = vst [vmem:[%s3 + $0x78] sm:$0xf] %v1120
    %1185 = vst [vmem:[%s3 + $0x7c] sm:$0xf] %v1121
    %1186 = vst [vmem:[%s3 + $0x80] sm:$0xf] %v1122
    %1187 = vst [vmem:[%s3 + $0x84] sm:$0xf] %v1123
    %1188 = vst [vmem:[%s3 + $0x88] sm:$0xf] %v1124
    %1189 = vst [vmem:[%s3 + $0x8c] sm:$0xf] %v1125
    %1190 = vst [vmem:[%s3 + $0x90] sm:$0xf] %v1126
    %1191 = vst [vmem:[%s3 + $0x94] sm:$0xf] %v1127
    %1192 = vst [vmem:[%s3 + $0x98] sm:$0xf] %v1128
    %1193 = vst [vmem:[%s3 + $0x9c] sm:$0xf] %v1129
    %1194 = vst [vmem:[%s3 + $0xa0] sm:$0xf] %v1130
    %1195 = vst [vmem:[%s3 + $0xa4] sm:$0xf] %v1131
    %1196 = vst [vmem:[%s3 + $0xa8] sm:$0xf] %v1132
    %1197 = vst [vmem:[%s3 + $0xac] sm:$0xf] %v1133
    %1198 = vst [vmem:[%s3 + $0xb0] sm:$0xf] %v1134
    %1199 = vst [vmem:[%s3 + $0xb4] sm:$0xf] %v1135
    %1200 = vst [vmem:[%s3 + $0xb8] sm:$0xf] %v1136
    %1201 = vst [vmem:[%s3 + $0xbc] sm:$0xf] %v1137
    %1202 = vst [vmem:[%s3 + $0xc0] sm:$0xf] %v1138
    %1203 = vst [vmem:[%s3 + $0xc4] sm:$0xf] %v1139
    %1204 = vst [vmem:[%s3 + $0xc8] sm:$0xf] %v1140
    %1205 = vst [vmem:[%s3 + $0xcc] sm:$0xf] %v1141
    %1206 = vst [vmem:[%s3 + $0xd0] sm:$0xf] %v1142
    %1207 = vst [vmem:[%s3 + $0xd4] sm:$0xf] %v1143
    %1208 = vst [vmem:[%s3 + $0xd8] sm:$0xf] %v1144
    %1209 = vst [vmem:[%s3 + $0xdc] sm:$0xf] %v1145
    %1210 = vst [vmem:[%s3 + $0xe0] sm:$0xf] %v1146
    %1211 = vst [vmem:[%s3 + $0xe4] sm:$0xf] %v1147
    %1212 = vst [vmem:[%s3 + $0xe8] sm:$0xf] %v1148
    %1213 = vst [vmem:[%s3 + $0xec] sm:$0xf] %v1149
    %1214 = vst [vmem:[%s3 + $0xf0] sm:$0xf] %v1150
    %1215 = vst [vmem:[%s3 + $0xf4] sm:$0xf] %v1151
    %1216 = vst [vmem:[%s3 + $0xf8] sm:$0xf] %v1152
    %1217 = vst [vmem:[%s3 + $0xfc] sm:$0xf] %v1153
  $region21: #{discriminator_forward.8} parent=0 // pred_fallthru
    _
  // Predicated region
  $region22: #{discriminator_forward.8} parent=0 // pred_check
    _
  $region23: #{discriminator_forward.8} parent=0 // pred_check_branch
    %1219 = sbr.rel (0) target = $region25
  $region24: #{discriminator_forward.8} parent=0 // pred_region
    _
  $region25: #{discriminator_forward.8} parent=0 // pred_fallthru
    _
  // Predicated region
  $region26: #{discriminator_forward.8} parent=0 // pred_check
    _
  $region27: #{discriminator_forward.8} parent=0 // pred_check_branch
    %1221 = sbr.rel (0) target = $region29
  $region28: #{discriminator_forward.8} parent=0 // pred_region
    _
  $region29: #{discriminator_forward.8} parent=0 // pred_fallthru
    _

// kernel: discriminator_forward.9
$region0: #{discriminator_forward.9}
  #allocation0 [shape = 'u32[]', space=smem, size = 0x4, offset = 0x4, fixed_abs, tag = 'smem constant byte address 0x4 - core index']
  #allocation1 [shape = 'u32[72,128]{1,0:T(1,128)}', space=vmem, size = 0x9000, scoped, tag = 'internal scratch']
  #allocation2 [shape = 'f32[128,128]{1,0:T(8,128)}', space=vmem, size = 0x10000, scoped, tag = 'scratch operand']
  %s0 = inlined_call_operand.vmem [shape: bf16[128,1024], index: 0, kind: input, shape index: {}]
  %s1 = inlined_call_operand.vmem [shape: bf16[1024,128], index: 1, kind: input, shape index: {}]
  %s2 = inlined_call_operand.vmem [shape: f32[1,128], index: 2, kind: input, shape index: {}]
  %s3 = inlined_call_operand.vmem [shape: bf16[128,128], index: 3, kind: output, shape index: {}]
  %s4 = sld [smem:[#allocation0]]
  $region76: #{discriminator_forward.9} parent=0
    _
  %s6 = ssub.s32 1, %s4
  %s7 = scalar_select 0, %s6, %s4
  $region1: #{discriminator_forward.9} parent=0
    #allocation3 [shape = 'u8[262144]{0}', space=vmem, size = 0x40000, scoped, tag = 'input window, operand 0']
    loop: start=0, step=1, limit=4
    $region2: #{discriminator_forward.9} parent=1 // loop_pre_header
      _
    $region3: #{discriminator_forward.9} parent=1 // loop_header
      %s9 = sphi 0, %s13
      %p10 = scmp.ge.s32.totalorder %s9, 4
      %s16 = sphi 0, %s35
      %s17 = sphi 0, %s31
      %s18 = sphi 0, %s27
      %s19 = sphi 0, %s16
      %s20 = sphi 0, %s17
      %s21 = sphi 0, %s18
      %s22 = sphi 0, %s19
      %s23 = sphi 0, %s20
      %s24 = sphi 0, %s21
      %s40 = sphi 0, %s42
      %s43 = sphi 0, %s40
      %s44 = sphi 0, %s43
      %s60 = sphi 0, %s44
      %s68 = sphi 0, %s70
      %s71 = sphi 0, %s68
      %s72 = sphi 0, %s71
      %s88 = sphi 0, %s72
      %s94 = sphi 0, %s96
      %s97 = sphi 0, %s94
      %s98 = sphi 0, %s97
      %s114 = sphi 0, %s98
      %s122 = sphi 0, %s124
      %s125 = sphi 0, %s122
      %s126 = sphi 0, %s125
      %s142 = sphi 0, %s126
    $region4: #{discriminator_forward.9} parent=1 // loop_header_branch
      %12 = sbr.rel (%p10) target = $region8
    $region5: #{discriminator_forward.9} parent=1 // loop_body
      %s14 = ssub.s32 %s9, 1
      %s15 = ssub.s32 %s9, 2
      %s25 = sadd.s32 1, %s18
      %p26 = scmp.ge.s32.totalorder %s25, 2
      %s27 = scalar_select %p26, 0, %s25
      %s28 = sadd.s32 1, %s17
      %s29 = scalar_select %p26, %s28, %s17
      %p30 = scmp.ge.s32.totalorder %s29, 1
      %s31 = scalar_select %p30, 0, %s29
      %s32 = sadd.s32 1, %s16
      %s33 = scalar_select %p30, %s32, %s16
      %p34 = scmp.ge.s32.totalorder %s33, 1
      %s35 = scalar_select %p34, 0, %s33
      %s36 = ssub.s32 %s16, %s35
      %s37 = ssub.s32 %s18, %s27
      %s38 = sor.u32 %s36, %s37
      %p39 = scmp.eq.s32.totalorder %s38, 0
      %s41 = sadd.s32 %s40, 1
      %s42 = scalar_select %p39, %s40, %s41
      %p45 = pneg %p39
      %p46 = scmp.eq.s32.totalorder %s9, 1
      %p47 = por %p45, %p46
      %p48 = scmp.ne.s32.totalorder %s40, %s43
      %p49 = scmp.eq.s32.totalorder %s9, 0
      %p50 = por %p48, %p49
      %p51 = scmp.ne.s32.totalorder %s40, %s43
      %p52 = scmp.eq.s32.totalorder %s14, 1
      %p53 = por %p51, %p52
      %p54 = scmp.ne.s32.totalorder %s43, %s44
      %p55 = scmp.eq.s32.totalorder %s14, 0
      %p56 = por %p54, %p55
      %p57 = scmp.ne.s32.totalorder %s43, %s44
      %p58 = scmp.eq.s32.totalorder %s15, 1
      %p59 = por %p57, %p58
      %p61 = scmp.ne.s32.totalorder %s44, %s60
      %p62 = scmp.eq.s32.totalorder %s15, 0
      %p63 = por %p61, %p62
      %s64 = ssub.s32 %s18, %s27
      %s65 = ssub.s32 %s17, %s31
      %s66 = sor.u32 %s64, %s65
      %p67 = scmp.eq.s32.totalorder %s66, 0
      %s69 = sadd.s32 %s68, 1
      %s70 = scalar_select %p67, %s68, %s69
      %p73 = pneg %p67
      %p74 = scmp.eq.s32.totalorder %s9, 1
      %p75 = por %p73, %p74
      %p76 = scmp.ne.s32.totalorder %s68, %s71
      %p77 = scmp.eq.s32.totalorder %s9, 0
      %p78 = por %p76, %p77
      %p79 = scmp.ne.s32.totalorder %s68, %s71
      %p80 = scmp.eq.s32.totalorder %s14, 1
      %p81 = por %p79, %p80
      %p82 = scmp.ne.s32.totalorder %s71, %s72
      %p83 = scmp.eq.s32.totalorder %s14, 0
      %p84 = por %p82, %p83
      %p85 = scmp.ne.s32.totalorder %s71, %s72
      %p86 = scmp.eq.s32.totalorder %s15, 1
      %p87 = por %p85, %p86
      %p89 = scmp.ne.s32.totalorder %s72, %s88
      %p90 = scmp.eq.s32.totalorder %s15, 0
      %p91 = por %p89, %p90
      %s92 = ssub.s32 %s17, %s31
      %p93 = scmp.eq.s32.totalorder %s92, 0
      %s95 = sadd.s32 %s94, 1
      %s96 = scalar_select %p93, %s94, %s95
      %p99 = pneg %p93
      %p100 = scmp.eq.s32.totalorder %s9, 1
      %p101 = por %p99, %p100
      %p102 = scmp.ne.s32.totalorder %s94, %s97
      %p103 = scmp.eq.s32.totalorder %s9, 0
      %p104 = por %p102, %p103
      %p105 = scmp.ne.s32.totalorder %s94, %s97
      %p106 = scmp.eq.s32.totalorder %s14, 1
      %p107 = por %p105, %p106
      %p108 = scmp.ne.s32.totalorder %s97, %s98
      %p109 = scmp.eq.s32.totalorder %s14, 0
      %p110 = por %p108, %p109
      %p111 = scmp.ne.s32.totalorder %s97, %s98
      %p112 = scmp.eq.s32.totalorder %s15, 1
      %p113 = por %p111, %p112
      %p115 = scmp.ne.s32.totalorder %s98, %s114
      %p116 = scmp.eq.s32.totalorder %s15, 0
      %p117 = por %p115, %p116
      %s118 = ssub.s32 %s16, %s35
      %s119 = ssub.s32 %s17, %s31
      %s120 = sor.u32 %s118, %s119
      %p121 = scmp.eq.s32.totalorder %s120, 0
      %s123 = sadd.s32 %s122, 1
      %s124 = scalar_select %p121, %s122, %s123
      %p127 = pneg %p121
      %p128 = scmp.eq.s32.totalorder %s9, 1
      %p129 = por %p127, %p128
      %p130 = scmp.ne.s32.totalorder %s122, %s125
      %p131 = scmp.eq.s32.totalorder %s9, 0
      %p132 = por %p130, %p131
      %p133 = scmp.ne.s32.totalorder %s122, %s125
      %p134 = scmp.eq.s32.totalorder %s14, 1
      %p135 = por %p133, %p134
      %p136 = scmp.ne.s32.totalorder %s125, %s126
      %p137 = scmp.eq.s32.totalorder %s14, 0
      %p138 = por %p136, %p137
      %p139 = scmp.ne.s32.totalorder %s125, %s126
      %p140 = scmp.eq.s32.totalorder %s15, 1
      %p141 = por %p139, %p140
      %p143 = scmp.ne.s32.totalorder %s126, %s142
      %p144 = scmp.eq.s32.totalorder %s15, 0
      %p145 = por %p143, %p144
      %p146 = scmp.le.s32.totalorder 1, %s9
      %p147 = scmp.lt.s32.totalorder %s9, 3
      %p148 = pnand %p146, %p147
      %p149 = pneg %p148
      // Predicated region
      $region9: #{discriminator_forward.9} parent=5 // pred_check
        _
      $region10: #{discriminator_forward.9} parent=5 // pred_check_branch
        %151 = sbr.rel (%p148) target = $region12
      $region11: #{discriminator_forward.9} parent=5 // pred_region
        %s152 = ssub.s32 %s9, 1
        // Predicated region
        $region13: #{discriminator_forward.9} parent=11 // pred_check
          %p153 = pneg %p110
        $region14: #{discriminator_forward.9} parent=11 // pred_check_branch
          %155 = sbr.rel (%p153) target = $region16
        $region15: #{discriminator_forward.9} parent=11 // pred_region
          %p156 = scmp.lt.s32.totalorder %s20, 0
          %s157 = scalar_select %p156, %s20, 0
          %s158 = scalar_lea.vmem %s2, %s157
        $region16: #{discriminator_forward.9} parent=11 // pred_fallthru
          _
      $region12: #{discriminator_forward.9} parent=5 // pred_fallthru
        _
      %p159 = scmp.lt.s32.totalorder %s9, 2
      // Predicated region
      $region17: #{discriminator_forward.9} parent=5 // pred_check
        %p160 = pneg %p159
      $region18: #{discriminator_forward.9} parent=5 // pred_check_branch
        %162 = sbr.rel (%p160) target = $region20
      $region19: #{discriminator_forward.9} parent=5 // pred_region
        // Predicated region
        $region21: #{discriminator_forward.9} parent=19 // pred_check
          %p163 = pneg %p50
        $region22: #{discriminator_forward.9} parent=19 // pred_check_branch
          %165 = sbr.rel (%p163) target = $region24
        $region23: #{discriminator_forward.9} parent=19 // pred_region
          %s166 = sand.u32 %s40, 1
          %s167 = sand.u32 %s40, 1
          %s168 = smul.addr %s167, 256
          %s169 = scalar_lea.vmem [#allocation3], %s168
          %s170 = smul.u32 16, %s16
          %s171 = smul.u32 4, %s18
          %s172 = smul.addr %s170, 8
          %s173 = sadd.s32 %s171, %s172
          %s174 = smul.addr %s173, 4
          %s175 = scalar_lea.vmem %s0, %s174
          // Predicated region
          $region25: #{discriminator_forward.9} parent=23 // pred_check
            _
          $region26: #{discriminator_forward.9} parent=23 // pred_check_branch
            %177 = sbr.rel (0) target = $region28
          $region27: #{discriminator_forward.9} parent=23 // pred_region
            // Predicated region
            $region29: #{discriminator_forward.9} parent=27 // pred_check
              _
            $region30: #{discriminator_forward.9} parent=27 // pred_check_branch
              %179 = sbr.rel (0) target = $region32
            $region31: #{discriminator_forward.9} parent=27 // pred_region
              loop: start=0, step=1, limit=1
              $region33: #{discriminator_forward.9} parent=31 // loop_pre_header
                _
              $region34: #{discriminator_forward.9} parent=31 // loop_header
                %s181 = sphi 0, %s185
                %p182 = scmp.ge.s32.totalorder %s181, 1
                %s186 = sphi %s175, %s175
                %s187 = sphi %s169, %s169
              $region35: #{discriminator_forward.9} parent=31 // loop_header_branch
                %184 = sbr.rel (%p182) target = $region39
              $region36: #{discriminator_forward.9} parent=31 // loop_body
                %v188 = vld [vmem:[%s186] sm:$0xff]
                %189 = vst [vmem:[%s187] sm:$0xff] %v188
                %v190 = vld [vmem:[%s186 + $0x8] sm:$0xff]
                %191 = vst [vmem:[%s187 + $0x8] sm:$0xff] %v190
                %v192 = vld [vmem:[%s186 + $0x20] sm:$0xff]
                %193 = vst [vmem:[%s187 + $0x10] sm:$0xff] %v192
                %v194 = vld [vmem:[%s186 + $0x28] sm:$0xff]
                %195 = vst [vmem:[%s187 + $0x18] sm:$0xff] %v194
                %v196 = vld [vmem:[%s186 + $0x40] sm:$0xff]
                %197 = vst [vmem:[%s187 + $0x20] sm:$0xff] %v196
                %v198 = vld [vmem:[%s186 + $0x48] sm:$0xff]
                %199 = vst [vmem:[%s187 + $0x28] sm:$0xff] %v198
                %v200 = vld [vmem:[%s186 + $0x60] sm:$0xff]
                %201 = vst [vmem:[%s187 + $0x30] sm:$0xff] %v200
                %v202 = vld [vmem:[%s186 + $0x68] sm:$0xff]
                %203 = vst [vmem:[%s187 + $0x38] sm:$0xff] %v202
                %v204 = vld [vmem:[%s186 + $0x80] sm:$0xff]
                %205 = vst [vmem:[%s187 + $0x40] sm:$0xff] %v204
                %v206 = vld [vmem:[%s186 + $0x88] sm:$0xff]
                %207 = vst [vmem:[%s187 + $0x48] sm:$0xff] %v206
                %v208 = vld [vmem:[%s186 + $0xa0] sm:$0xff]
                %209 = vst [vmem:[%s187 + $0x50] sm:$0xff] %v208
                %v210 = vld [vmem:[%s186 + $0xa8] sm:$0xff]
                %211 = vst [vmem:[%s187 + $0x58] sm:$0xff] %v210
                %v212 = vld [vmem:[%s186 + $0xc0] sm:$0xff]
                %213 = vst [vmem:[%s187 + $0x60] sm:$0xff] %v212
                %v214 = vld [vmem:[%s186 + $0xc8] sm:$0xff]
                %215 = vst [vmem:[%s187 + $0x68] sm:$0xff] %v214
                %v216 = vld [vmem:[%s186 + $0xe0] sm:$0xff]
                %217 = vst [vmem:[%s187 + $0x70] sm:$0xff] %v216
                %v218 = vld [vmem:[%s186 + $0xe8] sm:$0xff]
                %219 = vst [vmem:[%s187 + $0x78] sm:$0xff] %v218
                %v220 = vld [vmem:[%s186 + $0x100] sm:$0xff]
                %221 = vst [vmem:[%s187 + $0x80] sm:$0xff] %v220
                %v222 = vld [vmem:[%s186 + $0x108] sm:$0xff]
                %223 = vst [vmem:[%s187 + $0x88] sm:$0xff] %v222
                %v224 = vld [vmem:[%s186 + $0x120] sm:$0xff]
                %225 = vst [vmem:[%s187 + $0x90] sm:$0xff] %v224
                %v226 = vld [vmem:[%s186 + $0x128] sm:$0xff]
                %227 = vst [vmem:[%s187 + $0x98] sm:$0xff] %v226
                %v228 = vld [vmem:[%s186 + $0x140] sm:$0xff]
                %229 = vst [vmem:[%s187 + $0xa0] sm:$0xff] %v228
                %v230 = vld [vmem:[%s186 + $0x148] sm:$0xff]
                %231 = vst [vmem:[%s187 + $0xa8] sm:$0xff] %v230
                %v232 = vld [vmem:[%s186 + $0x160] sm:$0xff]
                %233 = vst [vmem:[%s187 + $0xb0] sm:$0xff] %v232
                %v234 = vld [vmem:[%s186 + $0x168] sm:$0xff]
                %235 = vst [vmem:[%s187 + $0xb8] sm:$0xff] %v234
                %v236 = vld [vmem:[%s186 + $0x180] sm:$0xff]
                %237 = vst [vmem:[%s187 + $0xc0] sm:$0xff] %v236
                %v238 = vld [vmem:[%s186 + $0x188] sm:$0xff]
                %239 = vst [vmem:[%s187 + $0xc8] sm:$0xff] %v238
                %v240 = vld [vmem:[%s186 + $0x1a0] sm:$0xff]
                %241 = vst [vmem:[%s187 + $0xd0] sm:$0xff] %v240
                %v242 = vld [vmem:[%s186 + $0x1a8] sm:$0xff]
                %243 = vst [vmem:[%s187 + $0xd8] sm:$0xff] %v242
                %v244 = vld [vmem:[%s186 + $0x1c0] sm:$0xff]
                %245 = vst [vmem:[%s187 + $0xe0] sm:$0xff] %v244
                %v246 = vld [vmem:[%s186 + $0x1c8] sm:$0xff]
                %247 = vst [vmem:[%s187 + $0xe8] sm:$0xff] %v246
                %v248 = vld [vmem:[%s186 + $0x1e0] sm:$0xff]
                %249 = vst [vmem:[%s187 + $0xf0] sm:$0xff] %v248
                %v250 = vld [vmem:[%s186 + $0x1e8] sm:$0xff]
                %251 = vst [vmem:[%s187 + $0xf8] sm:$0xff] %v250
              $region37: #{discriminator_forward.9} parent=31 // loop_footer
                %s185 = sadd.s32 1, %s181
              $region38: #{discriminator_forward.9} parent=31 // loop_footer_branch
                %180 = sbr.rel target = $region34
              $region39: #{discriminator_forward.9} parent=31 // loop_exit
                _
            $region32: #{discriminator_forward.9} parent=27 // pred_fallthru
              _
            // Predicated region
            $region40: #{discriminator_forward.9} parent=27 // pred_check
              _
            $region41: #{discriminator_forward.9} parent=27 // pred_check_branch
              %253 = sbr.rel target = $region43
            $region42: #{discriminator_forward.9} parent=27 // pred_region
              _
            $region43: #{discriminator_forward.9} parent=27 // pred_fallthru
              _
          $region28: #{discriminator_forward.9} parent=23 // pred_fallthru
            _
          %254 = vnop
        $region24: #{discriminator_forward.9} parent=19 // pred_fallthru
          _
        // Predicated region
        $region44: #{discriminator_forward.9} parent=19 // pred_check
          %p255 = pneg %p78
        $region45: #{discriminator_forward.9} parent=19 // pred_check_branch
          %257 = sbr.rel (%p255) target = $region47
        $region46: #{discriminator_forward.9} parent=19 // pred_region
          %s258 = smul.u32 64, %s18
          %p259 = scmp.lt.s32.totalorder %s258, 127
          %s260 = scalar_select %p259, %s258, 127
          %p261 = scmp.lt.s32.totalorder %s17, 0
          %s262 = scalar_select %p261, %s17, 0
          %s263 = sadd.s32 %s262, %s260
          %s264 = smul.addr %s263, 4
          %s265 = scalar_lea.vmem %s1, %s264
          %s266 = smul.u32 64, %s18
        $region47: #{discriminator_forward.9} parent=19 // pred_fallthru
          _
      $region20: #{discriminator_forward.9} parent=5 // pred_fallthru
        _
      %p267 = scmp.le.s32.totalorder 1, %s9
      %p268 = scmp.lt.s32.totalorder %s9, 3
      %p269 = pnand %p267, %p268
      %p270 = pneg %p269
      // Predicated region
      $region48: #{discriminator_forward.9} parent=5 // pred_check
        _
      $region49: #{discriminator_forward.9} parent=5 // pred_check_branch
        %272 = sbr.rel (%p269) target = $region51
      $region50: #{discriminator_forward.9} parent=5 // pred_region
        %s273 = ssub.s32 %s9, 1
        %s274 = sand.u32 %s43, 1
        %s275 = sand.u32 %s43, 1
        %s276 = smul.addr %s275, 256
        %s277 = scalar_lea.vmem [#allocation3], %s276
        // Predicated region
        $region52: #{discriminator_forward.9} parent=50 // pred_check
          %p278 = pneg %p56
        $region53: #{discriminator_forward.9} parent=50 // pred_check_branch
          %280 = sbr.rel (%p278) target = $region55
        $region54: #{discriminator_forward.9} parent=50 // pred_region
          _
        $region55: #{discriminator_forward.9} parent=50 // pred_fallthru
          _
        %s281 = sand.u32 %s43, 1
        %s282 = sand.u32 %s43, 1
        %s283 = smul.addr %s282, 256
        %s284 = scalar_lea.vmem [#allocation3], %s283
        %p285 = pneg %p56
        %p286 = pneg %p53
        %s287 = smul.u32 64, %s21
        %p288 = scmp.lt.s32.totalorder %s287, 127
        %s289 = scalar_select %p288, %s287, 127
        %p290 = scmp.lt.s32.totalorder %s20, 0
        %s291 = scalar_select %p290, %s20, 0
        %s292 = sadd.s32 %s291, %s289
        %s293 = smul.addr %s292, 4
        %s294 = scalar_lea.vmem %s1, %s293
        %p295 = pneg %p84
        %p296 = pneg %p81
        %p297 = scmp.lt.s32.totalorder %s20, 0
        %s298 = scalar_select %p297, %s20, 0
        %s299 = scalar_lea.vmem %s2, %s298
        %p300 = pneg %p110
        %p301 = pneg %p107
        %p302 = pneg %p138
        %p303 = pneg %p135
        %s304 = smul.u32 16, %s19
        %p305 = scmp.lt.s32.totalorder %s304, 15
        %s306 = scalar_select %p305, %s304, 15
        %p307 = scmp.lt.s32.totalorder %s20, 0
        %s308 = scalar_select %p307, %s20, 0
        %s309 = sadd.s32 %s308, %s306
        %s310 = smul.addr %s309, 4
        %s311 = scalar_lea.vmem %s3, %s310
        %s312 = smul.u32 16, %s19
        %s313 = smul.u32 4, %s21
        %s314 = smul.u32 64, %s21
        %p315 = scmp.lt.s32.totalorder %s314, 127
        %s316 = scalar_select %p315, %s314, 127
        %p317 = scmp.lt.s32.totalorder %s20, 0
        %s318 = scalar_select %p317, %s20, 0
        %s319 = sadd.s32 %s318, %s316
        %s320 = smul.addr %s319, 4
        %s321 = scalar_lea.vmem %s1, %s320
        %s322 = smul.u32 64, %s21
        %p323 = scmp.lt.s32.totalorder %s20, 0
        %s324 = scalar_select %p323, %s20, 0
        %s325 = scalar_lea.vmem %s2, %s324
        %s326 = smul.u32 16, %s19
        %p327 = scmp.lt.s32.totalorder %s326, 15
        %s328 = scalar_select %p327, %s326, 15
        %p329 = scmp.lt.s32.totalorder %s20, 0
        %s330 = scalar_select %p329, %s20, 0
        %s331 = sadd.s32 %s330, %s328
        %s332 = smul.addr %s331, 4
        %s333 = scalar_lea.vmem %s3, %s332
        %s334 = smul.u32 16, %s19
        %p335 = scmp.eq.s32.totalorder %s21, 0
        // Predicated region
        $region56: #{discriminator_forward.9} parent=50 // pred_check
          %p336 = pneg %p335
        $region57: #{discriminator_forward.9} parent=50 // pred_check_branch
          %338 = sbr.rel (%p336) target = $region59
        $region58: #{discriminator_forward.9} parent=50 // pred_region
          %339 = vst [vmem:[#allocation2] sm:$0xff] 0.0
          %340 = vst [vmem:[#allocation2 + $0x8] sm:$0xff] 0.0
          %341 = vst [vmem:[#allocation2 + $0x10] sm:$0xff] 0.0
          %342 = vst [vmem:[#allocation2 + $0x18] sm:$0xff] 0.0
          %343 = vst [vmem:[#allocation2 + $0x20] sm:$0xff] 0.0
          %344 = vst [vmem:[#allocation2 + $0x28] sm:$0xff] 0.0
          %345 = vst [vmem:[#allocation2 + $0x30] sm:$0xff] 0.0
          %346 = vst [vmem:[#allocation2 + $0x38] sm:$0xff] 0.0
          %347 = vst [vmem:[#allocation2 + $0x40] sm:$0xff] 0.0
          %348 = vst [vmem:[#allocation2 + $0x48] sm:$0xff] 0.0
          %349 = vst [vmem:[#allocation2 + $0x50] sm:$0xff] 0.0
          %350 = vst [vmem:[#allocation2 + $0x58] sm:$0xff] 0.0
          %351 = vst [vmem:[#allocation2 + $0x60] sm:$0xff] 0.0
          %352 = vst [vmem:[#allocation2 + $0x68] sm:$0xff] 0.0
          %353 = vst [vmem:[#allocation2 + $0x70] sm:$0xff] 0.0
          %354 = vst [vmem:[#allocation2 + $0x78] sm:$0xff] 0.0
        $region59: #{discriminator_forward.9} parent=50 // pred_fallthru
          _
        %v355 = vld [vmem:[#allocation2] sm:$0xff]
        %v356 = vld [vmem:[#allocation2 + $0x8] sm:$0xff]
        %v357 = vld [vmem:[#allocation2 + $0x10] sm:$0xff]
        %v358 = vld [vmem:[#allocation2 + $0x18] sm:$0xff]
        %v359 = vld [vmem:[#allocation2 + $0x20] sm:$0xff]
        %v360 = vld [vmem:[#allocation2 + $0x28] sm:$0xff]
        %v361 = vld [vmem:[#allocation2 + $0x30] sm:$0xff]
        %v362 = vld [vmem:[#allocation2 + $0x38] sm:$0xff]
        %v363 = vld [vmem:[#allocation2 + $0x40] sm:$0xff]
        %v364 = vld [vmem:[#allocation2 + $0x48] sm:$0xff]
        %v365 = vld [vmem:[#allocation2 + $0x50] sm:$0xff]
        %v366 = vld [vmem:[#allocation2 + $0x58] sm:$0xff]
        %v367 = vld [vmem:[#allocation2 + $0x60] sm:$0xff]
        %v368 = vld [vmem:[#allocation2 + $0x68] sm:$0xff]
        %v369 = vld [vmem:[#allocation2 + $0x70] sm:$0xff]
        %v370 = vld [vmem:[#allocation2 + $0x78] sm:$0xff]
        %v371 = vld [vmem:[%s277] sm:$0xff]
        %v372 = vld [vmem:[%s277 + $0x8] sm:$0xff]
        %v373 = vld [vmem:[%s277 + $0x10] sm:$0xff]
        %v374 = vld [vmem:[%s277 + $0x18] sm:$0xff]
        %v375 = vld [vmem:[%s277 + $0x20] sm:$0xff]
        %v376 = vld [vmem:[%s277 + $0x28] sm:$0xff]
        %v377 = vld [vmem:[%s277 + $0x30] sm:$0xff]
        %v378 = vld [vmem:[%s277 + $0x38] sm:$0xff]
        %v379 = vld [vmem:[%s277 + $0x40] sm:$0xff]
        %v380 = vld [vmem:[%s277 + $0x48] sm:$0xff]
        %v381 = vld [vmem:[%s277 + $0x50] sm:$0xff]
        %v382 = vld [vmem:[%s277 + $0x58] sm:$0xff]
        %v383 = vld [vmem:[%s277 + $0x60] sm:$0xff]
        %v384 = vld [vmem:[%s277 + $0x68] sm:$0xff]
        %v385 = vld [vmem:[%s277 + $0x70] sm:$0xff]
        %v386 = vld [vmem:[%s277 + $0x78] sm:$0xff]
        %v387 = vld [vmem:[%s277 + $0x80] sm:$0xff]
        %v388 = vld [vmem:[%s277 + $0x88] sm:$0xff]
        %v389 = vld [vmem:[%s277 + $0x90] sm:$0xff]
        %v390 = vld [vmem:[%s277 + $0x98] sm:$0xff]
        %v391 = vld [vmem:[%s277 + $0xa0] sm:$0xff]
        %v392 = vld [vmem:[%s277 + $0xa8] sm:$0xff]
        %v393 = vld [vmem:[%s277 + $0xb0] sm:$0xff]
        %v394 = vld [vmem:[%s277 + $0xb8] sm:$0xff]
        %v395 = vld [vmem:[%s277 + $0xc0] sm:$0xff]
        %v396 = vld [vmem:[%s277 + $0xc8] sm:$0xff]
        %v397 = vld [vmem:[%s277 + $0xd0] sm:$0xff]
        %v398 = vld [vmem:[%s277 + $0xd8] sm:$0xff]
        %v399 = vld [vmem:[%s277 + $0xe0] sm:$0xff]
        %v400 = vld [vmem:[%s277 + $0xe8] sm:$0xff]
        %v401 = vld [vmem:[%s277 + $0xf0] sm:$0xff]
        %v402 = vld [vmem:[%s277 + $0xf8] sm:$0xff]
        %v403 = vld [vmem:[%s321] sm:$0xf]
        %v404 = vld [vmem:[%s321 + $0x4] sm:$0xf]
        %v405 = vld [vmem:[%s321 + $0x8] sm:$0xf]
        %v406 = vld [vmem:[%s321 + $0xc] sm:$0xf]
        %v407 = vld [vmem:[%s321 + $0x10] sm:$0xf]
        %v408 = vld [vmem:[%s321 + $0x14] sm:$0xf]
        %v409 = vld [vmem:[%s321 + $0x18] sm:$0xf]
        %v410 = vld [vmem:[%s321 + $0x1c] sm:$0xf]
        %v411 = vld [vmem:[%s321 + $0x20] sm:$0xf]
        %v412 = vld [vmem:[%s321 + $0x24] sm:$0xf]
        %v413 = vld [vmem:[%s321 + $0x28] sm:$0xf]
        %v414 = vld [vmem:[%s321 + $0x2c] sm:$0xf]
        %v415 = vld [vmem:[%s321 + $0x30] sm:$0xf]
        %v416 = vld [vmem:[%s321 + $0x34] sm:$0xf]
        %v417 = vld [vmem:[%s321 + $0x38] sm:$0xf]
        %v418 = vld [vmem:[%s321 + $0x3c] sm:$0xf]
        %v419 = vld [vmem:[%s321 + $0x40] sm:$0xf]
        %v420 = vld [vmem:[%s321 + $0x44] sm:$0xf]
        %v421 = vld [vmem:[%s321 + $0x48] sm:$0xf]
        %v422 = vld [vmem:[%s321 + $0x4c] sm:$0xf]
        %v423 = vld [vmem:[%s321 + $0x50] sm:$0xf]
        %v424 = vld [vmem:[%s321 + $0x54] sm:$0xf]
        %v425 = vld [vmem:[%s321 + $0x58] sm:$0xf]
        %v426 = vld [vmem:[%s321 + $0x5c] sm:$0xf]
        %v427 = vld [vmem:[%s321 + $0x60] sm:$0xf]
        %v428 = vld [vmem:[%s321 + $0x64] sm:$0xf]
        %v429 = vld [vmem:[%s321 + $0x68] sm:$0xf]
        %v430 = vld [vmem:[%s321 + $0x6c] sm:$0xf]
        %v431 = vld [vmem:[%s321 + $0x70] sm:$0xf]
        %v432 = vld [vmem:[%s321 + $0x74] sm:$0xf]
        %v433 = vld [vmem:[%s321 + $0x78] sm:$0xf]
        %v434 = vld [vmem:[%s321 + $0x7c] sm:$0xf]
        %v435 = vld [vmem:[%s321 + $0x80] sm:$0xf]
        %v436 = vld [vmem:[%s321 + $0x84] sm:$0xf]
        %v437 = vld [vmem:[%s321 + $0x88] sm:$0xf]
        %v438 = vld [vmem:[%s321 + $0x8c] sm:$0xf]
        %v439 = vld [vmem:[%s321 + $0x90] sm:$0xf]
        %v440 = vld [vmem:[%s321 + $0x94] sm:$0xf]
        %v441 = vld [vmem:[%s321 + $0x98] sm:$0xf]
        %v442 = vld [vmem:[%s321 + $0x9c] sm:$0xf]
        %v443 = vld [vmem:[%s321 + $0xa0] sm:$0xf]
        %v444 = vld [vmem:[%s321 + $0xa4] sm:$0xf]
        %v445 = vld [vmem:[%s321 + $0xa8] sm:$0xf]
        %v446 = vld [vmem:[%s321 + $0xac] sm:$0xf]
        %v447 = vld [vmem:[%s321 + $0xb0] sm:$0xf]
        %v448 = vld [vmem:[%s321 + $0xb4] sm:$0xf]
        %v449 = vld [vmem:[%s321 + $0xb8] sm:$0xf]
        %v450 = vld [vmem:[%s321 + $0xbc] sm:$0xf]
        %v451 = vld [vmem:[%s321 + $0xc0] sm:$0xf]
        %v452 = vld [vmem:[%s321 + $0xc4] sm:$0xf]
        %v453 = vld [vmem:[%s321 + $0xc8] sm:$0xf]
        %v454 = vld [vmem:[%s321 + $0xcc] sm:$0xf]
        %v455 = vld [vmem:[%s321 + $0xd0] sm:$0xf]
        %v456 = vld [vmem:[%s321 + $0xd4] sm:$0xf]
        %v457 = vld [vmem:[%s321 + $0xd8] sm:$0xf]
        %v458 = vld [vmem:[%s321 + $0xdc] sm:$0xf]
        %v459 = vld [vmem:[%s321 + $0xe0] sm:$0xf]
        %v460 = vld [vmem:[%s321 + $0xe4] sm:$0xf]
        %v461 = vld [vmem:[%s321 + $0xe8] sm:$0xf]
        %v462 = vld [vmem:[%s321 + $0xec] sm:$0xf]
        %v463 = vld [vmem:[%s321 + $0xf0] sm:$0xf]
        %v464 = vld [vmem:[%s321 + $0xf4] sm:$0xf]
        %v465 = vld [vmem:[%s321 + $0xf8] sm:$0xf]
        %v466 = vld [vmem:[%s321 + $0xfc] sm:$0xf]
        %v499 = vunpack.c.l.b16 %v371
        %v500 = vunpack.c.h.b16 %v371
        %v501 = vunpack.c.l.b16 %v372
        %v502 = vunpack.c.h.b16 %v372
        %v503 = vunpack.c.l.b16 %v373
        %v504 = vunpack.c.h.b16 %v373
        %v505 = vunpack.c.l.b16 %v374
        %v506 = vunpack.c.h.b16 %v374
        %v507 = vunpack.c.l.b16 %v375
        %v508 = vunpack.c.h.b16 %v375
        %v509 = vunpack.c.l.b16 %v376
        %v510 = vunpack.c.h.b16 %v376
        %v511 = vunpack.c.l.b16 %v377
        %v512 = vunpack.c.h.b16 %v377
        %v513 = vunpack.c.l.b16 %v378
        %v514 = vunpack.c.h.b16 %v378
        %v515 = vunpack.c.l.b16 %v379
        %v516 = vunpack.c.h.b16 %v379
        %v517 = vunpack.c.l.b16 %v380
        %v518 = vunpack.c.h.b16 %v380
        %v519 = vunpack.c.l.b16 %v381
        %v520 = vunpack.c.h.b16 %v381
        %v521 = vunpack.c.l.b16 %v382
        %v522 = vunpack.c.h.b16 %v382
        %v523 = vunpack.c.l.b16 %v383
        %v524 = vunpack.c.h.b16 %v383
        %v525 = vunpack.c.l.b16 %v384
        %v526 = vunpack.c.h.b16 %v384
        %v527 = vunpack.c.l.b16 %v385
        %v528 = vunpack.c.h.b16 %v385
        %v529 = vunpack.c.l.b16 %v386
        %v530 = vunpack.c.h.b16 %v386
        %v531 = vunpack.c.l.b16 %v387
        %v532 = vunpack.c.h.b16 %v387
        %v533 = vunpack.c.l.b16 %v388
        %v534 = vunpack.c.h.b16 %v388
        %v535 = vunpack.c.l.b16 %v389
        %v536 = vunpack.c.h.b16 %v389
        %v537 = vunpack.c.l.b16 %v390
        %v538 = vunpack.c.h.b16 %v390
        %v539 = vunpack.c.l.b16 %v391
        %v540 = vunpack.c.h.b16 %v391
        %v541 = vunpack.c.l.b16 %v392
        %v542 = vunpack.c.h.b16 %v392
        %v543 = vunpack.c.l.b16 %v393
        %v544 = vunpack.c.h.b16 %v393
        %v545 = vunpack.c.l.b16 %v394
        %v546 = vunpack.c.h.b16 %v394
        %v547 = vunpack.c.l.b16 %v395
        %v548 = vunpack.c.h.b16 %v395
        %v549 = vunpack.c.l.b16 %v396
        %v550 = vunpack.c.h.b16 %v396
        %v551 = vunpack.c.l.b16 %v397
        %v552 = vunpack.c.h.b16 %v397
        %v553 = vunpack.c.l.b16 %v398
        %v554 = vunpack.c.h.b16 %v398
        %v555 = vunpack.c.l.b16 %v399
        %v556 = vunpack.c.h.b16 %v399
        %v557 = vunpack.c.l.b16 %v400
        %v558 = vunpack.c.h.b16 %v400
        %v559 = vunpack.c.l.b16 %v401
        %v560 = vunpack.c.h.b16 %v401
        %v561 = vunpack.c.l.b16 %v402
        %v562 = vunpack.c.h.b16 %v402
        %v563 = vpack.c.b16 %v503, %v499
        %v564 = vpack.c.b16 %v504, %v500
        %v565 = vpack.c.b16 %v505, %v501
        %v566 = vpack.c.b16 %v506, %v502
        %v567 = vpack.c.b16 %v511, %v507
        %v568 = vpack.c.b16 %v512, %v508
        %v569 = vpack.c.b16 %v513, %v509
        %v570 = vpack.c.b16 %v514, %v510
        %v571 = vpack.c.b16 %v519, %v515
        %v572 = vpack.c.b16 %v520, %v516
        %v573 = vpack.c.b16 %v521, %v517
        %v574 = vpack.c.b16 %v522, %v518
        %v575 = vpack.c.b16 %v527, %v523
        %v576 = vpack.c.b16 %v528, %v524
        %v577 = vpack.c.b16 %v529, %v525
        %v578 = vpack.c.b16 %v530, %v526
        %v579 = vpack.c.b16 %v535, %v531
        %v580 = vpack.c.b16 %v536, %v532
        %v581 = vpack.c.b16 %v537, %v533
        %v582 = vpack.c.b16 %v538, %v534
        %v583 = vpack.c.b16 %v543, %v539
        %v584 = vpack.c.b16 %v544, %v540
        %v585 = vpack.c.b16 %v545, %v541
        %v586 = vpack.c.b16 %v546, %v542
        %v587 = vpack.c.b16 %v551, %v547
        %v588 = vpack.c.b16 %v552, %v548
        %v589 = vpack.c.b16 %v553, %v549
        %v590 = vpack.c.b16 %v554, %v550
        %v591 = vpack.c.b16 %v559, %v555
        %v592 = vpack.c.b16 %v560, %v556
        %v593 = vpack.c.b16 %v561, %v557
        %v594 = vpack.c.b16 %v562, %v558
        %v691 = vunpack.c.l.b16 %v403
        %v692 = vunpack.c.l.b16 %v404
        %v693 = vunpack.c.l.b16 %v405
        %v694 = vunpack.c.l.b16 %v406
        %v695 = vunpack.c.l.b16 %v407
        %v696 = vunpack.c.l.b16 %v408
        %v697 = vunpack.c.l.b16 %v409
        %v698 = vunpack.c.l.b16 %v410
        %v699 = vunpack.c.l.b16 %v411
        %v700 = vunpack.c.l.b16 %v412
        %v701 = vunpack.c.l.b16 %v413
        %v702 = vunpack.c.l.b16 %v414
        %v703 = vunpack.c.l.b16 %v415
        %v704 = vunpack.c.l.b16 %v416
        %v705 = vunpack.c.l.b16 %v417
        %v706 = vunpack.c.l.b16 %v418
        %v707 = vunpack.c.l.b16 %v419
        %v708 = vunpack.c.l.b16 %v420
        %v709 = vunpack.c.l.b16 %v421
        %v710 = vunpack.c.l.b16 %v422
        %v711 = vunpack.c.l.b16 %v423
        %v712 = vunpack.c.l.b16 %v424
        %v713 = vunpack.c.l.b16 %v425
        %v714 = vunpack.c.l.b16 %v426
        %v715 = vunpack.c.l.b16 %v427
        %v716 = vunpack.c.l.b16 %v428
        %v717 = vunpack.c.l.b16 %v429
        %v718 = vunpack.c.l.b16 %v430
        %v719 = vunpack.c.l.b16 %v431
        %v720 = vunpack.c.l.b16 %v432
        %v721 = vunpack.c.l.b16 %v433
        %v722 = vunpack.c.l.b16 %v434
        %v723 = vunpack.c.l.b16 %v435
        %v724 = vunpack.c.l.b16 %v436
        %v725 = vunpack.c.l.b16 %v437
        %v726 = vunpack.c.l.b16 %v438
        %v727 = vunpack.c.l.b16 %v439
        %v728 = vunpack.c.l.b16 %v440
        %v729 = vunpack.c.l.b16 %v441
        %v730 = vunpack.c.l.b16 %v442
        %v731 = vunpack.c.l.b16 %v443
        %v732 = vunpack.c.l.b16 %v444
        %v733 = vunpack.c.l.b16 %v445
        %v734 = vunpack.c.l.b16 %v446
        %v735 = vunpack.c.l.b16 %v447
        %v736 = vunpack.c.l.b16 %v448
        %v737 = vunpack.c.l.b16 %v449
        %v738 = vunpack.c.l.b16 %v450
        %v739 = vunpack.c.l.b16 %v451
        %v740 = vunpack.c.l.b16 %v452
        %v741 = vunpack.c.l.b16 %v453
        %v742 = vunpack.c.l.b16 %v454
        %v743 = vunpack.c.l.b16 %v455
        %v744 = vunpack.c.l.b16 %v456
        %v745 = vunpack.c.l.b16 %v457
        %v746 = vunpack.c.l.b16 %v458
        %v747 = vunpack.c.l.b16 %v459
        %v748 = vunpack.c.l.b16 %v460
        %v749 = vunpack.c.l.b16 %v461
        %v750 = vunpack.c.l.b16 %v462
        %v751 = vunpack.c.l.b16 %v463
        %v752 = vunpack.c.l.b16 %v464
        %v753 = vunpack.c.l.b16 %v465
        %v754 = vunpack.c.l.b16 %v466
        %v755 = vpack.c.b16 %v692, %v691
        %v756 = vpack.c.b16 %v694, %v693
        %v757 = vpack.c.b16 %v696, %v695
        %v758 = vpack.c.b16 %v698, %v697
        %v759 = vpack.c.b16 %v700, %v699
        %v760 = vpack.c.b16 %v702, %v701
        %v761 = vpack.c.b16 %v704, %v703
        %v762 = vpack.c.b16 %v706, %v705
        %v763 = vpack.c.b16 %v708, %v707
        %v764 = vpack.c.b16 %v710, %v709
        %v765 = vpack.c.b16 %v712, %v711
        %v766 = vpack.c.b16 %v714, %v713
        %v767 = vpack.c.b16 %v716, %v715
        %v768 = vpack.c.b16 %v718, %v717
        %v769 = vpack.c.b16 %v720, %v719
        %v770 = vpack.c.b16 %v722, %v721
        %v771 = vpack.c.b16 %v724, %v723
        %v772 = vpack.c.b16 %v726, %v725
        %v773 = vpack.c.b16 %v728, %v727
        %v774 = vpack.c.b16 %v730, %v729
        %v775 = vpack.c.b16 %v732, %v731
        %v776 = vpack.c.b16 %v734, %v733
        %v777 = vpack.c.b16 %v736, %v735
        %v778 = vpack.c.b16 %v738, %v737
        %v779 = vpack.c.b16 %v740, %v739
        %v780 = vpack.c.b16 %v742, %v741
        %v781 = vpack.c.b16 %v744, %v743
        %v782 = vpack.c.b16 %v746, %v745
        %v783 = vpack.c.b16 %v748, %v747
        %v784 = vpack.c.b16 %v750, %v749
        %v785 = vpack.c.b16 %v752, %v751
        %v786 = vpack.c.b16 %v754, %v753
        %819 = vmatpush.bf16.msra.mxu0 %v762
        %820 = vmatpush.bf16.msra.mxu0 %v761
        %821 = vmatpush.bf16.msra.mxu0 %v760
        %822 = vmatpush.bf16.msra.mxu0 %v759
        %823 = vmatpush.bf16.msra.mxu0 %v758
        %824 = vmatpush.bf16.msra.mxu0 %v757
        %825 = vmatpush.bf16.msra.mxu0 %v756
        %826 = vmatpush.bf16.msra.mxu0 %v755
        %827 = vmatmul.bf16.gmra.mxu0 %v563
        %v828 = vpop.f32.mrf.mxu0
        %v829 = vadd.f32 0.0, %v828
        %v830 = vpop.f32.mrf.mxu0
        %v831 = vadd.f32 0.0, %v830
        %832 = vmatmul.bf16.gmra.mxu0 %v567
        %v833 = vpop.f32.mrf.mxu0
        %v834 = vadd.f32 0.0, %v833
        %v835 = vpop.f32.mrf.mxu0
        %v836 = vadd.f32 0.0, %v835
        %837 = vmatmul.bf16.gmra.mxu0 %v571
        %v838 = vpop.f32.mrf.mxu0
        %v839 = vadd.f32 0.0, %v838
        %v840 = vpop.f32.mrf.mxu0
        %v841 = vadd.f32 0.0, %v840
        %842 = vmatmul.bf16.gmra.mxu0 %v575
        %v843 = vpop.f32.mrf.mxu0
        %v844 = vadd.f32 0.0, %v843
        %v845 = vpop.f32.mrf.mxu0
        %v846 = vadd.f32 0.0, %v845
        %847 = vmatmul.bf16.gmra.mxu0 %v579
        %v848 = vpop.f32.mrf.mxu0
        %v849 = vadd.f32 0.0, %v848
        %v850 = vpop.f32.mrf.mxu0
        %v851 = vadd.f32 0.0, %v850
        %852 = vmatmul.bf16.gmra.mxu0 %v583
        %v853 = vpop.f32.mrf.mxu0
        %v854 = vadd.f32 0.0, %v853
        %v855 = vpop.f32.mrf.mxu0
        %v856 = vadd.f32 0.0, %v855
        %857 = vmatmul.bf16.gmra.mxu0 %v587
        %v858 = vpop.f32.mrf.mxu0
        %v859 = vadd.f32 0.0, %v858
        %v860 = vpop.f32.mrf.mxu0
        %v861 = vadd.f32 0.0, %v860
        %862 = vmatmul.bf16.gmra.mxu0 %v591
        %v863 = vpop.f32.mrf.mxu0
        %v864 = vadd.f32 0.0, %v863
        %v865 = vpop.f32.mrf.mxu0
        %v866 = vadd.f32 0.0, %v865
        %867 = vdwg.mxu0
        %868 = vmatpush.bf16.msra.mxu0 %v770
        %869 = vmatpush.bf16.msra.mxu0 %v769
        %870 = vmatpush.bf16.msra.mxu0 %v768
        %871 = vmatpush.bf16.msra.mxu0 %v767
        %872 = vmatpush.bf16.msra.mxu0 %v766
        %873 = vmatpush.bf16.msra.mxu0 %v765
        %874 = vmatpush.bf16.msra.mxu0 %v764
        %875 = vmatpush.bf16.msra.mxu0 %v763
        %876 = vmatmul.bf16.gmra.mxu0 %v564
        %v877 = vpop.f32.mrf.mxu0
        %v878 = vadd.f32 %v829, %v877
        %v879 = vpop.f32.mrf.mxu0
        %v880 = vadd.f32 %v831, %v879
        %881 = vmatmul.bf16.gmra.mxu0 %v568
        %v882 = vpop.f32.mrf.mxu0
        %v883 = vadd.f32 %v834, %v882
        %v884 = vpop.f32.mrf.mxu0
        %v885 = vadd.f32 %v836, %v884
        %886 = vmatmul.bf16.gmra.mxu0 %v572
        %v887 = vpop.f32.mrf.mxu0
        %v888 = vadd.f32 %v839, %v887
        %v889 = vpop.f32.mrf.mxu0
        %v890 = vadd.f32 %v841, %v889
        %891 = vmatmul.bf16.gmra.mxu0 %v576
        %v892 = vpop.f32.mrf.mxu0
        %v893 = vadd.f32 %v844, %v892
        %v894 = vpop.f32.mrf.mxu0
        %v895 = vadd.f32 %v846, %v894
        %896 = vmatmul.bf16.gmra.mxu0 %v580
        %v897 = vpop.f32.mrf.mxu0
        %v898 = vadd.f32 %v849, %v897
        %v899 = vpop.f32.mrf.mxu0
        %v900 = vadd.f32 %v851, %v899
        %901 = vmatmul.bf16.gmra.mxu0 %v584
        %v902 = vpop.f32.mrf.mxu0
        %v903 = vadd.f32 %v854, %v902
        %v904 = vpop.f32.mrf.mxu0
        %v905 = vadd.f32 %v856, %v904
        %906 = vmatmul.bf16.gmra.mxu0 %v588
        %v907 = vpop.f32.mrf.mxu0
        %v908 = vadd.f32 %v859, %v907
        %v909 = vpop.f32.mrf.mxu0
        %v910 = vadd.f32 %v861, %v909
        %911 = vmatmul.bf16.gmra.mxu0 %v592
        %v912 = vpop.f32.mrf.mxu0
        %v913 = vadd.f32 %v864, %v912
        %v914 = vpop.f32.mrf.mxu0
        %v915 = vadd.f32 %v866, %v914
        %916 = vdwg.mxu0
        %917 = vmatpush.bf16.msra.mxu0 %v778
        %918 = vmatpush.bf16.msra.mxu0 %v777
        %919 = vmatpush.bf16.msra.mxu0 %v776
        %920 = vmatpush.bf16.msra.mxu0 %v775
        %921 = vmatpush.bf16.msra.mxu0 %v774
        %922 = vmatpush.bf16.msra.mxu0 %v773
        %923 = vmatpush.bf16.msra.mxu0 %v772
        %924 = vmatpush.bf16.msra.mxu0 %v771
        %925 = vmatmul.bf16.gmra.mxu0 %v565
        %v926 = vpop.f32.mrf.mxu0
        %v927 = vadd.f32 %v878, %v926
        %v928 = vpop.f32.mrf.mxu0
        %v929 = vadd.f32 %v880, %v928
        %930 = vmatmul.bf16.gmra.mxu0 %v569
        %v931 = vpop.f32.mrf.mxu0
        %v932 = vadd.f32 %v883, %v931
        %v933 = vpop.f32.mrf.mxu0
        %v934 = vadd.f32 %v885, %v933
        %935 = vmatmul.bf16.gmra.mxu0 %v573
        %v936 = vpop.f32.mrf.mxu0
        %v937 = vadd.f32 %v888, %v936
        %v938 = vpop.f32.mrf.mxu0
        %v939 = vadd.f32 %v890, %v938
        %940 = vmatmul.bf16.gmra.mxu0 %v577
        %v941 = vpop.f32.mrf.mxu0
        %v942 = vadd.f32 %v893, %v941
        %v943 = vpop.f32.mrf.mxu0
        %v944 = vadd.f32 %v895, %v943
        %945 = vmatmul.bf16.gmra.mxu0 %v581
        %v946 = vpop.f32.mrf.mxu0
        %v947 = vadd.f32 %v898, %v946
        %v948 = vpop.f32.mrf.mxu0
        %v949 = vadd.f32 %v900, %v948
        %950 = vmatmul.bf16.gmra.mxu0 %v585
        %v951 = vpop.f32.mrf.mxu0
        %v952 = vadd.f32 %v903, %v951
        %v953 = vpop.f32.mrf.mxu0
        %v954 = vadd.f32 %v905, %v953
        %955 = vmatmul.bf16.gmra.mxu0 %v589
        %v956 = vpop.f32.mrf.mxu0
        %v957 = vadd.f32 %v908, %v956
        %v958 = vpop.f32.mrf.mxu0
        %v959 = vadd.f32 %v910, %v958
        %960 = vmatmul.bf16.gmra.mxu0 %v593
        %v961 = vpop.f32.mrf.mxu0
        %v962 = vadd.f32 %v913, %v961
        %v963 = vpop.f32.mrf.mxu0
        %v964 = vadd.f32 %v915, %v963
        %965 = vdwg.mxu0
        %966 = vmatpush.bf16.msra.mxu0 %v786
        %967 = vmatpush.bf16.msra.mxu0 %v785
        %968 = vmatpush.bf16.msra.mxu0 %v784
        %969 = vmatpush.bf16.msra.mxu0 %v783
        %970 = vmatpush.bf16.msra.mxu0 %v782
        %971 = vmatpush.bf16.msra.mxu0 %v781
        %972 = vmatpush.bf16.msra.mxu0 %v780
        %973 = vmatpush.bf16.msra.mxu0 %v779
        %974 = vmatmul.bf16.gmra.mxu0 %v566
        %v975 = vpop.f32.mrf.mxu0
        %v976 = vadd.f32 %v927, %v975
        %v977 = vpop.f32.mrf.mxu0
        %v978 = vadd.f32 %v929, %v977
        %979 = vmatmul.bf16.gmra.mxu0 %v570
        %v980 = vpop.f32.mrf.mxu0
        %v981 = vadd.f32 %v932, %v980
        %v982 = vpop.f32.mrf.mxu0
        %v983 = vadd.f32 %v934, %v982
        %984 = vmatmul.bf16.gmra.mxu0 %v574
        %v985 = vpop.f32.mrf.mxu0
        %v986 = vadd.f32 %v937, %v985
        %v987 = vpop.f32.mrf.mxu0
        %v988 = vadd.f32 %v939, %v987
        %989 = vmatmul.bf16.gmra.mxu0 %v578
        %v990 = vpop.f32.mrf.mxu0
        %v991 = vadd.f32 %v942, %v990
        %v992 = vpop.f32.mrf.mxu0
        %v993 = vadd.f32 %v944, %v992
        %994 = vmatmul.bf16.gmra.mxu0 %v582
        %v995 = vpop.f32.mrf.mxu0
        %v996 = vadd.f32 %v947, %v995
        %v997 = vpop.f32.mrf.mxu0
        %v998 = vadd.f32 %v949, %v997
        %999 = vmatmul.bf16.gmra.mxu0 %v586
        %v1000 = vpop.f32.mrf.mxu0
        %v1001 = vadd.f32 %v952, %v1000
        %v1002 = vpop.f32.mrf.mxu0
        %v1003 = vadd.f32 %v954, %v1002
        %1004 = vmatmul.bf16.gmra.mxu0 %v590
        %v1005 = vpop.f32.mrf.mxu0
        %v1006 = vadd.f32 %v957, %v1005
        %v1007 = vpop.f32.mrf.mxu0
        %v1008 = vadd.f32 %v959, %v1007
        %1009 = vmatmul.bf16.gmra.mxu0 %v594
        %v1010 = vpop.f32.mrf.mxu0
        %v1011 = vadd.f32 %v962, %v1010
        %v1012 = vpop.f32.mrf.mxu0
        %v1013 = vadd.f32 %v964, %v1012
        %1014 = vdwg.mxu0
        %v1015 = vadd.f32 %v355, %v976
        %v1016 = vadd.f32 %v356, %v978
        %v1017 = vadd.f32 %v357, %v981
        %v1018 = vadd.f32 %v358, %v983
        %v1019 = vadd.f32 %v359, %v986
        %v1020 = vadd.f32 %v360, %v988
        %v1021 = vadd.f32 %v361, %v991
        %v1022 = vadd.f32 %v362, %v993
        %v1023 = vadd.f32 %v363, %v996
        %v1024 = vadd.f32 %v364, %v998
        %v1025 = vadd.f32 %v365, %v1001
        %v1026 = vadd.f32 %v366, %v1003
        %v1027 = vadd.f32 %v367, %v1006
        %v1028 = vadd.f32 %v368, %v1008
        %v1029 = vadd.f32 %v369, %v1011
        %v1030 = vadd.f32 %v370, %v1013
        %1031 = vst [vmem:[#allocation2] sm:$0xff] %v1015
        %1032 = vst [vmem:[#allocation2 + $0x8] sm:$0xff] %v1016
        %1033 = vst [vmem:[#allocation2 + $0x10] sm:$0xff] %v1017
        %1034 = vst [vmem:[#allocation2 + $0x18] sm:$0xff] %v1018
        %1035 = vst [vmem:[#allocation2 + $0x20] sm:$0xff] %v1019
        %1036 = vst [vmem:[#allocation2 + $0x28] sm:$0xff] %v1020
        %1037 = vst [vmem:[#allocation2 + $0x30] sm:$0xff] %v1021
        %1038 = vst [vmem:[#allocation2 + $0x38] sm:$0xff] %v1022
        %1039 = vst [vmem:[#allocation2 + $0x40] sm:$0xff] %v1023
        %1040 = vst [vmem:[#allocation2 + $0x48] sm:$0xff] %v1024
        %1041 = vst [vmem:[#allocation2 + $0x50] sm:$0xff] %v1025
        %1042 = vst [vmem:[#allocation2 + $0x58] sm:$0xff] %v1026
        %1043 = vst [vmem:[#allocation2 + $0x60] sm:$0xff] %v1027
        %1044 = vst [vmem:[#allocation2 + $0x68] sm:$0xff] %v1028
        %1045 = vst [vmem:[#allocation2 + $0x70] sm:$0xff] %v1029
        %1046 = vst [vmem:[#allocation2 + $0x78] sm:$0xff] %v1030
        %p1047 = scmp.eq.s32.totalorder %s21, 1
        // Predicated region
        $region60: #{discriminator_forward.9} parent=50 // pred_check
          %p1048 = pneg %p1047
        $region61: #{discriminator_forward.9} parent=50 // pred_check_branch
          %1050 = sbr.rel (%p1048) target = $region63
        $region62: #{discriminator_forward.9} parent=50 // pred_region
          %v1051 = vld [vmem:[#allocation2] sm:$0xff]
          %v1052 = vld [vmem:[#allocation2 + $0x8] sm:$0xff]
          %v1053 = vld [vmem:[#allocation2 + $0x10] sm:$0xff]
          %v1054 = vld [vmem:[#allocation2 + $0x18] sm:$0xff]
          %v1055 = vld [vmem:[#allocation2 + $0x20] sm:$0xff]
          %v1056 = vld [vmem:[#allocation2 + $0x28] sm:$0xff]
          %v1057 = vld [vmem:[#allocation2 + $0x30] sm:$0xff]
          %v1058 = vld [vmem:[#allocation2 + $0x38] sm:$0xff]
          %v1059 = vld [vmem:[#allocation2 + $0x40] sm:$0xff]
          %v1060 = vld [vmem:[#allocation2 + $0x48] sm:$0xff]
          %v1061 = vld [vmem:[#allocation2 + $0x50] sm:$0xff]
          %v1062 = vld [vmem:[#allocation2 + $0x58] sm:$0xff]
          %v1063 = vld [vmem:[#allocation2 + $0x60] sm:$0xff]
          %v1064 = vld [vmem:[#allocation2 + $0x68] sm:$0xff]
          %v1065 = vld [vmem:[#allocation2 + $0x70] sm:$0xff]
          %v1066 = vld [vmem:[#allocation2 + $0x78] sm:$0xff]
          %v1067 = vld [vmem:[%s325] sm:$0x1]
          %v1069 = vperm.slane %v1067, 0
          %v1071 = vadd.f32 %v1051, %v1069
          %v1072 = vadd.f32 %v1052, %v1069
          %v1073 = vadd.f32 %v1053, %v1069
          %v1074 = vadd.f32 %v1054, %v1069
          %v1075 = vadd.f32 %v1055, %v1069
          %v1076 = vadd.f32 %v1056, %v1069
          %v1077 = vadd.f32 %v1057, %v1069
          %v1078 = vadd.f32 %v1058, %v1069
          %v1079 = vadd.f32 %v1059, %v1069
          %v1080 = vadd.f32 %v1060, %v1069
          %v1081 = vadd.f32 %v1061, %v1069
          %v1082 = vadd.f32 %v1062, %v1069
          %v1083 = vadd.f32 %v1063, %v1069
          %v1084 = vadd.f32 %v1064, %v1069
          %v1085 = vadd.f32 %v1065, %v1069
          %v1086 = vadd.f32 %v1066, %v1069
          %v1087 = vpack.c.bf16 %v1071, %v1071
          %v1088 = vpack.c.bf16 %v1072, %v1072
          %v1089 = vpack.c.bf16 %v1073, %v1073
          %v1090 = vpack.c.bf16 %v1074, %v1074
          %v1091 = vpack.c.bf16 %v1075, %v1075
          %v1092 = vpack.c.bf16 %v1076, %v1076
          %v1093 = vpack.c.bf16 %v1077, %v1077
          %v1094 = vpack.c.bf16 %v1078, %v1078
          %v1095 = vpack.c.bf16 %v1079, %v1079
          %v1096 = vpack.c.bf16 %v1080, %v1080
          %v1097 = vpack.c.bf16 %v1081, %v1081
          %v1098 = vpack.c.bf16 %v1082, %v1082
          %v1099 = vpack.c.bf16 %v1083, %v1083
          %v1100 = vpack.c.bf16 %v1084, %v1084
          %v1101 = vpack.c.bf16 %v1085, %v1085
          %v1102 = vpack.c.bf16 %v1086, %v1086
          %1103 = vst [vmem:[%s333] sm:$0xf] %v1087
          %1104 = vst [vmem:[%s333 + $0x4] sm:$0xf] %v1088
          %1105 = vst [vmem:[%s333 + $0x8] sm:$0xf] %v1089
          %1106 = vst [vmem:[%s333 + $0xc] sm:$0xf] %v1090
          %1107 = vst [vmem:[%s333 + $0x10] sm:$0xf] %v1091
          %1108 = vst [vmem:[%s333 + $0x14] sm:$0xf] %v1092
          %1109 = vst [vmem:[%s333 + $0x18] sm:$0xf] %v1093
          %1110 = vst [vmem:[%s333 + $0x1c] sm:$0xf] %v1094
          %1111 = vst [vmem:[%s333 + $0x20] sm:$0xf] %v1095
          %1112 = vst [vmem:[%s333 + $0x24] sm:$0xf] %v1096
          %1113 = vst [vmem:[%s333 + $0x28] sm:$0xf] %v1097
          %1114 = vst [vmem:[%s333 + $0x2c] sm:$0xf] %v1098
          %1115 = vst [vmem:[%s333 + $0x30] sm:$0xf] %v1099
          %1116 = vst [vmem:[%s333 + $0x34] sm:$0xf] %v1100
          %1117 = vst [vmem:[%s333 + $0x38] sm:$0xf] %v1101
          %1118 = vst [vmem:[%s333 + $0x3c] sm:$0xf] %v1102
        $region63: #{discriminator_forward.9} parent=50 // pred_fallthru
          _
        %s1119 = smul.u32 16, %s19
        %p1120 = scmp.lt.s32.totalorder %s1119, 15
        %s1121 = scalar_select %p1120, %s1119, 15
        %p1122 = scmp.lt.s32.totalorder %s20, 0
        %s1123 = scalar_select %p1122, %s20, 0
        %s1124 = sadd.s32 %s1123, %s1121
        %s1125 = smul.addr %s1124, 4
        %s1126 = scalar_lea.vmem %s3, %s1125
        // Predicated region
        $region64: #{discriminator_forward.9} parent=50 // pred_check
          %p1127 = pneg %p135
        $region65: #{discriminator_forward.9} parent=50 // pred_check_branch
          %1129 = sbr.rel (%p1127) target = $region67
        $region66: #{discriminator_forward.9} parent=50 // pred_region
          %s1130 = smul.u32 16, %s19
        $region67: #{discriminator_forward.9} parent=50 // pred_fallthru
          _
        // Predicated region
        $region68: #{discriminator_forward.9} parent=50 // pred_check
          %p1131 = pneg %p135
        $region69: #{discriminator_forward.9} parent=50 // pred_check_branch
          %1133 = sbr.rel (%p1131) target = $region71
        $region70: #{discriminator_forward.9} parent=50 // pred_region
          %s1134 = smul.u32 16, %s19
          %p1135 = scmp.lt.s32.totalorder %s1134, 15
          %s1136 = scalar_select %p1135, %s1134, 15
          %p1137 = scmp.lt.s32.totalorder %s20, 0
          %s1138 = scalar_select %p1137, %s20, 0
          %s1139 = sadd.s32 %s1138, %s1136
          %s1140 = smul.addr %s1139, 4
          %s1141 = scalar_lea.vmem %s3, %s1140
        $region71: #{discriminator_forward.9} parent=50 // pred_fallthru
          _
      $region51: #{discriminator_forward.9} parent=5 // pred_fallthru
        _
      %p1142 = scmp.le.s32.totalorder 2, %s9
      // Predicated region
      $region72: #{discriminator_forward.9} parent=5 // pred_check
        %p1143 = pneg %p1142
      $region73: #{discriminator_forward.9} parent=5 // pred_check_branch
        %1145 = sbr.rel (%p1143) target = $region75
      $region74: #{discriminator_forward.9} parent=5 // pred_region
        %s1146 = ssub.s32 %s9, 2
      $region75: #{discriminator_forward.9} parent=5 // pred_fallthru
        _
    $region6: #{discriminator_forward.9} parent=1 // loop_footer
      %s13 = sadd.s32 1, %s9
    $region7: #{discriminator_forward.9} parent=1 // loop_footer_branch
      %8 = sbr.rel target = $region3
    $region8: #{discriminator_forward.9} parent=1 // loop_exit
      _

// kernel: discriminator_forward.10
$region0: #{discriminator_forward.10}
  #allocation0 [shape = 'u32[]', space=smem, size = 0x4, offset = 0x4, fixed_abs, tag = 'smem constant byte address 0x4 - core index']
  #allocation1 [shape = 'u32[72,128]{1,0:T(1,128)}', space=vmem, size = 0x9000, scoped, tag = 'internal scratch']
  %s0 = inlined_call_operand.vmem [shape: bf16[2,64,128], index: 0, kind: input, shape index: {}]
  %s1 = inlined_call_operand.vmem [shape: bf16[2,64,128], index: 1, kind: output, shape index: {}]
  %s2 = sld [smem:[#allocation0]]
  $region37: #{discriminator_forward.10} parent=0
    _
  %s4 = ssub.s32 1, %s2
  %s5 = scalar_select 0, %s4, %s2
  loop: start=0, step=1, limit=4
  $region2: #{discriminator_forward.10} parent=0 // loop_pre_header
    _
  $region3: #{discriminator_forward.10} parent=0 // loop_header
    %s7 = sphi 0, %s11
    %p8 = scmp.ge.s32.totalorder %s7, 4
    %s14 = sphi 0, %s26
    %s15 = sphi 0, %s22
    %s16 = sphi 0, %s14
    %s17 = sphi 0, %s15
    %s18 = sphi 0, %s16
    %s19 = sphi 0, %s17
    %s31 = sphi 0, %s33
    %s34 = sphi 0, %s31
    %s35 = sphi 0, %s34
    %s51 = sphi 0, %s35
    %s59 = sphi 0, %s61
    %s62 = sphi 0, %s59
    %s63 = sphi 0, %s62
    %s79 = sphi 0, %s63
  $region4: #{discriminator_forward.10} parent=0 // loop_header_branch
    %10 = sbr.rel (%p8) target = $region8
  $region5: #{discriminator_forward.10} parent=0 // loop_body
    %s12 = ssub.s32 %s7, 1
    %s13 = ssub.s32 %s7, 2
    %s20 = sadd.s32 1, %s15
    %p21 = scmp.ge.s32.totalorder %s20, 1
    %s22 = scalar_select %p21, 0, %s20
    %s23 = sadd.s32 1, %s14
    %s24 = scalar_select %p21, %s23, %s14
    %p25 = scmp.ge.s32.totalorder %s24, 2
    %s26 = scalar_select %p25, 0, %s24
    %s27 = ssub.s32 %s14, %s26
    %s28 = ssub.s32 %s15, %s22
    %s29 = sor.u32 %s27, %s28
    %p30 = scmp.eq.s32.totalorder %s29, 0
    %s32 = sadd.s32 %s31, 1
    %s33 = scalar_select %p30, %s31, %s32
    %p36 = pneg %p30
    %p37 = scmp.eq.s32.totalorder %s7, 1
    %p38 = por %p36, %p37
    %p39 = scmp.ne.s32.totalorder %s31, %s34
    %p40 = scmp.eq.s32.totalorder %s7, 0
    %p41 = por %p39, %p40
    %p42 = scmp.ne.s32.totalorder %s31, %s34
    %p43 = scmp.eq.s32.totalorder %s12, 1
    %p44 = por %p42, %p43
    %p45 = scmp.ne.s32.totalorder %s34, %s35
    %p46 = scmp.eq.s32.totalorder %s12, 0
    %p47 = por %p45, %p46
    %p48 = scmp.ne.s32.totalorder %s34, %s35
    %p49 = scmp.eq.s32.totalorder %s13, 1
    %p50 = por %p48, %p49
    %p52 = scmp.ne.s32.totalorder %s35, %s51
    %p53 = scmp.eq.s32.totalorder %s13, 0
    %p54 = por %p52, %p53
    %s55 = ssub.s32 %s14, %s26
    %s56 = ssub.s32 %s15, %s22
    %s57 = sor.u32 %s55, %s56
    %p58 = scmp.eq.s32.totalorder %s57, 0
    %s60 = sadd.s32 %s59, 1
    %s61 = scalar_select %p58, %s59, %s60
    %p64 = pneg %p58
    %p65 = scmp.eq.s32.totalorder %s7, 1
    %p66 = por %p64, %p65
    %p67 = scmp.ne.s32.totalorder %s59, %s62
    %p68 = scmp.eq.s32.totalorder %s7, 0
    %p69 = por %p67, %p68
    %p70 = scmp.ne.s32.totalorder %s59, %s62
    %p71 = scmp.eq.s32.totalorder %s12, 1
    %p72 = por %p70, %p71
    %p73 = scmp.ne.s32.totalorder %s62, %s63
    %p74 = scmp.eq.s32.totalorder %s12, 0
    %p75 = por %p73, %p74
    %p76 = scmp.ne.s32.totalorder %s62, %s63
    %p77 = scmp.eq.s32.totalorder %s13, 1
    %p78 = por %p76, %p77
    %p80 = scmp.ne.s32.totalorder %s63, %s79
    %p81 = scmp.eq.s32.totalorder %s13, 0
    %p82 = por %p80, %p81
    %p83 = scmp.le.s32.totalorder 1, %s7
    %p84 = scmp.lt.s32.totalorder %s7, 3
    %p85 = pnand %p83, %p84
    %p86 = pneg %p85
    // Predicated region
    $region9: #{discriminator_forward.10} parent=5 // pred_check
      _
    $region10: #{discriminator_forward.10} parent=5 // pred_check_branch
      %88 = sbr.rel (%p85) target = $region12
    $region11: #{discriminator_forward.10} parent=5 // pred_region
      %s89 = ssub.s32 %s7, 1
    $region12: #{discriminator_forward.10} parent=5 // pred_fallthru
      _
    %p90 = scmp.lt.s32.totalorder %s7, 2
    // Predicated region
    $region13: #{discriminator_forward.10} parent=5 // pred_check
      %p91 = pneg %p90
    $region14: #{discriminator_forward.10} parent=5 // pred_check_branch
      %93 = sbr.rel (%p91) target = $region16
    $region15: #{discriminator_forward.10} parent=5 // pred_region
      // Predicated region
      $region17: #{discriminator_forward.10} parent=15 // pred_check
        %p94 = pneg %p41
      $region18: #{discriminator_forward.10} parent=15 // pred_check_branch
        %96 = sbr.rel (%p94) target = $region20
      $region19: #{discriminator_forward.10} parent=15 // pred_region
        %p97 = scmp.lt.s32.totalorder %s14, 1
        %s98 = scalar_select %p97, %s14, 1
        %p99 = scmp.lt.s32.totalorder %s15, 0
        %s100 = scalar_select %p99, %s15, 0
        %s101 = smul.addr %s98, 8
        %s102 = sadd.s32 %s100, %s101
        %s103 = smul.addr %s102, 4
        %s104 = scalar_lea.vmem %s0, %s103
      $region20: #{discriminator_forward.10} parent=15 // pred_fallthru
        _
    $region16: #{discriminator_forward.10} parent=5 // pred_fallthru
      _
    %p105 = scmp.le.s32.totalorder 1, %s7
    %p106 = scmp.lt.s32.totalorder %s7, 3
    %p107 = pnand %p105, %p106
    %p108 = pneg %p107
    // Predicated region
    $region21: #{discriminator_forward.10} parent=5 // pred_check
      _
    $region22: #{discriminator_forward.10} parent=5 // pred_check_branch
      %110 = sbr.rel (%p107) target = $region24
    $region23: #{discriminator_forward.10} parent=5 // pred_region
      %s111 = ssub.s32 %s7, 1
      %p112 = scmp.lt.s32.totalorder %s16, 1
      %s113 = scalar_select %p112, %s16, 1
      %p114 = scmp.lt.s32.totalorder %s17, 0
      %s115 = scalar_select %p114, %s17, 0
      %s116 = smul.addr %s113, 8
      %s117 = sadd.s32 %s115, %s116
      %s118 = smul.addr %s117, 4
      %s119 = scalar_lea.vmem %s0, %s118
      %p120 = pneg %p47
      %p121 = pneg %p44
      %p122 = pneg %p75
      %p123 = pneg %p72
      %p124 = scmp.lt.s32.totalorder %s16, 1
      %s125 = scalar_select %p124, %s16, 1
      %p126 = scmp.lt.s32.totalorder %s17, 0
      %s127 = scalar_select %p126, %s17, 0
      %s128 = smul.addr %s125, 8
      %s129 = sadd.s32 %s127, %s128
      %s130 = smul.addr %s129, 4
      %s131 = scalar_lea.vmem %s1, %s130
      %p132 = scmp.lt.s32.totalorder %s16, 1
      %s133 = scalar_select %p132, %s16, 1
      %p134 = scmp.lt.s32.totalorder %s17, 0
      %s135 = scalar_select %p134, %s17, 0
      %s136 = smul.addr %s133, 8
      %s137 = sadd.s32 %s135, %s136
      %s138 = smul.addr %s137, 4
      %s139 = scalar_lea.vmem %s0, %s138
      %p140 = scmp.lt.s32.totalorder %s16, 1
      %s141 = scalar_select %p140, %s16, 1
      %p142 = scmp.lt.s32.totalorder %s17, 0
      %s143 = scalar_select %p142, %s17, 0
      %s144 = smul.addr %s141, 8
      %s145 = sadd.s32 %s143, %s144
      %s146 = smul.addr %s145, 4
      %s147 = scalar_lea.vmem %s1, %s146
      %v148 = vld [vmem:[%s139] sm:$0xf]
      %v149 = vld [vmem:[%s139 + $0x4] sm:$0xf]
      %v150 = vld [vmem:[%s139 + $0x8] sm:$0xf]
      %v151 = vld [vmem:[%s139 + $0xc] sm:$0xf]
      %v152 = vld [vmem:[%s139 + $0x10] sm:$0xf]
      %v153 = vld [vmem:[%s139 + $0x14] sm:$0xf]
      %v154 = vld [vmem:[%s139 + $0x18] sm:$0xf]
      %v155 = vld [vmem:[%s139 + $0x1c] sm:$0xf]
      %v156 = vunpack.c.l.bf16 %v148
      %v157 = vunpack.c.l.bf16 %v149
      %v158 = vunpack.c.l.bf16 %v150
      %v159 = vunpack.c.l.bf16 %v151
      %v160 = vunpack.c.l.bf16 %v152
      %v161 = vunpack.c.l.bf16 %v153
      %v162 = vunpack.c.l.bf16 %v154
      %v163 = vunpack.c.l.bf16 %v155
      %v164 = vadd.f32 %v156, %v157
      %v165 = vadd.f32 %v164, %v158
      %v166 = vadd.f32 %v165, %v159
      %v167 = vadd.f32 %v166, %v160
      %v168 = vadd.f32 %v167, %v161
      %v169 = vadd.f32 %v168, %v162
      %v170 = vadd.f32 %v169, %v163
      %v171 = vrot.slane %v170, 4
      %v172 = vadd.f32 %v170, %v171
      %v173 = vrot.slane %v172, 2
      %v174 = vadd.f32 %v172, %v173
      %v175 = vrot.slane %v174, 1
      %v176 = vadd.f32 %v174, %v175
      %v177 = vrcp.pop 64.0
      %v178 = vmul.f32 64.0, %v177
      %v179 = vsub.f32 1.0, %v178
      %v180 = vmul.f32 %v177, %v179
      %v181 = vadd.f32 %v177, %v180
      %vm182 = vweird.f32 %v177
      %v183 = vsel %vm182, %v177, %v181
      %v184 = vmul.f32 %v176, %v183
      %v185 = vmul.f32 %v156, %v156
      %v186 = vmul.f32 %v157, %v157
      %v187 = vmul.f32 %v158, %v158
      %v188 = vmul.f32 %v159, %v159
      %v189 = vmul.f32 %v160, %v160
      %v190 = vmul.f32 %v161, %v161
      %v191 = vmul.f32 %v162, %v162
      %v192 = vmul.f32 %v163, %v163
      %v193 = vadd.f32 %v185, %v186
      %v194 = vadd.f32 %v193, %v187
      %v195 = vadd.f32 %v194, %v188
      %v196 = vadd.f32 %v195, %v189
      %v197 = vadd.f32 %v196, %v190
      %v198 = vadd.f32 %v197, %v191
      %v199 = vadd.f32 %v198, %v192
      %v200 = vrot.slane %v199, 4
      %v201 = vadd.f32 %v199, %v200
      %v202 = vrot.slane %v201, 2
      %v203 = vadd.f32 %v201, %v202
      %v204 = vrot.slane %v203, 1
      %v205 = vadd.f32 %v203, %v204
      %v206 = vmul.f32 %v205, %v183
      %v207 = vmul.f32 %v184, %v184
      %v208 = vsub.f32 %v206, %v207
      %v209 = vmax.f32 %v208, 0.0
      %v210 = vsub.f32 %v156, %v184
      %v211 = vsub.f32 %v157, %v184
      %v212 = vsub.f32 %v158, %v184
      %v213 = vsub.f32 %v159, %v184
      %v214 = vsub.f32 %v160, %v184
      %v215 = vsub.f32 %v161, %v184
      %v216 = vsub.f32 %v162, %v184
      %v217 = vsub.f32 %v163, %v184
      %v218 = vadd.f32 %v209, 1e-05
      %v219 = vrsqrt.pop %v218
      %v220 = vmul.f32 %v219, %v218
      %v221 = vmul.f32 %v220, %v219
      %v222 = vmul.f32 0.5, %v221
      %v223 = vsub.f32 1.5, %v222
      %v224 = vmul.f32 %v219, %v223
      %vm225 = vweird.f32 %v218
      %vm226 = vweird.f32 %v219
      %vm227 = vmor %vm225, %vm226
      %v228 = vsel %vm227, %v219, %v224
      %v229 = vmul.f32 %v210, %v228
      %v230 = vmul.f32 %v211, %v228
      %v231 = vmul.f32 %v212, %v228
      %v232 = vmul.f32 %v213, %v228
      %v233 = vmul.f32 %v214, %v228
      %v234 = vmul.f32 %v215, %v228
      %v235 = vmul.f32 %v216, %v228
      %v236 = vmul.f32 %v217, %v228
      %vm237 = vcmp.ge.f32.partialorder %v229, 0.0
      %vm238 = vcmp.ge.f32.partialorder %v230, 0.0
      %vm239 = vcmp.ge.f32.partialorder %v231, 0.0
      %vm240 = vcmp.ge.f32.partialorder %v232, 0.0
      %vm241 = vcmp.ge.f32.partialorder %v233, 0.0
      %vm242 = vcmp.ge.f32.partialorder %v234, 0.0
      %vm243 = vcmp.ge.f32.partialorder %v235, 0.0
      %vm244 = vcmp.ge.f32.partialorder %v236, 0.0
      %v245 = vmul.f32 %v229, 0.2
      %v246 = vmul.f32 %v230, 0.2
      %v247 = vmul.f32 %v231, 0.2
      %v248 = vmul.f32 %v232, 0.2
      %v249 = vmul.f32 %v233, 0.2
      %v250 = vmul.f32 %v234, 0.2
      %v251 = vmul.f32 %v235, 0.2
      %v252 = vmul.f32 %v236, 0.2
      %v253 = vsel %vm237, %v229, %v245
      %v254 = vsel %vm238, %v230, %v246
      %v255 = vsel %vm239, %v231, %v247
      %v256 = vsel %vm240, %v232, %v248
      %v257 = vsel %vm241, %v233, %v249
      %v258 = vsel %vm242, %v234, %v250
      %v259 = vsel %vm243, %v235, %v251
      %v260 = vsel %vm244, %v236, %v252
      %v261 = vpack.c.bf16 %v253, %v253
      %v262 = vpack.c.bf16 %v254, %v254
      %v263 = vpack.c.bf16 %v255, %v255
      %v264 = vpack.c.bf16 %v256, %v256
      %v265 = vpack.c.bf16 %v257, %v257
      %v266 = vpack.c.bf16 %v258, %v258
      %v267 = vpack.c.bf16 %v259, %v259
      %v268 = vpack.c.bf16 %v260, %v260
      %269 = vst [vmem:[%s147] sm:$0xf] %v261
      %270 = vst [vmem:[%s147 + $0x4] sm:$0xf] %v262
      %271 = vst [vmem:[%s147 + $0x8] sm:$0xf] %v263
      %272 = vst [vmem:[%s147 + $0xc] sm:$0xf] %v264
      %273 = vst [vmem:[%s147 + $0x10] sm:$0xf] %v265
      %274 = vst [vmem:[%s147 + $0x14] sm:$0xf] %v266
      %275 = vst [vmem:[%s147 + $0x18] sm:$0xf] %v267
      %276 = vst [vmem:[%s147 + $0x1c] sm:$0xf] %v268
      %p277 = scmp.lt.s32.totalorder %s16, 1
      %s278 = scalar_select %p277, %s16, 1
      %p279 = scmp.lt.s32.totalorder %s17, 0
      %s280 = scalar_select %p279, %s17, 0
      %s281 = smul.addr %s278, 8
      %s282 = sadd.s32 %s280, %s281
      %s283 = smul.addr %s282, 4
      %s284 = scalar_lea.vmem %s1, %s283
      // Predicated region
      $region25: #{discriminator_forward.10} parent=23 // pred_check
        %p285 = pneg %p72
      $region26: #{discriminator_forward.10} parent=23 // pred_check_branch
        %287 = sbr.rel (%p285) target = $region28
      $region27: #{discriminator_forward.10} parent=23 // pred_region
        _
      $region28: #{discriminator_forward.10} parent=23 // pred_fallthru
        _
    $region24: #{discriminator_forward.10} parent=5 // pred_fallthru
      _
    %p288 = scmp.le.s32.totalorder 2, %s7
    // Predicated region
    $region29: #{discriminator_forward.10} parent=5 // pred_check
      %p289 = pneg %p288
    $region30: #{discriminator_forward.10} parent=5 // pred_check_branch
      %291 = sbr.rel (%p289) target = $region32
    $region31: #{discriminator_forward.10} parent=5 // pred_region
      %s292 = ssub.s32 %s7, 2
      // Predicated region
      $region33: #{discriminator_forward.10} parent=31 // pred_check
        %p293 = pneg %p78
      $region34: #{discriminator_forward.10} parent=31 // pred_check_branch
        %295 = sbr.rel (%p293) target = $region36
      $region35: #{discriminator_forward.10} parent=31 // pred_region
        %p296 = scmp.lt.s32.totalorder %s18, 1
        %s297 = scalar_select %p296, %s18, 1
        %p298 = scmp.lt.s32.totalorder %s19, 0
        %s299 = scalar_select %p298, %s19, 0
        %s300 = smul.addr %s297, 8
        %s301 = sadd.s32 %s299, %s300
        %s302 = smul.addr %s301, 4
        %s303 = scalar_lea.vmem %s1, %s302
      $region36: #{discriminator_forward.10} parent=31 // pred_fallthru
        _
    $region32: #{discriminator_forward.10} parent=5 // pred_fallthru
      _
  $region6: #{discriminator_forward.10} parent=0 // loop_footer
    %s11 = sadd.s32 1, %s7
  $region7: #{discriminator_forward.10} parent=0 // loop_footer_branch
    %6 = sbr.rel target = $region3
  $region8: #{discriminator_forward.10} parent=0 // loop_exit
    _

// kernel: discriminator_forward.12
$region0: #{discriminator_forward.12}
  #allocation0 [shape = 'u32[]', space=smem, size = 0x4, offset = 0x4, fixed_abs, tag = 'smem constant byte address 0x4 - core index']
  #allocation1 [shape = 'u32[72,128]{1,0:T(1,128)}', space=vmem, size = 0x9000, scoped, tag = 'internal scratch']
  %s0 = inlined_call_operand.vmem [shape: bf16[2,16,256], index: 0, kind: input, shape index: {}]
  %s1 = inlined_call_operand.vmem [shape: bf16[2,16,256], index: 1, kind: output, shape index: {}]
  %s2 = sld [smem:[#allocation0]]
  $region115: #{discriminator_forward.12} parent=0
    _
  %s4 = ssub.s32 1, %s2
  %s5 = scalar_select 0, %s4, %s2
  $region1: #{discriminator_forward.12} parent=0
    #allocation2 [shape = 'u8[8192]{0}', space=vmem, size = 0x2000, scoped, tag = 'input window, operand 0']
    #allocation3 [shape = 'u8[8192]{0}', space=vmem, size = 0x2000, scoped, tag = 'output window, operand 0']
    loop: start=0, step=1, limit=6
    $region2: #{discriminator_forward.12} parent=1 // loop_pre_header
      _
    $region3: #{discriminator_forward.12} parent=1 // loop_header
      %s7 = sphi 0, %s11
      %p8 = scmp.ge.s32.totalorder %s7, 6
      %s14 = sphi 0, %s26
      %s15 = sphi 0, %s22
      %s16 = sphi 0, %s14
      %s17 = sphi 0, %s15
      %s18 = sphi 0, %s16
      %s19 = sphi 0, %s17
      %s31 = sphi 0, %s33
      %s34 = sphi 0, %s31
      %s35 = sphi 0, %s34
      %s51 = sphi 0, %s35
      %s59 = sphi 0, %s61
      %s62 = sphi 0, %s59
      %s63 = sphi 0, %s62
      %s79 = sphi 0, %s63
    $region4: #{discriminator_forward.12} parent=1 // loop_header_branch
      %10 = sbr.rel (%p8) target = $region8
    $region5: #{discriminator_forward.12} parent=1 // loop_body
      %s12 = ssub.s32 %s7, 1
      %s13 = ssub.s32 %s7, 2
      %s20 = sadd.s32 1, %s15
      %p21 = scmp.ge.s32.totalorder %s20, 2
      %s22 = scalar_select %p21, 0, %s20
      %s23 = sadd.s32 1, %s14
      %s24 = scalar_select %p21, %s23, %s14
      %p25 = scmp.ge.s32.totalorder %s24, 2
      %s26 = scalar_select %p25, 0, %s24
      %s27 = ssub.s32 %s14, %s26
      %s28 = ssub.s32 %s15, %s22
      %s29 = sor.u32 %s27, %s28
      %p30 = scmp.eq.s32.totalorder %s29, 0
      %s32 = sadd.s32 %s31, 1
      %s33 = scalar_select %p30, %s31, %s32
      %p36 = pneg %p30
      %p37 = scmp.eq.s32.totalorder %s7, 3
      %p38 = por %p36, %p37
      %p39 = scmp.ne.s32.totalorder %s31, %s34
      %p40 = scmp.eq.s32.totalorder %s7, 0
      %p41 = por %p39, %p40
      %p42 = scmp.ne.s32.totalorder %s31, %s34
      %p43 = scmp.eq.s32.totalorder %s12, 3
      %p44 = por %p42, %p43
      %p45 = scmp.ne.s32.totalorder %s34, %s35
      %p46 = scmp.eq.s32.totalorder %s12, 0
      %p47 = por %p45, %p46
      %p48 = scmp.ne.s32.totalorder %s34, %s35
      %p49 = scmp.eq.s32.totalorder %s13, 3
      %p50 = por %p48, %p49
      %p52 = scmp.ne.s32.totalorder %s35, %s51
      %p53 = scmp.eq.s32.totalorder %s13, 0
      %p54 = por %p52, %p53
      %s55 = ssub.s32 %s14, %s26
      %s56 = ssub.s32 %s15, %s22
      %s57 = sor.u32 %s55, %s56
      %p58 = scmp.eq.s32.totalorder %s57, 0
      %s60 = sadd.s32 %s59, 1
      %s61 = scalar_select %p58, %s59, %s60
      %p64 = pneg %p58
      %p65 = scmp.eq.s32.totalorder %s7, 3
      %p66 = por %p64, %p65
      %p67 = scmp.ne.s32.totalorder %s59, %s62
      %p68 = scmp.eq.s32.totalorder %s7, 0
      %p69 = por %p67, %p68
      %p70 = scmp.ne.s32.totalorder %s59, %s62
      %p71 = scmp.eq.s32.totalorder %s12, 3
      %p72 = por %p70, %p71
      %p73 = scmp.ne.s32.totalorder %s62, %s63
      %p74 = scmp.eq.s32.totalorder %s12, 0
      %p75 = por %p73, %p74
      %p76 = scmp.ne.s32.totalorder %s62, %s63
      %p77 = scmp.eq.s32.totalorder %s13, 3
      %p78 = por %p76, %p77
      %p80 = scmp.ne.s32.totalorder %s63, %s79
      %p81 = scmp.eq.s32.totalorder %s13, 0
      %p82 = por %p80, %p81
      %p83 = scmp.le.s32.totalorder 1, %s7
      %p84 = scmp.lt.s32.totalorder %s7, 5
      %p85 = pnand %p83, %p84
      %p86 = pneg %p85
      // Predicated region
      $region9: #{discriminator_forward.12} parent=5 // pred_check
        _
      $region10: #{discriminator_forward.12} parent=5 // pred_check_branch
        %88 = sbr.rel (%p85) target = $region12
      $region11: #{discriminator_forward.12} parent=5 // pred_region
        %s89 = ssub.s32 %s7, 1
      $region12: #{discriminator_forward.12} parent=5 // pred_fallthru
        _
      %p90 = scmp.lt.s32.totalorder %s7, 4
      // Predicated region
      $region13: #{discriminator_forward.12} parent=5 // pred_check
        %p91 = pneg %p90
      $region14: #{discriminator_forward.12} parent=5 // pred_check_branch
        %93 = sbr.rel (%p91) target = $region16
      $region15: #{discriminator_forward.12} parent=5 // pred_region
        // Predicated region
        $region17: #{discriminator_forward.12} parent=15 // pred_check
          %p94 = pneg %p41
        $region18: #{discriminator_forward.12} parent=15 // pred_check_branch
          %96 = sbr.rel (%p94) target = $region20
        $region19: #{discriminator_forward.12} parent=15 // pred_region
          %s97 = sand.u32 %s31, 1
          %s98 = sand.u32 %s31, 1
          %s99 = smul.addr %s98, 8
          %s100 = scalar_lea.vmem [#allocation2], %s99
          %s101 = smul.addr %s14, 4
          %s102 = sadd.s32 %s15, %s101
          %s103 = smul.addr %s102, 4
          %s104 = scalar_lea.vmem %s0, %s103
          // Predicated region
          $region21: #{discriminator_forward.12} parent=19 // pred_check
            _
          $region22: #{discriminator_forward.12} parent=19 // pred_check_branch
            %106 = sbr.rel (0) target = $region24
          $region23: #{discriminator_forward.12} parent=19 // pred_region
            // Predicated region
            $region25: #{discriminator_forward.12} parent=23 // pred_check
              _
            $region26: #{discriminator_forward.12} parent=23 // pred_check_branch
              %108 = sbr.rel target = $region28
            $region27: #{discriminator_forward.12} parent=23 // pred_region
              // Predicated region
              $region40: #{discriminator_forward.12} parent=27 // pred_check
                _
              $region41: #{discriminator_forward.12} parent=27 // pred_check_branch
                %126 = sbr.rel (0) target = $region43
              $region42: #{discriminator_forward.12} parent=27 // pred_region
                loop: start=0, step=1, limit=1
                $region44: #{discriminator_forward.12} parent=42 // loop_pre_header
                  _
                $region45: #{discriminator_forward.12} parent=42 // loop_header
                  %s128 = sphi 0, %s132
                  %p129 = scmp.ge.s32.totalorder %s128, 1
                  %s133 = sphi %s104, %s104
                  %s134 = sphi %s100, %s100
                $region46: #{discriminator_forward.12} parent=42 // loop_header_branch
                  %131 = sbr.rel (%p129) target = $region50
                $region47: #{discriminator_forward.12} parent=42 // loop_body
                  _
                $region48: #{discriminator_forward.12} parent=42 // loop_footer
                  %s132 = sadd.s32 1, %s128
                $region49: #{discriminator_forward.12} parent=42 // loop_footer_branch
                  %127 = sbr.rel target = $region45
                $region50: #{discriminator_forward.12} parent=42 // loop_exit
                  _
                %s136 = ssub.s32 16, 1
                loop: start=0, step=1, limit=1
                $region51: #{discriminator_forward.12} parent=42 // loop_pre_header
                  _
                $region52: #{discriminator_forward.12} parent=42 // loop_header
                  %s138 = sphi 0, %s142
                  %p139 = scmp.ge.s32.totalorder %s138, 1
                  %s143 = sphi %s104, %s104
                  %s144 = sphi %s100, %s100
                $region53: #{discriminator_forward.12} parent=42 // loop_header_branch
                  %141 = sbr.rel (%p139) target = $region57
                $region54: #{discriminator_forward.12} parent=42 // loop_body
                  %v145 = vld [vmem:[%s143] sm:%s136]
                  %146 = vst [vmem:[%s144] sm:%s136] %v145
                  %v147 = vld [vmem:[%s143 + $0x8] sm:%s136]
                  %148 = vst [vmem:[%s144 + $0x4] sm:%s136] %v147
                $region55: #{discriminator_forward.12} parent=42 // loop_footer
                  %s142 = sadd.s32 1, %s138
                $region56: #{discriminator_forward.12} parent=42 // loop_footer_branch
                  %137 = sbr.rel target = $region52
                $region57: #{discriminator_forward.12} parent=42 // loop_exit
                  _
              $region43: #{discriminator_forward.12} parent=27 // pred_fallthru
                _
            $region28: #{discriminator_forward.12} parent=23 // pred_fallthru
              _
            // Predicated region
            $region29: #{discriminator_forward.12} parent=23 // pred_check
              _
            $region30: #{discriminator_forward.12} parent=23 // pred_check_branch
              %110 = sbr.rel (0) target = $region32
            $region31: #{discriminator_forward.12} parent=23 // pred_region
              %s112 = ssub.s32 16, 1
              loop: start=0, step=1, limit=1
              $region33: #{discriminator_forward.12} parent=31 // loop_pre_header
                _
              $region34: #{discriminator_forward.12} parent=31 // loop_header
                %s114 = sphi 0, %s118
                %p115 = scmp.ge.s32.totalorder %s114, 1
                %s119 = sphi %s104, %s104
                %s120 = sphi %s100, %s100
              $region35: #{discriminator_forward.12} parent=31 // loop_header_branch
                %117 = sbr.rel (%p115) target = $region39
              $region36: #{discriminator_forward.12} parent=31 // loop_body
                %v121 = vld [vmem:[%s119] sm:%s112]
                %122 = vst [vmem:[%s120] sm:%s112] %v121
                %v123 = vld [vmem:[%s119 + $0x8] sm:%s112]
                %124 = vst [vmem:[%s120 + $0x4] sm:%s112] %v123
              $region37: #{discriminator_forward.12} parent=31 // loop_footer
                %s118 = sadd.s32 1, %s114
              $region38: #{discriminator_forward.12} parent=31 // loop_footer_branch
                %113 = sbr.rel target = $region34
              $region39: #{discriminator_forward.12} parent=31 // loop_exit
                _
            $region32: #{discriminator_forward.12} parent=23 // pred_fallthru
              _
          $region24: #{discriminator_forward.12} parent=19 // pred_fallthru
            _
          %149 = vnop
        $region20: #{discriminator_forward.12} parent=15 // pred_fallthru
          _
      $region16: #{discriminator_forward.12} parent=5 // pred_fallthru
        _
      %p150 = scmp.le.s32.totalorder 1, %s7
      %p151 = scmp.lt.s32.totalorder %s7, 5
      %p152 = pnand %p150, %p151
      %p153 = pneg %p152
      // Predicated region
      $region58: #{discriminator_forward.12} parent=5 // pred_check
        _
      $region59: #{discriminator_forward.12} parent=5 // pred_check_branch
        %155 = sbr.rel (%p152) target = $region61
      $region60: #{discriminator_forward.12} parent=5 // pred_region
        %s156 = ssub.s32 %s7, 1
        %s157 = sand.u32 %s34, 1
        %s158 = sand.u32 %s34, 1
        %s159 = smul.addr %s158, 8
        %s160 = scalar_lea.vmem [#allocation2], %s159
        // Predicated region
        $region62: #{discriminator_forward.12} parent=60 // pred_check
          %p161 = pneg %p47
        $region63: #{discriminator_forward.12} parent=60 // pred_check_branch
          %163 = sbr.rel (%p161) target = $region65
        $region64: #{discriminator_forward.12} parent=60 // pred_region
          _
        $region65: #{discriminator_forward.12} parent=60 // pred_fallthru
          _
        %s164 = sand.u32 %s34, 1
        %s165 = sand.u32 %s34, 1
        %s166 = smul.addr %s165, 8
        %s167 = scalar_lea.vmem [#allocation2], %s166
        %p168 = pneg %p47
        %p169 = pneg %p44
        %p170 = pneg %p75
        %p171 = pneg %p72
        %s172 = sand.u32 %s62, 1
        %s173 = sand.u32 %s62, 1
        %s174 = smul.addr %s173, 8
        %s175 = scalar_lea.vmem [#allocation3], %s174
        %v176 = vld [vmem:[%s160] sm:$0xf]
        %v177 = vld [vmem:[%s160 + $0x4] sm:$0xf]
        %v178 = vunpack.c.l.bf16 %v176
        %v179 = vunpack.c.l.bf16 %v177
        %v180 = vadd.f32 %v178, %v179
        %v181 = vrot.slane %v180, 4
        %v182 = vadd.f32 %v180, %v181
        %v183 = vrot.slane %v182, 2
        %v184 = vadd.f32 %v182, %v183
        %v185 = vrot.slane %v184, 1
        %v186 = vadd.f32 %v184, %v185
        %v187 = vrcp.pop 16.0
        %v188 = vmul.f32 16.0, %v187
        %v189 = vsub.f32 1.0, %v188
        %v190 = vmul.f32 %v187, %v189
        %v191 = vadd.f32 %v187, %v190
        %vm192 = vweird.f32 %v187
        %v193 = vsel %vm192, %v187, %v191
        %v194 = vmul.f32 %v186, %v193
        %v195 = vmul.f32 %v178, %v178
        %v196 = vmul.f32 %v179, %v179
        %v197 = vadd.f32 %v195, %v196
        %v198 = vrot.slane %v197, 4
        %v199 = vadd.f32 %v197, %v198
        %v200 = vrot.slane %v199, 2
        %v201 = vadd.f32 %v199, %v200
        %v202 = vrot.slane %v201, 1
        %v203 = vadd.f32 %v201, %v202
        %v204 = vmul.f32 %v203, %v193
        %v205 = vmul.f32 %v194, %v194
        %v206 = vsub.f32 %v204, %v205
        %v207 = vmax.f32 %v206, 0.0
        %v208 = vsub.f32 %v178, %v194
        %v209 = vsub.f32 %v179, %v194
        %v210 = vadd.f32 %v207, 1e-05
        %v211 = vrsqrt.pop %v210
        %v212 = vmul.f32 %v211, %v210
        %v213 = vmul.f32 %v212, %v211
        %v214 = vmul.f32 0.5, %v213
        %v215 = vsub.f32 1.5, %v214
        %v216 = vmul.f32 %v211, %v215
        %vm217 = vweird.f32 %v210
        %vm218 = vweird.f32 %v211
        %vm219 = vmor %vm217, %vm218
        %v220 = vsel %vm219, %v211, %v216
        %v221 = vmul.f32 %v208, %v220
        %v222 = vmul.f32 %v209, %v220
        %vm223 = vcmp.ge.f32.partialorder %v221, 0.0
        %vm224 = vcmp.ge.f32.partialorder %v222, 0.0
        %v225 = vmul.f32 %v221, 0.2
        %v226 = vmul.f32 %v222, 0.2
        %v227 = vsel %vm223, %v221, %v225
        %v228 = vsel %vm224, %v222, %v226
        %v229 = vpack.c.bf16 %v227, %v227
        %v230 = vpack.c.bf16 %v228, %v228
        %231 = vst [vmem:[%s175] sm:$0xf] %v229
        %232 = vst [vmem:[%s175 + $0x4] sm:$0xf] %v230
        %s233 = sand.u32 %s62, 1
        %s234 = sand.u32 %s62, 1
        %s235 = smul.addr %s234, 8
        %s236 = scalar_lea.vmem [#allocation3], %s235
        // Predicated region
        $region66: #{discriminator_forward.12} parent=60 // pred_check
          %p237 = pneg %p72
        $region67: #{discriminator_forward.12} parent=60 // pred_check_branch
          %239 = sbr.rel (%p237) target = $region69
        $region68: #{discriminator_forward.12} parent=60 // pred_region
          %s240 = smul.addr %s16, 4
          %s241 = sadd.s32 %s17, %s240
          %s242 = smul.addr %s241, 4
          %s243 = scalar_lea.vmem %s1, %s242
          // Predicated region
          $region70: #{discriminator_forward.12} parent=68 // pred_check
            _
          $region71: #{discriminator_forward.12} parent=68 // pred_check_branch
            %245 = sbr.rel (0) target = $region73
          $region72: #{discriminator_forward.12} parent=68 // pred_region
            // Predicated region
            $region74: #{discriminator_forward.12} parent=72 // pred_check
              _
            $region75: #{discriminator_forward.12} parent=72 // pred_check_branch
              %247 = sbr.rel target = $region77
            $region76: #{discriminator_forward.12} parent=72 // pred_region
              // Predicated region
              $region89: #{discriminator_forward.12} parent=76 // pred_check
                _
              $region90: #{discriminator_forward.12} parent=76 // pred_check_branch
                %265 = sbr.rel (0) target = $region92
              $region91: #{discriminator_forward.12} parent=76 // pred_region
                loop: start=0, step=1, limit=1
                $region93: #{discriminator_forward.12} parent=91 // loop_pre_header
                  _
                $region94: #{discriminator_forward.12} parent=91 // loop_header
                  %s267 = sphi 0, %s271
                  %p268 = scmp.ge.s32.totalorder %s267, 1
                  %s272 = sphi %s236, %s236
                  %s273 = sphi %s243, %s243
                $region95: #{discriminator_forward.12} parent=91 // loop_header_branch
                  %270 = sbr.rel (%p268) target = $region99
                $region96: #{discriminator_forward.12} parent=91 // loop_body
                  _
                $region97: #{discriminator_forward.12} parent=91 // loop_footer
                  %s271 = sadd.s32 1, %s267
                $region98: #{discriminator_forward.12} parent=91 // loop_footer_branch
                  %266 = sbr.rel target = $region94
                $region99: #{discriminator_forward.12} parent=91 // loop_exit
                  _
                %s275 = ssub.s32 16, 1
                loop: start=0, step=1, limit=1
                $region100: #{discriminator_forward.12} parent=91 // loop_pre_header
                  _
                $region101: #{discriminator_forward.12} parent=91 // loop_header
                  %s277 = sphi 0, %s281
                  %p278 = scmp.ge.s32.totalorder %s277, 1
                  %s282 = sphi %s236, %s236
                  %s283 = sphi %s243, %s243
                $region102: #{discriminator_forward.12} parent=91 // loop_header_branch
                  %280 = sbr.rel (%p278) target = $region106
                $region103: #{discriminator_forward.12} parent=91 // loop_body
                  %v284 = vld [vmem:[%s282] sm:%s275]
                  %285 = vst [vmem:[%s283] sm:%s275] %v284
                  %v286 = vld [vmem:[%s282 + $0x4] sm:%s275]
                  %287 = vst [vmem:[%s283 + $0x8] sm:%s275] %v286
                $region104: #{discriminator_forward.12} parent=91 // loop_footer
                  %s281 = sadd.s32 1, %s277
                $region105: #{discriminator_forward.12} parent=91 // loop_footer_branch
                  %276 = sbr.rel target = $region101
                $region106: #{discriminator_forward.12} parent=91 // loop_exit
                  _
              $region92: #{discriminator_forward.12} parent=76 // pred_fallthru
                _
            $region77: #{discriminator_forward.12} parent=72 // pred_fallthru
              _
            // Predicated region
            $region78: #{discriminator_forward.12} parent=72 // pred_check
              _
            $region79: #{discriminator_forward.12} parent=72 // pred_check_branch
              %249 = sbr.rel (0) target = $region81
            $region80: #{discriminator_forward.12} parent=72 // pred_region
              %s251 = ssub.s32 16, 1
              loop: start=0, step=1, limit=1
              $region82: #{discriminator_forward.12} parent=80 // loop_pre_header
                _
              $region83: #{discriminator_forward.12} parent=80 // loop_header
                %s253 = sphi 0, %s257
                %p254 = scmp.ge.s32.totalorder %s253, 1
                %s258 = sphi %s236, %s236
                %s259 = sphi %s243, %s243
              $region84: #{discriminator_forward.12} parent=80 // loop_header_branch
                %256 = sbr.rel (%p254) target = $region88
              $region85: #{discriminator_forward.12} parent=80 // loop_body
                %v260 = vld [vmem:[%s258] sm:%s251]
                %261 = vst [vmem:[%s259] sm:%s251] %v260
                %v262 = vld [vmem:[%s258 + $0x4] sm:%s251]
                %263 = vst [vmem:[%s259 + $0x8] sm:%s251] %v262
              $region86: #{discriminator_forward.12} parent=80 // loop_footer
                %s257 = sadd.s32 1, %s253
              $region87: #{discriminator_forward.12} parent=80 // loop_footer_branch
                %252 = sbr.rel target = $region83
              $region88: #{discriminator_forward.12} parent=80 // loop_exit
                _
            $region81: #{discriminator_forward.12} parent=72 // pred_fallthru
              _
          $region73: #{discriminator_forward.12} parent=68 // pred_fallthru
            _
          %288 = vnop
        $region69: #{discriminator_forward.12} parent=60 // pred_fallthru
          _
      $region61: #{discriminator_forward.12} parent=5 // pred_fallthru
        _
      %p289 = scmp.le.s32.totalorder 2, %s7
      // Predicated region
      $region107: #{discriminator_forward.12} parent=5 // pred_check
        %p290 = pneg %p289
      $region108: #{discriminator_forward.12} parent=5 // pred_check_branch
        %292 = sbr.rel (%p290) target = $region110
      $region109: #{discriminator_forward.12} parent=5 // pred_region
        %s293 = ssub.s32 %s7, 2
        // Predicated region
        $region111: #{discriminator_forward.12} parent=109 // pred_check
          %p294 = pneg %p78
        $region112: #{discriminator_forward.12} parent=109 // pred_check_branch
          %296 = sbr.rel (%p294) target = $region114
        $region113: #{discriminator_forward.12} parent=109 // pred_region
          %s297 = sand.u32 %s63, 1
          %s298 = sand.u32 %s63, 1
          %s299 = smul.addr %s298, 8
          %s300 = scalar_lea.vmem [#allocation3], %s299
        $region114: #{discriminator_forward.12} parent=109 // pred_fallthru
          _
      $region110: #{discriminator_forward.12} parent=5 // pred_fallthru
        _
    $region6: #{discriminator_forward.12} parent=1 // loop_footer
      %s11 = sadd.s32 1, %s7
    $region7: #{discriminator_forward.12} parent=1 // loop_footer_branch
      %6 = sbr.rel target = $region3
    $region8: #{discriminator_forward.12} parent=1 // loop_exit
      _

// kernel: discriminator_forward.11
$region0: #{discriminator_forward.11}
  #allocation0 [shape = 'u32[]', space=smem, size = 0x4, offset = 0x4, fixed_abs, tag = 'smem constant byte address 0x4 - core index']
  #allocation1 [shape = 'u32[72,128]{1,0:T(1,128)}', space=vmem, size = 0x9000, scoped, tag = 'internal scratch']
  #allocation2 [shape = 'f32[32,256]{1,0:T(8,128)}', space=vmem, size = 0x8000, scoped, tag = 'scratch operand']
  %s0 = inlined_call_operand.vmem [shape: bf16[32,2048], index: 0, kind: input, shape index: {}]
  %s1 = inlined_call_operand.vmem [shape: bf16[2048,256], index: 1, kind: input, shape index: {}]
  %s2 = inlined_call_operand.vmem [shape: f32[1,256], index: 2, kind: input, shape index: {}]
  %s3 = inlined_call_operand.vmem [shape: bf16[32,256], index: 3, kind: output, shape index: {}]
  %s4 = sld [smem:[#allocation0]]
  $region76: #{discriminator_forward.11} parent=0
    _
  %s6 = ssub.s32 1, %s4
  %s7 = scalar_select 0, %s6, %s4
  $region1: #{discriminator_forward.11} parent=0
    #allocation3 [shape = 'u8[65536]{0}', space=vmem, size = 0x10000, scoped, tag = 'input window, operand 0']
    loop: start=0, step=1, limit=6
    $region2: #{discriminator_forward.11} parent=1 // loop_pre_header
      _
    $region3: #{discriminator_forward.11} parent=1 // loop_header
      %s9 = sphi 0, %s13
      %p10 = scmp.ge.s32.totalorder %s9, 6
      %s16 = sphi 0, %s35
      %s17 = sphi 0, %s31
      %s18 = sphi 0, %s27
      %s19 = sphi 0, %s16
      %s20 = sphi 0, %s17
      %s21 = sphi 0, %s18
      %s22 = sphi 0, %s19
      %s23 = sphi 0, %s20
      %s24 = sphi 0, %s21
      %s40 = sphi 0, %s42
      %s43 = sphi 0, %s40
      %s44 = sphi 0, %s43
      %s60 = sphi 0, %s44
      %s68 = sphi 0, %s70
      %s71 = sphi 0, %s68
      %s72 = sphi 0, %s71
      %s88 = sphi 0, %s72
      %s94 = sphi 0, %s96
      %s97 = sphi 0, %s94
      %s98 = sphi 0, %s97
      %s114 = sphi 0, %s98
      %s122 = sphi 0, %s124
      %s125 = sphi 0, %s122
      %s126 = sphi 0, %s125
      %s142 = sphi 0, %s126
    $region4: #{discriminator_forward.11} parent=1 // loop_header_branch
      %12 = sbr.rel (%p10) target = $region8
    $region5: #{discriminator_forward.11} parent=1 // loop_body
      %s14 = ssub.s32 %s9, 1
      %s15 = ssub.s32 %s9, 2
      %s25 = sadd.s32 1, %s18
      %p26 = scmp.ge.s32.totalorder %s25, 4
      %s27 = scalar_select %p26, 0, %s25
      %s28 = sadd.s32 1, %s17
      %s29 = scalar_select %p26, %s28, %s17
      %p30 = scmp.ge.s32.totalorder %s29, 1
      %s31 = scalar_select %p30, 0, %s29
      %s32 = sadd.s32 1, %s16
      %s33 = scalar_select %p30, %s32, %s16
      %p34 = scmp.ge.s32.totalorder %s33, 1
      %s35 = scalar_select %p34, 0, %s33
      %s36 = ssub.s32 %s16, %s35
      %s37 = ssub.s32 %s18, %s27
      %s38 = sor.u32 %s36, %s37
      %p39 = scmp.eq.s32.totalorder %s38, 0
      %s41 = sadd.s32 %s40, 1
      %s42 = scalar_select %p39, %s40, %s41
      %p45 = pneg %p39
      %p46 = scmp.eq.s32.totalorder %s9, 3
      %p47 = por %p45, %p46
      %p48 = scmp.ne.s32.totalorder %s40, %s43
      %p49 = scmp.eq.s32.totalorder %s9, 0
      %p50 = por %p48, %p49
      %p51 = scmp.ne.s32.totalorder %s40, %s43
      %p52 = scmp.eq.s32.totalorder %s14, 3
      %p53 = por %p51, %p52
      %p54 = scmp.ne.s32.totalorder %s43, %s44
      %p55 = scmp.eq.s32.totalorder %s14, 0
      %p56 = por %p54, %p55
      %p57 = scmp.ne.s32.totalorder %s43, %s44
      %p58 = scmp.eq.s32.totalorder %s15, 3
      %p59 = por %p57, %p58
      %p61 = scmp.ne.s32.totalorder %s44, %s60
      %p62 = scmp.eq.s32.totalorder %s15, 0
      %p63 = por %p61, %p62
      %s64 = ssub.s32 %s18, %s27
      %s65 = ssub.s32 %s17, %s31
      %s66 = sor.u32 %s64, %s65
      %p67 = scmp.eq.s32.totalorder %s66, 0
      %s69 = sadd.s32 %s68, 1
      %s70 = scalar_select %p67, %s68, %s69
      %p73 = pneg %p67
      %p74 = scmp.eq.s32.totalorder %s9, 3
      %p75 = por %p73, %p74
      %p76 = scmp.ne.s32.totalorder %s68, %s71
      %p77 = scmp.eq.s32.totalorder %s9, 0
      %p78 = por %p76, %p77
      %p79 = scmp.ne.s32.totalorder %s68, %s71
      %p80 = scmp.eq.s32.totalorder %s14, 3
      %p81 = por %p79, %p80
      %p82 = scmp.ne.s32.totalorder %s71, %s72
      %p83 = scmp.eq.s32.totalorder %s14, 0
      %p84 = por %p82, %p83
      %p85 = scmp.ne.s32.totalorder %s71, %s72
      %p86 = scmp.eq.s32.totalorder %s15, 3
      %p87 = por %p85, %p86
      %p89 = scmp.ne.s32.totalorder %s72, %s88
      %p90 = scmp.eq.s32.totalorder %s15, 0
      %p91 = por %p89, %p90
      %s92 = ssub.s32 %s17, %s31
      %p93 = scmp.eq.s32.totalorder %s92, 0
      %s95 = sadd.s32 %s94, 1
      %s96 = scalar_select %p93, %s94, %s95
      %p99 = pneg %p93
      %p100 = scmp.eq.s32.totalorder %s9, 3
      %p101 = por %p99, %p100
      %p102 = scmp.ne.s32.totalorder %s94, %s97
      %p103 = scmp.eq.s32.totalorder %s9, 0
      %p104 = por %p102, %p103
      %p105 = scmp.ne.s32.totalorder %s94, %s97
      %p106 = scmp.eq.s32.totalorder %s14, 3
      %p107 = por %p105, %p106
      %p108 = scmp.ne.s32.totalorder %s97, %s98
      %p109 = scmp.eq.s32.totalorder %s14, 0
      %p110 = por %p108, %p109
      %p111 = scmp.ne.s32.totalorder %s97, %s98
      %p112 = scmp.eq.s32.totalorder %s15, 3
      %p113 = por %p111, %p112
      %p115 = scmp.ne.s32.totalorder %s98, %s114
      %p116 = scmp.eq.s32.totalorder %s15, 0
      %p117 = por %p115, %p116
      %s118 = ssub.s32 %s16, %s35
      %s119 = ssub.s32 %s17, %s31
      %s120 = sor.u32 %s118, %s119
      %p121 = scmp.eq.s32.totalorder %s120, 0
      %s123 = sadd.s32 %s122, 1
      %s124 = scalar_select %p121, %s122, %s123
      %p127 = pneg %p121
      %p128 = scmp.eq.s32.totalorder %s9, 3
      %p129 = por %p127, %p128
      %p130 = scmp.ne.s32.totalorder %s122, %s125
      %p131 = scmp.eq.s32.totalorder %s9, 0
      %p132 = por %p130, %p131
      %p133 = scmp.ne.s32.totalorder %s122, %s125
      %p134 = scmp.eq.s32.totalorder %s14, 3
      %p135 = por %p133, %p134
      %p136 = scmp.ne.s32.totalorder %s125, %s126
      %p137 = scmp.eq.s32.totalorder %s14, 0
      %p138 = por %p136, %p137
      %p139 = scmp.ne.s32.totalorder %s125, %s126
      %p140 = scmp.eq.s32.totalorder %s15, 3
      %p141 = por %p139, %p140
      %p143 = scmp.ne.s32.totalorder %s126, %s142
      %p144 = scmp.eq.s32.totalorder %s15, 0
      %p145 = por %p143, %p144
      %p146 = scmp.le.s32.totalorder 1, %s9
      %p147 = scmp.lt.s32.totalorder %s9, 5
      %p148 = pnand %p146, %p147
      %p149 = pneg %p148
      // Predicated region
      $region9: #{discriminator_forward.11} parent=5 // pred_check
        _
      $region10: #{discriminator_forward.11} parent=5 // pred_check_branch
        %151 = sbr.rel (%p148) target = $region12
      $region11: #{discriminator_forward.11} parent=5 // pred_region
        %s152 = ssub.s32 %s9, 1
        // Predicated region
        $region13: #{discriminator_forward.11} parent=11 // pred_check
          %p153 = pneg %p110
        $region14: #{discriminator_forward.11} parent=11 // pred_check_branch
          %155 = sbr.rel (%p153) target = $region16
        $region15: #{discriminator_forward.11} parent=11 // pred_region
          %s156 = smul.u32 2, %s20
          %p157 = scmp.lt.s32.totalorder %s156, 1
          %s158 = scalar_select %p157, %s156, 1
          %s159 = scalar_lea.vmem %s2, %s158
          %s160 = smul.u32 2, %s20
        $region16: #{discriminator_forward.11} parent=11 // pred_fallthru
          _
      $region12: #{discriminator_forward.11} parent=5 // pred_fallthru
        _
      %p161 = scmp.lt.s32.totalorder %s9, 4
      // Predicated region
      $region17: #{discriminator_forward.11} parent=5 // pred_check
        %p162 = pneg %p161
      $region18: #{discriminator_forward.11} parent=5 // pred_check_branch
        %164 = sbr.rel (%p162) target = $region20
      $region19: #{discriminator_forward.11} parent=5 // pred_region
        // Predicated region
        $region21: #{discriminator_forward.11} parent=19 // pred_check
          %p165 = pneg %p50
        $region22: #{discriminator_forward.11} parent=19 // pred_check_branch
          %167 = sbr.rel (%p165) target = $region24
        $region23: #{discriminator_forward.11} parent=19 // pred_region
          %s168 = sand.u32 %s40, 1
          %s169 = sand.u32 %s40, 1
          %s170 = smul.addr %s169, 64
          %s171 = scalar_lea.vmem [#allocation3], %s170
          %s172 = smul.u32 4, %s16
          %s173 = smul.u32 4, %s18
          %s174 = smul.addr %s172, 16
          %s175 = sadd.s32 %s173, %s174
          %s176 = smul.addr %s175, 4
          %s177 = scalar_lea.vmem %s0, %s176
          // Predicated region
          $region25: #{discriminator_forward.11} parent=23 // pred_check
            _
          $region26: #{discriminator_forward.11} parent=23 // pred_check_branch
            %179 = sbr.rel (0) target = $region28
          $region27: #{discriminator_forward.11} parent=23 // pred_region
            // Predicated region
            $region29: #{discriminator_forward.11} parent=27 // pred_check
              _
            $region30: #{discriminator_forward.11} parent=27 // pred_check_branch
              %181 = sbr.rel (0) target = $region32
            $region31: #{discriminator_forward.11} parent=27 // pred_region
              loop: start=0, step=1, limit=1
              $region33: #{discriminator_forward.11} parent=31 // loop_pre_header
                _
              $region34: #{discriminator_forward.11} parent=31 // loop_header
                %s183 = sphi 0, %s187
                %p184 = scmp.ge.s32.totalorder %s183, 1
                %s188 = sphi %s177, %s177
                %s189 = sphi %s171, %s171
              $region35: #{discriminator_forward.11} parent=31 // loop_header_branch
                %186 = sbr.rel (%p184) target = $region39
              $region36: #{discriminator_forward.11} parent=31 // loop_body
                %v190 = vld [vmem:[%s188] sm:$0xff]
                %191 = vst [vmem:[%s189] sm:$0xff] %v190
                %v192 = vld [vmem:[%s188 + $0x8] sm:$0xff]
                %193 = vst [vmem:[%s189 + $0x8] sm:$0xff] %v192
                %v194 = vld [vmem:[%s188 + $0x40] sm:$0xff]
                %195 = vst [vmem:[%s189 + $0x10] sm:$0xff] %v194
                %v196 = vld [vmem:[%s188 + $0x48] sm:$0xff]
                %197 = vst [vmem:[%s189 + $0x18] sm:$0xff] %v196
                %v198 = vld [vmem:[%s188 + $0x80] sm:$0xff]
                %199 = vst [vmem:[%s189 + $0x20] sm:$0xff] %v198
                %v200 = vld [vmem:[%s188 + $0x88] sm:$0xff]
                %201 = vst [vmem:[%s189 + $0x28] sm:$0xff] %v200
                %v202 = vld [vmem:[%s188 + $0xc0] sm:$0xff]
                %203 = vst [vmem:[%s189 + $0x30] sm:$0xff] %v202
                %v204 = vld [vmem:[%s188 + $0xc8] sm:$0xff]
                %205 = vst [vmem:[%s189 + $0x38] sm:$0xff] %v204
              $region37: #{discriminator_forward.11} parent=31 // loop_footer
                %s187 = sadd.s32 1, %s183
              $region38: #{discriminator_forward.11} parent=31 // loop_footer_branch
                %182 = sbr.rel target = $region34
              $region39: #{discriminator_forward.11} parent=31 // loop_exit
                _
            $region32: #{discriminator_forward.11} parent=27 // pred_fallthru
              _
            // Predicated region
            $region40: #{discriminator_forward.11} parent=27 // pred_check
              _
            $region41: #{discriminator_forward.11} parent=27 // pred_check_branch
              %207 = sbr.rel target = $region43
            $region42: #{discriminator_forward.11} parent=27 // pred_region
              _
            $region43: #{discriminator_forward.11} parent=27 // pred_fallthru
              _
          $region28: #{discriminator_forward.11} parent=23 // pred_fallthru
            _
          %208 = vnop
        $region24: #{discriminator_forward.11} parent=19 // pred_fallthru
          _
        // Predicated region
        $region44: #{discriminator_forward.11} parent=19 // pred_check
          %p209 = pneg %p78
        $region45: #{discriminator_forward.11} parent=19 // pred_check_branch
          %211 = sbr.rel (%p209) target = $region47
        $region46: #{discriminator_forward.11} parent=19 // pred_region
          %s212 = smul.u32 64, %s18
          %s213 = smul.u32 2, %s17
          %p214 = scmp.lt.s32.totalorder %s212, 255
          %s215 = scalar_select %p214, %s212, 255
          %p216 = scmp.lt.s32.totalorder %s213, 1
          %s217 = scalar_select %p216, %s213, 1
          %s218 = smul.addr %s215, 2
          %s219 = sadd.s32 %s217, %s218
          %s220 = smul.addr %s219, 4
          %s221 = scalar_lea.vmem %s1, %s220
          %s222 = smul.u32 64, %s18
          %s223 = smul.u32 2, %s17
        $region47: #{discriminator_forward.11} parent=19 // pred_fallthru
          _
      $region20: #{discriminator_forward.11} parent=5 // pred_fallthru
        _
      %p224 = scmp.le.s32.totalorder 1, %s9
      %p225 = scmp.lt.s32.totalorder %s9, 5
      %p226 = pnand %p224, %p225
      %p227 = pneg %p226
      // Predicated region
      $region48: #{discriminator_forward.11} parent=5 // pred_check
        _
      $region49: #{discriminator_forward.11} parent=5 // pred_check_branch
        %229 = sbr.rel (%p226) target = $region51
      $region50: #{discriminator_forward.11} parent=5 // pred_region
        %s230 = ssub.s32 %s9, 1
        %s231 = sand.u32 %s43, 1
        %s232 = sand.u32 %s43, 1
        %s233 = smul.addr %s232, 64
        %s234 = scalar_lea.vmem [#allocation3], %s233
        // Predicated region
        $region52: #{discriminator_forward.11} parent=50 // pred_check
          %p235 = pneg %p56
        $region53: #{discriminator_forward.11} parent=50 // pred_check_branch
          %237 = sbr.rel (%p235) target = $region55
        $region54: #{discriminator_forward.11} parent=50 // pred_region
          _
        $region55: #{discriminator_forward.11} parent=50 // pred_fallthru
          _
        %s238 = sand.u32 %s43, 1
        %s239 = sand.u32 %s43, 1
        %s240 = smul.addr %s239, 64
        %s241 = scalar_lea.vmem [#allocation3], %s240
        %p242 = pneg %p56
        %p243 = pneg %p53
        %s244 = smul.u32 64, %s21
        %s245 = smul.u32 2, %s20
        %p246 = scmp.lt.s32.totalorder %s244, 255
        %s247 = scalar_select %p246, %s244, 255
        %p248 = scmp.lt.s32.totalorder %s245, 1
        %s249 = scalar_select %p248, %s245, 1
        %s250 = smul.addr %s247, 2
        %s251 = sadd.s32 %s249, %s250
        %s252 = smul.addr %s251, 4
        %s253 = scalar_lea.vmem %s1, %s252
        %p254 = pneg %p84
        %p255 = pneg %p81
        %s256 = smul.u32 2, %s20
        %p257 = scmp.lt.s32.totalorder %s256, 1
        %s258 = scalar_select %p257, %s256, 1
        %s259 = scalar_lea.vmem %s2, %s258
        %p260 = pneg %p110
        %p261 = pneg %p107
        %p262 = pneg %p138
        %p263 = pneg %p135
        %s264 = smul.u32 4, %s19
        %s265 = smul.u32 2, %s20
        %p266 = scmp.lt.s32.totalorder %s264, 3
        %s267 = scalar_select %p266, %s264, 3
        %p268 = scmp.lt.s32.totalorder %s265, 1
        %s269 = scalar_select %p268, %s265, 1
        %s270 = smul.addr %s267, 2
        %s271 = sadd.s32 %s269, %s270
        %s272 = smul.addr %s271, 4
        %s273 = scalar_lea.vmem %s3, %s272
        %s274 = smul.u32 4, %s19
        %s275 = smul.u32 4, %s21
        %s276 = smul.u32 64, %s21
        %s277 = smul.u32 2, %s20
        %p278 = scmp.lt.s32.totalorder %s276, 255
        %s279 = scalar_select %p278, %s276, 255
        %p280 = scmp.lt.s32.totalorder %s277, 1
        %s281 = scalar_select %p280, %s277, 1
        %s282 = smul.addr %s279, 2
        %s283 = sadd.s32 %s281, %s282
        %s284 = smul.addr %s283, 4
        %s285 = scalar_lea.vmem %s1, %s284
        %s286 = smul.u32 64, %s21
        %s287 = smul.u32 2, %s20
        %s288 = smul.u32 2, %s20
        %p289 = scmp.lt.s32.totalorder %s288, 1
        %s290 = scalar_select %p289, %s288, 1
        %s291 = scalar_lea.vmem %s2, %s290
        %s292 = smul.u32 2, %s20
        %s293 = smul.u32 4, %s19
        %s294 = smul.u32 2, %s20
        %p295 = scmp.lt.s32.totalorder %s293, 3
        %s296 = scalar_select %p295, %s293, 3
        %p297 = scmp.lt.s32.totalorder %s294, 1
        %s298 = scalar_select %p297, %s294, 1
        %s299 = smul.addr %s296, 2
        %s300 = sadd.s32 %s298, %s299
        %s301 = smul.addr %s300, 4
        %s302 = scalar_lea.vmem %s3, %s301
        %s303 = smul.u32 4, %s19
        %s304 = smul.u32 2, %s20
        %p305 = scmp.eq.s32.totalorder %s21, 0
        // Predicated region
        $region56: #{discriminator_forward.11} parent=50 // pred_check
          %p306 = pneg %p305
        $region57: #{discriminator_forward.11} parent=50 // pred_check_branch
          %308 = sbr.rel (%p306) target = $region59
        $region58: #{discriminator_forward.11} parent=50 // pred_region
          %309 = vst [vmem:[#allocation2] sm:$0xff] 0.0
          %310 = vst [vmem:[#allocation2 + $0x8] sm:$0xff] 0.0
          %311 = vst [vmem:[#allocation2 + $0x10] sm:$0xff] 0.0
          %312 = vst [vmem:[#allocation2 + $0x18] sm:$0xff] 0.0
          %313 = vst [vmem:[#allocation2 + $0x20] sm:$0xff] 0.0
          %314 = vst [vmem:[#allocation2 + $0x28] sm:$0xff] 0.0
          %315 = vst [vmem:[#allocation2 + $0x30] sm:$0xff] 0.0
          %316 = vst [vmem:[#allocation2 + $0x38] sm:$0xff] 0.0
        $region59: #{discriminator_forward.11} parent=50 // pred_fallthru
          _
        %v317 = vld [vmem:[#allocation2] sm:$0xff]
        %v318 = vld [vmem:[#allocation2 + $0x8] sm:$0xff]
        %v319 = vld [vmem:[#allocation2 + $0x10] sm:$0xff]
        %v320 = vld [vmem:[#allocation2 + $0x18] sm:$0xff]
        %v321 = vld [vmem:[#allocation2 + $0x20] sm:$0xff]
        %v322 = vld [vmem:[#allocation2 + $0x28] sm:$0xff]
        %v323 = vld [vmem:[#allocation2 + $0x30] sm:$0xff]
        %v324 = vld [vmem:[#allocation2 + $0x38] sm:$0xff]
        %v325 = vld [vmem:[%s234] sm:$0xff]
        %v326 = vld [vmem:[%s234 + $0x8] sm:$0xff]
        %v327 = vld [vmem:[%s234 + $0x10] sm:$0xff]
        %v328 = vld [vmem:[%s234 + $0x18] sm:$0xff]
        %v329 = vld [vmem:[%s234 + $0x20] sm:$0xff]
        %v330 = vld [vmem:[%s234 + $0x28] sm:$0xff]
        %v331 = vld [vmem:[%s234 + $0x30] sm:$0xff]
        %v332 = vld [vmem:[%s234 + $0x38] sm:$0xff]
        %v333 = vld [vmem:[%s285] sm:$0xff]
        %v334 = vld [vmem:[%s285 + $0x8] sm:$0xff]
        %v335 = vld [vmem:[%s285 + $0x10] sm:$0xff]
        %v336 = vld [vmem:[%s285 + $0x18] sm:$0xff]
        %v337 = vld [vmem:[%s285 + $0x20] sm:$0xff]
        %v338 = vld [vmem:[%s285 + $0x28] sm:$0xff]
        %v339 = vld [vmem:[%s285 + $0x30] sm:$0xff]
        %v340 = vld [vmem:[%s285 + $0x38] sm:$0xff]
        %v341 = vld [vmem:[%s285 + $0x40] sm:$0xff]
        %v342 = vld [vmem:[%s285 + $0x48] sm:$0xff]
        %v343 = vld [vmem:[%s285 + $0x50] sm:$0xff]
        %v344 = vld [vmem:[%s285 + $0x58] sm:$0xff]
        %v345 = vld [vmem:[%s285 + $0x60] sm:$0xff]
        %v346 = vld [vmem:[%s285 + $0x68] sm:$0xff]
        %v347 = vld [vmem:[%s285 + $0x70] sm:$0xff]
        %v348 = vld [vmem:[%s285 + $0x78] sm:$0xff]
        %v349 = vld [vmem:[%s285 + $0x80] sm:$0xff]
        %v350 = vld [vmem:[%s285 + $0x88] sm:$0xff]
        %v351 = vld [vmem:[%s285 + $0x90] sm:$0xff]
        %v352 = vld [vmem:[%s285 + $0x98] sm:$0xff]
        %v353 = vld [vmem:[%s285 + $0xa0] sm:$0xff]
        %v354 = vld [vmem:[%s285 + $0xa8] sm:$0xff]
        %v355 = vld [vmem:[%s285 + $0xb0] sm:$0xff]
        %v356 = vld [vmem:[%s285 + $0xb8] sm:$0xff]
        %v357 = vld [vmem:[%s285 + $0xc0] sm:$0xff]
        %v358 = vld [vmem:[%s285 + $0xc8] sm:$0xff]
        %v359 = vld [vmem:[%s285 + $0xd0] sm:$0xff]
        %v360 = vld [vmem:[%s285 + $0xd8] sm:$0xff]
        %v361 = vld [vmem:[%s285 + $0xe0] sm:$0xff]
        %v362 = vld [vmem:[%s285 + $0xe8] sm:$0xff]
        %v363 = vld [vmem:[%s285 + $0xf0] sm:$0xff]
        %v364 = vld [vmem:[%s285 + $0xf8] sm:$0xff]
        %v365 = vld [vmem:[%s285 + $0x100] sm:$0xff]
        %v366 = vld [vmem:[%s285 + $0x108] sm:$0xff]
        %v367 = vld [vmem:[%s285 + $0x110] sm:$0xff]
        %v368 = vld [vmem:[%s285 + $0x118] sm:$0xff]
        %v369 = vld [vmem:[%s285 + $0x120] sm:$0xff]
        %v370 = vld [vmem:[%s285 + $0x128] sm:$0xff]
        %v371 = vld [vmem:[%s285 + $0x130] sm:$0xff]
        %v372 = vld [vmem:[%s285 + $0x138] sm:$0xff]
        %v373 = vld [vmem:[%s285 + $0x140] sm:$0xff]
        %v374 = vld [vmem:[%s285 + $0x148] sm:$0xff]
        %v375 = vld [vmem:[%s285 + $0x150] sm:$0xff]
        %v376 = vld [vmem:[%s285 + $0x158] sm:$0xff]
        %v377 = vld [vmem:[%s285 + $0x160] sm:$0xff]
        %v378 = vld [vmem:[%s285 + $0x168] sm:$0xff]
        %v379 = vld [vmem:[%s285 + $0x170] sm:$0xff]
        %v380 = vld [vmem:[%s285 + $0x178] sm:$0xff]
        %v381 = vld [vmem:[%s285 + $0x180] sm:$0xff]
        %v382 = vld [vmem:[%s285 + $0x188] sm:$0xff]
        %v383 = vld [vmem:[%s285 + $0x190] sm:$0xff]
        %v384 = vld [vmem:[%s285 + $0x198] sm:$0xff]
        %v385 = vld [vmem:[%s285 + $0x1a0] sm:$0xff]
        %v386 = vld [vmem:[%s285 + $0x1a8] sm:$0xff]
        %v387 = vld [vmem:[%s285 + $0x1b0] sm:$0xff]
        %v388 = vld [vmem:[%s285 + $0x1b8] sm:$0xff]
        %v389 = vld [vmem:[%s285 + $0x1c0] sm:$0xff]
        %v390 = vld [vmem:[%s285 + $0x1c8] sm:$0xff]
        %v391 = vld [vmem:[%s285 + $0x1d0] sm:$0xff]
        %v392 = vld [vmem:[%s285 + $0x1d8] sm:$0xff]
        %v393 = vld [vmem:[%s285 + $0x1e0] sm:$0xff]
        %v394 = vld [vmem:[%s285 + $0x1e8] sm:$0xff]
        %v395 = vld [vmem:[%s285 + $0x1f0] sm:$0xff]
        %v396 = vld [vmem:[%s285 + $0x1f8] sm:$0xff]
        %v405 = vunpack.c.l.b16 %v325
        %v406 = vunpack.c.h.b16 %v325
        %v407 = vunpack.c.l.b16 %v326
        %v408 = vunpack.c.h.b16 %v326
        %v409 = vunpack.c.l.b16 %v327
        %v410 = vunpack.c.h.b16 %v327
        %v411 = vunpack.c.l.b16 %v328
        %v412 = vunpack.c.h.b16 %v328
        %v413 = vunpack.c.l.b16 %v329
        %v414 = vunpack.c.h.b16 %v329
        %v415 = vunpack.c.l.b16 %v330
        %v416 = vunpack.c.h.b16 %v330
        %v417 = vunpack.c.l.b16 %v331
        %v418 = vunpack.c.h.b16 %v331
        %v419 = vunpack.c.l.b16 %v332
        %v420 = vunpack.c.h.b16 %v332
        %v421 = vpack.c.b16 %v409, %v405
        %v422 = vpack.c.b16 %v410, %v406
        %v423 = vpack.c.b16 %v411, %v407
        %v424 = vpack.c.b16 %v412, %v408
        %v425 = vpack.c.b16 %v417, %v413
        %v426 = vpack.c.b16 %v418, %v414
        %v427 = vpack.c.b16 %v419, %v415
        %v428 = vpack.c.b16 %v420, %v416
        %v501 = vunpack.c.l.b16 %v333
        %v502 = vunpack.c.h.b16 %v333
        %v503 = vunpack.c.l.b16 %v334
        %v504 = vunpack.c.h.b16 %v334
        %v505 = vunpack.c.l.b16 %v335
        %v506 = vunpack.c.h.b16 %v335
        %v507 = vunpack.c.l.b16 %v336
        %v508 = vunpack.c.h.b16 %v336
        %v509 = vunpack.c.l.b16 %v337
        %v510 = vunpack.c.h.b16 %v337
        %v511 = vunpack.c.l.b16 %v338
        %v512 = vunpack.c.h.b16 %v338
        %v513 = vunpack.c.l.b16 %v339
        %v514 = vunpack.c.h.b16 %v339
        %v515 = vunpack.c.l.b16 %v340
        %v516 = vunpack.c.h.b16 %v340
        %v517 = vunpack.c.l.b16 %v341
        %v518 = vunpack.c.h.b16 %v341
        %v519 = vunpack.c.l.b16 %v342
        %v520 = vunpack.c.h.b16 %v342
        %v521 = vunpack.c.l.b16 %v343
        %v522 = vunpack.c.h.b16 %v343
        %v523 = vunpack.c.l.b16 %v344
        %v524 = vunpack.c.h.b16 %v344
        %v525 = vunpack.c.l.b16 %v345
        %v526 = vunpack.c.h.b16 %v345
        %v527 = vunpack.c.l.b16 %v346
        %v528 = vunpack.c.h.b16 %v346
        %v529 = vunpack.c.l.b16 %v347
        %v530 = vunpack.c.h.b16 %v347
        %v531 = vunpack.c.l.b16 %v348
        %v532 = vunpack.c.h.b16 %v348
        %v533 = vunpack.c.l.b16 %v349
        %v534 = vunpack.c.h.b16 %v349
        %v535 = vunpack.c.l.b16 %v350
        %v536 = vunpack.c.h.b16 %v350
        %v537 = vunpack.c.l.b16 %v351
        %v538 = vunpack.c.h.b16 %v351
        %v539 = vunpack.c.l.b16 %v352
        %v540 = vunpack.c.h.b16 %v352
        %v541 = vunpack.c.l.b16 %v353
        %v542 = vunpack.c.h.b16 %v353
        %v543 = vunpack.c.l.b16 %v354
        %v544 = vunpack.c.h.b16 %v354
        %v545 = vunpack.c.l.b16 %v355
        %v546 = vunpack.c.h.b16 %v355
        %v547 = vunpack.c.l.b16 %v356
        %v548 = vunpack.c.h.b16 %v356
        %v549 = vunpack.c.l.b16 %v357
        %v550 = vunpack.c.h.b16 %v357
        %v551 = vunpack.c.l.b16 %v358
        %v552 = vunpack.c.h.b16 %v358
        %v553 = vunpack.c.l.b16 %v359
        %v554 = vunpack.c.h.b16 %v359
        %v555 = vunpack.c.l.b16 %v360
        %v556 = vunpack.c.h.b16 %v360
        %v557 = vunpack.c.l.b16 %v361
        %v558 = vunpack.c.h.b16 %v361
        %v559 = vunpack.c.l.b16 %v362
        %v560 = vunpack.c.h.b16 %v362
        %v561 = vunpack.c.l.b16 %v363
        %v562 = vunpack.c.h.b16 %v363
        %v563 = vunpack.c.l.b16 %v364
        %v564 = vunpack.c.h.b16 %v364
        %v565 = vunpack.c.l.b16 %v365
        %v566 = vunpack.c.h.b16 %v365
        %v567 = vunpack.c.l.b16 %v366
        %v568 = vunpack.c.h.b16 %v366
        %v569 = vunpack.c.l.b16 %v367
        %v570 = vunpack.c.h.b16 %v367
        %v571 = vunpack.c.l.b16 %v368
        %v572 = vunpack.c.h.b16 %v368
        %v573 = vunpack.c.l.b16 %v369
        %v574 = vunpack.c.h.b16 %v369
        %v575 = vunpack.c.l.b16 %v370
        %v576 = vunpack.c.h.b16 %v370
        %v577 = vunpack.c.l.b16 %v371
        %v578 = vunpack.c.h.b16 %v371
        %v579 = vunpack.c.l.b16 %v372
        %v580 = vunpack.c.h.b16 %v372
        %v581 = vunpack.c.l.b16 %v373
        %v582 = vunpack.c.h.b16 %v373
        %v583 = vunpack.c.l.b16 %v374
        %v584 = vunpack.c.h.b16 %v374
        %v585 = vunpack.c.l.b16 %v375
        %v586 = vunpack.c.h.b16 %v375
        %v587 = vunpack.c.l.b16 %v376
        %v588 = vunpack.c.h.b16 %v376
        %v589 = vunpack.c.l.b16 %v377
        %v590 = vunpack.c.h.b16 %v377
        %v591 = vunpack.c.l.b16 %v378
        %v592 = vunpack.c.h.b16 %v378
        %v593 = vunpack.c.l.b16 %v379
        %v594 = vunpack.c.h.b16 %v379
        %v595 = vunpack.c.l.b16 %v380
        %v596 = vunpack.c.h.b16 %v380
        %v597 = vunpack.c.l.b16 %v381
        %v598 = vunpack.c.h.b16 %v381
        %v599 = vunpack.c.l.b16 %v382
        %v600 = vunpack.c.h.b16 %v382
        %v601 = vunpack.c.l.b16 %v383
        %v602 = vunpack.c.h.b16 %v383
        %v603 = vunpack.c.l.b16 %v384
        %v604 = vunpack.c.h.b16 %v384
        %v605 = vunpack.c.l.b16 %v385
        %v606 = vunpack.c.h.b16 %v385
        %v607 = vunpack.c.l.b16 %v386
        %v608 = vunpack.c.h.b16 %v386
        %v609 = vunpack.c.l.b16 %v387
        %v610 = vunpack.c.h.b16 %v387
        %v611 = vunpack.c.l.b16 %v388
        %v612 = vunpack.c.h.b16 %v388
        %v613 = vunpack.c.l.b16 %v389
        %v614 = vunpack.c.h.b16 %v389
        %v615 = vunpack.c.l.b16 %v390
        %v616 = vunpack.c.h.b16 %v390
        %v617 = vunpack.c.l.b16 %v391
        %v618 = vunpack.c.h.b16 %v391
        %v619 = vunpack.c.l.b16 %v392
        %v620 = vunpack.c.h.b16 %v392
        %v621 = vunpack.c.l.b16 %v393
        %v622 = vunpack.c.h.b16 %v393
        %v623 = vunpack.c.l.b16 %v394
        %v624 = vunpack.c.h.b16 %v394
        %v625 = vunpack.c.l.b16 %v395
        %v626 = vunpack.c.h.b16 %v395
        %v627 = vunpack.c.l.b16 %v396
        %v628 = vunpack.c.h.b16 %v396
        %v629 = vpack.c.b16 %v503, %v501
        %v630 = vpack.c.b16 %v504, %v502
        %v631 = vpack.c.b16 %v507, %v505
        %v632 = vpack.c.b16 %v508, %v506
        %v633 = vpack.c.b16 %v511, %v509
        %v634 = vpack.c.b16 %v512, %v510
        %v635 = vpack.c.b16 %v515, %v513
        %v636 = vpack.c.b16 %v516, %v514
        %v637 = vpack.c.b16 %v519, %v517
        %v638 = vpack.c.b16 %v520, %v518
        %v639 = vpack.c.b16 %v523, %v521
        %v640 = vpack.c.b16 %v524, %v522
        %v641 = vpack.c.b16 %v527, %v525
        %v642 = vpack.c.b16 %v528, %v526
        %v643 = vpack.c.b16 %v531, %v529
        %v644 = vpack.c.b16 %v532, %v530
        %v645 = vpack.c.b16 %v535, %v533
        %v646 = vpack.c.b16 %v536, %v534
        %v647 = vpack.c.b16 %v539, %v537
        %v648 = vpack.c.b16 %v540, %v538
        %v649 = vpack.c.b16 %v543, %v541
        %v650 = vpack.c.b16 %v544, %v542
        %v651 = vpack.c.b16 %v547, %v545
        %v652 = vpack.c.b16 %v548, %v546
        %v653 = vpack.c.b16 %v551, %v549
        %v654 = vpack.c.b16 %v552, %v550
        %v655 = vpack.c.b16 %v555, %v553
        %v656 = vpack.c.b16 %v556, %v554
        %v657 = vpack.c.b16 %v559, %v557
        %v658 = vpack.c.b16 %v560, %v558
        %v659 = vpack.c.b16 %v563, %v561
        %v660 = vpack.c.b16 %v564, %v562
        %v661 = vpack.c.b16 %v567, %v565
        %v662 = vpack.c.b16 %v568, %v566
        %v663 = vpack.c.b16 %v571, %v569
        %v664 = vpack.c.b16 %v572, %v570
        %v665 = vpack.c.b16 %v575, %v573
        %v666 = vpack.c.b16 %v576, %v574
        %v667 = vpack.c.b16 %v579, %v577
        %v668 = vpack.c.b16 %v580, %v578
        %v669 = vpack.c.b16 %v583, %v581
        %v670 = vpack.c.b16 %v584, %v582
        %v671 = vpack.c.b16 %v587, %v585
        %v672 = vpack.c.b16 %v588, %v586
        %v673 = vpack.c.b16 %v591, %v589
        %v674 = vpack.c.b16 %v592, %v590
        %v675 = vpack.c.b16 %v595, %v593
        %v676 = vpack.c.b16 %v596, %v594
        %v677 = vpack.c.b16 %v599, %v597
        %v678 = vpack.c.b16 %v600, %v598
        %v679 = vpack.c.b16 %v603, %v601
        %v680 = vpack.c.b16 %v604, %v602
        %v681 = vpack.c.b16 %v607, %v605
        %v682 = vpack.c.b16 %v608, %v606
        %v683 = vpack.c.b16 %v611, %v609
        %v684 = vpack.c.b16 %v612, %v610
        %v685 = vpack.c.b16 %v615, %v613
        %v686 = vpack.c.b16 %v616, %v614
        %v687 = vpack.c.b16 %v619, %v617
        %v688 = vpack.c.b16 %v620, %v618
        %v689 = vpack.c.b16 %v623, %v621
        %v690 = vpack.c.b16 %v624, %v622
        %v691 = vpack.c.b16 %v627, %v625
        %v692 = vpack.c.b16 %v628, %v626
        %757 = vmatpush.bf16.msra.mxu0 %v643
        %758 = vmatpush.bf16.msra.mxu0 %v641
        %759 = vmatpush.bf16.msra.mxu0 %v639
        %760 = vmatpush.bf16.msra.mxu0 %v637
        %761 = vmatpush.bf16.msra.mxu0 %v635
        %762 = vmatpush.bf16.msra.mxu0 %v633
        %763 = vmatpush.bf16.msra.mxu0 %v631
        %764 = vmatpush.bf16.msra.mxu0 %v629
        %765 = vmatmul.bf16.gmra.mxu0 %v421
        %v766 = vpop.f32.mrf.mxu0
        %v767 = vadd.f32 0.0, %v766
        %v768 = vpop.f32.mrf.mxu0
        %v769 = vadd.f32 0.0, %v768
        %770 = vmatmul.bf16.gmra.mxu0 %v425
        %v771 = vpop.f32.mrf.mxu0
        %v772 = vadd.f32 0.0, %v771
        %v773 = vpop.f32.mrf.mxu0
        %v774 = vadd.f32 0.0, %v773
        %775 = vdwg.mxu0
        %776 = vmatpush.bf16.msra.mxu0 %v659
        %777 = vmatpush.bf16.msra.mxu0 %v657
        %778 = vmatpush.bf16.msra.mxu0 %v655
        %779 = vmatpush.bf16.msra.mxu0 %v653
        %780 = vmatpush.bf16.msra.mxu0 %v651
        %781 = vmatpush.bf16.msra.mxu0 %v649
        %782 = vmatpush.bf16.msra.mxu0 %v647
        %783 = vmatpush.bf16.msra.mxu0 %v645
        %784 = vmatmul.bf16.gmra.mxu0 %v422
        %v785 = vpop.f32.mrf.mxu0
        %v786 = vadd.f32 %v767, %v785
        %v787 = vpop.f32.mrf.mxu0
        %v788 = vadd.f32 %v769, %v787
        %789 = vmatmul.bf16.gmra.mxu0 %v426
        %v790 = vpop.f32.mrf.mxu0
        %v791 = vadd.f32 %v772, %v790
        %v792 = vpop.f32.mrf.mxu0
        %v793 = vadd.f32 %v774, %v792
        %794 = vdwg.mxu0
        %795 = vmatpush.bf16.msra.mxu0 %v675
        %796 = vmatpush.bf16.msra.mxu0 %v673
        %797 = vmatpush.bf16.msra.mxu0 %v671
        %798 = vmatpush.bf16.msra.mxu0 %v669
        %799 = vmatpush.bf16.msra.mxu0 %v667
        %800 = vmatpush.bf16.msra.mxu0 %v665
        %801 = vmatpush.bf16.msra.mxu0 %v663
        %802 = vmatpush.bf16.msra.mxu0 %v661
        %803 = vmatmul.bf16.gmra.mxu0 %v423
        %v804 = vpop.f32.mrf.mxu0
        %v805 = vadd.f32 %v786, %v804
        %v806 = vpop.f32.mrf.mxu0
        %v807 = vadd.f32 %v788, %v806
        %808 = vmatmul.bf16.gmra.mxu0 %v427
        %v809 = vpop.f32.mrf.mxu0
        %v810 = vadd.f32 %v791, %v809
        %v811 = vpop.f32.mrf.mxu0
        %v812 = vadd.f32 %v793, %v811
        %813 = vdwg.mxu0
        %814 = vmatpush.bf16.msra.mxu0 %v691
        %815 = vmatpush.bf16.msra.mxu0 %v689
        %816 = vmatpush.bf16.msra.mxu0 %v687
        %817 = vmatpush.bf16.msra.mxu0 %v685
        %818 = vmatpush.bf16.msra.mxu0 %v683
        %819 = vmatpush.bf16.msra.mxu0 %v681
        %820 = vmatpush.bf16.msra.mxu0 %v679
        %821 = vmatpush.bf16.msra.mxu0 %v677
        %822 = vmatmul.bf16.gmra.mxu0 %v424
        %v823 = vpop.f32.mrf.mxu0
        %v824 = vadd.f32 %v805, %v823
        %v825 = vpop.f32.mrf.mxu0
        %v826 = vadd.f32 %v807, %v825
        %827 = vmatmul.bf16.gmra.mxu0 %v428
        %v828 = vpop.f32.mrf.mxu0
        %v829 = vadd.f32 %v810, %v828
        %v830 = vpop.f32.mrf.mxu0
        %v831 = vadd.f32 %v812, %v830
        %832 = vdwg.mxu0
        %833 = vmatpush.bf16.msra.mxu0 %v644
        %834 = vmatpush.bf16.msra.mxu0 %v642
        %835 = vmatpush.bf16.msra.mxu0 %v640
        %836 = vmatpush.bf16.msra.mxu0 %v638
        %837 = vmatpush.bf16.msra.mxu0 %v636
        %838 = vmatpush.bf16.msra.mxu0 %v634
        %839 = vmatpush.bf16.msra.mxu0 %v632
        %840 = vmatpush.bf16.msra.mxu0 %v630
        %841 = vmatmul.bf16.gmra.mxu0 %v421
        %v842 = vpop.f32.mrf.mxu0
        %v843 = vadd.f32 0.0, %v842
        %v844 = vpop.f32.mrf.mxu0
        %v845 = vadd.f32 0.0, %v844
        %846 = vmatmul.bf16.gmra.mxu0 %v425
        %v847 = vpop.f32.mrf.mxu0
        %v848 = vadd.f32 0.0, %v847
        %v849 = vpop.f32.mrf.mxu0
        %v850 = vadd.f32 0.0, %v849
        %851 = vdwg.mxu0
        %852 = vmatpush.bf16.msra.mxu0 %v660
        %853 = vmatpush.bf16.msra.mxu0 %v658
        %854 = vmatpush.bf16.msra.mxu0 %v656
        %855 = vmatpush.bf16.msra.mxu0 %v654
        %856 = vmatpush.bf16.msra.mxu0 %v652
        %857 = vmatpush.bf16.msra.mxu0 %v650
        %858 = vmatpush.bf16.msra.mxu0 %v648
        %859 = vmatpush.bf16.msra.mxu0 %v646
        %860 = vmatmul.bf16.gmra.mxu0 %v422
        %v861 = vpop.f32.mrf.mxu0
        %v862 = vadd.f32 %v843, %v861
        %v863 = vpop.f32.mrf.mxu0
        %v864 = vadd.f32 %v845, %v863
        %865 = vmatmul.bf16.gmra.mxu0 %v426
        %v866 = vpop.f32.mrf.mxu0
        %v867 = vadd.f32 %v848, %v866
        %v868 = vpop.f32.mrf.mxu0
        %v869 = vadd.f32 %v850, %v868
        %870 = vdwg.mxu0
        %871 = vmatpush.bf16.msra.mxu0 %v676
        %872 = vmatpush.bf16.msra.mxu0 %v674
        %873 = vmatpush.bf16.msra.mxu0 %v672
        %874 = vmatpush.bf16.msra.mxu0 %v670
        %875 = vmatpush.bf16.msra.mxu0 %v668
        %876 = vmatpush.bf16.msra.mxu0 %v666
        %877 = vmatpush.bf16.msra.mxu0 %v664
        %878 = vmatpush.bf16.msra.mxu0 %v662
        %879 = vmatmul.bf16.gmra.mxu0 %v423
        %v880 = vpop.f32.mrf.mxu0
        %v881 = vadd.f32 %v862, %v880
        %v882 = vpop.f32.mrf.mxu0
        %v883 = vadd.f32 %v864, %v882
        %884 = vmatmul.bf16.gmra.mxu0 %v427
        %v885 = vpop.f32.mrf.mxu0
        %v886 = vadd.f32 %v867, %v885
        %v887 = vpop.f32.mrf.mxu0
        %v888 = vadd.f32 %v869, %v887
        %889 = vdwg.mxu0
        %890 = vmatpush.bf16.msra.mxu0 %v692
        %891 = vmatpush.bf16.msra.mxu0 %v690
        %892 = vmatpush.bf16.msra.mxu0 %v688
        %893 = vmatpush.bf16.msra.mxu0 %v686
        %894 = vmatpush.bf16.msra.mxu0 %v684
        %895 = vmatpush.bf16.msra.mxu0 %v682
        %896 = vmatpush.bf16.msra.mxu0 %v680
        %897 = vmatpush.bf16.msra.mxu0 %v678
        %898 = vmatmul.bf16.gmra.mxu0 %v424
        %v899 = vpop.f32.mrf.mxu0
        %v900 = vadd.f32 %v881, %v899
        %v901 = vpop.f32.mrf.mxu0
        %v902 = vadd.f32 %v883, %v901
        %903 = vmatmul.bf16.gmra.mxu0 %v428
        %v904 = vpop.f32.mrf.mxu0
        %v905 = vadd.f32 %v886, %v904
        %v906 = vpop.f32.mrf.mxu0
        %v907 = vadd.f32 %v888, %v906
        %908 = vdwg.mxu0
        %v909 = vadd.f32 %v317, %v824
        %v910 = vadd.f32 %v318, %v900
        %v911 = vadd.f32 %v319, %v826
        %v912 = vadd.f32 %v320, %v902
        %v913 = vadd.f32 %v321, %v829
        %v914 = vadd.f32 %v322, %v905
        %v915 = vadd.f32 %v323, %v831
        %v916 = vadd.f32 %v324, %v907
        %917 = vst [vmem:[#allocation2] sm:$0xff] %v909
        %918 = vst [vmem:[#allocation2 + $0x8] sm:$0xff] %v910
        %919 = vst [vmem:[#allocation2 + $0x10] sm:$0xff] %v911
        %920 = vst [vmem:[#allocation2 + $0x18] sm:$0xff] %v912
        %921 = vst [vmem:[#allocation2 + $0x20] sm:$0xff] %v913
        %922 = vst [vmem:[#allocation2 + $0x28] sm:$0xff] %v914
        %923 = vst [vmem:[#allocation2 + $0x30] sm:$0xff] %v915
        %924 = vst [vmem:[#allocation2 + $0x38] sm:$0xff] %v916
        %p925 = scmp.eq.s32.totalorder %s21, 3
        // Predicated region
        $region60: #{discriminator_forward.11} parent=50 // pred_check
          %p926 = pneg %p925
        $region61: #{discriminator_forward.11} parent=50 // pred_check_branch
          %928 = sbr.rel (%p926) target = $region63
        $region62: #{discriminator_forward.11} parent=50 // pred_region
          %v929 = vld [vmem:[#allocation2] sm:$0xff]
          %v930 = vld [vmem:[#allocation2 + $0x8] sm:$0xff]
          %v931 = vld [vmem:[#allocation2 + $0x10] sm:$0xff]
          %v932 = vld [vmem:[#allocation2 + $0x18] sm:$0xff]
          %v933 = vld [vmem:[#allocation2 + $0x20] sm:$0xff]
          %v934 = vld [vmem:[#allocation2 + $0x28] sm:$0xff]
          %v935 = vld [vmem:[#allocation2 + $0x30] sm:$0xff]
          %v936 = vld [vmem:[#allocation2 + $0x38] sm:$0xff]
          %v937 = vld [vmem:[%s291] sm:$0x3]
          %v939 = vperm.slane %v937, 0
          %v940 = vperm.slane %v937, 1
          %v943 = vadd.f32 %v929, %v939
          %v944 = vadd.f32 %v930, %v940
          %v945 = vadd.f32 %v931, %v939
          %v946 = vadd.f32 %v932, %v940
          %v947 = vadd.f32 %v933, %v939
          %v948 = vadd.f32 %v934, %v940
          %v949 = vadd.f32 %v935, %v939
          %v950 = vadd.f32 %v936, %v940
          %v951 = vpack.c.bf16 %v944, %v943
          %v952 = vpack.c.bf16 %v946, %v945
          %v953 = vpack.c.bf16 %v948, %v947
          %v954 = vpack.c.bf16 %v950, %v949
          %955 = vst [vmem:[%s302] sm:$0xff] %v951
          %956 = vst [vmem:[%s302 + $0x8] sm:$0xff] %v952
          %957 = vst [vmem:[%s302 + $0x10] sm:$0xff] %v953
          %958 = vst [vmem:[%s302 + $0x18] sm:$0xff] %v954
        $region63: #{discriminator_forward.11} parent=50 // pred_fallthru
          _
        %s959 = smul.u32 4, %s19
        %s960 = smul.u32 2, %s20
        %p961 = scmp.lt.s32.totalorder %s959, 3
        %s962 = scalar_select %p961, %s959, 3
        %p963 = scmp.lt.s32.totalorder %s960, 1
        %s964 = scalar_select %p963, %s960, 1
        %s965 = smul.addr %s962, 2
        %s966 = sadd.s32 %s964, %s965
        %s967 = smul.addr %s966, 4
        %s968 = scalar_lea.vmem %s3, %s967
        // Predicated region
        $region64: #{discriminator_forward.11} parent=50 // pred_check
          %p969 = pneg %p135
        $region65: #{discriminator_forward.11} parent=50 // pred_check_branch
          %971 = sbr.rel (%p969) target = $region67
        $region66: #{discriminator_forward.11} parent=50 // pred_region
          %s972 = smul.u32 4, %s19
          %s973 = smul.u32 2, %s20
        $region67: #{discriminator_forward.11} parent=50 // pred_fallthru
          _
        // Predicated region
        $region68: #{discriminator_forward.11} parent=50 // pred_check
          %p974 = pneg %p135
        $region69: #{discriminator_forward.11} parent=50 // pred_check_branch
          %976 = sbr.rel (%p974) target = $region71
        $region70: #{discriminator_forward.11} parent=50 // pred_region
          %s977 = smul.u32 4, %s19
          %s978 = smul.u32 2, %s20
          %p979 = scmp.lt.s32.totalorder %s977, 3
          %s980 = scalar_select %p979, %s977, 3
          %p981 = scmp.lt.s32.totalorder %s978, 1
          %s982 = scalar_select %p981, %s978, 1
          %s983 = smul.addr %s980, 2
          %s984 = sadd.s32 %s982, %s983
          %s985 = smul.addr %s984, 4
          %s986 = scalar_lea.vmem %s3, %s985
        $region71: #{discriminator_forward.11} parent=50 // pred_fallthru
          _
      $region51: #{discriminator_forward.11} parent=5 // pred_fallthru
        _
      %p987 = scmp.le.s32.totalorder 2, %s9
      // Predicated region
      $region72: #{discriminator_forward.11} parent=5 // pred_check
        %p988 = pneg %p987
      $region73: #{discriminator_forward.11} parent=5 // pred_check_branch
        %990 = sbr.rel (%p988) target = $region75
      $region74: #{discriminator_forward.11} parent=5 // pred_region
        %s991 = ssub.s32 %s9, 2
      $region75: #{discriminator_forward.11} parent=5 // pred_fallthru
        _
    $region6: #{discriminator_forward.11} parent=1 // loop_footer
      %s13 = sadd.s32 1, %s9
    $region7: #{discriminator_forward.11} parent=1 // loop_footer_branch
      %8 = sbr.rel target = $region3
    $region8: #{discriminator_forward.11} parent=1 // loop_exit
      _

// kernel: discriminator_forward.13
$region0: #{discriminator_forward.13}
  #allocation0 [shape = 'u32[]', space=smem, size = 0x4, offset = 0x4, fixed_abs, tag = 'smem constant byte address 0x4 - core index']
  #allocation1 [shape = 'u32[72,128]{1,0:T(1,128)}', space=vmem, size = 0x9000, scoped, tag = 'internal scratch']
  #allocation2 [shape = 'f32[24,256]{1,0:T(8,128)}', space=vmem, size = 0x6000, scoped, tag = 'scratch operand']
  %s0 = inlined_call_operand.vmem [shape: bf16[24,4096], index: 0, kind: input, shape index: {}]
  %s1 = inlined_call_operand.vmem [shape: bf16[4096,512], index: 1, kind: input, shape index: {}]
  %s2 = inlined_call_operand.vmem [shape: f32[1,512], index: 2, kind: input, shape index: {}]
  %s3 = inlined_call_operand.vmem [shape: bf16[24,512], index: 3, kind: output, shape index: {}]
  %s4 = sld [smem:[#allocation0]]
  $region148: #{discriminator_forward.13} parent=0
    _
  %s6 = ssub.s32 1, %s4
  %s7 = scalar_select 0, %s6, %s4
  $region1: #{discriminator_forward.13} parent=0
    #allocation3 [shape = 'u8[49152]{0}', space=vmem, size = 0xc000, scoped, tag = 'input window, operand 0']
    #allocation4 [shape = 'u8[524288]{0}', space=vmem, size = 0x80000, scoped, tag = 'input window, operand 1']
    #allocation5 [shape = 'u8[24576]{0}', space=vmem, size = 0x6000, scoped, tag = 'output window, operand 0']
    loop: start=0, step=1, limit=18
    $region2: #{discriminator_forward.13} parent=1 // loop_pre_header
      _
    $region3: #{discriminator_forward.13} parent=1 // loop_header
      %s9 = sphi 0, %s13
      %p10 = scmp.ge.s32.totalorder %s9, 18
      %s16 = sphi 0, %s35
      %s17 = sphi 0, %s31
      %s18 = sphi 0, %s27
      %s19 = sphi 0, %s16
      %s20 = sphi 0, %s17
      %s21 = sphi 0, %s18
      %s22 = sphi 0, %s19
      %s23 = sphi 0, %s20
      %s24 = sphi 0, %s21
      %s40 = sphi 0, %s42
      %s43 = sphi 0, %s40
      %s44 = sphi 0, %s43
      %s60 = sphi 0, %s44
      %s68 = sphi 0, %s70
      %s71 = sphi 0, %s68
      %s72 = sphi 0, %s71
      %s88 = sphi 0, %s72
      %s94 = sphi 0, %s96
      %s97 = sphi 0, %s94
      %s98 = sphi 0, %s97
      %s114 = sphi 0, %s98
      %s122 = sphi 0, %s124
      %s125 = sphi 0, %s122
      %s126 = sphi 0, %s125
      %s142 = sphi 0, %s126
    $region4: #{discriminator_forward.13} parent=1 // loop_header_branch
      %12 = sbr.rel (%p10) target = $region8
    $region5: #{discriminator_forward.13} parent=1 // loop_body
      %s14 = ssub.s32 %s9, 1
      %s15 = ssub.s32 %s9, 2
      %s25 = sadd.s32 1, %s18
      %p26 = scmp.ge.s32.totalorder %s25, 8
      %s27 = scalar_select %p26, 0, %s25
      %s28 = sadd.s32 1, %s17
      %s29 = scalar_select %p26, %s28, %s17
      %p30 = scmp.ge.s32.totalorder %s29, 2
      %s31 = scalar_select %p30, 0, %s29
      %s32 = sadd.s32 1, %s16
      %s33 = scalar_select %p30, %s32, %s16
      %p34 = scmp.ge.s32.totalorder %s33, 1
      %s35 = scalar_select %p34, 0, %s33
      %s36 = ssub.s32 %s16, %s35
      %s37 = ssub.s32 %s18, %s27
      %s38 = sor.u32 %s36, %s37
      %p39 = scmp.eq.s32.totalorder %s38, 0
      %s41 = sadd.s32 %s40, 1
      %s42 = scalar_select %p39, %s40, %s41
      %p45 = pneg %p39
      %p46 = scmp.eq.s32.totalorder %s9, 15
      %p47 = por %p45, %p46
      %p48 = scmp.ne.s32.totalorder %s40, %s43
      %p49 = scmp.eq.s32.totalorder %s9, 0
      %p50 = por %p48, %p49
      %p51 = scmp.ne.s32.totalorder %s40, %s43
      %p52 = scmp.eq.s32.totalorder %s14, 15
      %p53 = por %p51, %p52
      %p54 = scmp.ne.s32.totalorder %s43, %s44
      %p55 = scmp.eq.s32.totalorder %s14, 0
      %p56 = por %p54, %p55
      %p57 = scmp.ne.s32.totalorder %s43, %s44
      %p58 = scmp.eq.s32.totalorder %s15, 15
      %p59 = por %p57, %p58
      %p61 = scmp.ne.s32.totalorder %s44, %s60
      %p62 = scmp.eq.s32.totalorder %s15, 0
      %p63 = por %p61, %p62
      %s64 = ssub.s32 %s18, %s27
      %s65 = ssub.s32 %s17, %s31
      %s66 = sor.u32 %s64, %s65
      %p67 = scmp.eq.s32.totalorder %s66, 0
      %s69 = sadd.s32 %s68, 1
      %s70 = scalar_select %p67, %s68, %s69
      %p73 = pneg %p67
      %p74 = scmp.eq.s32.totalorder %s9, 15
      %p75 = por %p73, %p74
      %p76 = scmp.ne.s32.totalorder %s68, %s71
      %p77 = scmp.eq.s32.totalorder %s9, 0
      %p78 = por %p76, %p77
      %p79 = scmp.ne.s32.totalorder %s68, %s71
      %p80 = scmp.eq.s32.totalorder %s14, 15
      %p81 = por %p79, %p80
      %p82 = scmp.ne.s32.totalorder %s71, %s72
      %p83 = scmp.eq.s32.totalorder %s14, 0
      %p84 = por %p82, %p83
      %p85 = scmp.ne.s32.totalorder %s71, %s72
      %p86 = scmp.eq.s32.totalorder %s15, 15
      %p87 = por %p85, %p86
      %p89 = scmp.ne.s32.totalorder %s72, %s88
      %p90 = scmp.eq.s32.totalorder %s15, 0
      %p91 = por %p89, %p90
      %s92 = ssub.s32 %s17, %s31
      %p93 = scmp.eq.s32.totalorder %s92, 0
      %s95 = sadd.s32 %s94, 1
      %s96 = scalar_select %p93, %s94, %s95
      %p99 = pneg %p93
      %p100 = scmp.eq.s32.totalorder %s9, 15
      %p101 = por %p99, %p100
      %p102 = scmp.ne.s32.totalorder %s94, %s97
      %p103 = scmp.eq.s32.totalorder %s9, 0
      %p104 = por %p102, %p103
      %p105 = scmp.ne.s32.totalorder %s94, %s97
      %p106 = scmp.eq.s32.totalorder %s14, 15
      %p107 = por %p105, %p106
      %p108 = scmp.ne.s32.totalorder %s97, %s98
      %p109 = scmp.eq.s32.totalorder %s14, 0
      %p110 = por %p108, %p109
      %p111 = scmp.ne.s32.totalorder %s97, %s98
      %p112 = scmp.eq.s32.totalorder %s15, 15
      %p113 = por %p111, %p112
      %p115 = scmp.ne.s32.totalorder %s98, %s114
      %p116 = scmp.eq.s32.totalorder %s15, 0
      %p117 = por %p115, %p116
      %s118 = ssub.s32 %s16, %s35
      %s119 = ssub.s32 %s17, %s31
      %s120 = sor.u32 %s118, %s119
      %p121 = scmp.eq.s32.totalorder %s120, 0
      %s123 = sadd.s32 %s122, 1
      %s124 = scalar_select %p121, %s122, %s123
      %p127 = pneg %p121
      %p128 = scmp.eq.s32.totalorder %s9, 15
      %p129 = por %p127, %p128
      %p130 = scmp.ne.s32.totalorder %s122, %s125
      %p131 = scmp.eq.s32.totalorder %s9, 0
      %p132 = por %p130, %p131
      %p133 = scmp.ne.s32.totalorder %s122, %s125
      %p134 = scmp.eq.s32.totalorder %s14, 15
      %p135 = por %p133, %p134
      %p136 = scmp.ne.s32.totalorder %s125, %s126
      %p137 = scmp.eq.s32.totalorder %s14, 0
      %p138 = por %p136, %p137
      %p139 = scmp.ne.s32.totalorder %s125, %s126
      %p140 = scmp.eq.s32.totalorder %s15, 15
      %p141 = por %p139, %p140
      %p143 = scmp.ne.s32.totalorder %s126, %s142
      %p144 = scmp.eq.s32.totalorder %s15, 0
      %p145 = por %p143, %p144
      %p146 = scmp.le.s32.totalorder 1, %s9
      %p147 = scmp.lt.s32.totalorder %s9, 17
      %p148 = pnand %p146, %p147
      %p149 = pneg %p148
      // Predicated region
      $region9: #{discriminator_forward.13} parent=5 // pred_check
        _
      $region10: #{discriminator_forward.13} parent=5 // pred_check_branch
        %151 = sbr.rel (%p148) target = $region12
      $region11: #{discriminator_forward.13} parent=5 // pred_region
        %s152 = ssub.s32 %s9, 1
      $region12: #{discriminator_forward.13} parent=5 // pred_fallthru
        _
      %p153 = scmp.lt.s32.totalorder %s9, 16
      // Predicated region
      $region13: #{discriminator_forward.13} parent=5 // pred_check
        %p154 = pneg %p153
      $region14: #{discriminator_forward.13} parent=5 // pred_check_branch
        %156 = sbr.rel (%p154) target = $region16
      $region15: #{discriminator_forward.13} parent=5 // pred_region
        // Predicated region
        $region17: #{discriminator_forward.13} parent=15 // pred_check
          %p157 = pneg %p50
        $region18: #{discriminator_forward.13} parent=15 // pred_check_branch
          %159 = sbr.rel (%p157) target = $region20
        $region19: #{discriminator_forward.13} parent=15 // pred_region
          %s160 = sand.u32 %s40, 1
          %s161 = sand.u32 %s40, 1
          %s162 = smul.addr %s161, 48
          %s163 = scalar_lea.vmem [#allocation3], %s162
          %s164 = smul.u32 3, %s16
          %s165 = smul.u32 4, %s18
          %s166 = smul.addr %s164, 32
          %s167 = sadd.s32 %s165, %s166
          %s168 = smul.addr %s167, 4
          %s169 = scalar_lea.vmem %s0, %s168
          // Predicated region
          $region21: #{discriminator_forward.13} parent=19 // pred_check
            _
          $region22: #{discriminator_forward.13} parent=19 // pred_check_branch
            %171 = sbr.rel (0) target = $region24
          $region23: #{discriminator_forward.13} parent=19 // pred_region
            // Predicated region
            $region25: #{discriminator_forward.13} parent=23 // pred_check
              _
            $region26: #{discriminator_forward.13} parent=23 // pred_check_branch
              %173 = sbr.rel (0) target = $region28
            $region27: #{discriminator_forward.13} parent=23 // pred_region
              loop: start=0, step=1, limit=1
              $region29: #{discriminator_forward.13} parent=27 // loop_pre_header
                _
              $region30: #{discriminator_forward.13} parent=27 // loop_header
                %s175 = sphi 0, %s179
                %p176 = scmp.ge.s32.totalorder %s175, 1
                %s180 = sphi %s169, %s169
                %s181 = sphi %s163, %s163
              $region31: #{discriminator_forward.13} parent=27 // loop_header_branch
                %178 = sbr.rel (%p176) target = $region35
              $region32: #{discriminator_forward.13} parent=27 // loop_body
                %v182 = vld [vmem:[%s180] sm:$0xff]
                %183 = vst [vmem:[%s181] sm:$0xff] %v182
                %v184 = vld [vmem:[%s180 + $0x8] sm:$0xff]
                %185 = vst [vmem:[%s181 + $0x8] sm:$0xff] %v184
                %v186 = vld [vmem:[%s180 + $0x80] sm:$0xff]
                %187 = vst [vmem:[%s181 + $0x10] sm:$0xff] %v186
                %v188 = vld [vmem:[%s180 + $0x88] sm:$0xff]
                %189 = vst [vmem:[%s181 + $0x18] sm:$0xff] %v188
                %v190 = vld [vmem:[%s180 + $0x100] sm:$0xff]
                %191 = vst [vmem:[%s181 + $0x20] sm:$0xff] %v190
                %v192 = vld [vmem:[%s180 + $0x108] sm:$0xff]
                %193 = vst [vmem:[%s181 + $0x28] sm:$0xff] %v192
              $region33: #{discriminator_forward.13} parent=27 // loop_footer
                %s179 = sadd.s32 1, %s175
              $region34: #{discriminator_forward.13} parent=27 // loop_footer_branch
                %174 = sbr.rel target = $region30
              $region35: #{discriminator_forward.13} parent=27 // loop_exit
                _
            $region28: #{discriminator_forward.13} parent=23 // pred_fallthru
              _
            // Predicated region
            $region36: #{discriminator_forward.13} parent=23 // pred_check
              _
            $region37: #{discriminator_forward.13} parent=23 // pred_check_branch
              %195 = sbr.rel target = $region39
            $region38: #{discriminator_forward.13} parent=23 // pred_region
              _
            $region39: #{discriminator_forward.13} parent=23 // pred_fallthru
              _
          $region24: #{discriminator_forward.13} parent=19 // pred_fallthru
            _
          %196 = vnop
        $region20: #{discriminator_forward.13} parent=15 // pred_fallthru
          _
        // Predicated region
        $region40: #{discriminator_forward.13} parent=15 // pred_check
          %p197 = pneg %p78
        $region41: #{discriminator_forward.13} parent=15 // pred_check_branch
          %199 = sbr.rel (%p197) target = $region43
        $region42: #{discriminator_forward.13} parent=15 // pred_region
          %s200 = sand.u32 %s68, 1
          %s201 = sand.u32 %s68, 1
          %s202 = smul.addr %s201, 512
          %s203 = scalar_lea.vmem [#allocation4], %s202
          %s204 = smul.u32 64, %s18
          %s205 = smul.u32 2, %s17
          %s206 = smul.addr %s204, 4
          %s207 = sadd.s32 %s205, %s206
          %s208 = smul.addr %s207, 4
          %s209 = scalar_lea.vmem %s1, %s208
          // Predicated region
          $region44: #{discriminator_forward.13} parent=42 // pred_check
            _
          $region45: #{discriminator_forward.13} parent=42 // pred_check_branch
            %211 = sbr.rel (0) target = $region47
          $region46: #{discriminator_forward.13} parent=42 // pred_region
            // Predicated region
            $region48: #{discriminator_forward.13} parent=46 // pred_check
              _
            $region49: #{discriminator_forward.13} parent=46 // pred_check_branch
              %213 = sbr.rel (0) target = $region51
            $region50: #{discriminator_forward.13} parent=46 // pred_region
              // Predicated region
              $region63: #{discriminator_forward.13} parent=50 // pred_check
                _
              $region64: #{discriminator_forward.13} parent=50 // pred_check_branch
                %355 = sbr.rel (0) target = $region66
              $region65: #{discriminator_forward.13} parent=50 // pred_region
                loop: start=0, step=1, limit=1
                $region67: #{discriminator_forward.13} parent=65 // loop_pre_header
                  _
                $region68: #{discriminator_forward.13} parent=65 // loop_header
                  %s357 = sphi 0, %s361
                  %p358 = scmp.ge.s32.totalorder %s357, 1
                  %s362 = sphi %s209, %s209
                  %s363 = sphi %s203, %s203
                $region69: #{discriminator_forward.13} parent=65 // loop_header_branch
                  %360 = sbr.rel (%p358) target = $region73
                $region70: #{discriminator_forward.13} parent=65 // loop_body
                  %v364 = vld [vmem:[%s362] sm:$0xff]
                  %365 = vst [vmem:[%s363] sm:$0xff] %v364
                  %v366 = vld [vmem:[%s362 + $0x10] sm:$0xff]
                  %367 = vst [vmem:[%s363 + $0x8] sm:$0xff] %v366
                  %v368 = vld [vmem:[%s362 + $0x20] sm:$0xff]
                  %369 = vst [vmem:[%s363 + $0x10] sm:$0xff] %v368
                  %v370 = vld [vmem:[%s362 + $0x30] sm:$0xff]
                  %371 = vst [vmem:[%s363 + $0x18] sm:$0xff] %v370
                  %v372 = vld [vmem:[%s362 + $0x40] sm:$0xff]
                  %373 = vst [vmem:[%s363 + $0x20] sm:$0xff] %v372
                  %v374 = vld [vmem:[%s362 + $0x50] sm:$0xff]
                  %375 = vst [vmem:[%s363 + $0x28] sm:$0xff] %v374
                  %v376 = vld [vmem:[%s362 + $0x60] sm:$0xff]
                  %377 = vst [vmem:[%s363 + $0x30] sm:$0xff] %v376
                  %v378 = vld [vmem:[%s362 + $0x70] sm:$0xff]
                  %379 = vst [vmem:[%s363 + $0x38] sm:$0xff] %v378
                  %v380 = vld [vmem:[%s362 + $0x80] sm:$0xff]
                  %381 = vst [vmem:[%s363 + $0x40] sm:$0xff] %v380
                  %v382 = vld [vmem:[%s362 + $0x90] sm:$0xff]
                  %383 = vst [vmem:[%s363 + $0x48] sm:$0xff] %v382
                  %v384 = vld [vmem:[%s362 + $0xa0] sm:$0xff]
                  %385 = vst [vmem:[%s363 + $0x50] sm:$0xff] %v384
                  %v386 = vld [vmem:[%s362 + $0xb0] sm:$0xff]
                  %387 = vst [vmem:[%s363 + $0x58] sm:$0xff] %v386
                  %v388 = vld [vmem:[%s362 + $0xc0] sm:$0xff]
                  %389 = vst [vmem:[%s363 + $0x60] sm:$0xff] %v388
                  %v390 = vld [vmem:[%s362 + $0xd0] sm:$0xff]
                  %391 = vst [vmem:[%s363 + $0x68] sm:$0xff] %v390
                  %v392 = vld [vmem:[%s362 + $0xe0] sm:$0xff]
                  %393 = vst [vmem:[%s363 + $0x70] sm:$0xff] %v392
                  %v394 = vld [vmem:[%s362 + $0xf0] sm:$0xff]
                  %395 = vst [vmem:[%s363 + $0x78] sm:$0xff] %v394
                  %v396 = vld [vmem:[%s362 + $0x100] sm:$0xff]
                  %397 = vst [vmem:[%s363 + $0x80] sm:$0xff] %v396
                  %v398 = vld [vmem:[%s362 + $0x110] sm:$0xff]
                  %399 = vst [vmem:[%s363 + $0x88] sm:$0xff] %v398
                  %v400 = vld [vmem:[%s362 + $0x120] sm:$0xff]
                  %401 = vst [vmem:[%s363 + $0x90] sm:$0xff] %v400
                  %v402 = vld [vmem:[%s362 + $0x130] sm:$0xff]
                  %403 = vst [vmem:[%s363 + $0x98] sm:$0xff] %v402
                  %v404 = vld [vmem:[%s362 + $0x140] sm:$0xff]
                  %405 = vst [vmem:[%s363 + $0xa0] sm:$0xff] %v404
                  %v406 = vld [vmem:[%s362 + $0x150] sm:$0xff]
                  %407 = vst [vmem:[%s363 + $0xa8] sm:$0xff] %v406
                  %v408 = vld [vmem:[%s362 + $0x160] sm:$0xff]
                  %409 = vst [vmem:[%s363 + $0xb0] sm:$0xff] %v408
                  %v410 = vld [vmem:[%s362 + $0x170] sm:$0xff]
                  %411 = vst [vmem:[%s363 + $0xb8] sm:$0xff] %v410
                  %v412 = vld [vmem:[%s362 + $0x180] sm:$0xff]
                  %413 = vst [vmem:[%s363 + $0xc0] sm:$0xff] %v412
                  %v414 = vld [vmem:[%s362 + $0x190] sm:$0xff]
                  %415 = vst [vmem:[%s363 + $0xc8] sm:$0xff] %v414
                  %v416 = vld [vmem:[%s362 + $0x1a0] sm:$0xff]
                  %417 = vst [vmem:[%s363 + $0xd0] sm:$0xff] %v416
                  %v418 = vld [vmem:[%s362 + $0x1b0] sm:$0xff]
                  %419 = vst [vmem:[%s363 + $0xd8] sm:$0xff] %v418
                  %v420 = vld [vmem:[%s362 + $0x1c0] sm:$0xff]
                  %421 = vst [vmem:[%s363 + $0xe0] sm:$0xff] %v420
                  %v422 = vld [vmem:[%s362 + $0x1d0] sm:$0xff]
                  %423 = vst [vmem:[%s363 + $0xe8] sm:$0xff] %v422
                  %v424 = vld [vmem:[%s362 + $0x1e0] sm:$0xff]
                  %425 = vst [vmem:[%s363 + $0xf0] sm:$0xff] %v424
                  %v426 = vld [vmem:[%s362 + $0x1f0] sm:$0xff]
                  %427 = vst [vmem:[%s363 + $0xf8] sm:$0xff] %v426
                  %v428 = vld [vmem:[%s362 + $0x200] sm:$0xff]
                  %429 = vst [vmem:[%s363 + $0x100] sm:$0xff] %v428
                  %v430 = vld [vmem:[%s362 + $0x210] sm:$0xff]
                  %431 = vst [vmem:[%s363 + $0x108] sm:$0xff] %v430
                  %v432 = vld [vmem:[%s362 + $0x220] sm:$0xff]
                  %433 = vst [vmem:[%s363 + $0x110] sm:$0xff] %v432
                  %v434 = vld [vmem:[%s362 + $0x230] sm:$0xff]
                  %435 = vst [vmem:[%s363 + $0x118] sm:$0xff] %v434
                  %v436 = vld [vmem:[%s362 + $0x240] sm:$0xff]
                  %437 = vst [vmem:[%s363 + $0x120] sm:$0xff] %v436
                  %v438 = vld [vmem:[%s362 + $0x250] sm:$0xff]
                  %439 = vst [vmem:[%s363 + $0x128] sm:$0xff] %v438
                  %v440 = vld [vmem:[%s362 + $0x260] sm:$0xff]
                  %441 = vst [vmem:[%s363 + $0x130] sm:$0xff] %v440
                  %v442 = vld [vmem:[%s362 + $0x270] sm:$0xff]
                  %443 = vst [vmem:[%s363 + $0x138] sm:$0xff] %v442
                  %v444 = vld [vmem:[%s362 + $0x280] sm:$0xff]
                  %445 = vst [vmem:[%s363 + $0x140] sm:$0xff] %v444
                  %v446 = vld [vmem:[%s362 + $0x290] sm:$0xff]
                  %447 = vst [vmem:[%s363 + $0x148] sm:$0xff] %v446
                  %v448 = vld [vmem:[%s362 + $0x2a0] sm:$0xff]
                  %449 = vst [vmem:[%s363 + $0x150] sm:$0xff] %v448
                  %v450 = vld [vmem:[%s362 + $0x2b0] sm:$0xff]
                  %451 = vst [vmem:[%s363 + $0x158] sm:$0xff] %v450
                  %v452 = vld [vmem:[%s362 + $0x2c0] sm:$0xff]
                  %453 = vst [vmem:[%s363 + $0x160] sm:$0xff] %v452
                  %v454 = vld [vmem:[%s362 + $0x2d0] sm:$0xff]
                  %455 = vst [vmem:[%s363 + $0x168] sm:$0xff] %v454
                  %v456 = vld [vmem:[%s362 + $0x2e0] sm:$0xff]
                  %457 = vst [vmem:[%s363 + $0x170] sm:$0xff] %v456
                  %v458 = vld [vmem:[%s362 + $0x2f0] sm:$0xff]
                  %459 = vst [vmem:[%s363 + $0x178] sm:$0xff] %v458
                  %v460 = vld [vmem:[%s362 + $0x300] sm:$0xff]
                  %461 = vst [vmem:[%s363 + $0x180] sm:$0xff] %v460
                  %v462 = vld [vmem:[%s362 + $0x310] sm:$0xff]
                  %463 = vst [vmem:[%s363 + $0x188] sm:$0xff] %v462
                  %v464 = vld [vmem:[%s362 + $0x320] sm:$0xff]
                  %465 = vst [vmem:[%s363 + $0x190] sm:$0xff] %v464
                  %v466 = vld [vmem:[%s362 + $0x330] sm:$0xff]
                  %467 = vst [vmem:[%s363 + $0x198] sm:$0xff] %v466
                  %v468 = vld [vmem:[%s362 + $0x340] sm:$0xff]
                  %469 = vst [vmem:[%s363 + $0x1a0] sm:$0xff] %v468
                  %v470 = vld [vmem:[%s362 + $0x350] sm:$0xff]
                  %471 = vst [vmem:[%s363 + $0x1a8] sm:$0xff] %v470
                  %v472 = vld [vmem:[%s362 + $0x360] sm:$0xff]
                  %473 = vst [vmem:[%s363 + $0x1b0] sm:$0xff] %v472
                  %v474 = vld [vmem:[%s362 + $0x370] sm:$0xff]
                  %475 = vst [vmem:[%s363 + $0x1b8] sm:$0xff] %v474
                  %v476 = vld [vmem:[%s362 + $0x380] sm:$0xff]
                  %477 = vst [vmem:[%s363 + $0x1c0] sm:$0xff] %v476
                  %v478 = vld [vmem:[%s362 + $0x390] sm:$0xff]
                  %479 = vst [vmem:[%s363 + $0x1c8] sm:$0xff] %v478
                  %v480 = vld [vmem:[%s362 + $0x3a0] sm:$0xff]
                  %481 = vst [vmem:[%s363 + $0x1d0] sm:$0xff] %v480
                  %v482 = vld [vmem:[%s362 + $0x3b0] sm:$0xff]
                  %483 = vst [vmem:[%s363 + $0x1d8] sm:$0xff] %v482
                  %v484 = vld [vmem:[%s362 + $0x3c0] sm:$0xff]
                  %485 = vst [vmem:[%s363 + $0x1e0] sm:$0xff] %v484
                  %v486 = vld [vmem:[%s362 + $0x3d0] sm:$0xff]
                  %487 = vst [vmem:[%s363 + $0x1e8] sm:$0xff] %v486
                  %v488 = vld [vmem:[%s362 + $0x3e0] sm:$0xff]
                  %489 = vst [vmem:[%s363 + $0x1f0] sm:$0xff] %v488
                  %v490 = vld [vmem:[%s362 + $0x3f0] sm:$0xff]
                  %491 = vst [vmem:[%s363 + $0x1f8] sm:$0xff] %v490
                $region71: #{discriminator_forward.13} parent=65 // loop_footer
                  %s361 = sadd.s32 1, %s357
                $region72: #{discriminator_forward.13} parent=65 // loop_footer_branch
                  %356 = sbr.rel target = $region68
                $region73: #{discriminator_forward.13} parent=65 // loop_exit
                  _
              $region66: #{discriminator_forward.13} parent=50 // pred_fallthru
                _
              // Predicated region
              $region74: #{discriminator_forward.13} parent=50 // pred_check
                _
              $region75: #{discriminator_forward.13} parent=50 // pred_check_branch
                %493 = sbr.rel target = $region77
              $region76: #{discriminator_forward.13} parent=50 // pred_region
                _
              $region77: #{discriminator_forward.13} parent=50 // pred_fallthru
                _
            $region51: #{discriminator_forward.13} parent=46 // pred_fallthru
              _
            // Predicated region
            $region52: #{discriminator_forward.13} parent=46 // pred_check
              _
            $region53: #{discriminator_forward.13} parent=46 // pred_check_branch
              %215 = sbr.rel target = $region55
            $region54: #{discriminator_forward.13} parent=46 // pred_region
              %s217 = ssub.s32 256, 1
              loop: start=0, step=1, limit=1
              $region56: #{discriminator_forward.13} parent=54 // loop_pre_header
                _
              $region57: #{discriminator_forward.13} parent=54 // loop_header
                %s219 = sphi 0, %s223
                %p220 = scmp.ge.s32.totalorder %s219, 1
                %s224 = sphi %s209, %s209
                %s225 = sphi %s203, %s203
              $region58: #{discriminator_forward.13} parent=54 // loop_header_branch
                %222 = sbr.rel (%p220) target = $region62
              $region59: #{discriminator_forward.13} parent=54 // loop_body
                %v226 = vld [vmem:[%s224] sm:%s217]
                %227 = vst [vmem:[%s225] sm:%s217] %v226
                %v228 = vld [vmem:[%s224 + $0x10] sm:%s217]
                %229 = vst [vmem:[%s225 + $0x8] sm:%s217] %v228
                %v230 = vld [vmem:[%s224 + $0x20] sm:%s217]
                %231 = vst [vmem:[%s225 + $0x10] sm:%s217] %v230
                %v232 = vld [vmem:[%s224 + $0x30] sm:%s217]
                %233 = vst [vmem:[%s225 + $0x18] sm:%s217] %v232
                %v234 = vld [vmem:[%s224 + $0x40] sm:%s217]
                %235 = vst [vmem:[%s225 + $0x20] sm:%s217] %v234
                %v236 = vld [vmem:[%s224 + $0x50] sm:%s217]
                %237 = vst [vmem:[%s225 + $0x28] sm:%s217] %v236
                %v238 = vld [vmem:[%s224 + $0x60] sm:%s217]
                %239 = vst [vmem:[%s225 + $0x30] sm:%s217] %v238
                %v240 = vld [vmem:[%s224 + $0x70] sm:%s217]
                %241 = vst [vmem:[%s225 + $0x38] sm:%s217] %v240
                %v242 = vld [vmem:[%s224 + $0x80] sm:%s217]
                %243 = vst [vmem:[%s225 + $0x40] sm:%s217] %v242
                %v244 = vld [vmem:[%s224 + $0x90] sm:%s217]
                %245 = vst [vmem:[%s225 + $0x48] sm:%s217] %v244
                %v246 = vld [vmem:[%s224 + $0xa0] sm:%s217]
                %247 = vst [vmem:[%s225 + $0x50] sm:%s217] %v246
                %v248 = vld [vmem:[%s224 + $0xb0] sm:%s217]
                %249 = vst [vmem:[%s225 + $0x58] sm:%s217] %v248
                %v250 = vld [vmem:[%s224 + $0xc0] sm:%s217]
                %251 = vst [vmem:[%s225 + $0x60] sm:%s217] %v250
                %v252 = vld [vmem:[%s224 + $0xd0] sm:%s217]
                %253 = vst [vmem:[%s225 + $0x68] sm:%s217] %v252
                %v254 = vld [vmem:[%s224 + $0xe0] sm:%s217]
                %255 = vst [vmem:[%s225 + $0x70] sm:%s217] %v254
                %v256 = vld [vmem:[%s224 + $0xf0] sm:%s217]
                %257 = vst [vmem:[%s225 + $0x78] sm:%s217] %v256
                %v258 = vld [vmem:[%s224 + $0x100] sm:%s217]
                %259 = vst [vmem:[%s225 + $0x80] sm:%s217] %v258
                %v260 = vld [vmem:[%s224 + $0x110] sm:%s217]
                %261 = vst [vmem:[%s225 + $0x88] sm:%s217] %v260
                %v262 = vld [vmem:[%s224 + $0x120] sm:%s217]
                %263 = vst [vmem:[%s225 + $0x90] sm:%s217] %v262
                %v264 = vld [vmem:[%s224 + $0x130] sm:%s217]
                %265 = vst [vmem:[%s225 + $0x98] sm:%s217] %v264
                %v266 = vld [vmem:[%s224 + $0x140] sm:%s217]
                %267 = vst [vmem:[%s225 + $0xa0] sm:%s217] %v266
                %v268 = vld [vmem:[%s224 + $0x150] sm:%s217]
                %269 = vst [vmem:[%s225 + $0xa8] sm:%s217] %v268
                %v270 = vld [vmem:[%s224 + $0x160] sm:%s217]
                %271 = vst [vmem:[%s225 + $0xb0] sm:%s217] %v270
                %v272 = vld [vmem:[%s224 + $0x170] sm:%s217]
                %273 = vst [vmem:[%s225 + $0xb8] sm:%s217] %v272
                %v274 = vld [vmem:[%s224 + $0x180] sm:%s217]
                %275 = vst [vmem:[%s225 + $0xc0] sm:%s217] %v274
                %v276 = vld [vmem:[%s224 + $0x190] sm:%s217]
                %277 = vst [vmem:[%s225 + $0xc8] sm:%s217] %v276
                %v278 = vld [vmem:[%s224 + $0x1a0] sm:%s217]
                %279 = vst [vmem:[%s225 + $0xd0] sm:%s217] %v278
                %v280 = vld [vmem:[%s224 + $0x1b0] sm:%s217]
                %281 = vst [vmem:[%s225 + $0xd8] sm:%s217] %v280
                %v282 = vld [vmem:[%s224 + $0x1c0] sm:%s217]
                %283 = vst [vmem:[%s225 + $0xe0] sm:%s217] %v282
                %v284 = vld [vmem:[%s224 + $0x1d0] sm:%s217]
                %285 = vst [vmem:[%s225 + $0xe8] sm:%s217] %v284
                %v286 = vld [vmem:[%s224 + $0x1e0] sm:%s217]
                %287 = vst [vmem:[%s225 + $0xf0] sm:%s217] %v286
                %v288 = vld [vmem:[%s224 + $0x1f0] sm:%s217]
                %289 = vst [vmem:[%s225 + $0xf8] sm:%s217] %v288
                %v290 = vld [vmem:[%s224 + $0x200] sm:%s217]
                %291 = vst [vmem:[%s225 + $0x100] sm:%s217] %v290
                %v292 = vld [vmem:[%s224 + $0x210] sm:%s217]
                %293 = vst [vmem:[%s225 + $0x108] sm:%s217] %v292
                %v294 = vld [vmem:[%s224 + $0x220] sm:%s217]
                %295 = vst [vmem:[%s225 + $0x110] sm:%s217] %v294
                %v296 = vld [vmem:[%s224 + $0x230] sm:%s217]
                %297 = vst [vmem:[%s225 + $0x118] sm:%s217] %v296
                %v298 = vld [vmem:[%s224 + $0x240] sm:%s217]
                %299 = vst [vmem:[%s225 + $0x120] sm:%s217] %v298
                %v300 = vld [vmem:[%s224 + $0x250] sm:%s217]
                %301 = vst [vmem:[%s225 + $0x128] sm:%s217] %v300
                %v302 = vld [vmem:[%s224 + $0x260] sm:%s217]
                %303 = vst [vmem:[%s225 + $0x130] sm:%s217] %v302
                %v304 = vld [vmem:[%s224 + $0x270] sm:%s217]
                %305 = vst [vmem:[%s225 + $0x138] sm:%s217] %v304
                %v306 = vld [vmem:[%s224 + $0x280] sm:%s217]
                %307 = vst [vmem:[%s225 + $0x140] sm:%s217] %v306
                %v308 = vld [vmem:[%s224 + $0x290] sm:%s217]
                %309 = vst [vmem:[%s225 + $0x148] sm:%s217] %v308
                %v310 = vld [vmem:[%s224 + $0x2a0] sm:%s217]
                %311 = vst [vmem:[%s225 + $0x150] sm:%s217] %v310
                %v312 = vld [vmem:[%s224 + $0x2b0] sm:%s217]
                %313 = vst [vmem:[%s225 + $0x158] sm:%s217] %v312
                %v314 = vld [vmem:[%s224 + $0x2c0] sm:%s217]
                %315 = vst [vmem:[%s225 + $0x160] sm:%s217] %v314
                %v316 = vld [vmem:[%s224 + $0x2d0] sm:%s217]
                %317 = vst [vmem:[%s225 + $0x168] sm:%s217] %v316
                %v318 = vld [vmem:[%s224 + $0x2e0] sm:%s217]
                %319 = vst [vmem:[%s225 + $0x170] sm:%s217] %v318
                %v320 = vld [vmem:[%s224 + $0x2f0] sm:%s217]
                %321 = vst [vmem:[%s225 + $0x178] sm:%s217] %v320
                %v322 = vld [vmem:[%s224 + $0x300] sm:%s217]
                %323 = vst [vmem:[%s225 + $0x180] sm:%s217] %v322
                %v324 = vld [vmem:[%s224 + $0x310] sm:%s217]
                %325 = vst [vmem:[%s225 + $0x188] sm:%s217] %v324
                %v326 = vld [vmem:[%s224 + $0x320] sm:%s217]
                %327 = vst [vmem:[%s225 + $0x190] sm:%s217] %v326
                %v328 = vld [vmem:[%s224 + $0x330] sm:%s217]
                %329 = vst [vmem:[%s225 + $0x198] sm:%s217] %v328
                %v330 = vld [vmem:[%s224 + $0x340] sm:%s217]
                %331 = vst [vmem:[%s225 + $0x1a0] sm:%s217] %v330
                %v332 = vld [vmem:[%s224 + $0x350] sm:%s217]
                %333 = vst [vmem:[%s225 + $0x1a8] sm:%s217] %v332
                %v334 = vld [vmem:[%s224 + $0x360] sm:%s217]
                %335 = vst [vmem:[%s225 + $0x1b0] sm:%s217] %v334
                %v336 = vld [vmem:[%s224 + $0x370] sm:%s217]
                %337 = vst [vmem:[%s225 + $0x1b8] sm:%s217] %v336
                %v338 = vld [vmem:[%s224 + $0x380] sm:%s217]
                %339 = vst [vmem:[%s225 + $0x1c0] sm:%s217] %v338
                %v340 = vld [vmem:[%s224 + $0x390] sm:%s217]
                %341 = vst [vmem:[%s225 + $0x1c8] sm:%s217] %v340
                %v342 = vld [vmem:[%s224 + $0x3a0] sm:%s217]
                %343 = vst [vmem:[%s225 + $0x1d0] sm:%s217] %v342
                %v344 = vld [vmem:[%s224 + $0x3b0] sm:%s217]
                %345 = vst [vmem:[%s225 + $0x1d8] sm:%s217] %v344
                %v346 = vld [vmem:[%s224 + $0x3c0] sm:%s217]
                %347 = vst [vmem:[%s225 + $0x1e0] sm:%s217] %v346
                %v348 = vld [vmem:[%s224 + $0x3d0] sm:%s217]
                %349 = vst [vmem:[%s225 + $0x1e8] sm:%s217] %v348
                %v350 = vld [vmem:[%s224 + $0x3e0] sm:%s217]
                %351 = vst [vmem:[%s225 + $0x1f0] sm:%s217] %v350
                %v352 = vld [vmem:[%s224 + $0x3f0] sm:%s217]
                %353 = vst [vmem:[%s225 + $0x1f8] sm:%s217] %v352
              $region60: #{discriminator_forward.13} parent=54 // loop_footer
                %s223 = sadd.s32 1, %s219
              $region61: #{discriminator_forward.13} parent=54 // loop_footer_branch
                %218 = sbr.rel target = $region57
              $region62: #{discriminator_forward.13} parent=54 // loop_exit
                _
            $region55: #{discriminator_forward.13} parent=46 // pred_fallthru
              _
          $region47: #{discriminator_forward.13} parent=42 // pred_fallthru
            _
          %494 = vnop
        $region43: #{discriminator_forward.13} parent=15 // pred_fallthru
          _
        // Predicated region
        $region78: #{discriminator_forward.13} parent=15 // pred_check
          %p495 = pneg %p104
        $region79: #{discriminator_forward.13} parent=15 // pred_check_branch
          %497 = sbr.rel (%p495) target = $region81
        $region80: #{discriminator_forward.13} parent=15 // pred_region
          %s498 = smul.u32 2, %s17
          %p499 = scmp.lt.s32.totalorder %s498, 3
          %s500 = scalar_select %p499, %s498, 3
          %s501 = scalar_lea.vmem %s2, %s500
          %s502 = smul.u32 2, %s17
        $region81: #{discriminator_forward.13} parent=15 // pred_fallthru
          _
      $region16: #{discriminator_forward.13} parent=5 // pred_fallthru
        _
      %p503 = scmp.le.s32.totalorder 1, %s9
      %p504 = scmp.lt.s32.totalorder %s9, 17
      %p505 = pnand %p503, %p504
      %p506 = pneg %p505
      // Predicated region
      $region82: #{discriminator_forward.13} parent=5 // pred_check
        _
      $region83: #{discriminator_forward.13} parent=5 // pred_check_branch
        %508 = sbr.rel (%p505) target = $region85
      $region84: #{discriminator_forward.13} parent=5 // pred_region
        %s509 = ssub.s32 %s9, 1
        %s510 = sand.u32 %s43, 1
        %s511 = sand.u32 %s43, 1
        %s512 = smul.addr %s511, 48
        %s513 = scalar_lea.vmem [#allocation3], %s512
        // Predicated region
        $region86: #{discriminator_forward.13} parent=84 // pred_check
          %p514 = pneg %p56
        $region87: #{discriminator_forward.13} parent=84 // pred_check_branch
          %516 = sbr.rel (%p514) target = $region89
        $region88: #{discriminator_forward.13} parent=84 // pred_region
          _
        $region89: #{discriminator_forward.13} parent=84 // pred_fallthru
          _
        %s517 = sand.u32 %s71, 1
        %s518 = sand.u32 %s71, 1
        %s519 = smul.addr %s518, 512
        %s520 = scalar_lea.vmem [#allocation4], %s519
        // Predicated region
        $region90: #{discriminator_forward.13} parent=84 // pred_check
          %p521 = pneg %p84
        $region91: #{discriminator_forward.13} parent=84 // pred_check_branch
          %523 = sbr.rel (%p521) target = $region93
        $region92: #{discriminator_forward.13} parent=84 // pred_region
          _
        $region93: #{discriminator_forward.13} parent=84 // pred_fallthru
          _
        %s524 = sand.u32 %s43, 1
        %s525 = sand.u32 %s43, 1
        %s526 = smul.addr %s525, 48
        %s527 = scalar_lea.vmem [#allocation3], %s526
        %p528 = pneg %p56
        %p529 = pneg %p53
        %s530 = sand.u32 %s71, 1
        %s531 = sand.u32 %s71, 1
        %s532 = smul.addr %s531, 512
        %s533 = scalar_lea.vmem [#allocation4], %s532
        %p534 = pneg %p84
        %p535 = pneg %p81
        %s536 = smul.u32 2, %s20
        %p537 = scmp.lt.s32.totalorder %s536, 3
        %s538 = scalar_select %p537, %s536, 3
        %s539 = scalar_lea.vmem %s2, %s538
        %p540 = pneg %p110
        %p541 = pneg %p107
        %p542 = pneg %p138
        %p543 = pneg %p135
        %s544 = sand.u32 %s125, 1
        %s545 = sand.u32 %s125, 1
        %s546 = smul.addr %s545, 24
        %s547 = scalar_lea.vmem [#allocation5], %s546
        %s548 = smul.u32 3, %s19
        %s549 = smul.u32 4, %s21
        %s550 = smul.u32 64, %s21
        %s551 = smul.u32 2, %s20
        %s552 = smul.u32 2, %s20
        %p553 = scmp.lt.s32.totalorder %s552, 3
        %s554 = scalar_select %p553, %s552, 3
        %s555 = scalar_lea.vmem %s2, %s554
        %s556 = smul.u32 2, %s20
        %s557 = smul.u32 3, %s19
        %s558 = smul.u32 2, %s20
        %p559 = scmp.eq.s32.totalorder %s21, 0
        // Predicated region
        $region94: #{discriminator_forward.13} parent=84 // pred_check
          %p560 = pneg %p559
        $region95: #{discriminator_forward.13} parent=84 // pred_check_branch
          %562 = sbr.rel (%p560) target = $region97
        $region96: #{discriminator_forward.13} parent=84 // pred_region
          %563 = vst [vmem:[#allocation2] sm:$0xff] 0.0
          %564 = vst [vmem:[#allocation2 + $0x8] sm:$0xff] 0.0
          %565 = vst [vmem:[#allocation2 + $0x10] sm:$0xff] 0.0
          %566 = vst [vmem:[#allocation2 + $0x18] sm:$0xff] 0.0
          %567 = vst [vmem:[#allocation2 + $0x20] sm:$0xff] 0.0
          %568 = vst [vmem:[#allocation2 + $0x28] sm:$0xff] 0.0
        $region97: #{discriminator_forward.13} parent=84 // pred_fallthru
          _
        %v569 = vld [vmem:[#allocation2] sm:$0xff]
        %v570 = vld [vmem:[#allocation2 + $0x8] sm:$0xff]
        %v571 = vld [vmem:[#allocation2 + $0x10] sm:$0xff]
        %v572 = vld [vmem:[#allocation2 + $0x18] sm:$0xff]
        %v573 = vld [vmem:[#allocation2 + $0x20] sm:$0xff]
        %v574 = vld [vmem:[#allocation2 + $0x28] sm:$0xff]
        %v575 = vld [vmem:[%s513] sm:$0xff]
        %v576 = vld [vmem:[%s513 + $0x8] sm:$0xff]
        %v577 = vld [vmem:[%s513 + $0x10] sm:$0xff]
        %v578 = vld [vmem:[%s513 + $0x18] sm:$0xff]
        %v579 = vld [vmem:[%s513 + $0x20] sm:$0xff]
        %v580 = vld [vmem:[%s513 + $0x28] sm:$0xff]
        %v581 = vld [vmem:[%s520] sm:$0xff]
        %v582 = vld [vmem:[%s520 + $0x8] sm:$0xff]
        %v583 = vld [vmem:[%s520 + $0x10] sm:$0xff]
        %v584 = vld [vmem:[%s520 + $0x18] sm:$0xff]
        %v585 = vld [vmem:[%s520 + $0x20] sm:$0xff]
        %v586 = vld [vmem:[%s520 + $0x28] sm:$0xff]
        %v587 = vld [vmem:[%s520 + $0x30] sm:$0xff]
        %v588 = vld [vmem:[%s520 + $0x38] sm:$0xff]
        %v589 = vld [vmem:[%s520 + $0x40] sm:$0xff]
        %v590 = vld [vmem:[%s520 + $0x48] sm:$0xff]
        %v591 = vld [vmem:[%s520 + $0x50] sm:$0xff]
        %v592 = vld [vmem:[%s520 + $0x58] sm:$0xff]
        %v593 = vld [vmem:[%s520 + $0x60] sm:$0xff]
        %v594 = vld [vmem:[%s520 + $0x68] sm:$0xff]
        %v595 = vld [vmem:[%s520 + $0x70] sm:$0xff]
        %v596 = vld [vmem:[%s520 + $0x78] sm:$0xff]
        %v597 = vld [vmem:[%s520 + $0x80] sm:$0xff]
        %v598 = vld [vmem:[%s520 + $0x88] sm:$0xff]
        %v599 = vld [vmem:[%s520 + $0x90] sm:$0xff]
        %v600 = vld [vmem:[%s520 + $0x98] sm:$0xff]
        %v601 = vld [vmem:[%s520 + $0xa0] sm:$0xff]
        %v602 = vld [vmem:[%s520 + $0xa8] sm:$0xff]
        %v603 = vld [vmem:[%s520 + $0xb0] sm:$0xff]
        %v604 = vld [vmem:[%s520 + $0xb8] sm:$0xff]
        %v605 = vld [vmem:[%s520 + $0xc0] sm:$0xff]
        %v606 = vld [vmem:[%s520 + $0xc8] sm:$0xff]
        %v607 = vld [vmem:[%s520 + $0xd0] sm:$0xff]
        %v608 = vld [vmem:[%s520 + $0xd8] sm:$0xff]
        %v609 = vld [vmem:[%s520 + $0xe0] sm:$0xff]
        %v610 = vld [vmem:[%s520 + $0xe8] sm:$0xff]
        %v611 = vld [vmem:[%s520 + $0xf0] sm:$0xff]
        %v612 = vld [vmem:[%s520 + $0xf8] sm:$0xff]
        %v613 = vld [vmem:[%s520 + $0x100] sm:$0xff]
        %v614 = vld [vmem:[%s520 + $0x108] sm:$0xff]
        %v615 = vld [vmem:[%s520 + $0x110] sm:$0xff]
        %v616 = vld [vmem:[%s520 + $0x118] sm:$0xff]
        %v617 = vld [vmem:[%s520 + $0x120] sm:$0xff]
        %v618 = vld [vmem:[%s520 + $0x128] sm:$0xff]
        %v619 = vld [vmem:[%s520 + $0x130] sm:$0xff]
        %v620 = vld [vmem:[%s520 + $0x138] sm:$0xff]
        %v621 = vld [vmem:[%s520 + $0x140] sm:$0xff]
        %v622 = vld [vmem:[%s520 + $0x148] sm:$0xff]
        %v623 = vld [vmem:[%s520 + $0x150] sm:$0xff]
        %v624 = vld [vmem:[%s520 + $0x158] sm:$0xff]
        %v625 = vld [vmem:[%s520 + $0x160] sm:$0xff]
        %v626 = vld [vmem:[%s520 + $0x168] sm:$0xff]
        %v627 = vld [vmem:[%s520 + $0x170] sm:$0xff]
        %v628 = vld [vmem:[%s520 + $0x178] sm:$0xff]
        %v629 = vld [vmem:[%s520 + $0x180] sm:$0xff]
        %v630 = vld [vmem:[%s520 + $0x188] sm:$0xff]
        %v631 = vld [vmem:[%s520 + $0x190] sm:$0xff]
        %v632 = vld [vmem:[%s520 + $0x198] sm:$0xff]
        %v633 = vld [vmem:[%s520 + $0x1a0] sm:$0xff]
        %v634 = vld [vmem:[%s520 + $0x1a8] sm:$0xff]
        %v635 = vld [vmem:[%s520 + $0x1b0] sm:$0xff]
        %v636 = vld [vmem:[%s520 + $0x1b8] sm:$0xff]
        %v637 = vld [vmem:[%s520 + $0x1c0] sm:$0xff]
        %v638 = vld [vmem:[%s520 + $0x1c8] sm:$0xff]
        %v639 = vld [vmem:[%s520 + $0x1d0] sm:$0xff]
        %v640 = vld [vmem:[%s520 + $0x1d8] sm:$0xff]
        %v641 = vld [vmem:[%s520 + $0x1e0] sm:$0xff]
        %v642 = vld [vmem:[%s520 + $0x1e8] sm:$0xff]
        %v643 = vld [vmem:[%s520 + $0x1f0] sm:$0xff]
        %v644 = vld [vmem:[%s520 + $0x1f8] sm:$0xff]
        %v651 = vunpack.c.l.b16 %v575
        %v652 = vunpack.c.h.b16 %v575
        %v653 = vunpack.c.l.b16 %v576
        %v654 = vunpack.c.h.b16 %v576
        %v655 = vunpack.c.l.b16 %v577
        %v656 = vunpack.c.h.b16 %v577
        %v657 = vunpack.c.l.b16 %v578
        %v658 = vunpack.c.h.b16 %v578
        %v659 = vunpack.c.l.b16 %v579
        %v660 = vunpack.c.h.b16 %v579
        %v661 = vunpack.c.l.b16 %v580
        %v662 = vunpack.c.h.b16 %v580
        %v663 = vpack.c.b16 %v655, %v651
        %v664 = vpack.c.b16 %v656, %v652
        %v665 = vpack.c.b16 %v657, %v653
        %v666 = vpack.c.b16 %v658, %v654
        %v667 = vpack.c.b16 %v659, %v659
        %v668 = vpack.c.b16 %v660, %v660
        %v669 = vpack.c.b16 %v661, %v661
        %v670 = vpack.c.b16 %v662, %v662
        %v743 = vunpack.c.l.b16 %v581
        %v744 = vunpack.c.h.b16 %v581
        %v745 = vunpack.c.l.b16 %v582
        %v746 = vunpack.c.h.b16 %v582
        %v747 = vunpack.c.l.b16 %v583
        %v748 = vunpack.c.h.b16 %v583
        %v749 = vunpack.c.l.b16 %v584
        %v750 = vunpack.c.h.b16 %v584
        %v751 = vunpack.c.l.b16 %v585
        %v752 = vunpack.c.h.b16 %v585
        %v753 = vunpack.c.l.b16 %v586
        %v754 = vunpack.c.h.b16 %v586
        %v755 = vunpack.c.l.b16 %v587
        %v756 = vunpack.c.h.b16 %v587
        %v757 = vunpack.c.l.b16 %v588
        %v758 = vunpack.c.h.b16 %v588
        %v759 = vunpack.c.l.b16 %v589
        %v760 = vunpack.c.h.b16 %v589
        %v761 = vunpack.c.l.b16 %v590
        %v762 = vunpack.c.h.b16 %v590
        %v763 = vunpack.c.l.b16 %v591
        %v764 = vunpack.c.h.b16 %v591
        %v765 = vunpack.c.l.b16 %v592
        %v766 = vunpack.c.h.b16 %v592
        %v767 = vunpack.c.l.b16 %v593
        %v768 = vunpack.c.h.b16 %v593
        %v769 = vunpack.c.l.b16 %v594
        %v770 = vunpack.c.h.b16 %v594
        %v771 = vunpack.c.l.b16 %v595
        %v772 = vunpack.c.h.b16 %v595
        %v773 = vunpack.c.l.b16 %v596
        %v774 = vunpack.c.h.b16 %v596
        %v775 = vunpack.c.l.b16 %v597
        %v776 = vunpack.c.h.b16 %v597
        %v777 = vunpack.c.l.b16 %v598
        %v778 = vunpack.c.h.b16 %v598
        %v779 = vunpack.c.l.b16 %v599
        %v780 = vunpack.c.h.b16 %v599
        %v781 = vunpack.c.l.b16 %v600
        %v782 = vunpack.c.h.b16 %v600
        %v783 = vunpack.c.l.b16 %v601
        %v784 = vunpack.c.h.b16 %v601
        %v785 = vunpack.c.l.b16 %v602
        %v786 = vunpack.c.h.b16 %v602
        %v787 = vunpack.c.l.b16 %v603
        %v788 = vunpack.c.h.b16 %v603
        %v789 = vunpack.c.l.b16 %v604
        %v790 = vunpack.c.h.b16 %v604
        %v791 = vunpack.c.l.b16 %v605
        %v792 = vunpack.c.h.b16 %v605
        %v793 = vunpack.c.l.b16 %v606
        %v794 = vunpack.c.h.b16 %v606
        %v795 = vunpack.c.l.b16 %v607
        %v796 = vunpack.c.h.b16 %v607
        %v797 = vunpack.c.l.b16 %v608
        %v798 = vunpack.c.h.b16 %v608
        %v799 = vunpack.c.l.b16 %v609
        %v800 = vunpack.c.h.b16 %v609
        %v801 = vunpack.c.l.b16 %v610
        %v802 = vunpack.c.h.b16 %v610
        %v803 = vunpack.c.l.b16 %v611
        %v804 = vunpack.c.h.b16 %v611
        %v805 = vunpack.c.l.b16 %v612
        %v806 = vunpack.c.h.b16 %v612
        %v807 = vunpack.c.l.b16 %v613
        %v808 = vunpack.c.h.b16 %v613
        %v809 = vunpack.c.l.b16 %v614
        %v810 = vunpack.c.h.b16 %v614
        %v811 = vunpack.c.l.b16 %v615
        %v812 = vunpack.c.h.b16 %v615
        %v813 = vunpack.c.l.b16 %v616
        %v814 = vunpack.c.h.b16 %v616
        %v815 = vunpack.c.l.b16 %v617
        %v816 = vunpack.c.h.b16 %v617
        %v817 = vunpack.c.l.b16 %v618
        %v818 = vunpack.c.h.b16 %v618
        %v819 = vunpack.c.l.b16 %v619
        %v820 = vunpack.c.h.b16 %v619
        %v821 = vunpack.c.l.b16 %v620
        %v822 = vunpack.c.h.b16 %v620
        %v823 = vunpack.c.l.b16 %v621
        %v824 = vunpack.c.h.b16 %v621
        %v825 = vunpack.c.l.b16 %v622
        %v826 = vunpack.c.h.b16 %v622
        %v827 = vunpack.c.l.b16 %v623
        %v828 = vunpack.c.h.b16 %v623
        %v829 = vunpack.c.l.b16 %v624
        %v830 = vunpack.c.h.b16 %v624
        %v831 = vunpack.c.l.b16 %v625
        %v832 = vunpack.c.h.b16 %v625
        %v833 = vunpack.c.l.b16 %v626
        %v834 = vunpack.c.h.b16 %v626
        %v835 = vunpack.c.l.b16 %v627
        %v836 = vunpack.c.h.b16 %v627
        %v837 = vunpack.c.l.b16 %v628
        %v838 = vunpack.c.h.b16 %v628
        %v839 = vunpack.c.l.b16 %v629
        %v840 = vunpack.c.h.b16 %v629
        %v841 = vunpack.c.l.b16 %v630
        %v842 = vunpack.c.h.b16 %v630
        %v843 = vunpack.c.l.b16 %v631
        %v844 = vunpack.c.h.b16 %v631
        %v845 = vunpack.c.l.b16 %v632
        %v846 = vunpack.c.h.b16 %v632
        %v847 = vunpack.c.l.b16 %v633
        %v848 = vunpack.c.h.b16 %v633
        %v849 = vunpack.c.l.b16 %v634
        %v850 = vunpack.c.h.b16 %v634
        %v851 = vunpack.c.l.b16 %v635
        %v852 = vunpack.c.h.b16 %v635
        %v853 = vunpack.c.l.b16 %v636
        %v854 = vunpack.c.h.b16 %v636
        %v855 = vunpack.c.l.b16 %v637
        %v856 = vunpack.c.h.b16 %v637
        %v857 = vunpack.c.l.b16 %v638
        %v858 = vunpack.c.h.b16 %v638
        %v859 = vunpack.c.l.b16 %v639
        %v860 = vunpack.c.h.b16 %v639
        %v861 = vunpack.c.l.b16 %v640
        %v862 = vunpack.c.h.b16 %v640
        %v863 = vunpack.c.l.b16 %v641
        %v864 = vunpack.c.h.b16 %v641
        %v865 = vunpack.c.l.b16 %v642
        %v866 = vunpack.c.h.b16 %v642
        %v867 = vunpack.c.l.b16 %v643
        %v868 = vunpack.c.h.b16 %v643
        %v869 = vunpack.c.l.b16 %v644
        %v870 = vunpack.c.h.b16 %v644
        %v871 = vpack.c.b16 %v745, %v743
        %v872 = vpack.c.b16 %v746, %v744
        %v873 = vpack.c.b16 %v749, %v747
        %v874 = vpack.c.b16 %v750, %v748
        %v875 = vpack.c.b16 %v753, %v751
        %v876 = vpack.c.b16 %v754, %v752
        %v877 = vpack.c.b16 %v757, %v755
        %v878 = vpack.c.b16 %v758, %v756
        %v879 = vpack.c.b16 %v761, %v759
        %v880 = vpack.c.b16 %v762, %v760
        %v881 = vpack.c.b16 %v765, %v763
        %v882 = vpack.c.b16 %v766, %v764
        %v883 = vpack.c.b16 %v769, %v767
        %v884 = vpack.c.b16 %v770, %v768
        %v885 = vpack.c.b16 %v773, %v771
        %v886 = vpack.c.b16 %v774, %v772
        %v887 = vpack.c.b16 %v777, %v775
        %v888 = vpack.c.b16 %v778, %v776
        %v889 = vpack.c.b16 %v781, %v779
        %v890 = vpack.c.b16 %v782, %v780
        %v891 = vpack.c.b16 %v785, %v783
        %v892 = vpack.c.b16 %v786, %v784
        %v893 = vpack.c.b16 %v789, %v787
        %v894 = vpack.c.b16 %v790, %v788
        %v895 = vpack.c.b16 %v793, %v791
        %v896 = vpack.c.b16 %v794, %v792
        %v897 = vpack.c.b16 %v797, %v795
        %v898 = vpack.c.b16 %v798, %v796
        %v899 = vpack.c.b16 %v801, %v799
        %v900 = vpack.c.b16 %v802, %v800
        %v901 = vpack.c.b16 %v805, %v803
        %v902 = vpack.c.b16 %v806, %v804
        %v903 = vpack.c.b16 %v809, %v807
        %v904 = vpack.c.b16 %v810, %v808
        %v905 = vpack.c.b16 %v813, %v811
        %v906 = vpack.c.b16 %v814, %v812
        %v907 = vpack.c.b16 %v817, %v815
        %v908 = vpack.c.b16 %v818, %v816
        %v909 = vpack.c.b16 %v821, %v819
        %v910 = vpack.c.b16 %v822, %v820
        %v911 = vpack.c.b16 %v825, %v823
        %v912 = vpack.c.b16 %v826, %v824
        %v913 = vpack.c.b16 %v829, %v827
        %v914 = vpack.c.b16 %v830, %v828
        %v915 = vpack.c.b16 %v833, %v831
        %v916 = vpack.c.b16 %v834, %v832
        %v917 = vpack.c.b16 %v837, %v835
        %v918 = vpack.c.b16 %v838, %v836
        %v919 = vpack.c.b16 %v841, %v839
        %v920 = vpack.c.b16 %v842, %v840
        %v921 = vpack.c.b16 %v845, %v843
        %v922 = vpack.c.b16 %v846, %v844
        %v923 = vpack.c.b16 %v849, %v847
        %v924 = vpack.c.b16 %v850, %v848
        %v925 = vpack.c.b16 %v853, %v851
        %v926 = vpack.c.b16 %v854, %v852
        %v927 = vpack.c.b16 %v857, %v855
        %v928 = vpack.c.b16 %v858, %v856
        %v929 = vpack.c.b16 %v861, %v859
        %v930 = vpack.c.b16 %v862, %v860
        %v931 = vpack.c.b16 %v865, %v863
        %v932 = vpack.c.b16 %v866, %v864
        %v933 = vpack.c.b16 %v869, %v867
        %v934 = vpack.c.b16 %v870, %v868
        %999 = vmatpush.bf16.msra.mxu0 %v885
        %1000 = vmatpush.bf16.msra.mxu0 %v883
        %1001 = vmatpush.bf16.msra.mxu0 %v881
        %1002 = vmatpush.bf16.msra.mxu0 %v879
        %1003 = vmatpush.bf16.msra.mxu0 %v877
        %1004 = vmatpush.bf16.msra.mxu0 %v875
        %1005 = vmatpush.bf16.msra.mxu0 %v873
        %1006 = vmatpush.bf16.msra.mxu0 %v871
        %1007 = vmatmul.bf16.gmra.mxu0 %v663
        %v1008 = vpop.f32.mrf.mxu0
        %v1009 = vadd.f32 0.0, %v1008
        %v1010 = vpop.f32.mrf.mxu0
        %v1011 = vadd.f32 0.0, %v1010
        %1012 = vmatmul.bf16.gmra.mxu0 %v667
        %v1013 = vpop.f32.mrf.mxu0
        %v1014 = vadd.f32 0.0, %v1013
        %v1015 = vpop.f32.mrf.mxu0
        %1016 = vdwg.mxu0
        %1017 = vmatpush.bf16.msra.mxu0 %v901
        %1018 = vmatpush.bf16.msra.mxu0 %v899
        %1019 = vmatpush.bf16.msra.mxu0 %v897
        %1020 = vmatpush.bf16.msra.mxu0 %v895
        %1021 = vmatpush.bf16.msra.mxu0 %v893
        %1022 = vmatpush.bf16.msra.mxu0 %v891
        %1023 = vmatpush.bf16.msra.mxu0 %v889
        %1024 = vmatpush.bf16.msra.mxu0 %v887
        %1025 = vmatmul.bf16.gmra.mxu0 %v664
        %v1026 = vpop.f32.mrf.mxu0
        %v1027 = vadd.f32 %v1009, %v1026
        %v1028 = vpop.f32.mrf.mxu0
        %v1029 = vadd.f32 %v1011, %v1028
        %1030 = vmatmul.bf16.gmra.mxu0 %v668
        %v1031 = vpop.f32.mrf.mxu0
        %v1032 = vadd.f32 %v1014, %v1031
        %v1033 = vpop.f32.mrf.mxu0
        %1034 = vdwg.mxu0
        %1035 = vmatpush.bf16.msra.mxu0 %v917
        %1036 = vmatpush.bf16.msra.mxu0 %v915
        %1037 = vmatpush.bf16.msra.mxu0 %v913
        %1038 = vmatpush.bf16.msra.mxu0 %v911
        %1039 = vmatpush.bf16.msra.mxu0 %v909
        %1040 = vmatpush.bf16.msra.mxu0 %v907
        %1041 = vmatpush.bf16.msra.mxu0 %v905
        %1042 = vmatpush.bf16.msra.mxu0 %v903
        %1043 = vmatmul.bf16.gmra.mxu0 %v665
        %v1044 = vpop.f32.mrf.mxu0
        %v1045 = vadd.f32 %v1027, %v1044
        %v1046 = vpop.f32.mrf.mxu0
        %v1047 = vadd.f32 %v1029, %v1046
        %1048 = vmatmul.bf16.gmra.mxu0 %v669
        %v1049 = vpop.f32.mrf.mxu0
        %v1050 = vadd.f32 %v1032, %v1049
        %v1051 = vpop.f32.mrf.mxu0
        %1052 = vdwg.mxu0
        %1053 = vmatpush.bf16.msra.mxu0 %v933
        %1054 = vmatpush.bf16.msra.mxu0 %v931
        %1055 = vmatpush.bf16.msra.mxu0 %v929
        %1056 = vmatpush.bf16.msra.mxu0 %v927
        %1057 = vmatpush.bf16.msra.mxu0 %v925
        %1058 = vmatpush.bf16.msra.mxu0 %v923
        %1059 = vmatpush.bf16.msra.mxu0 %v921
        %1060 = vmatpush.bf16.msra.mxu0 %v919
        %1061 = vmatmul.bf16.gmra.mxu0 %v666
        %v1062 = vpop.f32.mrf.mxu0
        %v1063 = vadd.f32 %v1045, %v1062
        %v1064 = vpop.f32.mrf.mxu0
        %v1065 = vadd.f32 %v1047, %v1064
        %1066 = vmatmul.bf16.gmra.mxu0 %v670
        %v1067 = vpop.f32.mrf.mxu0
        %v1068 = vadd.f32 %v1050, %v1067
        %v1069 = vpop.f32.mrf.mxu0
        %1070 = vdwg.mxu0
        %1071 = vmatpush.bf16.msra.mxu0 %v886
        %1072 = vmatpush.bf16.msra.mxu0 %v884
        %1073 = vmatpush.bf16.msra.mxu0 %v882
        %1074 = vmatpush.bf16.msra.mxu0 %v880
        %1075 = vmatpush.bf16.msra.mxu0 %v878
        %1076 = vmatpush.bf16.msra.mxu0 %v876
        %1077 = vmatpush.bf16.msra.mxu0 %v874
        %1078 = vmatpush.bf16.msra.mxu0 %v872
        %1079 = vmatmul.bf16.gmra.mxu0 %v663
        %v1080 = vpop.f32.mrf.mxu0
        %v1081 = vadd.f32 0.0, %v1080
        %v1082 = vpop.f32.mrf.mxu0
        %v1083 = vadd.f32 0.0, %v1082
        %1084 = vmatmul.bf16.gmra.mxu0 %v667
        %v1085 = vpop.f32.mrf.mxu0
        %v1086 = vadd.f32 0.0, %v1085
        %v1087 = vpop.f32.mrf.mxu0
        %1088 = vdwg.mxu0
        %1089 = vmatpush.bf16.msra.mxu0 %v902
        %1090 = vmatpush.bf16.msra.mxu0 %v900
        %1091 = vmatpush.bf16.msra.mxu0 %v898
        %1092 = vmatpush.bf16.msra.mxu0 %v896
        %1093 = vmatpush.bf16.msra.mxu0 %v894
        %1094 = vmatpush.bf16.msra.mxu0 %v892
        %1095 = vmatpush.bf16.msra.mxu0 %v890
        %1096 = vmatpush.bf16.msra.mxu0 %v888
        %1097 = vmatmul.bf16.gmra.mxu0 %v664
        %v1098 = vpop.f32.mrf.mxu0
        %v1099 = vadd.f32 %v1081, %v1098
        %v1100 = vpop.f32.mrf.mxu0
        %v1101 = vadd.f32 %v1083, %v1100
        %1102 = vmatmul.bf16.gmra.mxu0 %v668
        %v1103 = vpop.f32.mrf.mxu0
        %v1104 = vadd.f32 %v1086, %v1103
        %v1105 = vpop.f32.mrf.mxu0
        %1106 = vdwg.mxu0
        %1107 = vmatpush.bf16.msra.mxu0 %v918
        %1108 = vmatpush.bf16.msra.mxu0 %v916
        %1109 = vmatpush.bf16.msra.mxu0 %v914
        %1110 = vmatpush.bf16.msra.mxu0 %v912
        %1111 = vmatpush.bf16.msra.mxu0 %v910
        %1112 = vmatpush.bf16.msra.mxu0 %v908
        %1113 = vmatpush.bf16.msra.mxu0 %v906
        %1114 = vmatpush.bf16.msra.mxu0 %v904
        %1115 = vmatmul.bf16.gmra.mxu0 %v665
        %v1116 = vpop.f32.mrf.mxu0
        %v1117 = vadd.f32 %v1099, %v1116
        %v1118 = vpop.f32.mrf.mxu0
        %v1119 = vadd.f32 %v1101, %v1118
        %1120 = vmatmul.bf16.gmra.mxu0 %v669
        %v1121 = vpop.f32.mrf.mxu0
        %v1122 = vadd.f32 %v1104, %v1121
        %v1123 = vpop.f32.mrf.mxu0
        %1124 = vdwg.mxu0
        %1125 = vmatpush.bf16.msra.mxu0 %v934
        %1126 = vmatpush.bf16.msra.mxu0 %v932
        %1127 = vmatpush.bf16.msra.mxu0 %v930
        %1128 = vmatpush.bf16.msra.mxu0 %v928
        %1129 = vmatpush.bf16.msra.mxu0 %v926
        %1130 = vmatpush.bf16.msra.mxu0 %v924
        %1131 = vmatpush.bf16.msra.mxu0 %v922
        %1132 = vmatpush.bf16.msra.mxu0 %v920
        %1133 = vmatmul.bf16.gmra.mxu0 %v666
        %v1134 = vpop.f32.mrf.mxu0
        %v1135 = vadd.f32 %v1117, %v1134
        %v1136 = vpop.f32.mrf.mxu0
        %v1137 = vadd.f32 %v1119, %v1136
        %1138 = vmatmul.bf16.gmra.mxu0 %v670
        %v1139 = vpop.f32.mrf.mxu0
        %v1140 = vadd.f32 %v1122, %v1139
        %v1141 = vpop.f32.mrf.mxu0
        %1142 = vdwg.mxu0
        %v1143 = vadd.f32 %v569, %v1063
        %v1144 = vadd.f32 %v570, %v1135
        %v1145 = vadd.f32 %v571, %v1065
        %v1146 = vadd.f32 %v572, %v1137
        %v1147 = vadd.f32 %v573, %v1068
        %v1148 = vadd.f32 %v574, %v1140
        %1149 = vst [vmem:[#allocation2] sm:$0xff] %v1143
        %1150 = vst [vmem:[#allocation2 + $0x8] sm:$0xff] %v1144
        %1151 = vst [vmem:[#allocation2 + $0x10] sm:$0xff] %v1145
        %1152 = vst [vmem:[#allocation2 + $0x18] sm:$0xff] %v1146
        %1153 = vst [vmem:[#allocation2 + $0x20] sm:$0xff] %v1147
        %1154 = vst [vmem:[#allocation2 + $0x28] sm:$0xff] %v1148
        %p1155 = scmp.eq.s32.totalorder %s21, 7
        // Predicated region
        $region98: #{discriminator_forward.13} parent=84 // pred_check
          %p1156 = pneg %p1155
        $region99: #{discriminator_forward.13} parent=84 // pred_check_branch
          %1158 = sbr.rel (%p1156) target = $region101
        $region100: #{discriminator_forward.13} parent=84 // pred_region
          %v1159 = vld [vmem:[#allocation2] sm:$0xff]
          %v1160 = vld [vmem:[#allocation2 + $0x8] sm:$0xff]
          %v1161 = vld [vmem:[#allocation2 + $0x10] sm:$0xff]
          %v1162 = vld [vmem:[#allocation2 + $0x18] sm:$0xff]
          %v1163 = vld [vmem:[#allocation2 + $0x20] sm:$0xff]
          %v1164 = vld [vmem:[#allocation2 + $0x28] sm:$0xff]
          %v1165 = vld [vmem:[%s555] sm:$0x3]
          %v1167 = vperm.slane %v1165, 0
          %v1168 = vperm.slane %v1165, 1
          %v1171 = vadd.f32 %v1159, %v1167
          %v1172 = vadd.f32 %v1160, %v1168
          %v1173 = vadd.f32 %v1161, %v1167
          %v1174 = vadd.f32 %v1162, %v1168
          %v1175 = vadd.f32 %v1163, %v1167
          %v1176 = vadd.f32 %v1164, %v1168
          %v1177 = vpack.c.bf16 %v1172, %v1171
          %v1178 = vpack.c.bf16 %v1174, %v1173
          %v1179 = vpack.c.bf16 %v1176, %v1175
          %1180 = vst [vmem:[%s547] sm:$0xff] %v1177
          %1181 = vst [vmem:[%s547 + $0x8] sm:$0xff] %v1178
          %1182 = vst [vmem:[%s547 + $0x10] sm:$0xff] %v1179
        $region101: #{discriminator_forward.13} parent=84 // pred_fallthru
          _
        %s1183 = sand.u32 %s125, 1
        %s1184 = sand.u32 %s125, 1
        %s1185 = smul.addr %s1184, 24
        %s1186 = scalar_lea.vmem [#allocation5], %s1185
        // Predicated region
        $region102: #{discriminator_forward.13} parent=84 // pred_check
          %p1187 = pneg %p135
        $region103: #{discriminator_forward.13} parent=84 // pred_check_branch
          %1189 = sbr.rel (%p1187) target = $region105
        $region104: #{discriminator_forward.13} parent=84 // pred_region
          %s1190 = smul.u32 3, %s19
          %s1191 = smul.u32 2, %s20
          %s1192 = smul.addr %s1190, 4
          %s1193 = sadd.s32 %s1191, %s1192
          %s1194 = smul.addr %s1193, 4
          %s1195 = scalar_lea.vmem %s3, %s1194
          // Predicated region
          $region106: #{discriminator_forward.13} parent=104 // pred_check
            _
          $region107: #{discriminator_forward.13} parent=104 // pred_check_branch
            %1197 = sbr.rel (0) target = $region109
          $region108: #{discriminator_forward.13} parent=104 // pred_region
            // Predicated region
            $region110: #{discriminator_forward.13} parent=108 // pred_check
              _
            $region111: #{discriminator_forward.13} parent=108 // pred_check_branch
              %1199 = sbr.rel (0) target = $region113
            $region112: #{discriminator_forward.13} parent=108 // pred_region
              // Predicated region
              $region125: #{discriminator_forward.13} parent=112 // pred_check
                _
              $region126: #{discriminator_forward.13} parent=112 // pred_check_branch
                %1219 = sbr.rel (0) target = $region128
              $region127: #{discriminator_forward.13} parent=112 // pred_region
                loop: start=0, step=1, limit=1
                $region129: #{discriminator_forward.13} parent=127 // loop_pre_header
                  _
                $region130: #{discriminator_forward.13} parent=127 // loop_header
                  %s1221 = sphi 0, %s1225
                  %p1222 = scmp.ge.s32.totalorder %s1221, 1
                  %s1226 = sphi %s1186, %s1186
                  %s1227 = sphi %s1195, %s1195
                $region131: #{discriminator_forward.13} parent=127 // loop_header_branch
                  %1224 = sbr.rel (%p1222) target = $region135
                $region132: #{discriminator_forward.13} parent=127 // loop_body
                  %v1228 = vld [vmem:[%s1226] sm:$0xff]
                  %1229 = vst [vmem:[%s1227] sm:$0xff] %v1228
                  %v1230 = vld [vmem:[%s1226 + $0x8] sm:$0xff]
                  %1231 = vst [vmem:[%s1227 + $0x10] sm:$0xff] %v1230
                  %v1232 = vld [vmem:[%s1226 + $0x10] sm:$0xff]
                  %1233 = vst [vmem:[%s1227 + $0x20] sm:$0xff] %v1232
                $region133: #{discriminator_forward.13} parent=127 // loop_footer
                  %s1225 = sadd.s32 1, %s1221
                $region134: #{discriminator_forward.13} parent=127 // loop_footer_branch
                  %1220 = sbr.rel target = $region130
                $region135: #{discriminator_forward.13} parent=127 // loop_exit
                  _
              $region128: #{discriminator_forward.13} parent=112 // pred_fallthru
                _
              // Predicated region
              $region136: #{discriminator_forward.13} parent=112 // pred_check
                _
              $region137: #{discriminator_forward.13} parent=112 // pred_check_branch
                %1235 = sbr.rel target = $region139
              $region138: #{discriminator_forward.13} parent=112 // pred_region
                _
              $region139: #{discriminator_forward.13} parent=112 // pred_fallthru
                _
            $region113: #{discriminator_forward.13} parent=108 // pred_fallthru
              _
            // Predicated region
            $region114: #{discriminator_forward.13} parent=108 // pred_check
              _
            $region115: #{discriminator_forward.13} parent=108 // pred_check_branch
              %1201 = sbr.rel target = $region117
            $region116: #{discriminator_forward.13} parent=108 // pred_region
              %s1203 = ssub.s32 256, 1
              loop: start=0, step=1, limit=1
              $region118: #{discriminator_forward.13} parent=116 // loop_pre_header
                _
              $region119: #{discriminator_forward.13} parent=116 // loop_header
                %s1205 = sphi 0, %s1209
                %p1206 = scmp.ge.s32.totalorder %s1205, 1
                %s1210 = sphi %s1186, %s1186
                %s1211 = sphi %s1195, %s1195
              $region120: #{discriminator_forward.13} parent=116 // loop_header_branch
                %1208 = sbr.rel (%p1206) target = $region124
              $region121: #{discriminator_forward.13} parent=116 // loop_body
                %v1212 = vld [vmem:[%s1210] sm:%s1203]
                %1213 = vst [vmem:[%s1211] sm:%s1203] %v1212
                %v1214 = vld [vmem:[%s1210 + $0x8] sm:%s1203]
                %1215 = vst [vmem:[%s1211 + $0x10] sm:%s1203] %v1214
                %v1216 = vld [vmem:[%s1210 + $0x10] sm:%s1203]
                %1217 = vst [vmem:[%s1211 + $0x20] sm:%s1203] %v1216
              $region122: #{discriminator_forward.13} parent=116 // loop_footer
                %s1209 = sadd.s32 1, %s1205
              $region123: #{discriminator_forward.13} parent=116 // loop_footer_branch
                %1204 = sbr.rel target = $region119
              $region124: #{discriminator_forward.13} parent=116 // loop_exit
                _
            $region117: #{discriminator_forward.13} parent=108 // pred_fallthru
              _
          $region109: #{discriminator_forward.13} parent=104 // pred_fallthru
            _
          %1236 = vnop
        $region105: #{discriminator_forward.13} parent=84 // pred_fallthru
          _
      $region85: #{discriminator_forward.13} parent=5 // pred_fallthru
        _
      %p1237 = scmp.le.s32.totalorder 2, %s9
      // Predicated region
      $region140: #{discriminator_forward.13} parent=5 // pred_check
        %p1238 = pneg %p1237
      $region141: #{discriminator_forward.13} parent=5 // pred_check_branch
        %1240 = sbr.rel (%p1238) target = $region143
      $region142: #{discriminator_forward.13} parent=5 // pred_region
        %s1241 = ssub.s32 %s9, 2
        // Predicated region
        $region144: #{discriminator_forward.13} parent=142 // pred_check
          %p1242 = pneg %p141
        $region145: #{discriminator_forward.13} parent=142 // pred_check_branch
          %1244 = sbr.rel (%p1242) target = $region147
        $region146: #{discriminator_forward.13} parent=142 // pred_region
          %s1245 = sand.u32 %s126, 1
          %s1246 = sand.u32 %s126, 1
          %s1247 = smul.addr %s1246, 24
          %s1248 = scalar_lea.vmem [#allocation5], %s1247
        $region147: #{discriminator_forward.13} parent=142 // pred_fallthru
          _
      $region143: #{discriminator_forward.13} parent=5 // pred_fallthru
        _
    $region6: #{discriminator_forward.13} parent=1 // loop_footer
      %s13 = sadd.s32 1, %s9
    $region7: #{discriminator_forward.13} parent=1 // loop_footer_branch
      %8 = sbr.rel target = $region3
    $region8: #{discriminator_forward.13} parent=1 // loop_exit
      _

// kernel: discriminator_forward.14
$region0: #{discriminator_forward.14}
  #allocation0 [shape = 'u32[]', space=smem, size = 0x4, offset = 0x4, fixed_abs, tag = 'smem constant byte address 0x4 - core index']
  #allocation1 [shape = 'u32[72,128]{1,0:T(1,128)}', space=vmem, size = 0x9000, scoped, tag = 'internal scratch']
  %s0 = inlined_call_operand.vmem [shape: bf16[2,9,512], index: 0, kind: input, shape index: {}]
  %s1 = inlined_call_operand.vmem [shape: bf16[2,9,512], index: 1, kind: output, shape index: {}]
  %s2 = sld [smem:[#allocation0]]
  $region115: #{discriminator_forward.14} parent=0
    _
  %s4 = ssub.s32 1, %s2
  %s5 = scalar_select 0, %s4, %s2
  $region1: #{discriminator_forward.14} parent=0
    #allocation2 [shape = 'u8[8192]{0}', space=vmem, size = 0x2000, scoped, tag = 'input window, operand 0']
    #allocation3 [shape = 'u8[8192]{0}', space=vmem, size = 0x2000, scoped, tag = 'output window, operand 0']
    loop: start=0, step=1, limit=10
    $region2: #{discriminator_forward.14} parent=1 // loop_pre_header
      _
    $region3: #{discriminator_forward.14} parent=1 // loop_header
      %s7 = sphi 0, %s11
      %p8 = scmp.ge.s32.totalorder %s7, 10
      %s14 = sphi 0, %s26
      %s15 = sphi 0, %s22
      %s16 = sphi 0, %s14
      %s17 = sphi 0, %s15
      %s18 = sphi 0, %s16
      %s19 = sphi 0, %s17
      %s31 = sphi 0, %s33
      %s34 = sphi 0, %s31
      %s35 = sphi 0, %s34
      %s51 = sphi 0, %s35
      %s59 = sphi 0, %s61
      %s62 = sphi 0, %s59
      %s63 = sphi 0, %s62
      %s79 = sphi 0, %s63
    $region4: #{discriminator_forward.14} parent=1 // loop_header_branch
      %10 = sbr.rel (%p8) target = $region8
    $region5: #{discriminator_forward.14} parent=1 // loop_body
      %s12 = ssub.s32 %s7, 1
      %s13 = ssub.s32 %s7, 2
      %s20 = sadd.s32 1, %s15
      %p21 = scmp.ge.s32.totalorder %s20, 4
      %s22 = scalar_select %p21, 0, %s20
      %s23 = sadd.s32 1, %s14
      %s24 = scalar_select %p21, %s23, %s14
      %p25 = scmp.ge.s32.totalorder %s24, 2
      %s26 = scalar_select %p25, 0, %s24
      %s27 = ssub.s32 %s14, %s26
      %s28 = ssub.s32 %s15, %s22
      %s29 = sor.u32 %s27, %s28
      %p30 = scmp.eq.s32.totalorder %s29, 0
      %s32 = sadd.s32 %s31, 1
      %s33 = scalar_select %p30, %s31, %s32
      %p36 = pneg %p30
      %p37 = scmp.eq.s32.totalorder %s7, 7
      %p38 = por %p36, %p37
      %p39 = scmp.ne.s32.totalorder %s31, %s34
      %p40 = scmp.eq.s32.totalorder %s7, 0
      %p41 = por %p39, %p40
      %p42 = scmp.ne.s32.totalorder %s31, %s34
      %p43 = scmp.eq.s32.totalorder %s12, 7
      %p44 = por %p42, %p43
      %p45 = scmp.ne.s32.totalorder %s34, %s35
      %p46 = scmp.eq.s32.totalorder %s12, 0
      %p47 = por %p45, %p46
      %p48 = scmp.ne.s32.totalorder %s34, %s35
      %p49 = scmp.eq.s32.totalorder %s13, 7
      %p50 = por %p48, %p49
      %p52 = scmp.ne.s32.totalorder %s35, %s51
      %p53 = scmp.eq.s32.totalorder %s13, 0
      %p54 = por %p52, %p53
      %s55 = ssub.s32 %s14, %s26
      %s56 = ssub.s32 %s15, %s22
      %s57 = sor.u32 %s55, %s56
      %p58 = scmp.eq.s32.totalorder %s57, 0
      %s60 = sadd.s32 %s59, 1
      %s61 = scalar_select %p58, %s59, %s60
      %p64 = pneg %p58
      %p65 = scmp.eq.s32.totalorder %s7, 7
      %p66 = por %p64, %p65
      %p67 = scmp.ne.s32.totalorder %s59, %s62
      %p68 = scmp.eq.s32.totalorder %s7, 0
      %p69 = por %p67, %p68
      %p70 = scmp.ne.s32.totalorder %s59, %s62
      %p71 = scmp.eq.s32.totalorder %s12, 7
      %p72 = por %p70, %p71
      %p73 = scmp.ne.s32.totalorder %s62, %s63
      %p74 = scmp.eq.s32.totalorder %s12, 0
      %p75 = por %p73, %p74
      %p76 = scmp.ne.s32.totalorder %s62, %s63
      %p77 = scmp.eq.s32.totalorder %s13, 7
      %p78 = por %p76, %p77
      %p80 = scmp.ne.s32.totalorder %s63, %s79
      %p81 = scmp.eq.s32.totalorder %s13, 0
      %p82 = por %p80, %p81
      %p83 = scmp.le.s32.totalorder 1, %s7
      %p84 = scmp.lt.s32.totalorder %s7, 9
      %p85 = pnand %p83, %p84
      %p86 = pneg %p85
      // Predicated region
      $region9: #{discriminator_forward.14} parent=5 // pred_check
        _
      $region10: #{discriminator_forward.14} parent=5 // pred_check_branch
        %88 = sbr.rel (%p85) target = $region12
      $region11: #{discriminator_forward.14} parent=5 // pred_region
        %s89 = ssub.s32 %s7, 1
      $region12: #{discriminator_forward.14} parent=5 // pred_fallthru
        _
      %p90 = scmp.lt.s32.totalorder %s7, 8
      // Predicated region
      $region13: #{discriminator_forward.14} parent=5 // pred_check
        %p91 = pneg %p90
      $region14: #{discriminator_forward.14} parent=5 // pred_check_branch
        %93 = sbr.rel (%p91) target = $region16
      $region15: #{discriminator_forward.14} parent=5 // pred_region
        // Predicated region
        $region17: #{discriminator_forward.14} parent=15 // pred_check
          %p94 = pneg %p41
        $region18: #{discriminator_forward.14} parent=15 // pred_check_branch
          %96 = sbr.rel (%p94) target = $region20
        $region19: #{discriminator_forward.14} parent=15 // pred_region
          %s97 = sand.u32 %s31, 1
          %s98 = sand.u32 %s31, 1
          %s99 = smul.addr %s98, 8
          %s100 = scalar_lea.vmem [#allocation2], %s99
          %s101 = smul.addr %s14, 8
          %s102 = sadd.s32 %s15, %s101
          %s103 = smul.addr %s102, 4
          %s104 = scalar_lea.vmem %s0, %s103
          // Predicated region
          $region21: #{discriminator_forward.14} parent=19 // pred_check
            _
          $region22: #{discriminator_forward.14} parent=19 // pred_check_branch
            %106 = sbr.rel (0) target = $region24
          $region23: #{discriminator_forward.14} parent=19 // pred_region
            // Predicated region
            $region25: #{discriminator_forward.14} parent=23 // pred_check
              _
            $region26: #{discriminator_forward.14} parent=23 // pred_check_branch
              %108 = sbr.rel target = $region28
            $region27: #{discriminator_forward.14} parent=23 // pred_region
              // Predicated region
              $region40: #{discriminator_forward.14} parent=27 // pred_check
                _
              $region41: #{discriminator_forward.14} parent=27 // pred_check_branch
                %126 = sbr.rel (0) target = $region43
              $region42: #{discriminator_forward.14} parent=27 // pred_region
                loop: start=0, step=1, limit=1
                $region44: #{discriminator_forward.14} parent=42 // loop_pre_header
                  _
                $region45: #{discriminator_forward.14} parent=42 // loop_header
                  %s128 = sphi 0, %s132
                  %p129 = scmp.ge.s32.totalorder %s128, 1
                  %s133 = sphi %s104, %s104
                  %s134 = sphi %s100, %s100
                $region46: #{discriminator_forward.14} parent=42 // loop_header_branch
                  %131 = sbr.rel (%p129) target = $region50
                $region47: #{discriminator_forward.14} parent=42 // loop_body
                  _
                $region48: #{discriminator_forward.14} parent=42 // loop_footer
                  %s132 = sadd.s32 1, %s128
                $region49: #{discriminator_forward.14} parent=42 // loop_footer_branch
                  %127 = sbr.rel target = $region45
                $region50: #{discriminator_forward.14} parent=42 // loop_exit
                  _
                %s136 = ssub.s32 16, 1
                loop: start=0, step=1, limit=1
                $region51: #{discriminator_forward.14} parent=42 // loop_pre_header
                  _
                $region52: #{discriminator_forward.14} parent=42 // loop_header
                  %s138 = sphi 0, %s142
                  %p139 = scmp.ge.s32.totalorder %s138, 1
                  %s143 = sphi %s104, %s104
                  %s144 = sphi %s100, %s100
                $region53: #{discriminator_forward.14} parent=42 // loop_header_branch
                  %141 = sbr.rel (%p139) target = $region57
                $region54: #{discriminator_forward.14} parent=42 // loop_body
                  %v145 = vld [vmem:[%s143] sm:%s136]
                  %146 = vst [vmem:[%s144] sm:%s136] %v145
                  %v147 = vld [vmem:[%s143 + $0x10] sm:%s136]
                  %148 = vst [vmem:[%s144 + $0x4] sm:%s136] %v147
                $region55: #{discriminator_forward.14} parent=42 // loop_footer
                  %s142 = sadd.s32 1, %s138
                $region56: #{discriminator_forward.14} parent=42 // loop_footer_branch
                  %137 = sbr.rel target = $region52
                $region57: #{discriminator_forward.14} parent=42 // loop_exit
                  _
              $region43: #{discriminator_forward.14} parent=27 // pred_fallthru
                _
            $region28: #{discriminator_forward.14} parent=23 // pred_fallthru
              _
            // Predicated region
            $region29: #{discriminator_forward.14} parent=23 // pred_check
              _
            $region30: #{discriminator_forward.14} parent=23 // pred_check_branch
              %110 = sbr.rel (0) target = $region32
            $region31: #{discriminator_forward.14} parent=23 // pred_region
              %s112 = ssub.s32 16, 1
              loop: start=0, step=1, limit=1
              $region33: #{discriminator_forward.14} parent=31 // loop_pre_header
                _
              $region34: #{discriminator_forward.14} parent=31 // loop_header
                %s114 = sphi 0, %s118
                %p115 = scmp.ge.s32.totalorder %s114, 1
                %s119 = sphi %s104, %s104
                %s120 = sphi %s100, %s100
              $region35: #{discriminator_forward.14} parent=31 // loop_header_branch
                %117 = sbr.rel (%p115) target = $region39
              $region36: #{discriminator_forward.14} parent=31 // loop_body
                %v121 = vld [vmem:[%s119] sm:%s112]
                %122 = vst [vmem:[%s120] sm:%s112] %v121
                %v123 = vld [vmem:[%s119 + $0x10] sm:%s112]
                %124 = vst [vmem:[%s120 + $0x4] sm:%s112] %v123
              $region37: #{discriminator_forward.14} parent=31 // loop_footer
                %s118 = sadd.s32 1, %s114
              $region38: #{discriminator_forward.14} parent=31 // loop_footer_branch
                %113 = sbr.rel target = $region34
              $region39: #{discriminator_forward.14} parent=31 // loop_exit
                _
            $region32: #{discriminator_forward.14} parent=23 // pred_fallthru
              _
          $region24: #{discriminator_forward.14} parent=19 // pred_fallthru
            _
          %149 = vnop
        $region20: #{discriminator_forward.14} parent=15 // pred_fallthru
          _
      $region16: #{discriminator_forward.14} parent=5 // pred_fallthru
        _
      %p150 = scmp.le.s32.totalorder 1, %s7
      %p151 = scmp.lt.s32.totalorder %s7, 9
      %p152 = pnand %p150, %p151
      %p153 = pneg %p152
      // Predicated region
      $region58: #{discriminator_forward.14} parent=5 // pred_check
        _
      $region59: #{discriminator_forward.14} parent=5 // pred_check_branch
        %155 = sbr.rel (%p152) target = $region61
      $region60: #{discriminator_forward.14} parent=5 // pred_region
        %s156 = ssub.s32 %s7, 1
        %s157 = sand.u32 %s34, 1
        %s158 = sand.u32 %s34, 1
        %s159 = smul.addr %s158, 8
        %s160 = scalar_lea.vmem [#allocation2], %s159
        // Predicated region
        $region62: #{discriminator_forward.14} parent=60 // pred_check
          %p161 = pneg %p47
        $region63: #{discriminator_forward.14} parent=60 // pred_check_branch
          %163 = sbr.rel (%p161) target = $region65
        $region64: #{discriminator_forward.14} parent=60 // pred_region
          _
        $region65: #{discriminator_forward.14} parent=60 // pred_fallthru
          _
        %s164 = sand.u32 %s34, 1
        %s165 = sand.u32 %s34, 1
        %s166 = smul.addr %s165, 8
        %s167 = scalar_lea.vmem [#allocation2], %s166
        %p168 = pneg %p47
        %p169 = pneg %p44
        %p170 = pneg %p75
        %p171 = pneg %p72
        %s172 = sand.u32 %s62, 1
        %s173 = sand.u32 %s62, 1
        %s174 = smul.addr %s173, 8
        %s175 = scalar_lea.vmem [#allocation3], %s174
        %v176 = vld [vmem:[%s160] sm:$0xf]
        %v177 = vld [vmem:[%s160 + $0x4] sm:$0x1]
        %v178 = vunpack.c.l.bf16 %v176
        %v179 = vunpack.c.l.bf16 %v177
        %vm180 = vcmask 1040384
        %v181 = vsel %vm180, %v179, 0.0
        %v182 = vadd.f32 %v178, %v181
        %v183 = vrot.slane %v182, 4
        %v184 = vadd.f32 %v182, %v183
        %v185 = vrot.slane %v184, 2
        %v186 = vadd.f32 %v184, %v185
        %v187 = vrot.slane %v186, 1
        %v188 = vadd.f32 %v186, %v187
        %v189 = vrcp.pop 9.0
        %v190 = vmul.f32 9.0, %v189
        %v191 = vsub.f32 1.0, %v190
        %v192 = vmul.f32 %v189, %v191
        %v193 = vadd.f32 %v189, %v192
        %vm194 = vweird.f32 %v189
        %v195 = vsel %vm194, %v189, %v193
        %v196 = vmul.f32 %v188, %v195
        %v197 = vmul.f32 %v178, %v178
        %v198 = vmul.f32 %v179, %v179
        %v199 = vsel %vm180, %v198, 0.0
        %v200 = vadd.f32 %v197, %v199
        %v201 = vrot.slane %v200, 4
        %v202 = vadd.f32 %v200, %v201
        %v203 = vrot.slane %v202, 2
        %v204 = vadd.f32 %v202, %v203
        %v205 = vrot.slane %v204, 1
        %v206 = vadd.f32 %v204, %v205
        %v207 = vmul.f32 %v206, %v195
        %v208 = vmul.f32 %v196, %v196
        %v209 = vsub.f32 %v207, %v208
        %v210 = vmax.f32 %v209, 0.0
        %v211 = vsub.f32 %v178, %v196
        %v212 = vsub.f32 %v179, %v196
        %v213 = vadd.f32 %v210, 1e-05
        %v214 = vrsqrt.pop %v213
        %v215 = vmul.f32 %v214, %v213
        %v216 = vmul.f32 %v215, %v214
        %v217 = vmul.f32 0.5, %v216
        %v218 = vsub.f32 1.5, %v217
        %v219 = vmul.f32 %v214, %v218
        %vm220 = vweird.f32 %v213
        %vm221 = vweird.f32 %v214
        %vm222 = vmor %vm220, %vm221
        %v223 = vsel %vm222, %v214, %v219
        %v224 = vmul.f32 %v211, %v223
        %v225 = vmul.f32 %v212, %v223
        %vm226 = vcmp.ge.f32.partialorder %v224, 0.0
        %vm227 = vcmp.ge.f32.partialorder %v225, 0.0
        %v228 = vmul.f32 %v224, 0.2
        %v229 = vmul.f32 %v225, 0.2
        %v230 = vsel %vm226, %v224, %v228
        %v231 = vsel %vm227, %v225, %v229
        %v232 = vpack.c.bf16 %v230, %v230
        %v233 = vpack.c.bf16 %v231, %v231
        %234 = vst [vmem:[%s175] sm:$0xf] %v232
        %vm235 = vcmask 1040384
        %vm236 = vsmask.f32 256
        %vm237 = vmand %vm235, %vm236
        %v238 = vld [vmem:[%s175 + $0x4] sm:$0x1]
        %v239 = vsel %vm237, %v233, %v238
        %240 = vst [vmem:[%s175 + $0x4] sm:$0x1] %v239
        %s241 = sand.u32 %s62, 1
        %s242 = sand.u32 %s62, 1
        %s243 = smul.addr %s242, 8
        %s244 = scalar_lea.vmem [#allocation3], %s243
        // Predicated region
        $region66: #{discriminator_forward.14} parent=60 // pred_check
          %p245 = pneg %p72
        $region67: #{discriminator_forward.14} parent=60 // pred_check_branch
          %247 = sbr.rel (%p245) target = $region69
        $region68: #{discriminator_forward.14} parent=60 // pred_region
          %s248 = smul.addr %s16, 8
          %s249 = sadd.s32 %s17, %s248
          %s250 = smul.addr %s249, 4
          %s251 = scalar_lea.vmem %s1, %s250
          // Predicated region
          $region70: #{discriminator_forward.14} parent=68 // pred_check
            _
          $region71: #{discriminator_forward.14} parent=68 // pred_check_branch
            %253 = sbr.rel (0) target = $region73
          $region72: #{discriminator_forward.14} parent=68 // pred_region
            // Predicated region
            $region74: #{discriminator_forward.14} parent=72 // pred_check
              _
            $region75: #{discriminator_forward.14} parent=72 // pred_check_branch
              %255 = sbr.rel target = $region77
            $region76: #{discriminator_forward.14} parent=72 // pred_region
              // Predicated region
              $region89: #{discriminator_forward.14} parent=76 // pred_check
                _
              $region90: #{discriminator_forward.14} parent=76 // pred_check_branch
                %273 = sbr.rel (0) target = $region92
              $region91: #{discriminator_forward.14} parent=76 // pred_region
                loop: start=0, step=1, limit=1
                $region93: #{discriminator_forward.14} parent=91 // loop_pre_header
                  _
                $region94: #{discriminator_forward.14} parent=91 // loop_header
                  %s275 = sphi 0, %s279
                  %p276 = scmp.ge.s32.totalorder %s275, 1
                  %s280 = sphi %s244, %s244
                  %s281 = sphi %s251, %s251
                $region95: #{discriminator_forward.14} parent=91 // loop_header_branch
                  %278 = sbr.rel (%p276) target = $region99
                $region96: #{discriminator_forward.14} parent=91 // loop_body
                  _
                $region97: #{discriminator_forward.14} parent=91 // loop_footer
                  %s279 = sadd.s32 1, %s275
                $region98: #{discriminator_forward.14} parent=91 // loop_footer_branch
                  %274 = sbr.rel target = $region94
                $region99: #{discriminator_forward.14} parent=91 // loop_exit
                  _
                %s283 = ssub.s32 16, 1
                loop: start=0, step=1, limit=1
                $region100: #{discriminator_forward.14} parent=91 // loop_pre_header
                  _
                $region101: #{discriminator_forward.14} parent=91 // loop_header
                  %s285 = sphi 0, %s289
                  %p286 = scmp.ge.s32.totalorder %s285, 1
                  %s290 = sphi %s244, %s244
                  %s291 = sphi %s251, %s251
                $region102: #{discriminator_forward.14} parent=91 // loop_header_branch
                  %288 = sbr.rel (%p286) target = $region106
                $region103: #{discriminator_forward.14} parent=91 // loop_body
                  %v292 = vld [vmem:[%s290] sm:%s283]
                  %293 = vst [vmem:[%s291] sm:%s283] %v292
                  %v294 = vld [vmem:[%s290 + $0x4] sm:%s283]
                  %295 = vst [vmem:[%s291 + $0x10] sm:%s283] %v294
                $region104: #{discriminator_forward.14} parent=91 // loop_footer
                  %s289 = sadd.s32 1, %s285
                $region105: #{discriminator_forward.14} parent=91 // loop_footer_branch
                  %284 = sbr.rel target = $region101
                $region106: #{discriminator_forward.14} parent=91 // loop_exit
                  _
              $region92: #{discriminator_forward.14} parent=76 // pred_fallthru
                _
            $region77: #{discriminator_forward.14} parent=72 // pred_fallthru
              _
            // Predicated region
            $region78: #{discriminator_forward.14} parent=72 // pred_check
              _
            $region79: #{discriminator_forward.14} parent=72 // pred_check_branch
              %257 = sbr.rel (0) target = $region81
            $region80: #{discriminator_forward.14} parent=72 // pred_region
              %s259 = ssub.s32 16, 1
              loop: start=0, step=1, limit=1
              $region82: #{discriminator_forward.14} parent=80 // loop_pre_header
                _
              $region83: #{discriminator_forward.14} parent=80 // loop_header
                %s261 = sphi 0, %s265
                %p262 = scmp.ge.s32.totalorder %s261, 1
                %s266 = sphi %s244, %s244
                %s267 = sphi %s251, %s251
              $region84: #{discriminator_forward.14} parent=80 // loop_header_branch
                %264 = sbr.rel (%p262) target = $region88
              $region85: #{discriminator_forward.14} parent=80 // loop_body
                %v268 = vld [vmem:[%s266] sm:%s259]
                %269 = vst [vmem:[%s267] sm:%s259] %v268
                %v270 = vld [vmem:[%s266 + $0x4] sm:%s259]
                %271 = vst [vmem:[%s267 + $0x10] sm:%s259] %v270
              $region86: #{discriminator_forward.14} parent=80 // loop_footer
                %s265 = sadd.s32 1, %s261
              $region87: #{discriminator_forward.14} parent=80 // loop_footer_branch
                %260 = sbr.rel target = $region83
              $region88: #{discriminator_forward.14} parent=80 // loop_exit
                _
            $region81: #{discriminator_forward.14} parent=72 // pred_fallthru
              _
          $region73: #{discriminator_forward.14} parent=68 // pred_fallthru
            _
          %296 = vnop
        $region69: #{discriminator_forward.14} parent=60 // pred_fallthru
          _
      $region61: #{discriminator_forward.14} parent=5 // pred_fallthru
        _
      %p297 = scmp.le.s32.totalorder 2, %s7
      // Predicated region
      $region107: #{discriminator_forward.14} parent=5 // pred_check
        %p298 = pneg %p297
      $region108: #{discriminator_forward.14} parent=5 // pred_check_branch
        %300 = sbr.rel (%p298) target = $region110
      $region109: #{discriminator_forward.14} parent=5 // pred_region
        %s301 = ssub.s32 %s7, 2
        // Predicated region
        $region111: #{discriminator_forward.14} parent=109 // pred_check
          %p302 = pneg %p78
        $region112: #{discriminator_forward.14} parent=109 // pred_check_branch
          %304 = sbr.rel (%p302) target = $region114
        $region113: #{discriminator_forward.14} parent=109 // pred_region
          %s305 = sand.u32 %s63, 1
          %s306 = sand.u32 %s63, 1
          %s307 = smul.addr %s306, 8
          %s308 = scalar_lea.vmem [#allocation3], %s307
        $region114: #{discriminator_forward.14} parent=109 // pred_fallthru
          _
      $region110: #{discriminator_forward.14} parent=5 // pred_fallthru
        _
    $region6: #{discriminator_forward.14} parent=1 // loop_footer
      %s11 = sadd.s32 1, %s7
    $region7: #{discriminator_forward.14} parent=1 // loop_footer_branch
      %6 = sbr.rel target = $region3
    $region8: #{discriminator_forward.14} parent=1 // loop_exit
      _

// kernel: discriminator_forward.15
$region0: #{discriminator_forward.15}
  #allocation0 [shape = 'u32[]', space=smem, size = 0x4, offset = 0x4, fixed_abs, tag = 'smem constant byte address 0x4 - core index']
  #allocation1 [shape = 'u32[72,128]{1,0:T(1,128)}', space=vmem, size = 0x9000, scoped, tag = 'internal scratch']
  #allocation2 [shape = 'f32[8,128]{1,0:T(8,128)}', space=vmem, size = 0x1000, scoped, tag = 'scratch operand']
  %s0 = inlined_call_operand.vmem [shape: bf16[8,8192], index: 0, kind: input, shape index: {}]
  %s1 = inlined_call_operand.vmem [shape: bf16[8192,128], index: 1, kind: input, shape index: {}]
  %s2 = inlined_call_operand.vmem [shape: f32[1,128], index: 2, kind: input, shape index: {}]
  %s3 = inlined_call_operand.vmem [shape: f32[8,128], index: 3, kind: output, shape index: {}]
  %s4 = sld [smem:[#allocation0]]
  $region53: #{discriminator_forward.15} parent=0
    _
  %s6 = ssub.s32 1, %s4
  %s7 = scalar_select 0, %s6, %s4
  loop: start=0, step=1, limit=18
  $region2: #{discriminator_forward.15} parent=0 // loop_pre_header
    _
  $region3: #{discriminator_forward.15} parent=0 // loop_header
    %s9 = sphi 0, %s13
    %p10 = scmp.ge.s32.totalorder %s9, 18
    %s16 = sphi 0, %s35
    %s17 = sphi 0, %s31
    %s18 = sphi 0, %s27
    %s19 = sphi 0, %s16
    %s20 = sphi 0, %s17
    %s21 = sphi 0, %s18
    %s22 = sphi 0, %s19
    %s23 = sphi 0, %s20
    %s24 = sphi 0, %s21
    %s40 = sphi 0, %s42
    %s43 = sphi 0, %s40
    %s44 = sphi 0, %s43
    %s60 = sphi 0, %s44
    %s68 = sphi 0, %s70
    %s71 = sphi 0, %s68
    %s72 = sphi 0, %s71
    %s88 = sphi 0, %s72
    %s94 = sphi 0, %s96
    %s97 = sphi 0, %s94
    %s98 = sphi 0, %s97
    %s114 = sphi 0, %s98
    %s122 = sphi 0, %s124
    %s125 = sphi 0, %s122
    %s126 = sphi 0, %s125
    %s142 = sphi 0, %s126
  $region4: #{discriminator_forward.15} parent=0 // loop_header_branch
    %12 = sbr.rel (%p10) target = $region8
  $region5: #{discriminator_forward.15} parent=0 // loop_body
    %s14 = ssub.s32 %s9, 1
    %s15 = ssub.s32 %s9, 2
    %s25 = sadd.s32 1, %s18
    %p26 = scmp.ge.s32.totalorder %s25, 16
    %s27 = scalar_select %p26, 0, %s25
    %s28 = sadd.s32 1, %s17
    %s29 = scalar_select %p26, %s28, %s17
    %p30 = scmp.ge.s32.totalorder %s29, 1
    %s31 = scalar_select %p30, 0, %s29
    %s32 = sadd.s32 1, %s16
    %s33 = scalar_select %p30, %s32, %s16
    %p34 = scmp.ge.s32.totalorder %s33, 1
    %s35 = scalar_select %p34, 0, %s33
    %s36 = ssub.s32 %s16, %s35
    %s37 = ssub.s32 %s18, %s27
    %s38 = sor.u32 %s36, %s37
    %p39 = scmp.eq.s32.totalorder %s38, 0
    %s41 = sadd.s32 %s40, 1
    %s42 = scalar_select %p39, %s40, %s41
    %p45 = pneg %p39
    %p46 = scmp.eq.s32.totalorder %s9, 15
    %p47 = por %p45, %p46
    %p48 = scmp.ne.s32.totalorder %s40, %s43
    %p49 = scmp.eq.s32.totalorder %s9, 0
    %p50 = por %p48, %p49
    %p51 = scmp.ne.s32.totalorder %s40, %s43
    %p52 = scmp.eq.s32.totalorder %s14, 15
    %p53 = por %p51, %p52
    %p54 = scmp.ne.s32.totalorder %s43, %s44
    %p55 = scmp.eq.s32.totalorder %s14, 0
    %p56 = por %p54, %p55
    %p57 = scmp.ne.s32.totalorder %s43, %s44
    %p58 = scmp.eq.s32.totalorder %s15, 15
    %p59 = por %p57, %p58
    %p61 = scmp.ne.s32.totalorder %s44, %s60
    %p62 = scmp.eq.s32.totalorder %s15, 0
    %p63 = por %p61, %p62
    %s64 = ssub.s32 %s18, %s27
    %s65 = ssub.s32 %s17, %s31
    %s66 = sor.u32 %s64, %s65
    %p67 = scmp.eq.s32.totalorder %s66, 0
    %s69 = sadd.s32 %s68, 1
    %s70 = scalar_select %p67, %s68, %s69
    %p73 = pneg %p67
    %p74 = scmp.eq.s32.totalorder %s9, 15
    %p75 = por %p73, %p74
    %p76 = scmp.ne.s32.totalorder %s68, %s71
    %p77 = scmp.eq.s32.totalorder %s9, 0
    %p78 = por %p76, %p77
    %p79 = scmp.ne.s32.totalorder %s68, %s71
    %p80 = scmp.eq.s32.totalorder %s14, 15
    %p81 = por %p79, %p80
    %p82 = scmp.ne.s32.totalorder %s71, %s72
    %p83 = scmp.eq.s32.totalorder %s14, 0
    %p84 = por %p82, %p83
    %p85 = scmp.ne.s32.totalorder %s71, %s72
    %p86 = scmp.eq.s32.totalorder %s15, 15
    %p87 = por %p85, %p86
    %p89 = scmp.ne.s32.totalorder %s72, %s88
    %p90 = scmp.eq.s32.totalorder %s15, 0
    %p91 = por %p89, %p90
    %s92 = ssub.s32 %s17, %s31
    %p93 = scmp.eq.s32.totalorder %s92, 0
    %s95 = sadd.s32 %s94, 1
    %s96 = scalar_select %p93, %s94, %s95
    %p99 = pneg %p93
    %p100 = scmp.eq.s32.totalorder %s9, 15
    %p101 = por %p99, %p100
    %p102 = scmp.ne.s32.totalorder %s94, %s97
    %p103 = scmp.eq.s32.totalorder %s9, 0
    %p104 = por %p102, %p103
    %p105 = scmp.ne.s32.totalorder %s94, %s97
    %p106 = scmp.eq.s32.totalorder %s14, 15
    %p107 = por %p105, %p106
    %p108 = scmp.ne.s32.totalorder %s97, %s98
    %p109 = scmp.eq.s32.totalorder %s14, 0
    %p110 = por %p108, %p109
    %p111 = scmp.ne.s32.totalorder %s97, %s98
    %p112 = scmp.eq.s32.totalorder %s15, 15
    %p113 = por %p111, %p112
    %p115 = scmp.ne.s32.totalorder %s98, %s114
    %p116 = scmp.eq.s32.totalorder %s15, 0
    %p117 = por %p115, %p116
    %s118 = ssub.s32 %s16, %s35
    %s119 = ssub.s32 %s17, %s31
    %s120 = sor.u32 %s118, %s119
    %p121 = scmp.eq.s32.totalorder %s120, 0
    %s123 = sadd.s32 %s122, 1
    %s124 = scalar_select %p121, %s122, %s123
    %p127 = pneg %p121
    %p128 = scmp.eq.s32.totalorder %s9, 15
    %p129 = por %p127, %p128
    %p130 = scmp.ne.s32.totalorder %s122, %s125
    %p131 = scmp.eq.s32.totalorder %s9, 0
    %p132 = por %p130, %p131
    %p133 = scmp.ne.s32.totalorder %s122, %s125
    %p134 = scmp.eq.s32.totalorder %s14, 15
    %p135 = por %p133, %p134
    %p136 = scmp.ne.s32.totalorder %s125, %s126
    %p137 = scmp.eq.s32.totalorder %s14, 0
    %p138 = por %p136, %p137
    %p139 = scmp.ne.s32.totalorder %s125, %s126
    %p140 = scmp.eq.s32.totalorder %s15, 15
    %p141 = por %p139, %p140
    %p143 = scmp.ne.s32.totalorder %s126, %s142
    %p144 = scmp.eq.s32.totalorder %s15, 0
    %p145 = por %p143, %p144
    %p146 = scmp.le.s32.totalorder 1, %s9
    %p147 = scmp.lt.s32.totalorder %s9, 17
    %p148 = pnand %p146, %p147
    %p149 = pneg %p148
    // Predicated region
    $region9: #{discriminator_forward.15} parent=5 // pred_check
      _
    $region10: #{discriminator_forward.15} parent=5 // pred_check_branch
      %151 = sbr.rel (%p148) target = $region12
    $region11: #{discriminator_forward.15} parent=5 // pred_region
      %s152 = ssub.s32 %s9, 1
      // Predicated region
      $region13: #{discriminator_forward.15} parent=11 // pred_check
        %p153 = pneg %p110
      $region14: #{discriminator_forward.15} parent=11 // pred_check_branch
        %155 = sbr.rel (%p153) target = $region16
      $region15: #{discriminator_forward.15} parent=11 // pred_region
        %p156 = scmp.lt.s32.totalorder %s20, 0
        %s157 = scalar_select %p156, %s20, 0
        %s158 = scalar_lea.vmem %s2, %s157
      $region16: #{discriminator_forward.15} parent=11 // pred_fallthru
        _
    $region12: #{discriminator_forward.15} parent=5 // pred_fallthru
      _
    %p159 = scmp.lt.s32.totalorder %s9, 16
    // Predicated region
    $region17: #{discriminator_forward.15} parent=5 // pred_check
      %p160 = pneg %p159
    $region18: #{discriminator_forward.15} parent=5 // pred_check_branch
      %162 = sbr.rel (%p160) target = $region20
    $region19: #{discriminator_forward.15} parent=5 // pred_region
      // Predicated region
      $region21: #{discriminator_forward.15} parent=19 // pred_check
        %p163 = pneg %p50
      $region22: #{discriminator_forward.15} parent=19 // pred_check_branch
        %165 = sbr.rel (%p163) target = $region24
      $region23: #{discriminator_forward.15} parent=19 // pred_region
        %s166 = smul.u32 4, %s18
        %p167 = scmp.lt.s32.totalorder %s16, 0
        %s168 = scalar_select %p167, %s16, 0
        %p169 = scmp.lt.s32.totalorder %s166, 63
        %s170 = scalar_select %p169, %s166, 63
        %s171 = smul.addr %s168, 64
        %s172 = sadd.s32 %s170, %s171
        %s173 = smul.addr %s172, 4
        %s174 = scalar_lea.vmem %s0, %s173
        %s175 = smul.u32 4, %s18
      $region24: #{discriminator_forward.15} parent=19 // pred_fallthru
        _
      // Predicated region
      $region25: #{discriminator_forward.15} parent=19 // pred_check
        %p176 = pneg %p78
      $region26: #{discriminator_forward.15} parent=19 // pred_check_branch
        %178 = sbr.rel (%p176) target = $region28
      $region27: #{discriminator_forward.15} parent=19 // pred_region
        %s179 = smul.u32 64, %s18
        %p180 = scmp.lt.s32.totalorder %s179, 1023
        %s181 = scalar_select %p180, %s179, 1023
        %p182 = scmp.lt.s32.totalorder %s17, 0
        %s183 = scalar_select %p182, %s17, 0
        %s184 = sadd.s32 %s183, %s181
        %s185 = smul.addr %s184, 4
        %s186 = scalar_lea.vmem %s1, %s185
        %s187 = smul.u32 64, %s18
      $region28: #{discriminator_forward.15} parent=19 // pred_fallthru
        _
    $region20: #{discriminator_forward.15} parent=5 // pred_fallthru
      _
    %p188 = scmp.le.s32.totalorder 1, %s9
    %p189 = scmp.lt.s32.totalorder %s9, 17
    %p190 = pnand %p188, %p189
    %p191 = pneg %p190
    // Predicated region
    $region29: #{discriminator_forward.15} parent=5 // pred_check
      _
    $region30: #{discriminator_forward.15} parent=5 // pred_check_branch
      %193 = sbr.rel (%p190) target = $region32
    $region31: #{discriminator_forward.15} parent=5 // pred_region
      %s194 = ssub.s32 %s9, 1
      %s195 = smul.u32 4, %s21
      %p196 = scmp.lt.s32.totalorder %s19, 0
      %s197 = scalar_select %p196, %s19, 0
      %p198 = scmp.lt.s32.totalorder %s195, 63
      %s199 = scalar_select %p198, %s195, 63
      %s200 = smul.addr %s197, 64
      %s201 = sadd.s32 %s199, %s200
      %s202 = smul.addr %s201, 4
      %s203 = scalar_lea.vmem %s0, %s202
      %p204 = pneg %p56
      %p205 = pneg %p53
      %s206 = smul.u32 64, %s21
      %p207 = scmp.lt.s32.totalorder %s206, 1023
      %s208 = scalar_select %p207, %s206, 1023
      %p209 = scmp.lt.s32.totalorder %s20, 0
      %s210 = scalar_select %p209, %s20, 0
      %s211 = sadd.s32 %s210, %s208
      %s212 = smul.addr %s211, 4
      %s213 = scalar_lea.vmem %s1, %s212
      %p214 = pneg %p84
      %p215 = pneg %p81
      %p216 = scmp.lt.s32.totalorder %s20, 0
      %s217 = scalar_select %p216, %s20, 0
      %s218 = scalar_lea.vmem %s2, %s217
      %p219 = pneg %p110
      %p220 = pneg %p107
      %p221 = pneg %p138
      %p222 = pneg %p135
      %p223 = scmp.lt.s32.totalorder %s19, 0
      %s224 = scalar_select %p223, %s19, 0
      %p225 = scmp.lt.s32.totalorder %s20, 0
      %s226 = scalar_select %p225, %s20, 0
      %s227 = sadd.s32 %s226, %s224
      %s228 = smul.addr %s227, 8
      %s229 = scalar_lea.vmem %s3, %s228
      %s230 = smul.u32 4, %s21
      %p231 = scmp.lt.s32.totalorder %s19, 0
      %s232 = scalar_select %p231, %s19, 0
      %p233 = scmp.lt.s32.totalorder %s230, 63
      %s234 = scalar_select %p233, %s230, 63
      %s235 = smul.addr %s232, 64
      %s236 = sadd.s32 %s234, %s235
      %s237 = smul.addr %s236, 4
      %s238 = scalar_lea.vmem %s0, %s237
      %s239 = smul.u32 4, %s21
      %s240 = smul.u32 64, %s21
      %p241 = scmp.lt.s32.totalorder %s240, 1023
      %s242 = scalar_select %p241, %s240, 1023
      %p243 = scmp.lt.s32.totalorder %s20, 0
      %s244 = scalar_select %p243, %s20, 0
      %s245 = sadd.s32 %s244, %s242
      %s246 = smul.addr %s245, 4
      %s247 = scalar_lea.vmem %s1, %s246
      %s248 = smul.u32 64, %s21
      %p249 = scmp.lt.s32.totalorder %s20, 0
      %s250 = scalar_select %p249, %s20, 0
      %s251 = scalar_lea.vmem %s2, %s250
      %p252 = scmp.lt.s32.totalorder %s19, 0
      %s253 = scalar_select %p252, %s19, 0
      %p254 = scmp.lt.s32.totalorder %s20, 0
      %s255 = scalar_select %p254, %s20, 0
      %s256 = sadd.s32 %s255, %s253
      %s257 = smul.addr %s256, 8
      %s258 = scalar_lea.vmem %s3, %s257
      %p259 = scmp.eq.s32.totalorder %s21, 0
      // Predicated region
      $region33: #{discriminator_forward.15} parent=31 // pred_check
        %p260 = pneg %p259
      $region34: #{discriminator_forward.15} parent=31 // pred_check_branch
        %262 = sbr.rel (%p260) target = $region36
      $region35: #{discriminator_forward.15} parent=31 // pred_region
        %263 = vst [vmem:[#allocation2] sm:$0xff] 0.0
      $region36: #{discriminator_forward.15} parent=31 // pred_fallthru
        _
      %v264 = vld [vmem:[#allocation2] sm:$0xff]
      %v265 = vld [vmem:[%s238] sm:$0xff]
      %v266 = vld [vmem:[%s238 + $0x8] sm:$0xff]
      %v267 = vld [vmem:[%s247] sm:$0xf]
      %v268 = vld [vmem:[%s247 + $0x4] sm:$0xf]
      %v269 = vld [vmem:[%s247 + $0x8] sm:$0xf]
      %v270 = vld [vmem:[%s247 + $0xc] sm:$0xf]
      %v271 = vld [vmem:[%s247 + $0x10] sm:$0xf]
      %v272 = vld [vmem:[%s247 + $0x14] sm:$0xf]
      %v273 = vld [vmem:[%s247 + $0x18] sm:$0xf]
      %v274 = vld [vmem:[%s247 + $0x1c] sm:$0xf]
      %v275 = vld [vmem:[%s247 + $0x20] sm:$0xf]
      %v276 = vld [vmem:[%s247 + $0x24] sm:$0xf]
      %v277 = vld [vmem:[%s247 + $0x28] sm:$0xf]
      %v278 = vld [vmem:[%s247 + $0x2c] sm:$0xf]
      %v279 = vld [vmem:[%s247 + $0x30] sm:$0xf]
      %v280 = vld [vmem:[%s247 + $0x34] sm:$0xf]
      %v281 = vld [vmem:[%s247 + $0x38] sm:$0xf]
      %v282 = vld [vmem:[%s247 + $0x3c] sm:$0xf]
      %v283 = vld [vmem:[%s247 + $0x40] sm:$0xf]
      %v284 = vld [vmem:[%s247 + $0x44] sm:$0xf]
      %v285 = vld [vmem:[%s247 + $0x48] sm:$0xf]
      %v286 = vld [vmem:[%s247 + $0x4c] sm:$0xf]
      %v287 = vld [vmem:[%s247 + $0x50] sm:$0xf]
      %v288 = vld [vmem:[%s247 + $0x54] sm:$0xf]
      %v289 = vld [vmem:[%s247 + $0x58] sm:$0xf]
      %v290 = vld [vmem:[%s247 + $0x5c] sm:$0xf]
      %v291 = vld [vmem:[%s247 + $0x60] sm:$0xf]
      %v292 = vld [vmem:[%s247 + $0x64] sm:$0xf]
      %v293 = vld [vmem:[%s247 + $0x68] sm:$0xf]
      %v294 = vld [vmem:[%s247 + $0x6c] sm:$0xf]
      %v295 = vld [vmem:[%s247 + $0x70] sm:$0xf]
      %v296 = vld [vmem:[%s247 + $0x74] sm:$0xf]
      %v297 = vld [vmem:[%s247 + $0x78] sm:$0xf]
      %v298 = vld [vmem:[%s247 + $0x7c] sm:$0xf]
      %v299 = vld [vmem:[%s247 + $0x80] sm:$0xf]
      %v300 = vld [vmem:[%s247 + $0x84] sm:$0xf]
      %v301 = vld [vmem:[%s247 + $0x88] sm:$0xf]
      %v302 = vld [vmem:[%s247 + $0x8c] sm:$0xf]
      %v303 = vld [vmem:[%s247 + $0x90] sm:$0xf]
      %v304 = vld [vmem:[%s247 + $0x94] sm:$0xf]
      %v305 = vld [vmem:[%s247 + $0x98] sm:$0xf]
      %v306 = vld [vmem:[%s247 + $0x9c] sm:$0xf]
      %v307 = vld [vmem:[%s247 + $0xa0] sm:$0xf]
      %v308 = vld [vmem:[%s247 + $0xa4] sm:$0xf]
      %v309 = vld [vmem:[%s247 + $0xa8] sm:$0xf]
      %v310 = vld [vmem:[%s247 + $0xac] sm:$0xf]
      %v311 = vld [vmem:[%s247 + $0xb0] sm:$0xf]
      %v312 = vld [vmem:[%s247 + $0xb4] sm:$0xf]
      %v313 = vld [vmem:[%s247 + $0xb8] sm:$0xf]
      %v314 = vld [vmem:[%s247 + $0xbc] sm:$0xf]
      %v315 = vld [vmem:[%s247 + $0xc0] sm:$0xf]
      %v316 = vld [vmem:[%s247 + $0xc4] sm:$0xf]
      %v317 = vld [vmem:[%s247 + $0xc8] sm:$0xf]
      %v318 = vld [vmem:[%s247 + $0xcc] sm:$0xf]
      %v319 = vld [vmem:[%s247 + $0xd0] sm:$0xf]
      %v320 = vld [vmem:[%s247 + $0xd4] sm:$0xf]
      %v321 = vld [vmem:[%s247 + $0xd8] sm:$0xf]
      %v322 = vld [vmem:[%s247 + $0xdc] sm:$0xf]
      %v323 = vld [vmem:[%s247 + $0xe0] sm:$0xf]
      %v324 = vld [vmem:[%s247 + $0xe4] sm:$0xf]
      %v325 = vld [vmem:[%s247 + $0xe8] sm:$0xf]
      %v326 = vld [vmem:[%s247 + $0xec] sm:$0xf]
      %v327 = vld [vmem:[%s247 + $0xf0] sm:$0xf]
      %v328 = vld [vmem:[%s247 + $0xf4] sm:$0xf]
      %v329 = vld [vmem:[%s247 + $0xf8] sm:$0xf]
      %v330 = vld [vmem:[%s247 + $0xfc] sm:$0xf]
      %v333 = vunpack.c.l.b16 %v265
      %v334 = vunpack.c.h.b16 %v265
      %v335 = vunpack.c.l.b16 %v266
      %v336 = vunpack.c.h.b16 %v266
      %v337 = vpack.c.b16 %v333, %v333
      %v338 = vpack.c.b16 %v334, %v334
      %v339 = vpack.c.b16 %v335, %v335
      %v340 = vpack.c.b16 %v336, %v336
      %v409 = vunpack.c.l.b16 %v267
      %v410 = vunpack.c.l.b16 %v268
      %v411 = vunpack.c.l.b16 %v269
      %v412 = vunpack.c.l.b16 %v270
      %v413 = vunpack.c.l.b16 %v271
      %v414 = vunpack.c.l.b16 %v272
      %v415 = vunpack.c.l.b16 %v273
      %v416 = vunpack.c.l.b16 %v274
      %v417 = vunpack.c.l.b16 %v275
      %v418 = vunpack.c.l.b16 %v276
      %v419 = vunpack.c.l.b16 %v277
      %v420 = vunpack.c.l.b16 %v278
      %v421 = vunpack.c.l.b16 %v279
      %v422 = vunpack.c.l.b16 %v280
      %v423 = vunpack.c.l.b16 %v281
      %v424 = vunpack.c.l.b16 %v282
      %v425 = vunpack.c.l.b16 %v283
      %v426 = vunpack.c.l.b16 %v284
      %v427 = vunpack.c.l.b16 %v285
      %v428 = vunpack.c.l.b16 %v286
      %v429 = vunpack.c.l.b16 %v287
      %v430 = vunpack.c.l.b16 %v288
      %v431 = vunpack.c.l.b16 %v289
      %v432 = vunpack.c.l.b16 %v290
      %v433 = vunpack.c.l.b16 %v291
      %v434 = vunpack.c.l.b16 %v292
      %v435 = vunpack.c.l.b16 %v293
      %v436 = vunpack.c.l.b16 %v294
      %v437 = vunpack.c.l.b16 %v295
      %v438 = vunpack.c.l.b16 %v296
      %v439 = vunpack.c.l.b16 %v297
      %v440 = vunpack.c.l.b16 %v298
      %v441 = vunpack.c.l.b16 %v299
      %v442 = vunpack.c.l.b16 %v300
      %v443 = vunpack.c.l.b16 %v301
      %v444 = vunpack.c.l.b16 %v302
      %v445 = vunpack.c.l.b16 %v303
      %v446 = vunpack.c.l.b16 %v304
      %v447 = vunpack.c.l.b16 %v305
      %v448 = vunpack.c.l.b16 %v306
      %v449 = vunpack.c.l.b16 %v307
      %v450 = vunpack.c.l.b16 %v308
      %v451 = vunpack.c.l.b16 %v309
      %v452 = vunpack.c.l.b16 %v310
      %v453 = vunpack.c.l.b16 %v311
      %v454 = vunpack.c.l.b16 %v312
      %v455 = vunpack.c.l.b16 %v313
      %v456 = vunpack.c.l.b16 %v314
      %v457 = vunpack.c.l.b16 %v315
      %v458 = vunpack.c.l.b16 %v316
      %v459 = vunpack.c.l.b16 %v317
      %v460 = vunpack.c.l.b16 %v318
      %v461 = vunpack.c.l.b16 %v319
      %v462 = vunpack.c.l.b16 %v320
      %v463 = vunpack.c.l.b16 %v321
      %v464 = vunpack.c.l.b16 %v322
      %v465 = vunpack.c.l.b16 %v323
      %v466 = vunpack.c.l.b16 %v324
      %v467 = vunpack.c.l.b16 %v325
      %v468 = vunpack.c.l.b16 %v326
      %v469 = vunpack.c.l.b16 %v327
      %v470 = vunpack.c.l.b16 %v328
      %v471 = vunpack.c.l.b16 %v329
      %v472 = vunpack.c.l.b16 %v330
      %v473 = vpack.c.b16 %v410, %v409
      %v474 = vpack.c.b16 %v412, %v411
      %v475 = vpack.c.b16 %v414, %v413
      %v476 = vpack.c.b16 %v416, %v415
      %v477 = vpack.c.b16 %v418, %v417
      %v478 = vpack.c.b16 %v420, %v419
      %v479 = vpack.c.b16 %v422, %v421
      %v480 = vpack.c.b16 %v424, %v423
      %v481 = vpack.c.b16 %v426, %v425
      %v482 = vpack.c.b16 %v428, %v427
      %v483 = vpack.c.b16 %v430, %v429
      %v484 = vpack.c.b16 %v432, %v431
      %v485 = vpack.c.b16 %v434, %v433
      %v486 = vpack.c.b16 %v436, %v435
      %v487 = vpack.c.b16 %v438, %v437
      %v488 = vpack.c.b16 %v440, %v439
      %v489 = vpack.c.b16 %v442, %v441
      %v490 = vpack.c.b16 %v444, %v443
      %v491 = vpack.c.b16 %v446, %v445
      %v492 = vpack.c.b16 %v448, %v447
      %v493 = vpack.c.b16 %v450, %v449
      %v494 = vpack.c.b16 %v452, %v451
      %v495 = vpack.c.b16 %v454, %v453
      %v496 = vpack.c.b16 %v456, %v455
      %v497 = vpack.c.b16 %v458, %v457
      %v498 = vpack.c.b16 %v460, %v459
      %v499 = vpack.c.b16 %v462, %v461
      %v500 = vpack.c.b16 %v464, %v463
      %v501 = vpack.c.b16 %v466, %v465
      %v502 = vpack.c.b16 %v468, %v467
      %v503 = vpack.c.b16 %v470, %v469
      %v504 = vpack.c.b16 %v472, %v471
      %537 = vmatpush.bf16.msra.mxu0 %v480
      %538 = vmatpush.bf16.msra.mxu0 %v479
      %539 = vmatpush.bf16.msra.mxu0 %v478
      %540 = vmatpush.bf16.msra.mxu0 %v477
      %541 = vmatpush.bf16.msra.mxu0 %v476
      %542 = vmatpush.bf16.msra.mxu0 %v475
      %543 = vmatpush.bf16.msra.mxu0 %v474
      %544 = vmatpush.bf16.msra.mxu0 %v473
      %545 = vmatmul.bf16.gmra.mxu0 %v337
      %v546 = vpop.f32.mrf.mxu0
      %v547 = vadd.f32 0.0, %v546
      %v548 = vpop.f32.mrf.mxu0
      %549 = vdwg.mxu0
      %550 = vmatpush.bf16.msra.mxu0 %v488
      %551 = vmatpush.bf16.msra.mxu0 %v487
      %552 = vmatpush.bf16.msra.mxu0 %v486
      %553 = vmatpush.bf16.msra.mxu0 %v485
      %554 = vmatpush.bf16.msra.mxu0 %v484
      %555 = vmatpush.bf16.msra.mxu0 %v483
      %556 = vmatpush.bf16.msra.mxu0 %v482
      %557 = vmatpush.bf16.msra.mxu0 %v481
      %558 = vmatmul.bf16.gmra.mxu0 %v338
      %v559 = vpop.f32.mrf.mxu0
      %v560 = vadd.f32 %v547, %v559
      %v561 = vpop.f32.mrf.mxu0
      %562 = vdwg.mxu0
      %563 = vmatpush.bf16.msra.mxu0 %v496
      %564 = vmatpush.bf16.msra.mxu0 %v495
      %565 = vmatpush.bf16.msra.mxu0 %v494
      %566 = vmatpush.bf16.msra.mxu0 %v493
      %567 = vmatpush.bf16.msra.mxu0 %v492
      %568 = vmatpush.bf16.msra.mxu0 %v491
      %569 = vmatpush.bf16.msra.mxu0 %v490
      %570 = vmatpush.bf16.msra.mxu0 %v489
      %571 = vmatmul.bf16.gmra.mxu0 %v339
      %v572 = vpop.f32.mrf.mxu0
      %v573 = vadd.f32 %v560, %v572
      %v574 = vpop.f32.mrf.mxu0
      %575 = vdwg.mxu0
      %576 = vmatpush.bf16.msra.mxu0 %v504
      %577 = vmatpush.bf16.msra.mxu0 %v503
      %578 = vmatpush.bf16.msra.mxu0 %v502
      %579 = vmatpush.bf16.msra.mxu0 %v501
      %580 = vmatpush.bf16.msra.mxu0 %v500
      %581 = vmatpush.bf16.msra.mxu0 %v499
      %582 = vmatpush.bf16.msra.mxu0 %v498
      %583 = vmatpush.bf16.msra.mxu0 %v497
      %584 = vmatmul.bf16.gmra.mxu0 %v340
      %v585 = vpop.f32.mrf.mxu0
      %v586 = vadd.f32 %v573, %v585
      %v587 = vpop.f32.mrf.mxu0
      %588 = vdwg.mxu0
      %v589 = vadd.f32 %v264, %v586
      %590 = vst [vmem:[#allocation2] sm:$0xff] %v589
      %p591 = scmp.eq.s32.totalorder %s21, 15
      // Predicated region
      $region37: #{discriminator_forward.15} parent=31 // pred_check
        %p592 = pneg %p591
      $region38: #{discriminator_forward.15} parent=31 // pred_check_branch
        %594 = sbr.rel (%p592) target = $region40
      $region39: #{discriminator_forward.15} parent=31 // pred_region
        %v595 = vld [vmem:[#allocation2] sm:$0xff]
        %v596 = vld [vmem:[%s251] sm:$0x1]
        %v598 = vperm.slane %v596, 0
        %v600 = vadd.f32 %v595, %v598
        %v601 = vxor.u32 %v600, 2147483648
        %v602 = vmul.f32 %v601, 1.442695
        %v603 = vpow.pop %v602
        %v604 = vadd.f32 %v603, 1.0
        %v605 = vrcp.pop %v604
        %v606 = vmul.f32 %v604, %v605
        %v607 = vsub.f32 1.0, %v606
        %v608 = vmul.f32 %v605, %v607
        %v609 = vadd.f32 %v605, %v608
        %vm610 = vweird.f32 %v604
        %vm611 = vweird.f32 %v605
        %vm612 = vmor %vm610, %vm611
        %v613 = vsel %vm612, %v605, %v609
        %v614 = vand.u32 2147483647, %v604
        %vm615 = vcmp.eq.f32.partialorder %v614, 8.507059e+37
        %v616 = vand.u32 %v604, 2147483648
        %v617 = vor.u32 1.1754944e-38, %v616
        %v618 = vsel %vm615, %v617, %v613
        %v619 = vmul.f32 1.0, %v618
        %620 = vst [vmem:[%s258] sm:$0xff] %v619
      $region40: #{discriminator_forward.15} parent=31 // pred_fallthru
        _
      %p621 = scmp.lt.s32.totalorder %s19, 0
      %s622 = scalar_select %p621, %s19, 0
      %p623 = scmp.lt.s32.totalorder %s20, 0
      %s624 = scalar_select %p623, %s20, 0
      %s625 = sadd.s32 %s624, %s622
      %s626 = smul.addr %s625, 8
      %s627 = scalar_lea.vmem %s3, %s626
      // Predicated region
      $region41: #{discriminator_forward.15} parent=31 // pred_check
        %p628 = pneg %p135
      $region42: #{discriminator_forward.15} parent=31 // pred_check_branch
        %630 = sbr.rel (%p628) target = $region44
      $region43: #{discriminator_forward.15} parent=31 // pred_region
        _
      $region44: #{discriminator_forward.15} parent=31 // pred_fallthru
        _
      // Predicated region
      $region45: #{discriminator_forward.15} parent=31 // pred_check
        %p631 = pneg %p135
      $region46: #{discriminator_forward.15} parent=31 // pred_check_branch
        %633 = sbr.rel (%p631) target = $region48
      $region47: #{discriminator_forward.15} parent=31 // pred_region
        %p634 = scmp.lt.s32.totalorder %s19, 0
        %s635 = scalar_select %p634, %s19, 0
        %p636 = scmp.lt.s32.totalorder %s20, 0
        %s637 = scalar_select %p636, %s20, 0
        %s638 = sadd.s32 %s637, %s635
        %s639 = smul.addr %s638, 8
        %s640 = scalar_lea.vmem %s3, %s639
      $region48: #{discriminator_forward.15} parent=31 // pred_fallthru
        _
    $region32: #{discriminator_forward.15} parent=5 // pred_fallthru
      _
    %p641 = scmp.le.s32.totalorder 2, %s9
    // Predicated region
    $region49: #{discriminator_forward.15} parent=5 // pred_check
      %p642 = pneg %p641
    $region50: #{discriminator_forward.15} parent=5 // pred_check_branch
      %644 = sbr.rel (%p642) target = $region52
    $region51: #{discriminator_forward.15} parent=5 // pred_region
      %s645 = ssub.s32 %s9, 2
    $region52: #{discriminator_forward.15} parent=5 // pred_fallthru
      _
  $region6: #{discriminator_forward.15} parent=0 // loop_footer
    %s13 = sadd.s32 1, %s9
  $region7: #{discriminator_forward.15} parent=0 // loop_footer_branch
    %8 = sbr.rel target = $region3
  $region8: #{discriminator_forward.15} parent=0 // loop_exit
    _

</llo_original>
